<compile_context>
chip_gen: v6e
topology: v6e:2x2x1
jax: 0.10.0
libtpu: 0.0.40
codegen_flags: <defaults>
</compile_context>

<pallas_src>
import numpy as np
import jax
import jax.numpy as jnp
from jax import lax
from jax.experimental import pallas as pl
from jax.experimental.pallas import tpu as pltpu

_SQRT2 = np.float32(np.sqrt(2.0))
_NEG = np.float32(-1e30)          # effective -inf for maxpool padding (GELU >= -0.2)


def _round_up(n, m):
    return -(-n // m) * m


def _gelu_exact(x):
    # exact GELU (torch.nn.GELU default): 0.5*x*(1+erf(x/sqrt(2)))
    return 0.5 * x * (1.0 + lax.erf(x / _SQRT2))


# ---------------------------------------------------------------------------
# In-kernel building blocks (all sizes derived statically from ref/value shapes)
# ---------------------------------------------------------------------------
def _maxpool9s2p4(y, ypad_ref):
    """MaxPool1d(kernel=9, stride=2, padding=4) over rows of y ((l_conv, c) f32)."""
    l_conv, c = y.shape
    l_pool = (l_conv - 1) // 2 + 1
    # (-1e30)-padded copy of y in VMEM scratch; rows [4, 4+l_conv) hold y.
    ypad_ref[...] = jnp.full(ypad_ref.shape, _NEG, jnp.float32)
    ypad_ref[4:4 + l_conv, :] = y
    # stride-1 window max (9 shifted reads)
    z = jnp.full((l_conv, c), _NEG, jnp.float32)
    for j in range(9):
        z = jnp.maximum(z, ypad_ref[j:j + l_conv, :])
    # decimate rows by 2 with a 0/1 selection matmul (no strided / XLU ops)
    r = lax.broadcasted_iota(jnp.int32, (l_pool, l_conv), 0)
    t = lax.broadcasted_iota(jnp.int32, (l_pool, l_conv), 1)
    sel = (t == 2 * r).astype(jnp.float32)
    return jnp.dot(sel, z, preferred_element_type=jnp.float32)


def _store_zero_padded(act_ref, pooled):
    """Store pooled activation into a zero-padded (pad=4) bf16 scratch for next conv."""
    l_pool = pooled.shape[0]
    act_ref[...] = jnp.zeros(act_ref.shape, act_ref.dtype)
    act_ref[4:4 + l_pool, :] = pooled.astype(act_ref.dtype)


def _conv9_bn_gelu(act_ref, col_ref, w_ref, scale_ref, shift_ref):
    """Conv1d(k=9, s=1, p=4) as a single im2col matmul + folded BN + exact GELU."""
    l_out = col_ref.shape[0]
    c_in = act_ref.shape[1]
    for k in range(9):                       # build im2col LHS in VMEM (bf16)
        col_ref[:, k * c_in:(k + 1) * c_in] = act_ref[k:k + l_out, :]
    acc = jnp.dot(col_ref[...], w_ref[...], preferred_element_type=jnp.float32)
    return _gelu_exact(acc * scale_ref[...] + shift_ref[...])


# ---------------------------------------------------------------------------
# Fused kernel: whole encoder for one batch element per grid step
# ---------------------------------------------------------------------------
def _encoder_kernel(x1_ref,
                    w1_ref, s1_ref, b1_ref,
                    w2_ref, s2_ref, b2_ref,
                    w3_ref, s3_ref, b3_ref,
                    w4_ref, s4_ref, b4_ref,
                    o_ref,
                    yp1_ref, a1_ref, col2_ref,
                    yp2_ref, a2_ref, col3_ref,
                    yp3_ref, a3_ref, col4_ref,
                    yp4_ref):
    # ---- layer 1: Conv1d(2->64, k=49, s=6, p=24) + BN + GELU + MaxPool ----
    acc = jnp.dot(x1_ref[0], w1_ref[...], preferred_element_type=jnp.float32)
    y = _gelu_exact(acc * s1_ref[...] + b1_ref[...])
    _store_zero_padded(a1_ref, _maxpool9s2p4(y, yp1_ref))
    # (Dropout is identity in inference mode.)

    # ---- layer 2: Conv1d(64->128, k=9, s=1, p=4) + BN + GELU + MaxPool ----
    y = _conv9_bn_gelu(a1_ref, col2_ref, w2_ref, s2_ref, b2_ref)
    _store_zero_padded(a2_ref, _maxpool9s2p4(y, yp2_ref))

    # ---- layer 3: Conv1d(128->256) ----
    y = _conv9_bn_gelu(a2_ref, col3_ref, w3_ref, s3_ref, b3_ref)
    _store_zero_padded(a3_ref, _maxpool9s2p4(y, yp3_ref))

    # ---- layer 4: Conv1d(256->512) + AdaptiveAvgPool1d(1) ----
    y = _conv9_bn_gelu(a3_ref, col4_ref, w4_ref, s4_ref, b4_ref)
    p4 = _maxpool9s2p4(y, yp4_ref)
    o_ref[0, 0] = jnp.mean(p4, axis=0)


# ---------------------------------------------------------------------------
# Model wiring (glue)
# ---------------------------------------------------------------------------
_LAYER_CFGS = [
    # (c_in, c_out, K, stride, pad)
    (2, 64, 49, 6, 24),
    (64, 128, 9, 1, 4),
    (128, 256, 9, 1, 4),
    (256, 512, 9, 1, 4),
]


def init_params(key):
    """Deterministic synthetic parameters (conv weights + folded BN)."""
    params = []
    eps = 1e-5
    for (c_in, c_out, K, _s, _p) in _LAYER_CFGS:
        key, kw, kg, kb, km, kv = jax.random.split(key, 6)
        w = jax.random.normal(kw, (K, c_in, c_out), jnp.float32) / np.sqrt(c_in * K)
        gamma = 1.0 + 0.1 * jax.random.normal(kg, (c_out,), jnp.float32)
        beta = 0.1 * jax.random.normal(kb, (c_out,), jnp.float32)
        r_mean = 0.1 * jax.random.normal(km, (c_out,), jnp.float32)
        r_var = jax.random.uniform(kv, (c_out,), jnp.float32, 0.5, 1.5)
        scale = gamma / jnp.sqrt(r_var + eps)
        shift = beta - r_mean * scale
        params.append((w, scale.reshape(1, c_out), shift.reshape(1, c_out)))
    return params


def epoch_encoder_forward(x_ncw, params):
    """Fused Pallas forward.  x_ncw: (B, 2, L) float32 -> (B, 512) float32."""
    B, ci1, L = x_ncw.shape
    _, c1, K1, st1, pd1 = _LAYER_CFGS[0]
    c2, c3, c4 = (cfg[1] for cfg in _LAYER_CFGS[1:])

    # per-layer conv / pool output lengths (convs 2-4 preserve length)
    lc1 = (L + 2 * pd1 - K1) // st1 + 1
    lp1 = (lc1 - 1) // 2 + 1
    lc2, lp2 = lp1, (lp1 - 1) // 2 + 1
    lc3, lp3 = lp2, (lp2 - 1) // 2 + 1
    lc4 = lp3

    c1p = _round_up(c1, 128)            # lane-pad layer-1 channels 64 -> 128

    (w1, sc1, sh1), (w2, sc2, sh2), (w3, sc3, sh3), (w4, sc4, sh4) = params

    # ---- glue: NCW -> NLC and the layer-1 im2col slab (tiny: B*lc1*98 f32) ----
    x_nlc = jnp.transpose(x_ncw, (0, 2, 1)).astype(jnp.float32)
    xpad = jnp.pad(x_nlc, ((0, 0), (pd1, pd1), (0, 0)))
    win = (jnp.arange(lc1) * st1)[:, None] + jnp.arange(K1)[None, :]
    kdim = K1 * ci1
    kdimp = _round_up(kdim, 128)
    x1col = xpad[:, win, :].reshape(B, lc1, kdim)
    x1col = jnp.pad(x1col, ((0, 0), (0, 0), (0, kdimp - kdim))).astype(jnp.bfloat16)

    # ---- glue: flatten conv taps into the contraction dim, zero-pad, cast bf16 ----
    w1f = jnp.pad(w1.reshape(kdim, c1),
                  ((0, kdimp - kdim), (0, c1p - c1))).astype(jnp.bfloat16)
    s1p = jnp.pad(sc1, ((0, 0), (0, c1p - c1)))     # padded lanes: scale = shift = 0
    b1p = jnp.pad(sh1, ((0, 0), (0, c1p - c1)))
    w2f = jnp.pad(w2, ((0, 0), (0, c1p - c1), (0, 0))
                  ).reshape(9 * c1p, c2).astype(jnp.bfloat16)
    w3f = w3.reshape(9 * c2, c3).astype(jnp.bfloat16)
    w4f = w4.reshape(9 * c3, c4).astype(jnp.bfloat16)

    const = lambda b: (0, 0)
    in_specs = [
        pl.BlockSpec((1, lc1, kdimp), lambda b: (b, 0, 0)),
        pl.BlockSpec(w1f.shape, const), pl.BlockSpec(s1p.shape, const),
        pl.BlockSpec(b1p.shape, const),
        pl.BlockSpec(w2f.shape, const), pl.BlockSpec(sc2.shape, const),
        pl.BlockSpec(sh2.shape, const),
        pl.BlockSpec(w3f.shape, const), pl.BlockSpec(sc3.shape, const),
        pl.BlockSpec(sh3.shape, const),
        pl.BlockSpec(w4f.shape, const), pl.BlockSpec(sc4.shape, const),
        pl.BlockSpec(sh4.shape, const),
    ]
    scratch = [
        pltpu.VMEM((lc1 + 8, c1p), jnp.float32),     # yp1: -1e30-padded conv-1 out
        pltpu.VMEM((lp1 + 8, c1p), jnp.bfloat16),    # a1 : zero-padded pooled act 1
        pltpu.VMEM((lc2, 9 * c1p), jnp.bfloat16),    # col2: im2col LHS for conv-2
        pltpu.VMEM((lc2 + 8, c2), jnp.float32),      # yp2
        pltpu.VMEM((lp2 + 8, c2), jnp.bfloat16),     # a2
        pltpu.VMEM((lc3, 9 * c2), jnp.bfloat16),     # col3
        pltpu.VMEM((lc3 + 8, c3), jnp.float32),      # yp3
        pltpu.VMEM((lp3 + 8, c3), jnp.bfloat16),     # a3
        pltpu.VMEM((lc4, 9 * c3), jnp.bfloat16),     # col4
        pltpu.VMEM((lc4 + 8, c4), jnp.float32),      # yp4
    ]

    out = pl.pallas_call(
        _encoder_kernel,
        out_shape=jax.ShapeDtypeStruct((B, 1, c4), jnp.float32),
        grid=(B,),
        in_specs=in_specs,
        out_specs=pl.BlockSpec((1, 1, c4), lambda b: (b, 0, 0)),
        scratch_shapes=scratch,
        compiler_params=pltpu.CompilerParams(
            dimension_semantics=("parallel",)),      # v7x: one batch elem per TC
    )(x1col, w1f, s1p, b1p, w2f, sc2, sh2, w3f, sc3, sh3, w4f, sc4, sh4)
    return out[:, 0, :]                              # (B, 512)


# ---------------------------------------------------------------------------
# Pure-JAX reference (for numerical verification of the Pallas path)
# ---------------------------------------------------------------------------
def reference_forward(x_ncw, params):
    x = x_ncw.astype(jnp.float32)
    for (c_in, c_out, K, s, p), (w, scale, shift) in zip(_LAYER_CFGS, params):
        w_oik = jnp.transpose(w, (2, 1, 0))               # (C_out, C_in, K)
        x = lax.conv_general_dilated(
            x, w_oik, window_strides=(s,), padding=[(p, p)],
            dimension_numbers=("NCH", "OIH", "NCH"),
            precision=lax.Precision.HIGHEST)
        x = x * scale.reshape(1, c_out, 1) + shift.reshape(1, c_out, 1)
        x = _gelu_exact(x)
        x = lax.reduce_window(x, -jnp.inf, lax.max, (1, 1, 9), (1, 1, 2),
                              [(0, 0), (0, 0), (4, 4)])
    return jnp.mean(x, axis=2)


if __name__ == "__main__":
    key = jax.random.PRNGKey(0)
    kx, kp = jax.random.split(key)

    B, C_in, L = 2, 2, 384                 # NCW, as fed to the PyTorch module
    x = jax.random.normal(kx, (B, C_in, L), jnp.float32)
    params = init_params(kp)

    out = jax.jit(epoch_encoder_forward)(x, params)
    out = jax.block_until_ready(out)
    assert out.shape == (B, 512), out.shape

    ref = reference_forward(x, params)
    # Tolerance accounts for bf16 matmul operands (f32 accumulation) vs f32 reference.
    np.testing.assert_allclose(np.asarray(out), np.asarray(ref),
                               rtol=2e-2, atol=2e-2)
    print("KERNEL_OK")
</pallas_src>

<mosaic_0001>
module attributes {stable_mosaic.version = 11 : i64} {
  func.func @_encoder_kernel(%arg0: i32, %arg1: memref<1x64x128xbf16, #tpu.memory_space<vmem>>, %arg2: memref<128x128xbf16, #tpu.memory_space<vmem>>, %arg3: memref<1x128xf32, #tpu.memory_space<vmem>>, %arg4: memref<1x128xf32, #tpu.memory_space<vmem>>, %arg5: memref<1152x128xbf16, #tpu.memory_space<vmem>>, %arg6: memref<1x128xf32, #tpu.memory_space<vmem>>, %arg7: memref<1x128xf32, #tpu.memory_space<vmem>>, %arg8: memref<1152x256xbf16, #tpu.memory_space<vmem>>, %arg9: memref<1x256xf32, #tpu.memory_space<vmem>>, %arg10: memref<1x256xf32, #tpu.memory_space<vmem>>, %arg11: memref<2304x512xbf16, #tpu.memory_space<vmem>>, %arg12: memref<1x512xf32, #tpu.memory_space<vmem>>, %arg13: memref<1x512xf32, #tpu.memory_space<vmem>>, %arg14: memref<1x1x512xf32, #tpu.memory_space<vmem>>, %arg15: memref<72x128xf32, #tpu.memory_space<vmem>>, %arg16: memref<40x128xbf16, #tpu.memory_space<vmem>>, %arg17: memref<32x1152xbf16, #tpu.memory_space<vmem>>, %arg18: memref<40x128xf32, #tpu.memory_space<vmem>>, %arg19: memref<24x128xbf16, #tpu.memory_space<vmem>>, %arg20: memref<16x1152xbf16, #tpu.memory_space<vmem>>, %arg21: memref<24x256xf32, #tpu.memory_space<vmem>>, %arg22: memref<16x256xbf16, #tpu.memory_space<vmem>>, %arg23: memref<8x2304xbf16, #tpu.memory_space<vmem>>, %arg24: memref<16x512xf32, #tpu.memory_space<vmem>>) attributes {dimension_semantics = [#tpu.dimension_semantics<parallel>], iteration_bounds = array<i64: 2>, scalar_prefetch = 0 : i64, scratch_operands = 10 : i64, tpu.core_type = #tpu.core_type<tc>, window_params = [{transform_indices = @transform_0, window_bounds = array<i64: 1, 64, 128>}, {pipeline_mode = #tpu.pipeline_mode<synchronous>, transform_indices = @transform_1, window_bounds = array<i64: 128, 128>}, {pipeline_mode = #tpu.pipeline_mode<synchronous>, transform_indices = @transform_2, window_bounds = array<i64: 1, 128>}, {pipeline_mode = #tpu.pipeline_mode<synchronous>, transform_indices = @transform_3, window_bounds = array<i64: 1, 128>}, {pipeline_mode = #tpu.pipeline_mode<synchronous>, transform_indices = @transform_4, window_bounds = array<i64: 1152, 128>}, {pipeline_mode = #tpu.pipeline_mode<synchronous>, transform_indices = @transform_5, window_bounds = array<i64: 1, 128>}, {pipeline_mode = #tpu.pipeline_mode<synchronous>, transform_indices = @transform_6, window_bounds = array<i64: 1, 128>}, {pipeline_mode = #tpu.pipeline_mode<synchronous>, transform_indices = @transform_7, window_bounds = array<i64: 1152, 256>}, {pipeline_mode = #tpu.pipeline_mode<synchronous>, transform_indices = @transform_8, window_bounds = array<i64: 1, 256>}, {pipeline_mode = #tpu.pipeline_mode<synchronous>, transform_indices = @transform_9, window_bounds = array<i64: 1, 256>}, {pipeline_mode = #tpu.pipeline_mode<synchronous>, transform_indices = @transform_10, window_bounds = array<i64: 2304, 512>}, {pipeline_mode = #tpu.pipeline_mode<synchronous>, transform_indices = @transform_11, window_bounds = array<i64: 1, 512>}, {pipeline_mode = #tpu.pipeline_mode<synchronous>, transform_indices = @transform_12, window_bounds = array<i64: 1, 512>}, {transform_indices = @transform_13, window_bounds = array<i64: 1, 1, 512>}]} {
    %c0 = arith.constant 0 : index
    %c0_0 = arith.constant 0 : index
    %c0_1 = arith.constant 0 : index
    %0 = vector.load %arg1[%c0, %c0_0, %c0_1] : memref<1x64x128xbf16, #tpu.memory_space<vmem>>, vector<1x64x128xbf16>
    %1 = vector.shape_cast %0 : vector<1x64x128xbf16> to vector<64x128xbf16>
    %c0_2 = arith.constant 0 : index
    %c0_3 = arith.constant 0 : index
    %2 = vector.load %arg2[%c0_2, %c0_3] : memref<128x128xbf16, #tpu.memory_space<vmem>>, vector<128x128xbf16>
    %cst = arith.constant dense<0.000000e+00> : vector<64x128xf32>
    %3 = tpu.matmul %1, %2, %cst {dimension_numbers = #tpu.dot_dimension_numbers<[1], [0], [0], [1], [0, 0, 1, 1], [], []>} : vector<64x128xbf16>, vector<128x128xbf16>, vector<64x128xf32> -> vector<64x128xf32>
    %c0_4 = arith.constant 0 : index
    %c0_5 = arith.constant 0 : index
    %4 = vector.load %arg3[%c0_4, %c0_5] : memref<1x128xf32, #tpu.memory_space<vmem>>, vector<1x128xf32>
    %5 = vector.broadcast %4 : vector<1x128xf32> to vector<64x128xf32>
    %6 = arith.mulf %3, %5 : vector<64x128xf32>
    %c0_6 = arith.constant 0 : index
    %c0_7 = arith.constant 0 : index
    %7 = vector.load %arg4[%c0_6, %c0_7] : memref<1x128xf32, #tpu.memory_space<vmem>>, vector<1x128xf32>
    %8 = vector.broadcast %7 : vector<1x128xf32> to vector<64x128xf32>
    %9 = arith.addf %6, %8 : vector<64x128xf32>
    %cst_8 = arith.constant 5.000000e-01 : f32
    %10 = vector.broadcast %cst_8 : f32 to vector<64x128xf32>
    %11 = arith.mulf %10, %9 : vector<64x128xf32>
    %cst_9 = arith.constant 1.41421354 : f32
    %12 = vector.broadcast %cst_9 : f32 to vector<64x128xf32>
    %13 = arith.divf %9, %12 : vector<64x128xf32>
    %14 = math.erf %13 : vector<64x128xf32>
    %cst_10 = arith.constant 1.000000e+00 : f32
    %15 = vector.broadcast %cst_10 : f32 to vector<64x128xf32>
    %16 = arith.addf %15, %14 : vector<64x128xf32>
    %17 = arith.mulf %11, %16 : vector<64x128xf32>
    %cst_11 = arith.constant -1.000000e+30 : f32
    %18 = vector.broadcast %cst_11 : f32 to vector<72x128xf32>
    %c0_12 = arith.constant 0 : index
    %c0_13 = arith.constant 0 : index
    %19 = vector.load %arg15[%c0_12, %c0_13] : memref<72x128xf32, #tpu.memory_space<vmem>>, vector<72x128xf32>
    tpu.vector_store %arg15[%c0_12, %c0_13], %18 {strides = array<i32>} : memref<72x128xf32, #tpu.memory_space<vmem>>, vector<72x128xf32>,
    %c4 = arith.constant 4 : index
    %c0_14 = arith.constant 0 : index
    %20 = vector.load %arg15[%c4, %c0_14] : memref<72x128xf32, #tpu.memory_space<vmem>>, vector<64x128xf32>
    tpu.vector_store %arg15[%c4, %c0_14], %17 {strides = array<i32>} : memref<72x128xf32, #tpu.memory_space<vmem>>, vector<64x128xf32>,
    %cst_15 = arith.constant -1.000000e+30 : f32
    %21 = vector.broadcast %cst_15 : f32 to vector<64x128xf32>
    %c0_16 = arith.constant 0 : index
    %c0_17 = arith.constant 0 : index
    %22 = vector.load %arg15[%c0_16, %c0_17] : memref<72x128xf32, #tpu.memory_space<vmem>>, vector<64x128xf32>
    %23 = arith.maximumf %21, %22 : vector<64x128xf32>
    %c1 = arith.constant 1 : index
    %c0_18 = arith.constant 0 : index
    %24 = vector.load %arg15[%c1, %c0_18] : memref<72x128xf32, #tpu.memory_space<vmem>>, vector<64x128xf32>
    %25 = arith.maximumf %23, %24 : vector<64x128xf32>
    %c2 = arith.constant 2 : index
    %c0_19 = arith.constant 0 : index
    %26 = vector.load %arg15[%c2, %c0_19] : memref<72x128xf32, #tpu.memory_space<vmem>>, vector<64x128xf32>
    %27 = arith.maximumf %25, %26 : vector<64x128xf32>
    %c3 = arith.constant 3 : index
    %c0_20 = arith.constant 0 : index
    %28 = vector.load %arg15[%c3, %c0_20] : memref<72x128xf32, #tpu.memory_space<vmem>>, vector<64x128xf32>
    %29 = arith.maximumf %27, %28 : vector<64x128xf32>
    %c4_21 = arith.constant 4 : index
    %c0_22 = arith.constant 0 : index
    %30 = vector.load %arg15[%c4_21, %c0_22] : memref<72x128xf32, #tpu.memory_space<vmem>>, vector<64x128xf32>
    %31 = arith.maximumf %29, %30 : vector<64x128xf32>
    %c5 = arith.constant 5 : index
    %c0_23 = arith.constant 0 : index
    %32 = vector.load %arg15[%c5, %c0_23] : memref<72x128xf32, #tpu.memory_space<vmem>>, vector<64x128xf32>
    %33 = arith.maximumf %31, %32 : vector<64x128xf32>
    %c6 = arith.constant 6 : index
    %c0_24 = arith.constant 0 : index
    %34 = vector.load %arg15[%c6, %c0_24] : memref<72x128xf32, #tpu.memory_space<vmem>>, vector<64x128xf32>
    %35 = arith.maximumf %33, %34 : vector<64x128xf32>
    %c7 = arith.constant 7 : index
    %c0_25 = arith.constant 0 : index
    %36 = vector.load %arg15[%c7, %c0_25] : memref<72x128xf32, #tpu.memory_space<vmem>>, vector<64x128xf32>
    %37 = arith.maximumf %35, %36 : vector<64x128xf32>
    %c8 = arith.constant 8 : index
    %c0_26 = arith.constant 0 : index
    %38 = vector.load %arg15[%c8, %c0_26] : memref<72x128xf32, #tpu.memory_space<vmem>>, vector<64x128xf32>
    %39 = arith.maximumf %37, %38 : vector<64x128xf32>
    %40 = tpu.iota {dimensions = array<i32: 0>} : vector<32x64xi32>
    %41 = tpu.iota {dimensions = array<i32: 1>} : vector<32x64xi32>
    %c2_i32 = arith.constant 2 : i32
    %42 = vector.broadcast %c2_i32 : i32 to vector<32x64xi32>
    %43 = arith.muli %42, %40 : vector<32x64xi32>
    %44 = arith.cmpi eq, %41, %43 : vector<32x64xi32>
    %45 = arith.extui %44 : vector<32x64xi1> to vector<32x64xi32>
    %46 = arith.sitofp %45 : vector<32x64xi32> to vector<32x64xf32>
    %cst_27 = arith.constant dense<0.000000e+00> : vector<32x128xf32>
    %47 = tpu.matmul %46, %39, %cst_27 {dimension_numbers = #tpu.dot_dimension_numbers<[1], [0], [0], [1], [0, 0, 1, 1], [], []>} : vector<32x64xf32>, vector<64x128xf32>, vector<32x128xf32> -> vector<32x128xf32>
    %cst_28 = arith.constant 0.000000e+00 : bf16
    %48 = vector.broadcast %cst_28 : bf16 to vector<40x128xbf16>
    %c0_29 = arith.constant 0 : index
    %c0_30 = arith.constant 0 : index
    %49 = vector.load %arg16[%c0_29, %c0_30] : memref<40x128xbf16, #tpu.memory_space<vmem>>, vector<40x128xbf16>
    tpu.vector_store %arg16[%c0_29, %c0_30], %48 {strides = array<i32>} : memref<40x128xbf16, #tpu.memory_space<vmem>>, vector<40x128xbf16>,
    %50 = arith.truncf %47 : vector<32x128xf32> to vector<32x128xbf16>
    %c4_31 = arith.constant 4 : index
    %c0_32 = arith.constant 0 : index
    %51 = vector.load %arg16[%c4_31, %c0_32] : memref<40x128xbf16, #tpu.memory_space<vmem>>, vector<32x128xbf16>
    tpu.vector_store %arg16[%c4_31, %c0_32], %50 {strides = array<i32>} : memref<40x128xbf16, #tpu.memory_space<vmem>>, vector<32x128xbf16>,
    %c0_33 = arith.constant 0 : index
    %c0_34 = arith.constant 0 : index
    %52 = vector.load %arg16[%c0_33, %c0_34] : memref<40x128xbf16, #tpu.memory_space<vmem>>, vector<32x128xbf16>
    %c0_35 = arith.constant 0 : index
    %c0_36 = arith.constant 0 : index
    %53 = vector.load %arg17[%c0_35, %c0_36] : memref<32x1152xbf16, #tpu.memory_space<vmem>>, vector<32x128xbf16>
    tpu.vector_store %arg17[%c0_35, %c0_36], %52 {strides = array<i32>} : memref<32x1152xbf16, #tpu.memory_space<vmem>>, vector<32x128xbf16>,
    %c1_37 = arith.constant 1 : index
    %c0_38 = arith.constant 0 : index
    %54 = vector.load %arg16[%c1_37, %c0_38] : memref<40x128xbf16, #tpu.memory_space<vmem>>, vector<32x128xbf16>
    %c0_39 = arith.constant 0 : index
    %c128 = arith.constant 128 : index
    %55 = vector.load %arg17[%c0_39, %c128] : memref<32x1152xbf16, #tpu.memory_space<vmem>>, vector<32x128xbf16>
    tpu.vector_store %arg17[%c0_39, %c128], %54 {strides = array<i32>} : memref<32x1152xbf16, #tpu.memory_space<vmem>>, vector<32x128xbf16>,
    %c2_40 = arith.constant 2 : index
    %c0_41 = arith.constant 0 : index
    %56 = vector.load %arg16[%c2_40, %c0_41] : memref<40x128xbf16, #tpu.memory_space<vmem>>, vector<32x128xbf16>
    %c0_42 = arith.constant 0 : index
    %c256 = arith.constant 256 : index
    %57 = vector.load %arg17[%c0_42, %c256] : memref<32x1152xbf16, #tpu.memory_space<vmem>>, vector<32x128xbf16>
    tpu.vector_store %arg17[%c0_42, %c256], %56 {strides = array<i32>} : memref<32x1152xbf16, #tpu.memory_space<vmem>>, vector<32x128xbf16>,
    %c3_43 = arith.constant 3 : index
    %c0_44 = arith.constant 0 : index
    %58 = vector.load %arg16[%c3_43, %c0_44] : memref<40x128xbf16, #tpu.memory_space<vmem>>, vector<32x128xbf16>
    %c0_45 = arith.constant 0 : index
    %c384 = arith.constant 384 : index
    %59 = vector.load %arg17[%c0_45, %c384] : memref<32x1152xbf16, #tpu.memory_space<vmem>>, vector<32x128xbf16>
    tpu.vector_store %arg17[%c0_45, %c384], %58 {strides = array<i32>} : memref<32x1152xbf16, #tpu.memory_space<vmem>>, vector<32x128xbf16>,
    %c4_46 = arith.constant 4 : index
    %c0_47 = arith.constant 0 : index
    %60 = vector.load %arg16[%c4_46, %c0_47] : memref<40x128xbf16, #tpu.memory_space<vmem>>, vector<32x128xbf16>
    %c0_48 = arith.constant 0 : index
    %c512 = arith.constant 512 : index
    %61 = vector.load %arg17[%c0_48, %c512] : memref<32x1152xbf16, #tpu.memory_space<vmem>>, vector<32x128xbf16>
    tpu.vector_store %arg17[%c0_48, %c512], %60 {strides = array<i32>} : memref<32x1152xbf16, #tpu.memory_space<vmem>>, vector<32x128xbf16>,
    %c5_49 = arith.constant 5 : index
    %c0_50 = arith.constant 0 : index
    %62 = vector.load %arg16[%c5_49, %c0_50] : memref<40x128xbf16, #tpu.memory_space<vmem>>, vector<32x128xbf16>
    %c0_51 = arith.constant 0 : index
    %c640 = arith.constant 640 : index
    %63 = vector.load %arg17[%c0_51, %c640] : memref<32x1152xbf16, #tpu.memory_space<vmem>>, vector<32x128xbf16>
    tpu.vector_store %arg17[%c0_51, %c640], %62 {strides = array<i32>} : memref<32x1152xbf16, #tpu.memory_space<vmem>>, vector<32x128xbf16>,
    %c6_52 = arith.constant 6 : index
    %c0_53 = arith.constant 0 : index
    %64 = vector.load %arg16[%c6_52, %c0_53] : memref<40x128xbf16, #tpu.memory_space<vmem>>, vector<32x128xbf16>
    %c0_54 = arith.constant 0 : index
    %c768 = arith.constant 768 : index
    %65 = vector.load %arg17[%c0_54, %c768] : memref<32x1152xbf16, #tpu.memory_space<vmem>>, vector<32x128xbf16>
    tpu.vector_store %arg17[%c0_54, %c768], %64 {strides = array<i32>} : memref<32x1152xbf16, #tpu.memory_space<vmem>>, vector<32x128xbf16>,
    %c7_55 = arith.constant 7 : index
    %c0_56 = arith.constant 0 : index
    %66 = vector.load %arg16[%c7_55, %c0_56] : memref<40x128xbf16, #tpu.memory_space<vmem>>, vector<32x128xbf16>
    %c0_57 = arith.constant 0 : index
    %c896 = arith.constant 896 : index
    %67 = vector.load %arg17[%c0_57, %c896] : memref<32x1152xbf16, #tpu.memory_space<vmem>>, vector<32x128xbf16>
    tpu.vector_store %arg17[%c0_57, %c896], %66 {strides = array<i32>} : memref<32x1152xbf16, #tpu.memory_space<vmem>>, vector<32x128xbf16>,
    %c8_58 = arith.constant 8 : index
    %c0_59 = arith.constant 0 : index
    %68 = vector.load %arg16[%c8_58, %c0_59] : memref<40x128xbf16, #tpu.memory_space<vmem>>, vector<32x128xbf16>
    %c0_60 = arith.constant 0 : index
    %c1024 = arith.constant 1024 : index
    %69 = vector.load %arg17[%c0_60, %c1024] : memref<32x1152xbf16, #tpu.memory_space<vmem>>, vector<32x128xbf16>
    tpu.vector_store %arg17[%c0_60, %c1024], %68 {strides = array<i32>} : memref<32x1152xbf16, #tpu.memory_space<vmem>>, vector<32x128xbf16>,
    %c0_61 = arith.constant 0 : index
    %c0_62 = arith.constant 0 : index
    %70 = vector.load %arg17[%c0_61, %c0_62] : memref<32x1152xbf16, #tpu.memory_space<vmem>>, vector<32x1152xbf16>
    %c0_63 = arith.constant 0 : index
    %c0_64 = arith.constant 0 : index
    %71 = vector.load %arg5[%c0_63, %c0_64] : memref<1152x128xbf16, #tpu.memory_space<vmem>>, vector<1152x128xbf16>
    %cst_65 = arith.constant dense<0.000000e+00> : vector<32x128xf32>
    %72 = tpu.matmul %70, %71, %cst_65 {dimension_numbers = #tpu.dot_dimension_numbers<[1], [0], [0], [1], [0, 0, 1, 1], [], []>} : vector<32x1152xbf16>, vector<1152x128xbf16>, vector<32x128xf32> -> vector<32x128xf32>
    %c0_66 = arith.constant 0 : index
    %c0_67 = arith.constant 0 : index
    %73 = vector.load %arg6[%c0_66, %c0_67] : memref<1x128xf32, #tpu.memory_space<vmem>>, vector<1x128xf32>
    %74 = vector.broadcast %73 : vector<1x128xf32> to vector<32x128xf32>
    %75 = arith.mulf %72, %74 : vector<32x128xf32>
    %c0_68 = arith.constant 0 : index
    %c0_69 = arith.constant 0 : index
    %76 = vector.load %arg7[%c0_68, %c0_69] : memref<1x128xf32, #tpu.memory_space<vmem>>, vector<1x128xf32>
    %77 = vector.broadcast %76 : vector<1x128xf32> to vector<32x128xf32>
    %78 = arith.addf %75, %77 : vector<32x128xf32>
    %cst_70 = arith.constant 5.000000e-01 : f32
    %79 = vector.broadcast %cst_70 : f32 to vector<32x128xf32>
    %80 = arith.mulf %79, %78 : vector<32x128xf32>
    %cst_71 = arith.constant 1.41421354 : f32
    %81 = vector.broadcast %cst_71 : f32 to vector<32x128xf32>
    %82 = arith.divf %78, %81 : vector<32x128xf32>
    %83 = math.erf %82 : vector<32x128xf32>
    %cst_72 = arith.constant 1.000000e+00 : f32
    %84 = vector.broadcast %cst_72 : f32 to vector<32x128xf32>
    %85 = arith.addf %84, %83 : vector<32x128xf32>
    %86 = arith.mulf %80, %85 : vector<32x128xf32>
    %cst_73 = arith.constant -1.000000e+30 : f32
    %87 = vector.broadcast %cst_73 : f32 to vector<40x128xf32>
    %c0_74 = arith.constant 0 : index
    %c0_75 = arith.constant 0 : index
    %88 = vector.load %arg18[%c0_74, %c0_75] : memref<40x128xf32, #tpu.memory_space<vmem>>, vector<40x128xf32>
    tpu.vector_store %arg18[%c0_74, %c0_75], %87 {strides = array<i32>} : memref<40x128xf32, #tpu.memory_space<vmem>>, vector<40x128xf32>,
    %c4_76 = arith.constant 4 : index
    %c0_77 = arith.constant 0 : index
    %89 = vector.load %arg18[%c4_76, %c0_77] : memref<40x128xf32, #tpu.memory_space<vmem>>, vector<32x128xf32>
    tpu.vector_store %arg18[%c4_76, %c0_77], %86 {strides = array<i32>} : memref<40x128xf32, #tpu.memory_space<vmem>>, vector<32x128xf32>,
    %cst_78 = arith.constant -1.000000e+30 : f32
    %90 = vector.broadcast %cst_78 : f32 to vector<32x128xf32>
    %c0_79 = arith.constant 0 : index
    %c0_80 = arith.constant 0 : index
    %91 = vector.load %arg18[%c0_79, %c0_80] : memref<40x128xf32, #tpu.memory_space<vmem>>, vector<32x128xf32>
    %92 = arith.maximumf %90, %91 : vector<32x128xf32>
    %c1_81 = arith.constant 1 : index
    %c0_82 = arith.constant 0 : index
    %93 = vector.load %arg18[%c1_81, %c0_82] : memref<40x128xf32, #tpu.memory_space<vmem>>, vector<32x128xf32>
    %94 = arith.maximumf %92, %93 : vector<32x128xf32>
    %c2_83 = arith.constant 2 : index
    %c0_84 = arith.constant 0 : index
    %95 = vector.load %arg18[%c2_83, %c0_84] : memref<40x128xf32, #tpu.memory_space<vmem>>, vector<32x128xf32>
    %96 = arith.maximumf %94, %95 : vector<32x128xf32>
    %c3_85 = arith.constant 3 : index
    %c0_86 = arith.constant 0 : index
    %97 = vector.load %arg18[%c3_85, %c0_86] : memref<40x128xf32, #tpu.memory_space<vmem>>, vector<32x128xf32>
    %98 = arith.maximumf %96, %97 : vector<32x128xf32>
    %c4_87 = arith.constant 4 : index
    %c0_88 = arith.constant 0 : index
    %99 = vector.load %arg18[%c4_87, %c0_88] : memref<40x128xf32, #tpu.memory_space<vmem>>, vector<32x128xf32>
    %100 = arith.maximumf %98, %99 : vector<32x128xf32>
    %c5_89 = arith.constant 5 : index
    %c0_90 = arith.constant 0 : index
    %101 = vector.load %arg18[%c5_89, %c0_90] : memref<40x128xf32, #tpu.memory_space<vmem>>, vector<32x128xf32>
    %102 = arith.maximumf %100, %101 : vector<32x128xf32>
    %c6_91 = arith.constant 6 : index
    %c0_92 = arith.constant 0 : index
    %103 = vector.load %arg18[%c6_91, %c0_92] : memref<40x128xf32, #tpu.memory_space<vmem>>, vector<32x128xf32>
    %104 = arith.maximumf %102, %103 : vector<32x128xf32>
    %c7_93 = arith.constant 7 : index
    %c0_94 = arith.constant 0 : index
    %105 = vector.load %arg18[%c7_93, %c0_94] : memref<40x128xf32, #tpu.memory_space<vmem>>, vector<32x128xf32>
    %106 = arith.maximumf %104, %105 : vector<32x128xf32>
    %c8_95 = arith.constant 8 : index
    %c0_96 = arith.constant 0 : index
    %107 = vector.load %arg18[%c8_95, %c0_96] : memref<40x128xf32, #tpu.memory_space<vmem>>, vector<32x128xf32>
    %108 = arith.maximumf %106, %107 : vector<32x128xf32>
    %109 = tpu.iota {dimensions = array<i32: 0>} : vector<16x32xi32>
    %110 = tpu.iota {dimensions = array<i32: 1>} : vector<16x32xi32>
    %c2_i32_97 = arith.constant 2 : i32
    %111 = vector.broadcast %c2_i32_97 : i32 to vector<16x32xi32>
    %112 = arith.muli %111, %109 : vector<16x32xi32>
    %113 = arith.cmpi eq, %110, %112 : vector<16x32xi32>
    %114 = arith.extui %113 : vector<16x32xi1> to vector<16x32xi32>
    %115 = arith.sitofp %114 : vector<16x32xi32> to vector<16x32xf32>
    %cst_98 = arith.constant dense<0.000000e+00> : vector<16x128xf32>
    %116 = tpu.matmul %115, %108, %cst_98 {dimension_numbers = #tpu.dot_dimension_numbers<[1], [0], [0], [1], [0, 0, 1, 1], [], []>} : vector<16x32xf32>, vector<32x128xf32>, vector<16x128xf32> -> vector<16x128xf32>
    %cst_99 = arith.constant 0.000000e+00 : bf16
    %117 = vector.broadcast %cst_99 : bf16 to vector<24x128xbf16>
    %c0_100 = arith.constant 0 : index
    %c0_101 = arith.constant 0 : index
    %118 = vector.load %arg19[%c0_100, %c0_101] : memref<24x128xbf16, #tpu.memory_space<vmem>>, vector<24x128xbf16>
    tpu.vector_store %arg19[%c0_100, %c0_101], %117 {strides = array<i32>} : memref<24x128xbf16, #tpu.memory_space<vmem>>, vector<24x128xbf16>,
    %119 = arith.truncf %116 : vector<16x128xf32> to vector<16x128xbf16>
    %c4_102 = arith.constant 4 : index
    %c0_103 = arith.constant 0 : index
    %120 = vector.load %arg19[%c4_102, %c0_103] : memref<24x128xbf16, #tpu.memory_space<vmem>>, vector<16x128xbf16>
    tpu.vector_store %arg19[%c4_102, %c0_103], %119 {strides = array<i32>} : memref<24x128xbf16, #tpu.memory_space<vmem>>, vector<16x128xbf16>,
    %c0_104 = arith.constant 0 : index
    %c0_105 = arith.constant 0 : index
    %121 = vector.load %arg19[%c0_104, %c0_105] : memref<24x128xbf16, #tpu.memory_space<vmem>>, vector<16x128xbf16>
    %c0_106 = arith.constant 0 : index
    %c0_107 = arith.constant 0 : index
    %122 = vector.load %arg20[%c0_106, %c0_107] : memref<16x1152xbf16, #tpu.memory_space<vmem>>, vector<16x128xbf16>
    tpu.vector_store %arg20[%c0_106, %c0_107], %121 {strides = array<i32>} : memref<16x1152xbf16, #tpu.memory_space<vmem>>, vector<16x128xbf16>,
    %c1_108 = arith.constant 1 : index
    %c0_109 = arith.constant 0 : index
    %123 = vector.load %arg19[%c1_108, %c0_109] : memref<24x128xbf16, #tpu.memory_space<vmem>>, vector<16x128xbf16>
    %c0_110 = arith.constant 0 : index
    %c128_111 = arith.constant 128 : index
    %124 = vector.load %arg20[%c0_110, %c128_111] : memref<16x1152xbf16, #tpu.memory_space<vmem>>, vector<16x128xbf16>
    tpu.vector_store %arg20[%c0_110, %c128_111], %123 {strides = array<i32>} : memref<16x1152xbf16, #tpu.memory_space<vmem>>, vector<16x128xbf16>,
    %c2_112 = arith.constant 2 : index
    %c0_113 = arith.constant 0 : index
    %125 = vector.load %arg19[%c2_112, %c0_113] : memref<24x128xbf16, #tpu.memory_space<vmem>>, vector<16x128xbf16>
    %c0_114 = arith.constant 0 : index
    %c256_115 = arith.constant 256 : index
    %126 = vector.load %arg20[%c0_114, %c256_115] : memref<16x1152xbf16, #tpu.memory_space<vmem>>, vector<16x128xbf16>
    tpu.vector_store %arg20[%c0_114, %c256_115], %125 {strides = array<i32>} : memref<16x1152xbf16, #tpu.memory_space<vmem>>, vector<16x128xbf16>,
    %c3_116 = arith.constant 3 : index
    %c0_117 = arith.constant 0 : index
    %127 = vector.load %arg19[%c3_116, %c0_117] : memref<24x128xbf16, #tpu.memory_space<vmem>>, vector<16x128xbf16>
    %c0_118 = arith.constant 0 : index
    %c384_119 = arith.constant 384 : index
    %128 = vector.load %arg20[%c0_118, %c384_119] : memref<16x1152xbf16, #tpu.memory_space<vmem>>, vector<16x128xbf16>
    tpu.vector_store %arg20[%c0_118, %c384_119], %127 {strides = array<i32>} : memref<16x1152xbf16, #tpu.memory_space<vmem>>, vector<16x128xbf16>,
    %c4_120 = arith.constant 4 : index
    %c0_121 = arith.constant 0 : index
    %129 = vector.load %arg19[%c4_120, %c0_121] : memref<24x128xbf16, #tpu.memory_space<vmem>>, vector<16x128xbf16>
    %c0_122 = arith.constant 0 : index
    %c512_123 = arith.constant 512 : index
    %130 = vector.load %arg20[%c0_122, %c512_123] : memref<16x1152xbf16, #tpu.memory_space<vmem>>, vector<16x128xbf16>
    tpu.vector_store %arg20[%c0_122, %c512_123], %129 {strides = array<i32>} : memref<16x1152xbf16, #tpu.memory_space<vmem>>, vector<16x128xbf16>,
    %c5_124 = arith.constant 5 : index
    %c0_125 = arith.constant 0 : index
    %131 = vector.load %arg19[%c5_124, %c0_125] : memref<24x128xbf16, #tpu.memory_space<vmem>>, vector<16x128xbf16>
    %c0_126 = arith.constant 0 : index
    %c640_127 = arith.constant 640 : index
    %132 = vector.load %arg20[%c0_126, %c640_127] : memref<16x1152xbf16, #tpu.memory_space<vmem>>, vector<16x128xbf16>
    tpu.vector_store %arg20[%c0_126, %c640_127], %131 {strides = array<i32>} : memref<16x1152xbf16, #tpu.memory_space<vmem>>, vector<16x128xbf16>,
    %c6_128 = arith.constant 6 : index
    %c0_129 = arith.constant 0 : index
    %133 = vector.load %arg19[%c6_128, %c0_129] : memref<24x128xbf16, #tpu.memory_space<vmem>>, vector<16x128xbf16>
    %c0_130 = arith.constant 0 : index
    %c768_131 = arith.constant 768 : index
    %134 = vector.load %arg20[%c0_130, %c768_131] : memref<16x1152xbf16, #tpu.memory_space<vmem>>, vector<16x128xbf16>
    tpu.vector_store %arg20[%c0_130, %c768_131], %133 {strides = array<i32>} : memref<16x1152xbf16, #tpu.memory_space<vmem>>, vector<16x128xbf16>,
    %c7_132 = arith.constant 7 : index
    %c0_133 = arith.constant 0 : index
    %135 = vector.load %arg19[%c7_132, %c0_133] : memref<24x128xbf16, #tpu.memory_space<vmem>>, vector<16x128xbf16>
    %c0_134 = arith.constant 0 : index
    %c896_135 = arith.constant 896 : index
    %136 = vector.load %arg20[%c0_134, %c896_135] : memref<16x1152xbf16, #tpu.memory_space<vmem>>, vector<16x128xbf16>
    tpu.vector_store %arg20[%c0_134, %c896_135], %135 {strides = array<i32>} : memref<16x1152xbf16, #tpu.memory_space<vmem>>, vector<16x128xbf16>,
    %c8_136 = arith.constant 8 : index
    %c0_137 = arith.constant 0 : index
    %137 = vector.load %arg19[%c8_136, %c0_137] : memref<24x128xbf16, #tpu.memory_space<vmem>>, vector<16x128xbf16>
    %c0_138 = arith.constant 0 : index
    %c1024_139 = arith.constant 1024 : index
    %138 = vector.load %arg20[%c0_138, %c1024_139] : memref<16x1152xbf16, #tpu.memory_space<vmem>>, vector<16x128xbf16>
    tpu.vector_store %arg20[%c0_138, %c1024_139], %137 {strides = array<i32>} : memref<16x1152xbf16, #tpu.memory_space<vmem>>, vector<16x128xbf16>,
    %c0_140 = arith.constant 0 : index
    %c0_141 = arith.constant 0 : index
    %139 = vector.load %arg20[%c0_140, %c0_141] : memref<16x1152xbf16, #tpu.memory_space<vmem>>, vector<16x1152xbf16>
    %c0_142 = arith.constant 0 : index
    %c0_143 = arith.constant 0 : index
    %140 = vector.load %arg8[%c0_142, %c0_143] : memref<1152x256xbf16, #tpu.memory_space<vmem>>, vector<1152x256xbf16>
    %cst_144 = arith.constant dense<0.000000e+00> : vector<16x256xf32>
    %141 = tpu.matmul %139, %140, %cst_144 {dimension_numbers = #tpu.dot_dimension_numbers<[1], [0], [0], [1], [0, 0, 1, 1], [], []>} : vector<16x1152xbf16>, vector<1152x256xbf16>, vector<16x256xf32> -> vector<16x256xf32>
    %c0_145 = arith.constant 0 : index
    %c0_146 = arith.constant 0 : index
    %142 = vector.load %arg9[%c0_145, %c0_146] : memref<1x256xf32, #tpu.memory_space<vmem>>, vector<1x256xf32>
    %143 = vector.broadcast %142 : vector<1x256xf32> to vector<16x256xf32>
    %144 = arith.mulf %141, %143 : vector<16x256xf32>
    %c0_147 = arith.constant 0 : index
    %c0_148 = arith.constant 0 : index
    %145 = vector.load %arg10[%c0_147, %c0_148] : memref<1x256xf32, #tpu.memory_space<vmem>>, vector<1x256xf32>
    %146 = vector.broadcast %145 : vector<1x256xf32> to vector<16x256xf32>
    %147 = arith.addf %144, %146 : vector<16x256xf32>
    %cst_149 = arith.constant 5.000000e-01 : f32
    %148 = vector.broadcast %cst_149 : f32 to vector<16x256xf32>
    %149 = arith.mulf %148, %147 : vector<16x256xf32>
    %cst_150 = arith.constant 1.41421354 : f32
    %150 = vector.broadcast %cst_150 : f32 to vector<16x256xf32>
    %151 = arith.divf %147, %150 : vector<16x256xf32>
    %152 = math.erf %151 : vector<16x256xf32>
    %cst_151 = arith.constant 1.000000e+00 : f32
    %153 = vector.broadcast %cst_151 : f32 to vector<16x256xf32>
    %154 = arith.addf %153, %152 : vector<16x256xf32>
    %155 = arith.mulf %149, %154 : vector<16x256xf32>
    %cst_152 = arith.constant -1.000000e+30 : f32
    %156 = vector.broadcast %cst_152 : f32 to vector<24x256xf32>
    %c0_153 = arith.constant 0 : index
    %c0_154 = arith.constant 0 : index
    %157 = vector.load %arg21[%c0_153, %c0_154] : memref<24x256xf32, #tpu.memory_space<vmem>>, vector<24x256xf32>
    tpu.vector_store %arg21[%c0_153, %c0_154], %156 {strides = array<i32>} : memref<24x256xf32, #tpu.memory_space<vmem>>, vector<24x256xf32>,
    %c4_155 = arith.constant 4 : index
    %c0_156 = arith.constant 0 : index
    %158 = vector.load %arg21[%c4_155, %c0_156] : memref<24x256xf32, #tpu.memory_space<vmem>>, vector<16x256xf32>
    tpu.vector_store %arg21[%c4_155, %c0_156], %155 {strides = array<i32>} : memref<24x256xf32, #tpu.memory_space<vmem>>, vector<16x256xf32>,
    %cst_157 = arith.constant -1.000000e+30 : f32
    %159 = vector.broadcast %cst_157 : f32 to vector<16x256xf32>
    %c0_158 = arith.constant 0 : index
    %c0_159 = arith.constant 0 : index
    %160 = vector.load %arg21[%c0_158, %c0_159] : memref<24x256xf32, #tpu.memory_space<vmem>>, vector<16x256xf32>
    %161 = arith.maximumf %159, %160 : vector<16x256xf32>
    %c1_160 = arith.constant 1 : index
    %c0_161 = arith.constant 0 : index
    %162 = vector.load %arg21[%c1_160, %c0_161] : memref<24x256xf32, #tpu.memory_space<vmem>>, vector<16x256xf32>
    %163 = arith.maximumf %161, %162 : vector<16x256xf32>
    %c2_162 = arith.constant 2 : index
    %c0_163 = arith.constant 0 : index
    %164 = vector.load %arg21[%c2_162, %c0_163] : memref<24x256xf32, #tpu.memory_space<vmem>>, vector<16x256xf32>
    %165 = arith.maximumf %163, %164 : vector<16x256xf32>
    %c3_164 = arith.constant 3 : index
    %c0_165 = arith.constant 0 : index
    %166 = vector.load %arg21[%c3_164, %c0_165] : memref<24x256xf32, #tpu.memory_space<vmem>>, vector<16x256xf32>
    %167 = arith.maximumf %165, %166 : vector<16x256xf32>
    %c4_166 = arith.constant 4 : index
    %c0_167 = arith.constant 0 : index
    %168 = vector.load %arg21[%c4_166, %c0_167] : memref<24x256xf32, #tpu.memory_space<vmem>>, vector<16x256xf32>
    %169 = arith.maximumf %167, %168 : vector<16x256xf32>
    %c5_168 = arith.constant 5 : index
    %c0_169 = arith.constant 0 : index
    %170 = vector.load %arg21[%c5_168, %c0_169] : memref<24x256xf32, #tpu.memory_space<vmem>>, vector<16x256xf32>
    %171 = arith.maximumf %169, %170 : vector<16x256xf32>
    %c6_170 = arith.constant 6 : index
    %c0_171 = arith.constant 0 : index
    %172 = vector.load %arg21[%c6_170, %c0_171] : memref<24x256xf32, #tpu.memory_space<vmem>>, vector<16x256xf32>
    %173 = arith.maximumf %171, %172 : vector<16x256xf32>
    %c7_172 = arith.constant 7 : index
    %c0_173 = arith.constant 0 : index
    %174 = vector.load %arg21[%c7_172, %c0_173] : memref<24x256xf32, #tpu.memory_space<vmem>>, vector<16x256xf32>
    %175 = arith.maximumf %173, %174 : vector<16x256xf32>
    %c8_174 = arith.constant 8 : index
    %c0_175 = arith.constant 0 : index
    %176 = vector.load %arg21[%c8_174, %c0_175] : memref<24x256xf32, #tpu.memory_space<vmem>>, vector<16x256xf32>
    %177 = arith.maximumf %175, %176 : vector<16x256xf32>
    %178 = tpu.iota {dimensions = array<i32: 0>} : vector<8x16xi32>
    %179 = tpu.iota {dimensions = array<i32: 1>} : vector<8x16xi32>
    %c2_i32_176 = arith.constant 2 : i32
    %180 = vector.broadcast %c2_i32_176 : i32 to vector<8x16xi32>
    %181 = arith.muli %180, %178 : vector<8x16xi32>
    %182 = arith.cmpi eq, %179, %181 : vector<8x16xi32>
    %183 = arith.extui %182 : vector<8x16xi1> to vector<8x16xi32>
    %184 = arith.sitofp %183 : vector<8x16xi32> to vector<8x16xf32>
    %cst_177 = arith.constant dense<0.000000e+00> : vector<8x256xf32>
    %185 = tpu.matmul %184, %177, %cst_177 {dimension_numbers = #tpu.dot_dimension_numbers<[1], [0], [0], [1], [0, 0, 1, 1], [], []>} : vector<8x16xf32>, vector<16x256xf32>, vector<8x256xf32> -> vector<8x256xf32>
    %cst_178 = arith.constant 0.000000e+00 : bf16
    %186 = vector.broadcast %cst_178 : bf16 to vector<16x256xbf16>
    %c0_179 = arith.constant 0 : index
    %c0_180 = arith.constant 0 : index
    %187 = vector.load %arg22[%c0_179, %c0_180] : memref<16x256xbf16, #tpu.memory_space<vmem>>, vector<16x256xbf16>
    tpu.vector_store %arg22[%c0_179, %c0_180], %186 {strides = array<i32>} : memref<16x256xbf16, #tpu.memory_space<vmem>>, vector<16x256xbf16>,
    %188 = arith.truncf %185 : vector<8x256xf32> to vector<8x256xbf16>
    %c4_181 = arith.constant 4 : index
    %c0_182 = arith.constant 0 : index
    %189 = vector.load %arg22[%c4_181, %c0_182] : memref<16x256xbf16, #tpu.memory_space<vmem>>, vector<8x256xbf16>
    tpu.vector_store %arg22[%c4_181, %c0_182], %188 {strides = array<i32>} : memref<16x256xbf16, #tpu.memory_space<vmem>>, vector<8x256xbf16>,
    %c0_183 = arith.constant 0 : index
    %c0_184 = arith.constant 0 : index
    %190 = vector.load %arg22[%c0_183, %c0_184] : memref<16x256xbf16, #tpu.memory_space<vmem>>, vector<8x256xbf16>
    %c0_185 = arith.constant 0 : index
    %c0_186 = arith.constant 0 : index
    %191 = vector.load %arg23[%c0_185, %c0_186] : memref<8x2304xbf16, #tpu.memory_space<vmem>>, vector<8x256xbf16>
    tpu.vector_store %arg23[%c0_185, %c0_186], %190 {strides = array<i32>} : memref<8x2304xbf16, #tpu.memory_space<vmem>>, vector<8x256xbf16>,
    %c1_187 = arith.constant 1 : index
    %c0_188 = arith.constant 0 : index
    %192 = vector.load %arg22[%c1_187, %c0_188] : memref<16x256xbf16, #tpu.memory_space<vmem>>, vector<8x256xbf16>
    %c0_189 = arith.constant 0 : index
    %c256_190 = arith.constant 256 : index
    %193 = vector.load %arg23[%c0_189, %c256_190] : memref<8x2304xbf16, #tpu.memory_space<vmem>>, vector<8x256xbf16>
    tpu.vector_store %arg23[%c0_189, %c256_190], %192 {strides = array<i32>} : memref<8x2304xbf16, #tpu.memory_space<vmem>>, vector<8x256xbf16>,
    %c2_191 = arith.constant 2 : index
    %c0_192 = arith.constant 0 : index
    %194 = vector.load %arg22[%c2_191, %c0_192] : memref<16x256xbf16, #tpu.memory_space<vmem>>, vector<8x256xbf16>
    %c0_193 = arith.constant 0 : index
    %c512_194 = arith.constant 512 : index
    %195 = vector.load %arg23[%c0_193, %c512_194] : memref<8x2304xbf16, #tpu.memory_space<vmem>>, vector<8x256xbf16>
    tpu.vector_store %arg23[%c0_193, %c512_194], %194 {strides = array<i32>} : memref<8x2304xbf16, #tpu.memory_space<vmem>>, vector<8x256xbf16>,
    %c3_195 = arith.constant 3 : index
    %c0_196 = arith.constant 0 : index
    %196 = vector.load %arg22[%c3_195, %c0_196] : memref<16x256xbf16, #tpu.memory_space<vmem>>, vector<8x256xbf16>
    %c0_197 = arith.constant 0 : index
    %c768_198 = arith.constant 768 : index
    %197 = vector.load %arg23[%c0_197, %c768_198] : memref<8x2304xbf16, #tpu.memory_space<vmem>>, vector<8x256xbf16>
    tpu.vector_store %arg23[%c0_197, %c768_198], %196 {strides = array<i32>} : memref<8x2304xbf16, #tpu.memory_space<vmem>>, vector<8x256xbf16>,
    %c4_199 = arith.constant 4 : index
    %c0_200 = arith.constant 0 : index
    %198 = vector.load %arg22[%c4_199, %c0_200] : memref<16x256xbf16, #tpu.memory_space<vmem>>, vector<8x256xbf16>
    %c0_201 = arith.constant 0 : index
    %c1024_202 = arith.constant 1024 : index
    %199 = vector.load %arg23[%c0_201, %c1024_202] : memref<8x2304xbf16, #tpu.memory_space<vmem>>, vector<8x256xbf16>
    tpu.vector_store %arg23[%c0_201, %c1024_202], %198 {strides = array<i32>} : memref<8x2304xbf16, #tpu.memory_space<vmem>>, vector<8x256xbf16>,
    %c5_203 = arith.constant 5 : index
    %c0_204 = arith.constant 0 : index
    %200 = vector.load %arg22[%c5_203, %c0_204] : memref<16x256xbf16, #tpu.memory_space<vmem>>, vector<8x256xbf16>
    %c0_205 = arith.constant 0 : index
    %c1280 = arith.constant 1280 : index
    %201 = vector.load %arg23[%c0_205, %c1280] : memref<8x2304xbf16, #tpu.memory_space<vmem>>, vector<8x256xbf16>
    tpu.vector_store %arg23[%c0_205, %c1280], %200 {strides = array<i32>} : memref<8x2304xbf16, #tpu.memory_space<vmem>>, vector<8x256xbf16>,
    %c6_206 = arith.constant 6 : index
    %c0_207 = arith.constant 0 : index
    %202 = vector.load %arg22[%c6_206, %c0_207] : memref<16x256xbf16, #tpu.memory_space<vmem>>, vector<8x256xbf16>
    %c0_208 = arith.constant 0 : index
    %c1536 = arith.constant 1536 : index
    %203 = vector.load %arg23[%c0_208, %c1536] : memref<8x2304xbf16, #tpu.memory_space<vmem>>, vector<8x256xbf16>
    tpu.vector_store %arg23[%c0_208, %c1536], %202 {strides = array<i32>} : memref<8x2304xbf16, #tpu.memory_space<vmem>>, vector<8x256xbf16>,
    %c7_209 = arith.constant 7 : index
    %c0_210 = arith.constant 0 : index
    %204 = vector.load %arg22[%c7_209, %c0_210] : memref<16x256xbf16, #tpu.memory_space<vmem>>, vector<8x256xbf16>
    %c0_211 = arith.constant 0 : index
    %c1792 = arith.constant 1792 : index
    %205 = vector.load %arg23[%c0_211, %c1792] : memref<8x2304xbf16, #tpu.memory_space<vmem>>, vector<8x256xbf16>
    tpu.vector_store %arg23[%c0_211, %c1792], %204 {strides = array<i32>} : memref<8x2304xbf16, #tpu.memory_space<vmem>>, vector<8x256xbf16>,
    %c8_212 = arith.constant 8 : index
    %c0_213 = arith.constant 0 : index
    %206 = vector.load %arg22[%c8_212, %c0_213] : memref<16x256xbf16, #tpu.memory_space<vmem>>, vector<8x256xbf16>
    %c0_214 = arith.constant 0 : index
    %c2048 = arith.constant 2048 : index
    %207 = vector.load %arg23[%c0_214, %c2048] : memref<8x2304xbf16, #tpu.memory_space<vmem>>, vector<8x256xbf16>
    tpu.vector_store %arg23[%c0_214, %c2048], %206 {strides = array<i32>} : memref<8x2304xbf16, #tpu.memory_space<vmem>>, vector<8x256xbf16>,
    %c0_215 = arith.constant 0 : index
    %c0_216 = arith.constant 0 : index
    %208 = vector.load %arg23[%c0_215, %c0_216] : memref<8x2304xbf16, #tpu.memory_space<vmem>>, vector<8x2304xbf16>
    %c0_217 = arith.constant 0 : index
    %c0_218 = arith.constant 0 : index
    %209 = vector.load %arg11[%c0_217, %c0_218] : memref<2304x512xbf16, #tpu.memory_space<vmem>>, vector<2304x512xbf16>
    %cst_219 = arith.constant dense<0.000000e+00> : vector<8x512xf32>
    %210 = tpu.matmul %208, %209, %cst_219 {dimension_numbers = #tpu.dot_dimension_numbers<[1], [0], [0], [1], [0, 0, 1, 1], [], []>} : vector<8x2304xbf16>, vector<2304x512xbf16>, vector<8x512xf32> -> vector<8x512xf32>
    %c0_220 = arith.constant 0 : index
    %c0_221 = arith.constant 0 : index
    %211 = vector.load %arg12[%c0_220, %c0_221] : memref<1x512xf32, #tpu.memory_space<vmem>>, vector<1x512xf32>
    %212 = vector.broadcast %211 : vector<1x512xf32> to vector<8x512xf32>
    %213 = arith.mulf %210, %212 : vector<8x512xf32>
    %c0_222 = arith.constant 0 : index
    %c0_223 = arith.constant 0 : index
    %214 = vector.load %arg13[%c0_222, %c0_223] : memref<1x512xf32, #tpu.memory_space<vmem>>, vector<1x512xf32>
    %215 = vector.broadcast %214 : vector<1x512xf32> to vector<8x512xf32>
    %216 = arith.addf %213, %215 : vector<8x512xf32>
    %cst_224 = arith.constant 5.000000e-01 : f32
    %217 = vector.broadcast %cst_224 : f32 to vector<8x512xf32>
    %218 = arith.mulf %217, %216 : vector<8x512xf32>
    %cst_225 = arith.constant 1.41421354 : f32
    %219 = vector.broadcast %cst_225 : f32 to vector<8x512xf32>
    %220 = arith.divf %216, %219 : vector<8x512xf32>
    %221 = math.erf %220 : vector<8x512xf32>
    %cst_226 = arith.constant 1.000000e+00 : f32
    %222 = vector.broadcast %cst_226 : f32 to vector<8x512xf32>
    %223 = arith.addf %222, %221 : vector<8x512xf32>
    %224 = arith.mulf %218, %223 : vector<8x512xf32>
    %cst_227 = arith.constant -1.000000e+30 : f32
    %225 = vector.broadcast %cst_227 : f32 to vector<16x512xf32>
    %c0_228 = arith.constant 0 : index
    %c0_229 = arith.constant 0 : index
    %226 = vector.load %arg24[%c0_228, %c0_229] : memref<16x512xf32, #tpu.memory_space<vmem>>, vector<16x512xf32>
    tpu.vector_store %arg24[%c0_228, %c0_229], %225 {strides = array<i32>} : memref<16x512xf32, #tpu.memory_space<vmem>>, vector<16x512xf32>,
    %c4_230 = arith.constant 4 : index
    %c0_231 = arith.constant 0 : index
    %227 = vector.load %arg24[%c4_230, %c0_231] : memref<16x512xf32, #tpu.memory_space<vmem>>, vector<8x512xf32>
    tpu.vector_store %arg24[%c4_230, %c0_231], %224 {strides = array<i32>} : memref<16x512xf32, #tpu.memory_space<vmem>>, vector<8x512xf32>,
    %cst_232 = arith.constant -1.000000e+30 : f32
    %228 = vector.broadcast %cst_232 : f32 to vector<8x512xf32>
    %c0_233 = arith.constant 0 : index
    %c0_234 = arith.constant 0 : index
    %229 = vector.load %arg24[%c0_233, %c0_234] : memref<16x512xf32, #tpu.memory_space<vmem>>, vector<8x512xf32>
    %230 = arith.maximumf %228, %229 : vector<8x512xf32>
    %c1_235 = arith.constant 1 : index
    %c0_236 = arith.constant 0 : index
    %231 = vector.load %arg24[%c1_235, %c0_236] : memref<16x512xf32, #tpu.memory_space<vmem>>, vector<8x512xf32>
    %232 = arith.maximumf %230, %231 : vector<8x512xf32>
    %c2_237 = arith.constant 2 : index
    %c0_238 = arith.constant 0 : index
    %233 = vector.load %arg24[%c2_237, %c0_238] : memref<16x512xf32, #tpu.memory_space<vmem>>, vector<8x512xf32>
    %234 = arith.maximumf %232, %233 : vector<8x512xf32>
    %c3_239 = arith.constant 3 : index
    %c0_240 = arith.constant 0 : index
    %235 = vector.load %arg24[%c3_239, %c0_240] : memref<16x512xf32, #tpu.memory_space<vmem>>, vector<8x512xf32>
    %236 = arith.maximumf %234, %235 : vector<8x512xf32>
    %c4_241 = arith.constant 4 : index
    %c0_242 = arith.constant 0 : index
    %237 = vector.load %arg24[%c4_241, %c0_242] : memref<16x512xf32, #tpu.memory_space<vmem>>, vector<8x512xf32>
    %238 = arith.maximumf %236, %237 : vector<8x512xf32>
    %c5_243 = arith.constant 5 : index
    %c0_244 = arith.constant 0 : index
    %239 = vector.load %arg24[%c5_243, %c0_244] : memref<16x512xf32, #tpu.memory_space<vmem>>, vector<8x512xf32>
    %240 = arith.maximumf %238, %239 : vector<8x512xf32>
    %c6_245 = arith.constant 6 : index
    %c0_246 = arith.constant 0 : index
    %241 = vector.load %arg24[%c6_245, %c0_246] : memref<16x512xf32, #tpu.memory_space<vmem>>, vector<8x512xf32>
    %242 = arith.maximumf %240, %241 : vector<8x512xf32>
    %c7_247 = arith.constant 7 : index
    %c0_248 = arith.constant 0 : index
    %243 = vector.load %arg24[%c7_247, %c0_248] : memref<16x512xf32, #tpu.memory_space<vmem>>, vector<8x512xf32>
    %244 = arith.maximumf %242, %243 : vector<8x512xf32>
    %c8_249 = arith.constant 8 : index
    %c0_250 = arith.constant 0 : index
    %245 = vector.load %arg24[%c8_249, %c0_250] : memref<16x512xf32, #tpu.memory_space<vmem>>, vector<8x512xf32>
    %246 = arith.maximumf %244, %245 : vector<8x512xf32>
    %247 = tpu.iota {dimensions = array<i32: 0>} : vector<4x8xi32>
    %248 = tpu.iota {dimensions = array<i32: 1>} : vector<4x8xi32>
    %c2_i32_251 = arith.constant 2 : i32
    %249 = vector.broadcast %c2_i32_251 : i32 to vector<4x8xi32>
    %250 = arith.muli %249, %247 : vector<4x8xi32>
    %251 = arith.cmpi eq, %248, %250 : vector<4x8xi32>
    %252 = arith.extui %251 : vector<4x8xi1> to vector<4x8xi32>
    %253 = arith.sitofp %252 : vector<4x8xi32> to vector<4x8xf32>
    %cst_252 = arith.constant dense<0.000000e+00> : vector<4x512xf32>
    %254 = tpu.matmul %253, %246, %cst_252 {dimension_numbers = #tpu.dot_dimension_numbers<[1], [0], [0], [1], [0, 0, 1, 1], [], []>} : vector<4x8xf32>, vector<8x512xf32>, vector<4x512xf32> -> vector<4x512xf32>
    %cst_253 = arith.constant dense<0.000000e+00> : vector<512xf32>
    %255 = vector.multi_reduction <add>, %254, %cst_253 [0] : vector<4x512xf32> to vector<512xf32>
    %cst_254 = arith.constant 4.000000e+00 : f32
    %256 = vector.broadcast %cst_254 : f32 to vector<512xf32>
    %257 = arith.divf %255, %256 : vector<512xf32>
    %c0_255 = arith.constant 0 : index
    %c0_256 = arith.constant 0 : index
    %c0_257 = arith.constant 0 : index
    %258 = vector.load %arg14[%c0_255, %c0_256, %c0_257] : memref<1x1x512xf32, #tpu.memory_space<vmem>>, vector<1x1x512xf32>
    %259 = vector.shape_cast %258 : vector<1x1x512xf32> to vector<512xf32>
    %260 = vector.shape_cast %257 : vector<512xf32> to vector<1x1x512xf32>
    tpu.vector_store %arg14[%c0_255, %c0_256, %c0_257], %260 {strides = array<i32>} : memref<1x1x512xf32, #tpu.memory_space<vmem>>, vector<1x1x512xf32>,
    return
  }
  func.func @transform_0(%arg0: i32) -> (i32, i32, i32) {
    %c0_i32 = arith.constant 0 : i32
    %c0_i32_0 = arith.constant 0 : i32
    %c0_i32_1 = arith.constant 0 : i32
    return %arg0, %c0_i32, %c0_i32_0 : i32, i32, i32
  }
  func.func @transform_1(%arg0: i32) -> (i32, i32) {
    %c0_i32 = arith.constant 0 : i32
    %c0_i32_0 = arith.constant 0 : i32
    %c0_i32_1 = arith.constant 0 : i32
    return %c0_i32, %c0_i32_0 : i32, i32
  }
  func.func @transform_2(%arg0: i32) -> (i32, i32) {
    %c0_i32 = arith.constant 0 : i32
    %c0_i32_0 = arith.constant 0 : i32
    %c0_i32_1 = arith.constant 0 : i32
    return %c0_i32, %c0_i32_0 : i32, i32
  }
  func.func @transform_3(%arg0: i32) -> (i32, i32) {
    %c0_i32 = arith.constant 0 : i32
    %c0_i32_0 = arith.constant 0 : i32
    %c0_i32_1 = arith.constant 0 : i32
    return %c0_i32, %c0_i32_0 : i32, i32
  }
  func.func @transform_4(%arg0: i32) -> (i32, i32) {
    %c0_i32 = arith.constant 0 : i32
    %c0_i32_0 = arith.constant 0 : i32
    %c0_i32_1 = arith.constant 0 : i32
    return %c0_i32, %c0_i32_0 : i32, i32
  }
  func.func @transform_5(%arg0: i32) -> (i32, i32) {
    %c0_i32 = arith.constant 0 : i32
    %c0_i32_0 = arith.constant 0 : i32
    %c0_i32_1 = arith.constant 0 : i32
    return %c0_i32, %c0_i32_0 : i32, i32
  }
  func.func @transform_6(%arg0: i32) -> (i32, i32) {
    %c0_i32 = arith.constant 0 : i32
    %c0_i32_0 = arith.constant 0 : i32
    %c0_i32_1 = arith.constant 0 : i32
    return %c0_i32, %c0_i32_0 : i32, i32
  }
  func.func @transform_7(%arg0: i32) -> (i32, i32) {
    %c0_i32 = arith.constant 0 : i32
    %c0_i32_0 = arith.constant 0 : i32
    %c0_i32_1 = arith.constant 0 : i32
    return %c0_i32, %c0_i32_0 : i32, i32
  }
  func.func @transform_8(%arg0: i32) -> (i32, i32) {
    %c0_i32 = arith.constant 0 : i32
    %c0_i32_0 = arith.constant 0 : i32
    %c0_i32_1 = arith.constant 0 : i32
    return %c0_i32, %c0_i32_0 : i32, i32
  }
  func.func @transform_9(%arg0: i32) -> (i32, i32) {
    %c0_i32 = arith.constant 0 : i32
    %c0_i32_0 = arith.constant 0 : i32
    %c0_i32_1 = arith.constant 0 : i32
    return %c0_i32, %c0_i32_0 : i32, i32
  }
  func.func @transform_10(%arg0: i32) -> (i32, i32) {
    %c0_i32 = arith.constant 0 : i32
    %c0_i32_0 = arith.constant 0 : i32
    %c0_i32_1 = arith.constant 0 : i32
    return %c0_i32, %c0_i32_0 : i32, i32
  }
  func.func @transform_11(%arg0: i32) -> (i32, i32) {
    %c0_i32 = arith.constant 0 : i32
    %c0_i32_0 = arith.constant 0 : i32
    %c0_i32_1 = arith.constant 0 : i32
    return %c0_i32, %c0_i32_0 : i32, i32
  }
  func.func @transform_12(%arg0: i32) -> (i32, i32) {
    %c0_i32 = arith.constant 0 : i32
    %c0_i32_0 = arith.constant 0 : i32
    %c0_i32_1 = arith.constant 0 : i32
    return %c0_i32, %c0_i32_0 : i32, i32
  }
  func.func @transform_13(%arg0: i32) -> (i32, i32, i32) {
    %c0_i32 = arith.constant 0 : i32
    %c0_i32_0 = arith.constant 0 : i32
    %c0_i32_1 = arith.constant 0 : i32
    return %arg0, %c0_i32, %c0_i32_0 : i32, i32, i32
  }
}

</mosaic_0001>

<llo_original>
// kernel: epoch_encoder_forward.1
$region0: #{epoch_encoder_forward.1}
  #allocation0 [shape = 'u32[]', space=smem, size = 0x4, offset = 0x4, fixed_abs, tag = 'smem constant byte address 0x4 - core index']
  #allocation1 [shape = 'u32[144,128]{1,0:T(1,128)}', space=vmem, size = 0x12000, scoped, tag = 'internal scratch']
  #allocation2 [shape = 'f32[72,128]{1,0:T(8,128)}', space=vmem, size = 0x9000, scoped, tag = 'scratch operand']
  #allocation3 [shape = 'bf16[40,128]{1,0:T(8,128)(2,1)}', space=vmem, size = 0x2800, scoped, tag = 'scratch operand']
  #allocation4 [shape = 'bf16[32,1152]{1,0:T(8,128)(2,1)}', space=vmem, size = 0x12000, scoped, tag = 'scratch operand']
  #allocation5 [shape = 'f32[40,128]{1,0:T(8,128)}', space=vmem, size = 0x5000, scoped, tag = 'scratch operand']
  #allocation6 [shape = 'bf16[24,128]{1,0:T(8,128)(2,1)}', space=vmem, size = 0x1800, scoped, tag = 'scratch operand']
  #allocation7 [shape = 'bf16[16,1152]{1,0:T(8,128)(2,1)}', space=vmem, size = 0x9000, scoped, tag = 'scratch operand']
  #allocation8 [shape = 'f32[24,256]{1,0:T(8,128)}', space=vmem, size = 0x6000, scoped, tag = 'scratch operand']
  #allocation9 [shape = 'bf16[16,256]{1,0:T(8,128)(2,1)}', space=vmem, size = 0x2000, scoped, tag = 'scratch operand']
  #allocation10 [shape = 'bf16[8,2304]{1,0:T(8,128)(2,1)}', space=vmem, size = 0x9000, scoped, tag = 'scratch operand']
  #allocation11 [shape = 'f32[16,512]{1,0:T(8,128)}', space=vmem, size = 0x8000, scoped, tag = 'scratch operand']
  %s0 = inlined_call_operand.vmem [shape: bf16[2,64,128], index: 0, kind: input, shape index: {}]
  %s1 = inlined_call_operand.vmem [shape: bf16[128,128], index: 1, kind: input, shape index: {}]
  %s2 = inlined_call_operand.vmem [shape: f32[1,128], index: 2, kind: input, shape index: {}]
  %s3 = inlined_call_operand.vmem [shape: f32[1,128], index: 3, kind: input, shape index: {}]
  %s4 = inlined_call_operand.vmem [shape: bf16[1152,128], index: 4, kind: input, shape index: {}]
  %s5 = inlined_call_operand.vmem [shape: f32[1,128], index: 5, kind: input, shape index: {}]
  %s6 = inlined_call_operand.vmem [shape: f32[1,128], index: 6, kind: input, shape index: {}]
  %s7 = inlined_call_operand.vmem [shape: bf16[1152,256], index: 7, kind: input, shape index: {}]
  %s8 = inlined_call_operand.vmem [shape: f32[1,256], index: 8, kind: input, shape index: {}]
  %s9 = inlined_call_operand.vmem [shape: f32[1,256], index: 9, kind: input, shape index: {}]
  %s10 = inlined_call_operand.vmem [shape: bf16[2304,512], index: 10, kind: input, shape index: {}]
  %s11 = inlined_call_operand.vmem [shape: f32[1,512], index: 11, kind: input, shape index: {}]
  %s12 = inlined_call_operand.vmem [shape: f32[1,512], index: 12, kind: input, shape index: {}]
  %s13 = inlined_call_operand.vmem [shape: f32[2,1,512], index: 13, kind: output, shape index: {}]
  %s14 = sld [smem:[#allocation0]]
  $region85: #{epoch_encoder_forward.1} parent=0
    _
  %s16 = ssub.s32 1, %s14
  %s17 = scalar_select 0, %s16, %s14
  loop: start=0, step=1, limit=4
  $region2: #{epoch_encoder_forward.1} parent=0 // loop_pre_header
    _
  $region3: #{epoch_encoder_forward.1} parent=0 // loop_header
    %s19 = sphi 0, %s23
    %p20 = scmp.ge.s32.totalorder %s19, 4
    %s29 = sphi 0, %s31
    %s32 = sphi 0, %s29
    %s33 = sphi 0, %s32
    %s49 = sphi 0, %s33
    %s53 = sphi 0, %s53
    %s55 = sphi 0, %s53
    %s56 = sphi 0, %s55
    %s70 = sphi 0, %s56
    %s74 = sphi 0, %s74
    %s76 = sphi 0, %s74
    %s77 = sphi 0, %s76
    %s91 = sphi 0, %s77
    %s95 = sphi 0, %s95
    %s97 = sphi 0, %s95
    %s98 = sphi 0, %s97
    %s112 = sphi 0, %s98
    %s116 = sphi 0, %s116
    %s118 = sphi 0, %s116
    %s119 = sphi 0, %s118
    %s133 = sphi 0, %s119
    %s137 = sphi 0, %s137
    %s139 = sphi 0, %s137
    %s140 = sphi 0, %s139
    %s154 = sphi 0, %s140
    %s158 = sphi 0, %s158
    %s160 = sphi 0, %s158
    %s161 = sphi 0, %s160
    %s175 = sphi 0, %s161
    %s179 = sphi 0, %s179
    %s181 = sphi 0, %s179
    %s182 = sphi 0, %s181
    %s196 = sphi 0, %s182
    %s200 = sphi 0, %s200
    %s202 = sphi 0, %s200
    %s203 = sphi 0, %s202
    %s217 = sphi 0, %s203
    %s221 = sphi 0, %s221
    %s223 = sphi 0, %s221
    %s224 = sphi 0, %s223
    %s238 = sphi 0, %s224
    %s242 = sphi 0, %s242
    %s244 = sphi 0, %s242
    %s245 = sphi 0, %s244
    %s259 = sphi 0, %s245
    %s263 = sphi 0, %s263
    %s265 = sphi 0, %s263
    %s266 = sphi 0, %s265
    %s280 = sphi 0, %s266
    %s284 = sphi 0, %s284
    %s286 = sphi 0, %s284
    %s287 = sphi 0, %s286
    %s301 = sphi 0, %s287
    %s307 = sphi 0, %s309
    %s310 = sphi 0, %s307
    %s311 = sphi 0, %s310
    %s327 = sphi 0, %s311
  $region4: #{epoch_encoder_forward.1} parent=0 // loop_header_branch
    %22 = sbr.rel (%p20) target = $region8
  $region5: #{epoch_encoder_forward.1} parent=0 // loop_body
    %s24 = ssub.s32 %s19, 1
    %s25 = ssub.s32 %s19, 2
    %s26 = sadd.s32 %s19, 1
    %s27 = ssub.s32 %s19, %s26
    %p28 = scmp.eq.s32.totalorder %s27, 0
    %s30 = sadd.s32 %s29, 1
    %s31 = scalar_select %p28, %s29, %s30
    %p34 = pneg %p28
    %p35 = scmp.eq.s32.totalorder %s19, 1
    %p36 = por %p34, %p35
    %p37 = scmp.ne.s32.totalorder %s29, %s32
    %p38 = scmp.eq.s32.totalorder %s19, 0
    %p39 = por %p37, %p38
    %p40 = scmp.ne.s32.totalorder %s29, %s32
    %p41 = scmp.eq.s32.totalorder %s24, 1
    %p42 = por %p40, %p41
    %p43 = scmp.ne.s32.totalorder %s32, %s33
    %p44 = scmp.eq.s32.totalorder %s24, 0
    %p45 = por %p43, %p44
    %p46 = scmp.ne.s32.totalorder %s32, %s33
    %p47 = scmp.eq.s32.totalorder %s25, 1
    %p48 = por %p46, %p47
    %p50 = scmp.ne.s32.totalorder %s33, %s49
    %p51 = scmp.eq.s32.totalorder %s25, 0
    %p52 = por %p50, %p51
    %s54 = sadd.s32 %s53, 1
    %p57 = scmp.eq.s32.totalorder %s19, 1
    %p58 = scmp.ne.s32.totalorder %s53, %s55
    %p59 = scmp.eq.s32.totalorder %s19, 0
    %p60 = por %p58, %p59
    %p61 = scmp.ne.s32.totalorder %s53, %s55
    %p62 = scmp.eq.s32.totalorder %s24, 1
    %p63 = por %p61, %p62
    %p64 = scmp.ne.s32.totalorder %s55, %s56
    %p65 = scmp.eq.s32.totalorder %s24, 0
    %p66 = por %p64, %p65
    %p67 = scmp.ne.s32.totalorder %s55, %s56
    %p68 = scmp.eq.s32.totalorder %s25, 1
    %p69 = por %p67, %p68
    %p71 = scmp.ne.s32.totalorder %s56, %s70
    %p72 = scmp.eq.s32.totalorder %s25, 0
    %p73 = por %p71, %p72
    %s75 = sadd.s32 %s74, 1
    %p78 = scmp.eq.s32.totalorder %s19, 1
    %p79 = scmp.ne.s32.totalorder %s74, %s76
    %p80 = scmp.eq.s32.totalorder %s19, 0
    %p81 = por %p79, %p80
    %p82 = scmp.ne.s32.totalorder %s74, %s76
    %p83 = scmp.eq.s32.totalorder %s24, 1
    %p84 = por %p82, %p83
    %p85 = scmp.ne.s32.totalorder %s76, %s77
    %p86 = scmp.eq.s32.totalorder %s24, 0
    %p87 = por %p85, %p86
    %p88 = scmp.ne.s32.totalorder %s76, %s77
    %p89 = scmp.eq.s32.totalorder %s25, 1
    %p90 = por %p88, %p89
    %p92 = scmp.ne.s32.totalorder %s77, %s91
    %p93 = scmp.eq.s32.totalorder %s25, 0
    %p94 = por %p92, %p93
    %s96 = sadd.s32 %s95, 1
    %p99 = scmp.eq.s32.totalorder %s19, 1
    %p100 = scmp.ne.s32.totalorder %s95, %s97
    %p101 = scmp.eq.s32.totalorder %s19, 0
    %p102 = por %p100, %p101
    %p103 = scmp.ne.s32.totalorder %s95, %s97
    %p104 = scmp.eq.s32.totalorder %s24, 1
    %p105 = por %p103, %p104
    %p106 = scmp.ne.s32.totalorder %s97, %s98
    %p107 = scmp.eq.s32.totalorder %s24, 0
    %p108 = por %p106, %p107
    %p109 = scmp.ne.s32.totalorder %s97, %s98
    %p110 = scmp.eq.s32.totalorder %s25, 1
    %p111 = por %p109, %p110
    %p113 = scmp.ne.s32.totalorder %s98, %s112
    %p114 = scmp.eq.s32.totalorder %s25, 0
    %p115 = por %p113, %p114
    %s117 = sadd.s32 %s116, 1
    %p120 = scmp.eq.s32.totalorder %s19, 1
    %p121 = scmp.ne.s32.totalorder %s116, %s118
    %p122 = scmp.eq.s32.totalorder %s19, 0
    %p123 = por %p121, %p122
    %p124 = scmp.ne.s32.totalorder %s116, %s118
    %p125 = scmp.eq.s32.totalorder %s24, 1
    %p126 = por %p124, %p125
    %p127 = scmp.ne.s32.totalorder %s118, %s119
    %p128 = scmp.eq.s32.totalorder %s24, 0
    %p129 = por %p127, %p128
    %p130 = scmp.ne.s32.totalorder %s118, %s119
    %p131 = scmp.eq.s32.totalorder %s25, 1
    %p132 = por %p130, %p131
    %p134 = scmp.ne.s32.totalorder %s119, %s133
    %p135 = scmp.eq.s32.totalorder %s25, 0
    %p136 = por %p134, %p135
    %s138 = sadd.s32 %s137, 1
    %p141 = scmp.eq.s32.totalorder %s19, 1
    %p142 = scmp.ne.s32.totalorder %s137, %s139
    %p143 = scmp.eq.s32.totalorder %s19, 0
    %p144 = por %p142, %p143
    %p145 = scmp.ne.s32.totalorder %s137, %s139
    %p146 = scmp.eq.s32.totalorder %s24, 1
    %p147 = por %p145, %p146
    %p148 = scmp.ne.s32.totalorder %s139, %s140
    %p149 = scmp.eq.s32.totalorder %s24, 0
    %p150 = por %p148, %p149
    %p151 = scmp.ne.s32.totalorder %s139, %s140
    %p152 = scmp.eq.s32.totalorder %s25, 1
    %p153 = por %p151, %p152
    %p155 = scmp.ne.s32.totalorder %s140, %s154
    %p156 = scmp.eq.s32.totalorder %s25, 0
    %p157 = por %p155, %p156
    %s159 = sadd.s32 %s158, 1
    %p162 = scmp.eq.s32.totalorder %s19, 1
    %p163 = scmp.ne.s32.totalorder %s158, %s160
    %p164 = scmp.eq.s32.totalorder %s19, 0
    %p165 = por %p163, %p164
    %p166 = scmp.ne.s32.totalorder %s158, %s160
    %p167 = scmp.eq.s32.totalorder %s24, 1
    %p168 = por %p166, %p167
    %p169 = scmp.ne.s32.totalorder %s160, %s161
    %p170 = scmp.eq.s32.totalorder %s24, 0
    %p171 = por %p169, %p170
    %p172 = scmp.ne.s32.totalorder %s160, %s161
    %p173 = scmp.eq.s32.totalorder %s25, 1
    %p174 = por %p172, %p173
    %p176 = scmp.ne.s32.totalorder %s161, %s175
    %p177 = scmp.eq.s32.totalorder %s25, 0
    %p178 = por %p176, %p177
    %s180 = sadd.s32 %s179, 1
    %p183 = scmp.eq.s32.totalorder %s19, 1
    %p184 = scmp.ne.s32.totalorder %s179, %s181
    %p185 = scmp.eq.s32.totalorder %s19, 0
    %p186 = por %p184, %p185
    %p187 = scmp.ne.s32.totalorder %s179, %s181
    %p188 = scmp.eq.s32.totalorder %s24, 1
    %p189 = por %p187, %p188
    %p190 = scmp.ne.s32.totalorder %s181, %s182
    %p191 = scmp.eq.s32.totalorder %s24, 0
    %p192 = por %p190, %p191
    %p193 = scmp.ne.s32.totalorder %s181, %s182
    %p194 = scmp.eq.s32.totalorder %s25, 1
    %p195 = por %p193, %p194
    %p197 = scmp.ne.s32.totalorder %s182, %s196
    %p198 = scmp.eq.s32.totalorder %s25, 0
    %p199 = por %p197, %p198
    %s201 = sadd.s32 %s200, 1
    %p204 = scmp.eq.s32.totalorder %s19, 1
    %p205 = scmp.ne.s32.totalorder %s200, %s202
    %p206 = scmp.eq.s32.totalorder %s19, 0
    %p207 = por %p205, %p206
    %p208 = scmp.ne.s32.totalorder %s200, %s202
    %p209 = scmp.eq.s32.totalorder %s24, 1
    %p210 = por %p208, %p209
    %p211 = scmp.ne.s32.totalorder %s202, %s203
    %p212 = scmp.eq.s32.totalorder %s24, 0
    %p213 = por %p211, %p212
    %p214 = scmp.ne.s32.totalorder %s202, %s203
    %p215 = scmp.eq.s32.totalorder %s25, 1
    %p216 = por %p214, %p215
    %p218 = scmp.ne.s32.totalorder %s203, %s217
    %p219 = scmp.eq.s32.totalorder %s25, 0
    %p220 = por %p218, %p219
    %s222 = sadd.s32 %s221, 1
    %p225 = scmp.eq.s32.totalorder %s19, 1
    %p226 = scmp.ne.s32.totalorder %s221, %s223
    %p227 = scmp.eq.s32.totalorder %s19, 0
    %p228 = por %p226, %p227
    %p229 = scmp.ne.s32.totalorder %s221, %s223
    %p230 = scmp.eq.s32.totalorder %s24, 1
    %p231 = por %p229, %p230
    %p232 = scmp.ne.s32.totalorder %s223, %s224
    %p233 = scmp.eq.s32.totalorder %s24, 0
    %p234 = por %p232, %p233
    %p235 = scmp.ne.s32.totalorder %s223, %s224
    %p236 = scmp.eq.s32.totalorder %s25, 1
    %p237 = por %p235, %p236
    %p239 = scmp.ne.s32.totalorder %s224, %s238
    %p240 = scmp.eq.s32.totalorder %s25, 0
    %p241 = por %p239, %p240
    %s243 = sadd.s32 %s242, 1
    %p246 = scmp.eq.s32.totalorder %s19, 1
    %p247 = scmp.ne.s32.totalorder %s242, %s244
    %p248 = scmp.eq.s32.totalorder %s19, 0
    %p249 = por %p247, %p248
    %p250 = scmp.ne.s32.totalorder %s242, %s244
    %p251 = scmp.eq.s32.totalorder %s24, 1
    %p252 = por %p250, %p251
    %p253 = scmp.ne.s32.totalorder %s244, %s245
    %p254 = scmp.eq.s32.totalorder %s24, 0
    %p255 = por %p253, %p254
    %p256 = scmp.ne.s32.totalorder %s244, %s245
    %p257 = scmp.eq.s32.totalorder %s25, 1
    %p258 = por %p256, %p257
    %p260 = scmp.ne.s32.totalorder %s245, %s259
    %p261 = scmp.eq.s32.totalorder %s25, 0
    %p262 = por %p260, %p261
    %s264 = sadd.s32 %s263, 1
    %p267 = scmp.eq.s32.totalorder %s19, 1
    %p268 = scmp.ne.s32.totalorder %s263, %s265
    %p269 = scmp.eq.s32.totalorder %s19, 0
    %p270 = por %p268, %p269
    %p271 = scmp.ne.s32.totalorder %s263, %s265
    %p272 = scmp.eq.s32.totalorder %s24, 1
    %p273 = por %p271, %p272
    %p274 = scmp.ne.s32.totalorder %s265, %s266
    %p275 = scmp.eq.s32.totalorder %s24, 0
    %p276 = por %p274, %p275
    %p277 = scmp.ne.s32.totalorder %s265, %s266
    %p278 = scmp.eq.s32.totalorder %s25, 1
    %p279 = por %p277, %p278
    %p281 = scmp.ne.s32.totalorder %s266, %s280
    %p282 = scmp.eq.s32.totalorder %s25, 0
    %p283 = por %p281, %p282
    %s285 = sadd.s32 %s284, 1
    %p288 = scmp.eq.s32.totalorder %s19, 1
    %p289 = scmp.ne.s32.totalorder %s284, %s286
    %p290 = scmp.eq.s32.totalorder %s19, 0
    %p291 = por %p289, %p290
    %p292 = scmp.ne.s32.totalorder %s284, %s286
    %p293 = scmp.eq.s32.totalorder %s24, 1
    %p294 = por %p292, %p293
    %p295 = scmp.ne.s32.totalorder %s286, %s287
    %p296 = scmp.eq.s32.totalorder %s24, 0
    %p297 = por %p295, %p296
    %p298 = scmp.ne.s32.totalorder %s286, %s287
    %p299 = scmp.eq.s32.totalorder %s25, 1
    %p300 = por %p298, %p299
    %p302 = scmp.ne.s32.totalorder %s287, %s301
    %p303 = scmp.eq.s32.totalorder %s25, 0
    %p304 = por %p302, %p303
    %s305 = ssub.s32 %s19, %s26
    %p306 = scmp.eq.s32.totalorder %s305, 0
    %s308 = sadd.s32 %s307, 1
    %s309 = scalar_select %p306, %s307, %s308
    %p312 = pneg %p306
    %p313 = scmp.eq.s32.totalorder %s19, 1
    %p314 = por %p312, %p313
    %p315 = scmp.ne.s32.totalorder %s307, %s310
    %p316 = scmp.eq.s32.totalorder %s19, 0
    %p317 = por %p315, %p316
    %p318 = scmp.ne.s32.totalorder %s307, %s310
    %p319 = scmp.eq.s32.totalorder %s24, 1
    %p320 = por %p318, %p319
    %p321 = scmp.ne.s32.totalorder %s310, %s311
    %p322 = scmp.eq.s32.totalorder %s24, 0
    %p323 = por %p321, %p322
    %p324 = scmp.ne.s32.totalorder %s310, %s311
    %p325 = scmp.eq.s32.totalorder %s25, 1
    %p326 = por %p324, %p325
    %p328 = scmp.ne.s32.totalorder %s311, %s327
    %p329 = scmp.eq.s32.totalorder %s25, 0
    %p330 = por %p328, %p329
    %p331 = scmp.le.s32.totalorder 1, %s19
    %p332 = scmp.lt.s32.totalorder %s19, 3
    %p333 = pnand %p331, %p332
    %p334 = pneg %p333
    // Predicated region
    $region9: #{epoch_encoder_forward.1} parent=5 // pred_check
      _
    $region10: #{epoch_encoder_forward.1} parent=5 // pred_check_branch
      %336 = sbr.rel (%p333) target = $region12
    $region11: #{epoch_encoder_forward.1} parent=5 // pred_region
      %s337 = ssub.s32 %s19, 1
      // Predicated region
      $region13: #{epoch_encoder_forward.1} parent=11 // pred_check
        %p338 = pneg %p66
      $region14: #{epoch_encoder_forward.1} parent=11 // pred_check_branch
        %340 = sbr.rel (%p338) target = $region16
      $region15: #{epoch_encoder_forward.1} parent=11 // pred_region
        _
      $region16: #{epoch_encoder_forward.1} parent=11 // pred_fallthru
        _
      // Predicated region
      $region17: #{epoch_encoder_forward.1} parent=11 // pred_check
        %p341 = pneg %p87
      $region18: #{epoch_encoder_forward.1} parent=11 // pred_check_branch
        %343 = sbr.rel (%p341) target = $region20
      $region19: #{epoch_encoder_forward.1} parent=11 // pred_region
        _
      $region20: #{epoch_encoder_forward.1} parent=11 // pred_fallthru
        _
      // Predicated region
      $region21: #{epoch_encoder_forward.1} parent=11 // pred_check
        %p344 = pneg %p108
      $region22: #{epoch_encoder_forward.1} parent=11 // pred_check_branch
        %346 = sbr.rel (%p344) target = $region24
      $region23: #{epoch_encoder_forward.1} parent=11 // pred_region
        _
      $region24: #{epoch_encoder_forward.1} parent=11 // pred_fallthru
        _
      // Predicated region
      $region25: #{epoch_encoder_forward.1} parent=11 // pred_check
        %p347 = pneg %p129
      $region26: #{epoch_encoder_forward.1} parent=11 // pred_check_branch
        %349 = sbr.rel (%p347) target = $region28
      $region27: #{epoch_encoder_forward.1} parent=11 // pred_region
        _
      $region28: #{epoch_encoder_forward.1} parent=11 // pred_fallthru
        _
      // Predicated region
      $region29: #{epoch_encoder_forward.1} parent=11 // pred_check
        %p350 = pneg %p150
      $region30: #{epoch_encoder_forward.1} parent=11 // pred_check_branch
        %352 = sbr.rel (%p350) target = $region32
      $region31: #{epoch_encoder_forward.1} parent=11 // pred_region
        _
      $region32: #{epoch_encoder_forward.1} parent=11 // pred_fallthru
        _
      // Predicated region
      $region33: #{epoch_encoder_forward.1} parent=11 // pred_check
        %p353 = pneg %p171
      $region34: #{epoch_encoder_forward.1} parent=11 // pred_check_branch
        %355 = sbr.rel (%p353) target = $region36
      $region35: #{epoch_encoder_forward.1} parent=11 // pred_region
        _
      $region36: #{epoch_encoder_forward.1} parent=11 // pred_fallthru
        _
      // Predicated region
      $region37: #{epoch_encoder_forward.1} parent=11 // pred_check
        %p356 = pneg %p192
      $region38: #{epoch_encoder_forward.1} parent=11 // pred_check_branch
        %358 = sbr.rel (%p356) target = $region40
      $region39: #{epoch_encoder_forward.1} parent=11 // pred_region
        _
      $region40: #{epoch_encoder_forward.1} parent=11 // pred_fallthru
        _
      // Predicated region
      $region41: #{epoch_encoder_forward.1} parent=11 // pred_check
        %p359 = pneg %p213
      $region42: #{epoch_encoder_forward.1} parent=11 // pred_check_branch
        %361 = sbr.rel (%p359) target = $region44
      $region43: #{epoch_encoder_forward.1} parent=11 // pred_region
        _
      $region44: #{epoch_encoder_forward.1} parent=11 // pred_fallthru
        _
      // Predicated region
      $region45: #{epoch_encoder_forward.1} parent=11 // pred_check
        %p362 = pneg %p234
      $region46: #{epoch_encoder_forward.1} parent=11 // pred_check_branch
        %364 = sbr.rel (%p362) target = $region48
      $region47: #{epoch_encoder_forward.1} parent=11 // pred_region
        _
      $region48: #{epoch_encoder_forward.1} parent=11 // pred_fallthru
        _
      // Predicated region
      $region49: #{epoch_encoder_forward.1} parent=11 // pred_check
        %p365 = pneg %p255
      $region50: #{epoch_encoder_forward.1} parent=11 // pred_check_branch
        %367 = sbr.rel (%p365) target = $region52
      $region51: #{epoch_encoder_forward.1} parent=11 // pred_region
        _
      $region52: #{epoch_encoder_forward.1} parent=11 // pred_fallthru
        _
      // Predicated region
      $region53: #{epoch_encoder_forward.1} parent=11 // pred_check
        %p368 = pneg %p276
      $region54: #{epoch_encoder_forward.1} parent=11 // pred_check_branch
        %370 = sbr.rel (%p368) target = $region56
      $region55: #{epoch_encoder_forward.1} parent=11 // pred_region
        _
      $region56: #{epoch_encoder_forward.1} parent=11 // pred_fallthru
        _
      // Predicated region
      $region57: #{epoch_encoder_forward.1} parent=11 // pred_check
        %p371 = pneg %p297
      $region58: #{epoch_encoder_forward.1} parent=11 // pred_check_branch
        %373 = sbr.rel (%p371) target = $region60
      $region59: #{epoch_encoder_forward.1} parent=11 // pred_region
        _
      $region60: #{epoch_encoder_forward.1} parent=11 // pred_fallthru
        _
    $region12: #{epoch_encoder_forward.1} parent=5 // pred_fallthru
      _
    %p374 = scmp.lt.s32.totalorder %s19, 2
    // Predicated region
    $region61: #{epoch_encoder_forward.1} parent=5 // pred_check
      %p375 = pneg %p374
    $region62: #{epoch_encoder_forward.1} parent=5 // pred_check_branch
      %377 = sbr.rel (%p375) target = $region64
    $region63: #{epoch_encoder_forward.1} parent=5 // pred_region
      // Predicated region
      $region65: #{epoch_encoder_forward.1} parent=63 // pred_check
        %p378 = pneg %p39
      $region66: #{epoch_encoder_forward.1} parent=63 // pred_check_branch
        %380 = sbr.rel (%p378) target = $region68
      $region67: #{epoch_encoder_forward.1} parent=63 // pred_region
        %p381 = scmp.lt.s32.totalorder %s19, 1
        %s382 = scalar_select %p381, %s19, 1
        %s383 = smul.addr %s382, 8
        %s384 = smul.addr %s383, 4
        %s385 = scalar_lea.vmem %s0, %s384
      $region68: #{epoch_encoder_forward.1} parent=63 // pred_fallthru
        _
    $region64: #{epoch_encoder_forward.1} parent=5 // pred_fallthru
      _
    %p386 = scmp.le.s32.totalorder 1, %s19
    %p387 = scmp.lt.s32.totalorder %s19, 3
    %p388 = pnand %p386, %p387
    %p389 = pneg %p388
    // Predicated region
    $region69: #{epoch_encoder_forward.1} parent=5 // pred_check
      _
    $region70: #{epoch_encoder_forward.1} parent=5 // pred_check_branch
      %391 = sbr.rel (%p388) target = $region72
    $region71: #{epoch_encoder_forward.1} parent=5 // pred_region
      %s392 = ssub.s32 %s19, 1
      %p393 = scmp.lt.s32.totalorder %s24, 1
      %s394 = scalar_select %p393, %s24, 1
      %s395 = smul.addr %s394, 8
      %s396 = smul.addr %s395, 4
      %s397 = scalar_lea.vmem %s0, %s396
      %p398 = pneg %p45
      %p399 = pneg %p42
      %p400 = pneg %p66
      %p401 = pneg %p63
      %p402 = pneg %p87
      %p403 = pneg %p84
      %p404 = pneg %p108
      %p405 = pneg %p105
      %p406 = pneg %p129
      %p407 = pneg %p126
      %p408 = pneg %p150
      %p409 = pneg %p147
      %p410 = pneg %p171
      %p411 = pneg %p168
      %p412 = pneg %p192
      %p413 = pneg %p189
      %p414 = pneg %p213
      %p415 = pneg %p210
      %p416 = pneg %p234
      %p417 = pneg %p231
      %p418 = pneg %p255
      %p419 = pneg %p252
      %p420 = pneg %p276
      %p421 = pneg %p273
      %p422 = pneg %p297
      %p423 = pneg %p294
      %p424 = pneg %p323
      %p425 = pneg %p320
      %p426 = scmp.lt.s32.totalorder %s24, 1
      %s427 = scalar_select %p426, %s24, 1
      %s428 = smul.addr %s427, 4
      %s429 = scalar_lea.vmem %s13, %s428
      %p430 = scmp.lt.s32.totalorder %s24, 1
      %s431 = scalar_select %p430, %s24, 1
      %s432 = smul.addr %s431, 8
      %s433 = smul.addr %s432, 4
      %s434 = scalar_lea.vmem %s0, %s433
      %p435 = scmp.lt.s32.totalorder %s24, 1
      %s436 = scalar_select %p435, %s24, 1
      %s437 = smul.addr %s436, 4
      %s438 = scalar_lea.vmem %s13, %s437
      %v440 = vld [vmem:[%s434] sm:$0xf]
      %v441 = vld [vmem:[%s434 + $0x4] sm:$0xf]
      %v442 = vld [vmem:[%s434 + $0x8] sm:$0xf]
      %v443 = vld [vmem:[%s434 + $0xc] sm:$0xf]
      %v444 = vld [vmem:[%s434 + $0x10] sm:$0xf]
      %v445 = vld [vmem:[%s434 + $0x14] sm:$0xf]
      %v446 = vld [vmem:[%s434 + $0x18] sm:$0xf]
      %v447 = vld [vmem:[%s434 + $0x1c] sm:$0xf]
      %v448 = vld [vmem:[%s1] sm:$0xf]
      %v449 = vld [vmem:[%s1 + $0x4] sm:$0xf]
      %v450 = vld [vmem:[%s1 + $0x8] sm:$0xf]
      %v451 = vld [vmem:[%s1 + $0xc] sm:$0xf]
      %v452 = vld [vmem:[%s1 + $0x10] sm:$0xf]
      %v453 = vld [vmem:[%s1 + $0x14] sm:$0xf]
      %v454 = vld [vmem:[%s1 + $0x18] sm:$0xf]
      %v455 = vld [vmem:[%s1 + $0x1c] sm:$0xf]
      %v456 = vld [vmem:[%s1 + $0x20] sm:$0xf]
      %v457 = vld [vmem:[%s1 + $0x24] sm:$0xf]
      %v458 = vld [vmem:[%s1 + $0x28] sm:$0xf]
      %v459 = vld [vmem:[%s1 + $0x2c] sm:$0xf]
      %v460 = vld [vmem:[%s1 + $0x30] sm:$0xf]
      %v461 = vld [vmem:[%s1 + $0x34] sm:$0xf]
      %v462 = vld [vmem:[%s1 + $0x38] sm:$0xf]
      %v463 = vld [vmem:[%s1 + $0x3c] sm:$0xf]
      %v472 = vunpack.c.l.b16 %v440
      %v473 = vunpack.c.l.b16 %v441
      %v474 = vunpack.c.l.b16 %v442
      %v475 = vunpack.c.l.b16 %v443
      %v476 = vunpack.c.l.b16 %v444
      %v477 = vunpack.c.l.b16 %v445
      %v478 = vunpack.c.l.b16 %v446
      %v479 = vunpack.c.l.b16 %v447
      %v480 = vpack.c.b16 %v473, %v472
      %v481 = vpack.c.b16 %v475, %v474
      %v482 = vpack.c.b16 %v477, %v476
      %v483 = vpack.c.b16 %v479, %v478
      %v504 = vunpack.c.l.b16 %v448
      %v505 = vunpack.c.l.b16 %v449
      %v506 = vunpack.c.l.b16 %v450
      %v507 = vunpack.c.l.b16 %v451
      %v508 = vunpack.c.l.b16 %v452
      %v509 = vunpack.c.l.b16 %v453
      %v510 = vunpack.c.l.b16 %v454
      %v511 = vunpack.c.l.b16 %v455
      %v512 = vunpack.c.l.b16 %v456
      %v513 = vunpack.c.l.b16 %v457
      %v514 = vunpack.c.l.b16 %v458
      %v515 = vunpack.c.l.b16 %v459
      %v516 = vunpack.c.l.b16 %v460
      %v517 = vunpack.c.l.b16 %v461
      %v518 = vunpack.c.l.b16 %v462
      %v519 = vunpack.c.l.b16 %v463
      %v520 = vpack.c.b16 %v505, %v504
      %v521 = vpack.c.b16 %v507, %v506
      %v522 = vpack.c.b16 %v509, %v508
      %v523 = vpack.c.b16 %v511, %v510
      %v524 = vpack.c.b16 %v513, %v512
      %v525 = vpack.c.b16 %v515, %v514
      %v526 = vpack.c.b16 %v517, %v516
      %v527 = vpack.c.b16 %v519, %v518
      %536 = vmatprep.subr.bf16.mxu0 0
      %537 = vmatpush1.bf16.msra.mxu0 %v527
      %538 = vmatprep.subr.bf16.mxu0 0
      %539 = vmatpush1.bf16.msra.mxu0 %v526
      %540 = vmatprep.subr.bf16.mxu0 0
      %541 = vmatpush1.bf16.msra.mxu0 %v525
      %542 = vmatprep.subr.bf16.mxu0 0
      %543 = vmatpush1.bf16.msra.mxu0 %v524
      %544 = vmatprep.subr.bf16.mxu0 0
      %545 = vmatpush1.bf16.msra.mxu0 %v523
      %546 = vmatprep.subr.bf16.mxu0 0
      %547 = vmatpush1.bf16.msra.mxu0 %v522
      %548 = vmatprep.subr.bf16.mxu0 0
      %549 = vmatpush1.bf16.msra.mxu0 %v521
      %550 = vmatprep.subr.bf16.mxu0 0
      %551 = vmatpush1.bf16.msra.mxu0 %v520
      %552 = vmatprep.subr.bf16.mxu0 0
      %553 = vmatpush2.bf16.msra.mxu0 0
      %554 = vmatprep.subr.bf16.mxu0 0
      %555 = vmatpush2.bf16.msra.mxu0 0
      %556 = vmatprep.subr.bf16.mxu0 0
      %557 = vmatpush2.bf16.msra.mxu0 0
      %558 = vmatprep.subr.bf16.mxu0 0
      %559 = vmatpush2.bf16.msra.mxu0 0
      %560 = vmatprep.subr.bf16.mxu0 0
      %561 = vmatpush2.bf16.msra.mxu0 0
      %562 = vmatprep.subr.bf16.mxu0 0
      %563 = vmatpush2.bf16.msra.mxu0 0
      %564 = vmatprep.subr.bf16.mxu0 0
      %565 = vmatpush2.bf16.msra.mxu0 0
      %566 = vmatprep.subr.bf16.mxu0 0
      %567 = vmatpush2.bf16.msra.mxu0 0
      %568 = vmatprep.mubr.bf16.mxu0 0
      %569 = vmatmul.mubr.bf16.gmra.mxu0 %v480
      %v570 = vpop.f32.mrf.mxu0
      %v571 = vadd.f32 0.0, %v570
      %v572 = vpop.f32.mrf.mxu0
      %v573 = vpop.f32.mrf.mxu0
      %v574 = vadd.f32 0.0, %v573
      %v575 = vpop.f32.mrf.mxu0
      %576 = vmatprep.mubr.bf16.mxu0 0
      %577 = vmatmul.mubr.bf16.gmra.mxu0 %v481
      %v578 = vpop.f32.mrf.mxu0
      %v579 = vadd.f32 0.0, %v578
      %v580 = vpop.f32.mrf.mxu0
      %v581 = vpop.f32.mrf.mxu0
      %v582 = vadd.f32 0.0, %v581
      %v583 = vpop.f32.mrf.mxu0
      %584 = vmatprep.mubr.bf16.mxu0 0
      %585 = vmatmul.mubr.bf16.gmra.mxu0 %v482
      %v586 = vpop.f32.mrf.mxu0
      %v587 = vadd.f32 0.0, %v586
      %v588 = vpop.f32.mrf.mxu0
      %v589 = vpop.f32.mrf.mxu0
      %v590 = vadd.f32 0.0, %v589
      %v591 = vpop.f32.mrf.mxu0
      %592 = vmatprep.mubr.bf16.mxu0 0
      %593 = vmatmul.mubr.bf16.gmra.mxu0 %v483
      %v594 = vpop.f32.mrf.mxu0
      %v595 = vadd.f32 0.0, %v594
      %v596 = vpop.f32.mrf.mxu0
      %v597 = vpop.f32.mrf.mxu0
      %v598 = vadd.f32 0.0, %v597
      %v599 = vpop.f32.mrf.mxu0
      %600 = vdwg.mxu0
      %v601 = vld [vmem:[%s2] sm:$0x1]
      %v603 = vlaneseq
      %v604 = vshrl.u32 %v603, 7
      %v605 = vsub.s32 0, %v604
      %v606 = vrot.slane %v601, %v605
      %v608 = vmul.f32 %v571, %v606
      %v609 = vmul.f32 %v574, %v606
      %v610 = vmul.f32 %v579, %v606
      %v611 = vmul.f32 %v582, %v606
      %v612 = vmul.f32 %v587, %v606
      %v613 = vmul.f32 %v590, %v606
      %v614 = vmul.f32 %v595, %v606
      %v615 = vmul.f32 %v598, %v606
      %v616 = vld [vmem:[%s3] sm:$0x1]
      %v618 = vlaneseq
      %v619 = vshrl.u32 %v618, 7
      %v620 = vsub.s32 0, %v619
      %v621 = vrot.slane %v616, %v620
      %v623 = vadd.f32 %v608, %v621
      %v624 = vadd.f32 %v609, %v621
      %v625 = vadd.f32 %v610, %v621
      %v626 = vadd.f32 %v611, %v621
      %v627 = vadd.f32 %v612, %v621
      %v628 = vadd.f32 %v613, %v621
      %v629 = vadd.f32 %v614, %v621
      %v630 = vadd.f32 %v615, %v621
      %v631 = vmul.f32 %v623, 0.5
      %v632 = vmul.f32 %v624, 0.5
      %v633 = vmul.f32 %v625, 0.5
      %v634 = vmul.f32 %v626, 0.5
      %v635 = vmul.f32 %v627, 0.5
      %v636 = vmul.f32 %v628, 0.5
      %v637 = vmul.f32 %v629, 0.5
      %v638 = vmul.f32 %v630, 0.5
      %v639 = vrcp.pop 1.4142135
      %v640 = vmul.f32 %v623, %v639
      %v641 = vmul.f32 %v624, %v639
      %v642 = vmul.f32 %v625, %v639
      %v643 = vmul.f32 %v626, %v639
      %v644 = vmul.f32 %v627, %v639
      %v645 = vmul.f32 %v628, %v639
      %v646 = vmul.f32 %v629, %v639
      %v647 = vmul.f32 %v630, %v639
      %v648 = verf.f32.pop %v640
      %v649 = verf.f32.pop %v641
      %v650 = verf.f32.pop %v642
      %v651 = verf.f32.pop %v643
      %v652 = verf.f32.pop %v644
      %v653 = verf.f32.pop %v645
      %v654 = verf.f32.pop %v646
      %v655 = verf.f32.pop %v647
      %v656 = vadd.f32 %v648, 1.0
      %v657 = vadd.f32 %v649, 1.0
      %v658 = vadd.f32 %v650, 1.0
      %v659 = vadd.f32 %v651, 1.0
      %v660 = vadd.f32 %v652, 1.0
      %v661 = vadd.f32 %v653, 1.0
      %v662 = vadd.f32 %v654, 1.0
      %v663 = vadd.f32 %v655, 1.0
      %v664 = vmul.f32 %v631, %v656
      %v665 = vmul.f32 %v632, %v657
      %v666 = vmul.f32 %v633, %v658
      %v667 = vmul.f32 %v634, %v659
      %v668 = vmul.f32 %v635, %v660
      %v669 = vmul.f32 %v636, %v661
      %v670 = vmul.f32 %v637, %v662
      %v671 = vmul.f32 %v638, %v663
      %672 = vst [vmem:[#allocation2] sm:$0xff] -1e+30
      %673 = vst [vmem:[#allocation2 + $0x8] sm:$0xff] -1e+30
      %674 = vst [vmem:[#allocation2 + $0x10] sm:$0xff] -1e+30
      %675 = vst [vmem:[#allocation2 + $0x18] sm:$0xff] -1e+30
      %676 = vst [vmem:[#allocation2 + $0x20] sm:$0xff] -1e+30
      %677 = vst [vmem:[#allocation2 + $0x28] sm:$0xff] -1e+30
      %678 = vst [vmem:[#allocation2 + $0x30] sm:$0xff] -1e+30
      %679 = vst [vmem:[#allocation2 + $0x38] sm:$0xff] -1e+30
      %680 = vst [vmem:[#allocation2 + $0x40] sm:$0xff] -1e+30
      %681 = vst [vmem:[#allocation2 + $0x4] sm:$0xff] %v664
      %682 = vst [vmem:[#allocation2 + $0xc] sm:$0xff] %v665
      %683 = vst [vmem:[#allocation2 + $0x14] sm:$0xff] %v666
      %684 = vst [vmem:[#allocation2 + $0x1c] sm:$0xff] %v667
      %685 = vst [vmem:[#allocation2 + $0x24] sm:$0xff] %v668
      %686 = vst [vmem:[#allocation2 + $0x2c] sm:$0xff] %v669
      %687 = vst [vmem:[#allocation2 + $0x34] sm:$0xff] %v670
      %688 = vst [vmem:[#allocation2 + $0x3c] sm:$0xff] %v671
      %v689 = vld [vmem:[#allocation2] sm:$0xff]
      %v690 = vld [vmem:[#allocation2 + $0x8] sm:$0xff]
      %v691 = vld [vmem:[#allocation2 + $0x10] sm:$0xff]
      %v692 = vld [vmem:[#allocation2 + $0x18] sm:$0xff]
      %v693 = vld [vmem:[#allocation2 + $0x20] sm:$0xff]
      %v694 = vld [vmem:[#allocation2 + $0x28] sm:$0xff]
      %v695 = vld [vmem:[#allocation2 + $0x30] sm:$0xff]
      %v696 = vld [vmem:[#allocation2 + $0x38] sm:$0xff]
      %v697 = vmax.f32 %v689, -1e+30
      %v698 = vmax.f32 %v690, -1e+30
      %v699 = vmax.f32 %v691, -1e+30
      %v700 = vmax.f32 %v692, -1e+30
      %v701 = vmax.f32 %v693, -1e+30
      %v702 = vmax.f32 %v694, -1e+30
      %v703 = vmax.f32 %v695, -1e+30
      %v704 = vmax.f32 %v696, -1e+30
      %v705 = vld [vmem:[#allocation2 + $0x1] sm:$0xff]
      %v706 = vld [vmem:[#allocation2 + $0x9] sm:$0xff]
      %v707 = vld [vmem:[#allocation2 + $0x11] sm:$0xff]
      %v708 = vld [vmem:[#allocation2 + $0x19] sm:$0xff]
      %v709 = vld [vmem:[#allocation2 + $0x21] sm:$0xff]
      %v710 = vld [vmem:[#allocation2 + $0x29] sm:$0xff]
      %v711 = vld [vmem:[#allocation2 + $0x31] sm:$0xff]
      %v712 = vld [vmem:[#allocation2 + $0x39] sm:$0xff]
      %v713 = vmax.f32 %v697, %v705
      %v714 = vmax.f32 %v698, %v706
      %v715 = vmax.f32 %v699, %v707
      %v716 = vmax.f32 %v700, %v708
      %v717 = vmax.f32 %v701, %v709
      %v718 = vmax.f32 %v702, %v710
      %v719 = vmax.f32 %v703, %v711
      %v720 = vmax.f32 %v704, %v712
      %v721 = vld [vmem:[#allocation2 + $0x2] sm:$0xff]
      %v722 = vld [vmem:[#allocation2 + $0xa] sm:$0xff]
      %v723 = vld [vmem:[#allocation2 + $0x12] sm:$0xff]
      %v724 = vld [vmem:[#allocation2 + $0x1a] sm:$0xff]
      %v725 = vld [vmem:[#allocation2 + $0x22] sm:$0xff]
      %v726 = vld [vmem:[#allocation2 + $0x2a] sm:$0xff]
      %v727 = vld [vmem:[#allocation2 + $0x32] sm:$0xff]
      %v728 = vld [vmem:[#allocation2 + $0x3a] sm:$0xff]
      %v729 = vmax.f32 %v713, %v721
      %v730 = vmax.f32 %v714, %v722
      %v731 = vmax.f32 %v715, %v723
      %v732 = vmax.f32 %v716, %v724
      %v733 = vmax.f32 %v717, %v725
      %v734 = vmax.f32 %v718, %v726
      %v735 = vmax.f32 %v719, %v727
      %v736 = vmax.f32 %v720, %v728
      %v737 = vld [vmem:[#allocation2 + $0x3] sm:$0xff]
      %v738 = vld [vmem:[#allocation2 + $0xb] sm:$0xff]
      %v739 = vld [vmem:[#allocation2 + $0x13] sm:$0xff]
      %v740 = vld [vmem:[#allocation2 + $0x1b] sm:$0xff]
      %v741 = vld [vmem:[#allocation2 + $0x23] sm:$0xff]
      %v742 = vld [vmem:[#allocation2 + $0x2b] sm:$0xff]
      %v743 = vld [vmem:[#allocation2 + $0x33] sm:$0xff]
      %v744 = vld [vmem:[#allocation2 + $0x3b] sm:$0xff]
      %v745 = vmax.f32 %v729, %v737
      %v746 = vmax.f32 %v730, %v738
      %v747 = vmax.f32 %v731, %v739
      %v748 = vmax.f32 %v732, %v740
      %v749 = vmax.f32 %v733, %v741
      %v750 = vmax.f32 %v734, %v742
      %v751 = vmax.f32 %v735, %v743
      %v752 = vmax.f32 %v736, %v744
      %v753 = vld [vmem:[#allocation2 + $0x4] sm:$0xff]
      %v754 = vld [vmem:[#allocation2 + $0xc] sm:$0xff]
      %v755 = vld [vmem:[#allocation2 + $0x14] sm:$0xff]
      %v756 = vld [vmem:[#allocation2 + $0x1c] sm:$0xff]
      %v757 = vld [vmem:[#allocation2 + $0x24] sm:$0xff]
      %v758 = vld [vmem:[#allocation2 + $0x2c] sm:$0xff]
      %v759 = vld [vmem:[#allocation2 + $0x34] sm:$0xff]
      %v760 = vld [vmem:[#allocation2 + $0x3c] sm:$0xff]
      %v761 = vmax.f32 %v745, %v753
      %v762 = vmax.f32 %v746, %v754
      %v763 = vmax.f32 %v747, %v755
      %v764 = vmax.f32 %v748, %v756
      %v765 = vmax.f32 %v749, %v757
      %v766 = vmax.f32 %v750, %v758
      %v767 = vmax.f32 %v751, %v759
      %v768 = vmax.f32 %v752, %v760
      %v769 = vld [vmem:[#allocation2 + $0x5] sm:$0xff]
      %v770 = vld [vmem:[#allocation2 + $0xd] sm:$0xff]
      %v771 = vld [vmem:[#allocation2 + $0x15] sm:$0xff]
      %v772 = vld [vmem:[#allocation2 + $0x1d] sm:$0xff]
      %v773 = vld [vmem:[#allocation2 + $0x25] sm:$0xff]
      %v774 = vld [vmem:[#allocation2 + $0x2d] sm:$0xff]
      %v775 = vld [vmem:[#allocation2 + $0x35] sm:$0xff]
      %v776 = vld [vmem:[#allocation2 + $0x3d] sm:$0xff]
      %v777 = vmax.f32 %v761, %v769
      %v778 = vmax.f32 %v762, %v770
      %v779 = vmax.f32 %v763, %v771
      %v780 = vmax.f32 %v764, %v772
      %v781 = vmax.f32 %v765, %v773
      %v782 = vmax.f32 %v766, %v774
      %v783 = vmax.f32 %v767, %v775
      %v784 = vmax.f32 %v768, %v776
      %v785 = vld [vmem:[#allocation2 + $0x6] sm:$0xff]
      %v786 = vld [vmem:[#allocation2 + $0xe] sm:$0xff]
      %v787 = vld [vmem:[#allocation2 + $0x16] sm:$0xff]
      %v788 = vld [vmem:[#allocation2 + $0x1e] sm:$0xff]
      %v789 = vld [vmem:[#allocation2 + $0x26] sm:$0xff]
      %v790 = vld [vmem:[#allocation2 + $0x2e] sm:$0xff]
      %v791 = vld [vmem:[#allocation2 + $0x36] sm:$0xff]
      %v792 = vld [vmem:[#allocation2 + $0x3e] sm:$0xff]
      %v793 = vmax.f32 %v777, %v785
      %v794 = vmax.f32 %v778, %v786
      %v795 = vmax.f32 %v779, %v787
      %v796 = vmax.f32 %v780, %v788
      %v797 = vmax.f32 %v781, %v789
      %v798 = vmax.f32 %v782, %v790
      %v799 = vmax.f32 %v783, %v791
      %v800 = vmax.f32 %v784, %v792
      %v801 = vld [vmem:[#allocation2 + $0x7] sm:$0xff]
      %v802 = vld [vmem:[#allocation2 + $0xf] sm:$0xff]
      %v803 = vld [vmem:[#allocation2 + $0x17] sm:$0xff]
      %v804 = vld [vmem:[#allocation2 + $0x1f] sm:$0xff]
      %v805 = vld [vmem:[#allocation2 + $0x27] sm:$0xff]
      %v806 = vld [vmem:[#allocation2 + $0x2f] sm:$0xff]
      %v807 = vld [vmem:[#allocation2 + $0x37] sm:$0xff]
      %v808 = vld [vmem:[#allocation2 + $0x3f] sm:$0xff]
      %v809 = vmax.f32 %v793, %v801
      %v810 = vmax.f32 %v794, %v802
      %v811 = vmax.f32 %v795, %v803
      %v812 = vmax.f32 %v796, %v804
      %v813 = vmax.f32 %v797, %v805
      %v814 = vmax.f32 %v798, %v806
      %v815 = vmax.f32 %v799, %v807
      %v816 = vmax.f32 %v800, %v808
      %v817 = vld [vmem:[#allocation2 + $0x8] sm:$0xff]
      %v818 = vld [vmem:[#allocation2 + $0x10] sm:$0xff]
      %v819 = vld [vmem:[#allocation2 + $0x18] sm:$0xff]
      %v820 = vld [vmem:[#allocation2 + $0x20] sm:$0xff]
      %v821 = vld [vmem:[#allocation2 + $0x28] sm:$0xff]
      %v822 = vld [vmem:[#allocation2 + $0x30] sm:$0xff]
      %v823 = vld [vmem:[#allocation2 + $0x38] sm:$0xff]
      %v824 = vld [vmem:[#allocation2 + $0x40] sm:$0xff]
      %v825 = vmax.f32 %v809, %v817
      %v826 = vmax.f32 %v810, %v818
      %v827 = vmax.f32 %v811, %v819
      %v828 = vmax.f32 %v812, %v820
      %v829 = vmax.f32 %v813, %v821
      %v830 = vmax.f32 %v814, %v822
      %v831 = vmax.f32 %v815, %v823
      %v832 = vmax.f32 %v816, %v824
      %v833 = vlaneseq
      %v834 = vshrl.u32 %v833, 7
      %v835 = vadd.s32 %v834, 8
      %v836 = vadd.s32 %v834, 16
      %v837 = vadd.s32 %v834, 24
      %v838 = vlaneseq
      %v839 = vand.u32 %v838, 127
      %v840 = vmul.u32 %v834, 2
      %v841 = vmul.u32 %v835, 2
      %v842 = vmul.u32 %v836, 2
      %v843 = vmul.u32 %v837, 2
      %vm844 = vcmp.eq.s32.totalorder %v839, %v840
      %vm845 = vcmp.eq.s32.totalorder %v839, %v841
      %vm846 = vcmp.eq.s32.totalorder %v839, %v842
      %vm847 = vcmp.eq.s32.totalorder %v839, %v843
      %v848 = vsel %vm844, 1, 0
      %v849 = vsel %vm845, 1, 0
      %v850 = vsel %vm846, 1, 0
      %v851 = vsel %vm847, 1, 0
      %v852 = vcvt.s32.f32 %v848
      %v853 = vcvt.s32.f32 %v849
      %v854 = vcvt.s32.f32 %v850
      %v855 = vcvt.s32.f32 %v851
      %vm856 = vcmask 523264
      %v858 = vsel %vm856, %v852, 0
      %v861 = vsel %vm856, %v853, 0
      %v864 = vsel %vm856, %v854, 0
      %v867 = vsel %vm856, %v855, 0
      %869 = vmatprep.subr.mxu0 0.0
      %870 = vmatpush1.msra.mxu0 0.0
      %871 = vmatprep.subr.mxu0 0.0
      %872 = vmatpush1.msra.mxu0 0.0
      %873 = vmatprep.subr.mxu0 0.0
      %874 = vmatpush1.msra.mxu0 0.0
      %875 = vmatprep.subr.mxu0 0.0
      %876 = vmatpush1.msra.mxu0 0.0
      %877 = vmatprep.subr.mxu0 0.0
      %878 = vmatpush1.msra.mxu0 0.0
      %879 = vmatprep.subr.mxu0 0.0
      %880 = vmatpush1.msra.mxu0 0.0
      %881 = vmatprep.subr.mxu0 0.0
      %882 = vmatpush1.msra.mxu0 0.0
      %883 = vmatprep.subr.mxu0 0.0
      %884 = vmatpush1.msra.mxu0 0.0
      %885 = vmatprep.subr.mxu0 0.0
      %886 = vmatpush1.msra.mxu0 %v832
      %887 = vmatprep.subr.mxu0 0.0
      %888 = vmatpush1.msra.mxu0 %v831
      %889 = vmatprep.subr.mxu0 0.0
      %890 = vmatpush1.msra.mxu0 %v830
      %891 = vmatprep.subr.mxu0 0.0
      %892 = vmatpush1.msra.mxu0 %v829
      %893 = vmatprep.subr.mxu0 0.0
      %894 = vmatpush1.msra.mxu0 %v828
      %895 = vmatprep.subr.mxu0 0.0
      %896 = vmatpush1.msra.mxu0 %v827
      %897 = vmatprep.subr.mxu0 0.0
      %898 = vmatpush1.msra.mxu0 %v826
      %899 = vmatprep.subr.mxu0 0.0
      %900 = vmatpush1.msra.mxu0 %v825
      %901 = vmatprep.subr.mxu0 0.0
      %902 = vmatpush2.msra.mxu0 0.0
      %903 = vmatprep.subr.mxu0 0.0
      %904 = vmatpush2.msra.mxu0 0.0
      %905 = vmatprep.subr.mxu0 0.0
      %906 = vmatpush2.msra.mxu0 0.0
      %907 = vmatprep.subr.mxu0 0.0
      %908 = vmatpush2.msra.mxu0 0.0
      %909 = vmatprep.subr.mxu0 0.0
      %910 = vmatpush2.msra.mxu0 0.0
      %911 = vmatprep.subr.mxu0 0.0
      %912 = vmatpush2.msra.mxu0 0.0
      %913 = vmatprep.subr.mxu0 0.0
      %914 = vmatpush2.msra.mxu0 0.0
      %915 = vmatprep.subr.mxu0 0.0
      %916 = vmatpush2.msra.mxu0 0.0
      %917 = vmatprep.subr.mxu0 0.0
      %918 = vmatpush2.msra.mxu0 0.0
      %919 = vmatprep.subr.mxu0 0.0
      %920 = vmatpush2.msra.mxu0 0.0
      %921 = vmatprep.subr.mxu0 0.0
      %922 = vmatpush2.msra.mxu0 0.0
      %923 = vmatprep.subr.mxu0 0.0
      %924 = vmatpush2.msra.mxu0 0.0
      %925 = vmatprep.subr.mxu0 0.0
      %926 = vmatpush2.msra.mxu0 0.0
      %927 = vmatprep.subr.mxu0 0.0
      %928 = vmatpush2.msra.mxu0 0.0
      %929 = vmatprep.subr.mxu0 0.0
      %930 = vmatpush2.msra.mxu0 0.0
      %931 = vmatprep.subr.mxu0 0.0
      %932 = vmatpush2.msra.mxu0 0.0
      %933 = vmatprep.mubr.f32.mxu0 0.0
      %934 = vmatmul.mubr.f32.gmra.mxu0 %v858
      %v935 = vpop.f32.mrf.mxu0
      %v936 = vadd.f32 0.0, %v935
      %v937 = vpop.f32.mrf.mxu0
      %938 = vmatprep.mubr.f32.mxu0 0.0
      %939 = vmatmul.mubr.f32.gmra.mxu0 %v861
      %v940 = vpop.f32.mrf.mxu0
      %v941 = vadd.f32 0.0, %v940
      %v942 = vpop.f32.mrf.mxu0
      %943 = vmatprep.mubr.f32.mxu0 0.0
      %944 = vmatmul.mubr.f32.gmra.mxu0 %v864
      %v945 = vpop.f32.mrf.mxu0
      %v946 = vadd.f32 0.0, %v945
      %v947 = vpop.f32.mrf.mxu0
      %948 = vmatprep.mubr.f32.mxu0 0.0
      %949 = vmatmul.mubr.f32.gmra.mxu0 %v867
      %v950 = vpop.f32.mrf.mxu0
      %v951 = vadd.f32 0.0, %v950
      %v952 = vpop.f32.mrf.mxu0
      %953 = vdwg.mxu0
      %954 = vst [vmem:[#allocation3] sm:$0xf] 0
      %955 = vst [vmem:[#allocation3 + $0x4] sm:$0xf] 0
      %956 = vst [vmem:[#allocation3 + $0x8] sm:$0xf] 0
      %957 = vst [vmem:[#allocation3 + $0xc] sm:$0xf] 0
      %958 = vst [vmem:[#allocation3 + $0x10] sm:$0xf] 0
      %v959 = vpack.c.bf16 %v941, %v936
      %v960 = vpack.c.bf16 %v951, %v946
      %v963 = vunpack.c.l.b16 %v959
      %v964 = vunpack.c.h.b16 %v959
      %v965 = vunpack.c.l.b16 %v960
      %v966 = vunpack.c.h.b16 %v960
      %v967 = vpack.c.b16 %v963, %v963
      %v968 = vpack.c.b16 %v964, %v964
      %v969 = vpack.c.b16 %v965, %v965
      %v970 = vpack.c.b16 %v966, %v966
      %vm971 = vcmask 1041408
      %vm972 = vcmask 1045508
      %vm973 = vmor %vm971, %vm972
      %v974 = vrot.slane %v967, 6
      %v975 = vrot.slane %v974, 4
      %v976 = vrot.slane %v968, 6
      %v977 = vsel %vm973, %v975, %v976
      %v978 = vrot.slane %v976, 4
      %v979 = vrot.slane %v969, 6
      %v980 = vsel %vm973, %v978, %v979
      %v981 = vrot.slane %v979, 4
      %v982 = vrot.slane %v970, 6
      %v983 = vsel %vm973, %v981, %v982
      %v984 = vrot.slane %v982, 4
      %990 = vst [vmem:[#allocation3] sm:$0xc] %v974
      %991 = vst [vmem:[#allocation3 + $0x4] sm:$0xf] %v977
      %992 = vst [vmem:[#allocation3 + $0x8] sm:$0xf] %v980
      %993 = vst [vmem:[#allocation3 + $0xc] sm:$0xf] %v983
      %994 = vst [vmem:[#allocation3 + $0x10] sm:$0x3] %v984
      %v995 = vld [vmem:[#allocation3] sm:$0xf]
      %v996 = vld [vmem:[#allocation3 + $0x4] sm:$0xf]
      %v997 = vld [vmem:[#allocation3 + $0x8] sm:$0xf]
      %v998 = vld [vmem:[#allocation3 + $0xc] sm:$0xf]
      %999 = vst [vmem:[#allocation4] sm:$0xf] %v995
      %1000 = vst [vmem:[#allocation4 + $0x24] sm:$0xf] %v996
      %1001 = vst [vmem:[#allocation4 + $0x48] sm:$0xf] %v997
      %1002 = vst [vmem:[#allocation4 + $0x6c] sm:$0xf] %v998
      %v1003 = vld [vmem:[#allocation3] sm:$0xf]
      %v1004 = vld [vmem:[#allocation3 + $0x4] sm:$0xf]
      %v1005 = vld [vmem:[#allocation3 + $0x8] sm:$0xf]
      %v1006 = vld [vmem:[#allocation3 + $0xc] sm:$0xf]
      %v1007 = vld [vmem:[#allocation3 + $0x10] sm:$0x1]
      %vm1008 = vsmask.f32 3328
      %vm1009 = vsmask.f32 7440
      %vm1010 = vmor %vm1008, %vm1009
      %v1012 = vshrl.u32 %v1003, 16
      %v1014 = vrot.slane %v1012, 4
      %v1015 = vshll.u32 %v1003, 16
      %v1017 = vrot.slane %v1015, 5
      %v1018 = vor.u32 %v1014, %v1017
      %v1019 = vrot.slane %v1018, 4
      %v1021 = vshll.u32 %v1004, 16
      %v1023 = vrot.slane %v1021, 5
      %v1024 = vsel %vm1010, %v1019, %v1023
      %v1025 = vshrl.u32 %v1004, 16
      %v1027 = vrot.slane %v1025, 4
      %v1028 = vor.u32 %v1027, %v1023
      %v1029 = vrot.slane %v1028, 4
      %v1031 = vshll.u32 %v1005, 16
      %v1033 = vrot.slane %v1031, 5
      %v1034 = vsel %vm1010, %v1029, %v1033
      %v1035 = vshrl.u32 %v1005, 16
      %v1037 = vrot.slane %v1035, 4
      %v1038 = vor.u32 %v1037, %v1033
      %v1039 = vrot.slane %v1038, 4
      %v1041 = vshll.u32 %v1006, 16
      %v1043 = vrot.slane %v1041, 5
      %v1044 = vsel %vm1010, %v1039, %v1043
      %v1045 = vshrl.u32 %v1006, 16
      %v1047 = vrot.slane %v1045, 4
      %v1048 = vor.u32 %v1047, %v1043
      %v1049 = vrot.slane %v1048, 4
      %v1051 = vshll.u32 %v1007, 16
      %v1053 = vrot.slane %v1051, 5
      %v1054 = vsel %vm1010, %v1049, %v1053
      %1059 = vst [vmem:[#allocation4 + $0x4] sm:$0xf] %v1024
      %1060 = vst [vmem:[#allocation4 + $0x28] sm:$0xf] %v1034
      %1061 = vst [vmem:[#allocation4 + $0x4c] sm:$0xf] %v1044
      %1062 = vst [vmem:[#allocation4 + $0x70] sm:$0xf] %v1054
      %v1063 = vld [vmem:[#allocation3] sm:$0xe]
      %v1064 = vld [vmem:[#allocation3 + $0x4] sm:$0xf]
      %v1065 = vld [vmem:[#allocation3 + $0x8] sm:$0xf]
      %v1066 = vld [vmem:[#allocation3 + $0xc] sm:$0xf]
      %v1067 = vld [vmem:[#allocation3 + $0x10] sm:$0x1]
      %vm1073 = vcmask 1042432
      %vm1074 = vcmask 1046532
      %vm1075 = vmor %vm1073, %vm1074
      %v1076 = vrot.slane %v1063, 5
      %v1077 = vrot.slane %v1076, 4
      %v1078 = vrot.slane %v1064, 5
      %v1079 = vsel %vm1075, %v1077, %v1078
      %v1080 = vrot.slane %v1078, 4
      %v1081 = vrot.slane %v1065, 5
      %v1082 = vsel %vm1075, %v1080, %v1081
      %v1083 = vrot.slane %v1081, 4
      %v1084 = vrot.slane %v1066, 5
      %v1085 = vsel %vm1075, %v1083, %v1084
      %v1086 = vrot.slane %v1084, 4
      %v1087 = vrot.slane %v1067, 5
      %v1088 = vsel %vm1075, %v1086, %v1087
      %1093 = vst [vmem:[#allocation4 + $0x8] sm:$0xf] %v1079
      %1094 = vst [vmem:[#allocation4 + $0x2c] sm:$0xf] %v1082
      %1095 = vst [vmem:[#allocation4 + $0x50] sm:$0xf] %v1085
      %1096 = vst [vmem:[#allocation4 + $0x74] sm:$0xf] %v1088
      %v1097 = vld [vmem:[#allocation3] sm:$0xe]
      %v1098 = vld [vmem:[#allocation3 + $0x4] sm:$0xf]
      %v1099 = vld [vmem:[#allocation3 + $0x8] sm:$0xf]
      %v1100 = vld [vmem:[#allocation3 + $0xc] sm:$0xf]
      %v1101 = vld [vmem:[#allocation3 + $0x10] sm:$0x3]
      %vm1102 = vsmask.f32 2304
      %vm1103 = vsmask.f32 6416
      %vm1104 = vmor %vm1102, %vm1103
      %v1106 = vshrl.u32 %v1097, 16
      %v1108 = vrot.slane %v1106, 5
      %v1109 = vshll.u32 %v1097, 16
      %v1111 = vrot.slane %v1109, 6
      %v1112 = vor.u32 %v1108, %v1111
      %v1113 = vrot.slane %v1112, 4
      %v1115 = vshrl.u32 %v1098, 16
      %v1117 = vrot.slane %v1115, 5
      %v1118 = vshll.u32 %v1098, 16
      %v1120 = vrot.slane %v1118, 6
      %v1121 = vor.u32 %v1117, %v1120
      %v1122 = vsel %vm1104, %v1113, %v1121
      %v1123 = vrot.slane %v1121, 4
      %v1125 = vshrl.u32 %v1099, 16
      %v1127 = vrot.slane %v1125, 5
      %v1128 = vshll.u32 %v1099, 16
      %v1130 = vrot.slane %v1128, 6
      %v1131 = vor.u32 %v1127, %v1130
      %v1132 = vsel %vm1104, %v1123, %v1131
      %v1133 = vrot.slane %v1131, 4
      %v1135 = vshrl.u32 %v1100, 16
      %v1137 = vrot.slane %v1135, 5
      %v1138 = vshll.u32 %v1100, 16
      %v1140 = vrot.slane %v1138, 6
      %v1141 = vor.u32 %v1137, %v1140
      %v1142 = vsel %vm1104, %v1133, %v1141
      %v1143 = vrot.slane %v1141, 4
      %v1145 = vshrl.u32 %v1101, 16
      %v1147 = vrot.slane %v1145, 5
      %v1148 = vshll.u32 %v1101, 16
      %v1150 = vrot.slane %v1148, 6
      %v1151 = vor.u32 %v1147, %v1150
      %v1152 = vsel %vm1104, %v1143, %v1151
      %1157 = vst [vmem:[#allocation4 + $0xc] sm:$0xf] %v1122
      %1158 = vst [vmem:[#allocation4 + $0x30] sm:$0xf] %v1132
      %1159 = vst [vmem:[#allocation4 + $0x54] sm:$0xf] %v1142
      %1160 = vst [vmem:[#allocation4 + $0x78] sm:$0xf] %v1152
      %v1161 = vld [vmem:[#allocation3] sm:$0xc]
      %v1162 = vld [vmem:[#allocation3 + $0x4] sm:$0xf]
      %v1163 = vld [vmem:[#allocation3 + $0x8] sm:$0xf]
      %v1164 = vld [vmem:[#allocation3 + $0xc] sm:$0xf]
      %v1165 = vld [vmem:[#allocation3 + $0x10] sm:$0x3]
      %v1171 = vrot.slane %v1161, 6
      %v1172 = vrot.slane %v1171, 4
      %v1173 = vrot.slane %v1162, 6
      %v1174 = vsel %vm973, %v1172, %v1173
      %v1175 = vrot.slane %v1173, 4
      %v1176 = vrot.slane %v1163, 6
      %v1177 = vsel %vm973, %v1175, %v1176
      %v1178 = vrot.slane %v1176, 4
      %v1179 = vrot.slane %v1164, 6
      %v1180 = vsel %vm973, %v1178, %v1179
      %v1181 = vrot.slane %v1179, 4
      %v1182 = vrot.slane %v1165, 6
      %v1183 = vsel %vm973, %v1181, %v1182
      %1188 = vst [vmem:[#allocation4 + $0x10] sm:$0xf] %v1174
      %1189 = vst [vmem:[#allocation4 + $0x34] sm:$0xf] %v1177
      %1190 = vst [vmem:[#allocation4 + $0x58] sm:$0xf] %v1180
      %1191 = vst [vmem:[#allocation4 + $0x7c] sm:$0xf] %v1183
      %v1192 = vld [vmem:[#allocation3] sm:$0xc]
      %v1193 = vld [vmem:[#allocation3 + $0x4] sm:$0xf]
      %v1194 = vld [vmem:[#allocation3 + $0x8] sm:$0xf]
      %v1195 = vld [vmem:[#allocation3 + $0xc] sm:$0xf]
      %v1196 = vld [vmem:[#allocation3 + $0x10] sm:$0x7]
      %vm1197 = vsmask.f32 1280
      %vm1198 = vsmask.f32 5392
      %vm1199 = vmor %vm1197, %vm1198
      %v1201 = vshrl.u32 %v1192, 16
      %v1203 = vrot.slane %v1201, 6
      %v1204 = vshll.u32 %v1192, 16
      %v1206 = vrot.slane %v1204, 7
      %v1207 = vor.u32 %v1203, %v1206
      %v1208 = vrot.slane %v1207, 4
      %v1210 = vshrl.u32 %v1193, 16
      %v1212 = vrot.slane %v1210, 6
      %v1213 = vshll.u32 %v1193, 16
      %v1215 = vrot.slane %v1213, 7
      %v1216 = vor.u32 %v1212, %v1215
      %v1217 = vsel %vm1199, %v1208, %v1216
      %v1218 = vrot.slane %v1216, 4
      %v1220 = vshrl.u32 %v1194, 16
      %v1222 = vrot.slane %v1220, 6
      %v1223 = vshll.u32 %v1194, 16
      %v1225 = vrot.slane %v1223, 7
      %v1226 = vor.u32 %v1222, %v1225
      %v1227 = vsel %vm1199, %v1218, %v1226
      %v1228 = vrot.slane %v1226, 4
      %v1230 = vshrl.u32 %v1195, 16
      %v1232 = vrot.slane %v1230, 6
      %v1233 = vshll.u32 %v1195, 16
      %v1235 = vrot.slane %v1233, 7
      %v1236 = vor.u32 %v1232, %v1235
      %v1237 = vsel %vm1199, %v1228, %v1236
      %v1238 = vrot.slane %v1236, 4
      %v1240 = vshrl.u32 %v1196, 16
      %v1242 = vrot.slane %v1240, 6
      %v1243 = vshll.u32 %v1196, 16
      %v1245 = vrot.slane %v1243, 7
      %v1246 = vor.u32 %v1242, %v1245
      %v1247 = vsel %vm1199, %v1238, %v1246
      %1252 = vst [vmem:[#allocation4 + $0x14] sm:$0xf] %v1217
      %1253 = vst [vmem:[#allocation4 + $0x38] sm:$0xf] %v1227
      %1254 = vst [vmem:[#allocation4 + $0x5c] sm:$0xf] %v1237
      %1255 = vst [vmem:[#allocation4 + $0x80] sm:$0xf] %v1247
      %v1256 = vld [vmem:[#allocation3] sm:$0x8]
      %v1257 = vld [vmem:[#allocation3 + $0x4] sm:$0xf]
      %v1258 = vld [vmem:[#allocation3 + $0x8] sm:$0xf]
      %v1259 = vld [vmem:[#allocation3 + $0xc] sm:$0xf]
      %v1260 = vld [vmem:[#allocation3 + $0x10] sm:$0x7]
      %vm1266 = vcmask 1040384
      %vm1267 = vcmask 1044484
      %vm1268 = vmor %vm1266, %vm1267
      %v1269 = vrot.slane %v1256, 7
      %v1270 = vrot.slane %v1269, 4
      %v1271 = vrot.slane %v1257, 7
      %v1272 = vsel %vm1268, %v1270, %v1271
      %v1273 = vrot.slane %v1271, 4
      %v1274 = vrot.slane %v1258, 7
      %v1275 = vsel %vm1268, %v1273, %v1274
      %v1276 = vrot.slane %v1274, 4
      %v1277 = vrot.slane %v1259, 7
      %v1278 = vsel %vm1268, %v1276, %v1277
      %v1279 = vrot.slane %v1277, 4
      %v1280 = vrot.slane %v1260, 7
      %v1281 = vsel %vm1268, %v1279, %v1280
      %1286 = vst [vmem:[#allocation4 + $0x18] sm:$0xf] %v1272
      %1287 = vst [vmem:[#allocation4 + $0x3c] sm:$0xf] %v1275
      %1288 = vst [vmem:[#allocation4 + $0x60] sm:$0xf] %v1278
      %1289 = vst [vmem:[#allocation4 + $0x84] sm:$0xf] %v1281
      %v1290 = vld [vmem:[#allocation3] sm:$0x8]
      %v1291 = vld [vmem:[#allocation3 + $0x4] sm:$0xf]
      %v1292 = vld [vmem:[#allocation3 + $0x8] sm:$0xf]
      %v1293 = vld [vmem:[#allocation3 + $0xc] sm:$0xf]
      %v1294 = vld [vmem:[#allocation3 + $0x10] sm:$0xf]
      %vm1295 = vsmask.f32 256
      %vm1296 = vsmask.f32 4368
      %vm1297 = vmor %vm1295, %vm1296
      %v1299 = vshrl.u32 %v1290, 16
      %v1301 = vrot.slane %v1299, 7
      %v1302 = vrot.slane %v1301, 4
      %v1304 = vshrl.u32 %v1291, 16
      %v1306 = vrot.slane %v1304, 7
      %v1307 = vshll.u32 %v1291, 16
      %v1309 = vor.u32 %v1306, %v1307
      %v1310 = vsel %vm1297, %v1302, %v1309
      %v1311 = vrot.slane %v1306, 4
      %v1313 = vshrl.u32 %v1292, 16
      %v1315 = vrot.slane %v1313, 7
      %v1316 = vshll.u32 %v1292, 16
      %v1318 = vor.u32 %v1315, %v1316
      %v1319 = vsel %vm1297, %v1311, %v1318
      %v1320 = vrot.slane %v1315, 4
      %v1322 = vshrl.u32 %v1293, 16
      %v1324 = vrot.slane %v1322, 7
      %v1325 = vshll.u32 %v1293, 16
      %v1327 = vor.u32 %v1324, %v1325
      %v1328 = vsel %vm1297, %v1320, %v1327
      %v1329 = vrot.slane %v1324, 4
      %v1331 = vshrl.u32 %v1294, 16
      %v1333 = vrot.slane %v1331, 7
      %v1334 = vshll.u32 %v1294, 16
      %v1336 = vor.u32 %v1333, %v1334
      %v1337 = vsel %vm1297, %v1329, %v1336
      %1342 = vst [vmem:[#allocation4 + $0x1c] sm:$0xf] %v1310
      %1343 = vst [vmem:[#allocation4 + $0x40] sm:$0xf] %v1319
      %1344 = vst [vmem:[#allocation4 + $0x64] sm:$0xf] %v1328
      %1345 = vst [vmem:[#allocation4 + $0x88] sm:$0xf] %v1337
      %v1346 = vld [vmem:[#allocation3 + $0x4] sm:$0xf]
      %v1347 = vld [vmem:[#allocation3 + $0x8] sm:$0xf]
      %v1348 = vld [vmem:[#allocation3 + $0xc] sm:$0xf]
      %v1349 = vld [vmem:[#allocation3 + $0x10] sm:$0xf]
      %1350 = vst [vmem:[#allocation4 + $0x20] sm:$0xf] %v1346
      %1351 = vst [vmem:[#allocation4 + $0x44] sm:$0xf] %v1347
      %1352 = vst [vmem:[#allocation4 + $0x68] sm:$0xf] %v1348
      %1353 = vst [vmem:[#allocation4 + $0x8c] sm:$0xf] %v1349
      %v1354 = vld [vmem:[#allocation4] sm:$0xff]
      %v1355 = vld [vmem:[#allocation4 + $0x8] sm:$0xff]
      %v1356 = vld [vmem:[#allocation4 + $0x10] sm:$0xff]
      %v1357 = vld [vmem:[#allocation4 + $0x18] sm:$0xff]
      %v1358 = vld [vmem:[#allocation4 + $0x20] sm:$0xf]
      %v1359 = vld [vmem:[#allocation4 + $0x24] sm:$0xff]
      %v1360 = vld [vmem:[#allocation4 + $0x2c] sm:$0xff]
      %v1361 = vld [vmem:[#allocation4 + $0x34] sm:$0xff]
      %v1362 = vld [vmem:[#allocation4 + $0x3c] sm:$0xff]
      %v1363 = vld [vmem:[#allocation4 + $0x44] sm:$0xf]
      %v1364 = vld [vmem:[#allocation4 + $0x48] sm:$0xff]
      %v1365 = vld [vmem:[#allocation4 + $0x50] sm:$0xff]
      %v1366 = vld [vmem:[#allocation4 + $0x58] sm:$0xff]
      %v1367 = vld [vmem:[#allocation4 + $0x60] sm:$0xff]
      %v1368 = vld [vmem:[#allocation4 + $0x68] sm:$0xf]
      %v1369 = vld [vmem:[#allocation4 + $0x6c] sm:$0xff]
      %v1370 = vld [vmem:[#allocation4 + $0x74] sm:$0xff]
      %v1371 = vld [vmem:[#allocation4 + $0x7c] sm:$0xff]
      %v1372 = vld [vmem:[#allocation4 + $0x84] sm:$0xff]
      %v1373 = vld [vmem:[#allocation4 + $0x8c] sm:$0xf]
      %v1374 = vld [vmem:[%s4] sm:$0xf]
      %v1375 = vld [vmem:[%s4 + $0x4] sm:$0xf]
      %v1376 = vld [vmem:[%s4 + $0x8] sm:$0xf]
      %v1377 = vld [vmem:[%s4 + $0xc] sm:$0xf]
      %v1378 = vld [vmem:[%s4 + $0x10] sm:$0xf]
      %v1379 = vld [vmem:[%s4 + $0x14] sm:$0xf]
      %v1380 = vld [vmem:[%s4 + $0x18] sm:$0xf]
      %v1381 = vld [vmem:[%s4 + $0x1c] sm:$0xf]
      %v1382 = vld [vmem:[%s4 + $0x20] sm:$0xf]
      %v1383 = vld [vmem:[%s4 + $0x24] sm:$0xf]
      %v1384 = vld [vmem:[%s4 + $0x28] sm:$0xf]
      %v1385 = vld [vmem:[%s4 + $0x2c] sm:$0xf]
      %v1386 = vld [vmem:[%s4 + $0x30] sm:$0xf]
      %v1387 = vld [vmem:[%s4 + $0x34] sm:$0xf]
      %v1388 = vld [vmem:[%s4 + $0x38] sm:$0xf]
      %v1389 = vld [vmem:[%s4 + $0x3c] sm:$0xf]
      %v1390 = vld [vmem:[%s4 + $0x40] sm:$0xf]
      %v1391 = vld [vmem:[%s4 + $0x44] sm:$0xf]
      %v1392 = vld [vmem:[%s4 + $0x48] sm:$0xf]
      %v1393 = vld [vmem:[%s4 + $0x4c] sm:$0xf]
      %v1394 = vld [vmem:[%s4 + $0x50] sm:$0xf]
      %v1395 = vld [vmem:[%s4 + $0x54] sm:$0xf]
      %v1396 = vld [vmem:[%s4 + $0x58] sm:$0xf]
      %v1397 = vld [vmem:[%s4 + $0x5c] sm:$0xf]
      %v1398 = vld [vmem:[%s4 + $0x60] sm:$0xf]
      %v1399 = vld [vmem:[%s4 + $0x64] sm:$0xf]
      %v1400 = vld [vmem:[%s4 + $0x68] sm:$0xf]
      %v1401 = vld [vmem:[%s4 + $0x6c] sm:$0xf]
      %v1402 = vld [vmem:[%s4 + $0x70] sm:$0xf]
      %v1403 = vld [vmem:[%s4 + $0x74] sm:$0xf]
      %v1404 = vld [vmem:[%s4 + $0x78] sm:$0xf]
      %v1405 = vld [vmem:[%s4 + $0x7c] sm:$0xf]
      %v1406 = vld [vmem:[%s4 + $0x80] sm:$0xf]
      %v1407 = vld [vmem:[%s4 + $0x84] sm:$0xf]
      %v1408 = vld [vmem:[%s4 + $0x88] sm:$0xf]
      %v1409 = vld [vmem:[%s4 + $0x8c] sm:$0xf]
      %v1410 = vld [vmem:[%s4 + $0x90] sm:$0xf]
      %v1411 = vld [vmem:[%s4 + $0x94] sm:$0xf]
      %v1412 = vld [vmem:[%s4 + $0x98] sm:$0xf]
      %v1413 = vld [vmem:[%s4 + $0x9c] sm:$0xf]
      %v1414 = vld [vmem:[%s4 + $0xa0] sm:$0xf]
      %v1415 = vld [vmem:[%s4 + $0xa4] sm:$0xf]
      %v1416 = vld [vmem:[%s4 + $0xa8] sm:$0xf]
      %v1417 = vld [vmem:[%s4 + $0xac] sm:$0xf]
      %v1418 = vld [vmem:[%s4 + $0xb0] sm:$0xf]
      %v1419 = vld [vmem:[%s4 + $0xb4] sm:$0xf]
      %v1420 = vld [vmem:[%s4 + $0xb8] sm:$0xf]
      %v1421 = vld [vmem:[%s4 + $0xbc] sm:$0xf]
      %v1422 = vld [vmem:[%s4 + $0xc0] sm:$0xf]
      %v1423 = vld [vmem:[%s4 + $0xc4] sm:$0xf]
      %v1424 = vld [vmem:[%s4 + $0xc8] sm:$0xf]
      %v1425 = vld [vmem:[%s4 + $0xcc] sm:$0xf]
      %v1426 = vld [vmem:[%s4 + $0xd0] sm:$0xf]
      %v1427 = vld [vmem:[%s4 + $0xd4] sm:$0xf]
      %v1428 = vld [vmem:[%s4 + $0xd8] sm:$0xf]
      %v1429 = vld [vmem:[%s4 + $0xdc] sm:$0xf]
      %v1430 = vld [vmem:[%s4 + $0xe0] sm:$0xf]
      %v1431 = vld [vmem:[%s4 + $0xe4] sm:$0xf]
      %v1432 = vld [vmem:[%s4 + $0xe8] sm:$0xf]
      %v1433 = vld [vmem:[%s4 + $0xec] sm:$0xf]
      %v1434 = vld [vmem:[%s4 + $0xf0] sm:$0xf]
      %v1435 = vld [vmem:[%s4 + $0xf4] sm:$0xf]
      %v1436 = vld [vmem:[%s4 + $0xf8] sm:$0xf]
      %v1437 = vld [vmem:[%s4 + $0xfc] sm:$0xf]
      %v1438 = vld [vmem:[%s4 + $0x100] sm:$0xf]
      %v1439 = vld [vmem:[%s4 + $0x104] sm:$0xf]
      %v1440 = vld [vmem:[%s4 + $0x108] sm:$0xf]
      %v1441 = vld [vmem:[%s4 + $0x10c] sm:$0xf]
      %v1442 = vld [vmem:[%s4 + $0x110] sm:$0xf]
      %v1443 = vld [vmem:[%s4 + $0x114] sm:$0xf]
      %v1444 = vld [vmem:[%s4 + $0x118] sm:$0xf]
      %v1445 = vld [vmem:[%s4 + $0x11c] sm:$0xf]
      %v1446 = vld [vmem:[%s4 + $0x120] sm:$0xf]
      %v1447 = vld [vmem:[%s4 + $0x124] sm:$0xf]
      %v1448 = vld [vmem:[%s4 + $0x128] sm:$0xf]
      %v1449 = vld [vmem:[%s4 + $0x12c] sm:$0xf]
      %v1450 = vld [vmem:[%s4 + $0x130] sm:$0xf]
      %v1451 = vld [vmem:[%s4 + $0x134] sm:$0xf]
      %v1452 = vld [vmem:[%s4 + $0x138] sm:$0xf]
      %v1453 = vld [vmem:[%s4 + $0x13c] sm:$0xf]
      %v1454 = vld [vmem:[%s4 + $0x140] sm:$0xf]
      %v1455 = vld [vmem:[%s4 + $0x144] sm:$0xf]
      %v1456 = vld [vmem:[%s4 + $0x148] sm:$0xf]
      %v1457 = vld [vmem:[%s4 + $0x14c] sm:$0xf]
      %v1458 = vld [vmem:[%s4 + $0x150] sm:$0xf]
      %v1459 = vld [vmem:[%s4 + $0x154] sm:$0xf]
      %v1460 = vld [vmem:[%s4 + $0x158] sm:$0xf]
      %v1461 = vld [vmem:[%s4 + $0x15c] sm:$0xf]
      %v1462 = vld [vmem:[%s4 + $0x160] sm:$0xf]
      %v1463 = vld [vmem:[%s4 + $0x164] sm:$0xf]
      %v1464 = vld [vmem:[%s4 + $0x168] sm:$0xf]
      %v1465 = vld [vmem:[%s4 + $0x16c] sm:$0xf]
      %v1466 = vld [vmem:[%s4 + $0x170] sm:$0xf]
      %v1467 = vld [vmem:[%s4 + $0x174] sm:$0xf]
      %v1468 = vld [vmem:[%s4 + $0x178] sm:$0xf]
      %v1469 = vld [vmem:[%s4 + $0x17c] sm:$0xf]
      %v1470 = vld [vmem:[%s4 + $0x180] sm:$0xf]
      %v1471 = vld [vmem:[%s4 + $0x184] sm:$0xf]
      %v1472 = vld [vmem:[%s4 + $0x188] sm:$0xf]
      %v1473 = vld [vmem:[%s4 + $0x18c] sm:$0xf]
      %v1474 = vld [vmem:[%s4 + $0x190] sm:$0xf]
      %v1475 = vld [vmem:[%s4 + $0x194] sm:$0xf]
      %v1476 = vld [vmem:[%s4 + $0x198] sm:$0xf]
      %v1477 = vld [vmem:[%s4 + $0x19c] sm:$0xf]
      %v1478 = vld [vmem:[%s4 + $0x1a0] sm:$0xf]
      %v1479 = vld [vmem:[%s4 + $0x1a4] sm:$0xf]
      %v1480 = vld [vmem:[%s4 + $0x1a8] sm:$0xf]
      %v1481 = vld [vmem:[%s4 + $0x1ac] sm:$0xf]
      %v1482 = vld [vmem:[%s4 + $0x1b0] sm:$0xf]
      %v1483 = vld [vmem:[%s4 + $0x1b4] sm:$0xf]
      %v1484 = vld [vmem:[%s4 + $0x1b8] sm:$0xf]
      %v1485 = vld [vmem:[%s4 + $0x1bc] sm:$0xf]
      %v1486 = vld [vmem:[%s4 + $0x1c0] sm:$0xf]
      %v1487 = vld [vmem:[%s4 + $0x1c4] sm:$0xf]
      %v1488 = vld [vmem:[%s4 + $0x1c8] sm:$0xf]
      %v1489 = vld [vmem:[%s4 + $0x1cc] sm:$0xf]
      %v1490 = vld [vmem:[%s4 + $0x1d0] sm:$0xf]
      %v1491 = vld [vmem:[%s4 + $0x1d4] sm:$0xf]
      %v1492 = vld [vmem:[%s4 + $0x1d8] sm:$0xf]
      %v1493 = vld [vmem:[%s4 + $0x1dc] sm:$0xf]
      %v1494 = vld [vmem:[%s4 + $0x1e0] sm:$0xf]
      %v1495 = vld [vmem:[%s4 + $0x1e4] sm:$0xf]
      %v1496 = vld [vmem:[%s4 + $0x1e8] sm:$0xf]
      %v1497 = vld [vmem:[%s4 + $0x1ec] sm:$0xf]
      %v1498 = vld [vmem:[%s4 + $0x1f0] sm:$0xf]
      %v1499 = vld [vmem:[%s4 + $0x1f4] sm:$0xf]
      %v1500 = vld [vmem:[%s4 + $0x1f8] sm:$0xf]
      %v1501 = vld [vmem:[%s4 + $0x1fc] sm:$0xf]
      %v1502 = vld [vmem:[%s4 + $0x200] sm:$0xf]
      %v1503 = vld [vmem:[%s4 + $0x204] sm:$0xf]
      %v1504 = vld [vmem:[%s4 + $0x208] sm:$0xf]
      %v1505 = vld [vmem:[%s4 + $0x20c] sm:$0xf]
      %v1506 = vld [vmem:[%s4 + $0x210] sm:$0xf]
      %v1507 = vld [vmem:[%s4 + $0x214] sm:$0xf]
      %v1508 = vld [vmem:[%s4 + $0x218] sm:$0xf]
      %v1509 = vld [vmem:[%s4 + $0x21c] sm:$0xf]
      %v1510 = vld [vmem:[%s4 + $0x220] sm:$0xf]
      %v1511 = vld [vmem:[%s4 + $0x224] sm:$0xf]
      %v1512 = vld [vmem:[%s4 + $0x228] sm:$0xf]
      %v1513 = vld [vmem:[%s4 + $0x22c] sm:$0xf]
      %v1514 = vld [vmem:[%s4 + $0x230] sm:$0xf]
      %v1515 = vld [vmem:[%s4 + $0x234] sm:$0xf]
      %v1516 = vld [vmem:[%s4 + $0x238] sm:$0xf]
      %v1517 = vld [vmem:[%s4 + $0x23c] sm:$0xf]
      %v1538 = vunpack.c.l.b16 %v1354
      %v1539 = vunpack.c.h.b16 %v1354
      %v1540 = vunpack.c.l.b16 %v1355
      %v1541 = vunpack.c.h.b16 %v1355
      %v1542 = vunpack.c.l.b16 %v1356
      %v1543 = vunpack.c.h.b16 %v1356
      %v1544 = vunpack.c.l.b16 %v1357
      %v1545 = vunpack.c.h.b16 %v1357
      %v1546 = vunpack.c.l.b16 %v1358
      %v1547 = vunpack.c.l.b16 %v1359
      %v1548 = vunpack.c.h.b16 %v1359
      %v1549 = vunpack.c.l.b16 %v1360
      %v1550 = vunpack.c.h.b16 %v1360
      %v1551 = vunpack.c.l.b16 %v1361
      %v1552 = vunpack.c.h.b16 %v1361
      %v1553 = vunpack.c.l.b16 %v1362
      %v1554 = vunpack.c.h.b16 %v1362
      %v1555 = vunpack.c.l.b16 %v1363
      %v1556 = vunpack.c.l.b16 %v1364
      %v1557 = vunpack.c.h.b16 %v1364
      %v1558 = vunpack.c.l.b16 %v1365
      %v1559 = vunpack.c.h.b16 %v1365
      %v1560 = vunpack.c.l.b16 %v1366
      %v1561 = vunpack.c.h.b16 %v1366
      %v1562 = vunpack.c.l.b16 %v1367
      %v1563 = vunpack.c.h.b16 %v1367
      %v1564 = vunpack.c.l.b16 %v1368
      %v1565 = vunpack.c.l.b16 %v1369
      %v1566 = vunpack.c.h.b16 %v1369
      %v1567 = vunpack.c.l.b16 %v1370
      %v1568 = vunpack.c.h.b16 %v1370
      %v1569 = vunpack.c.l.b16 %v1371
      %v1570 = vunpack.c.h.b16 %v1371
      %v1571 = vunpack.c.l.b16 %v1372
      %v1572 = vunpack.c.h.b16 %v1372
      %v1573 = vunpack.c.l.b16 %v1373
      %v1574 = vpack.c.b16 %v1547, %v1538
      %v1575 = vpack.c.b16 %v1548, %v1539
      %v1576 = vpack.c.b16 %v1549, %v1540
      %v1577 = vpack.c.b16 %v1550, %v1541
      %v1578 = vpack.c.b16 %v1551, %v1542
      %v1579 = vpack.c.b16 %v1552, %v1543
      %v1580 = vpack.c.b16 %v1553, %v1544
      %v1581 = vpack.c.b16 %v1554, %v1545
      %v1582 = vpack.c.b16 %v1555, %v1546
      %v1583 = vpack.c.b16 %v1565, %v1556
      %v1584 = vpack.c.b16 %v1566, %v1557
      %v1585 = vpack.c.b16 %v1567, %v1558
      %v1586 = vpack.c.b16 %v1568, %v1559
      %v1587 = vpack.c.b16 %v1569, %v1560
      %v1588 = vpack.c.b16 %v1570, %v1561
      %v1589 = vpack.c.b16 %v1571, %v1562
      %v1590 = vpack.c.b16 %v1572, %v1563
      %v1591 = vpack.c.b16 %v1573, %v1564
      %v1754 = vunpack.c.l.b16 %v1374
      %v1755 = vunpack.c.l.b16 %v1375
      %v1756 = vunpack.c.l.b16 %v1376
      %v1757 = vunpack.c.l.b16 %v1377
      %v1758 = vunpack.c.l.b16 %v1378
      %v1759 = vunpack.c.l.b16 %v1379
      %v1760 = vunpack.c.l.b16 %v1380
      %v1761 = vunpack.c.l.b16 %v1381
      %v1762 = vunpack.c.l.b16 %v1382
      %v1763 = vunpack.c.l.b16 %v1383
      %v1764 = vunpack.c.l.b16 %v1384
      %v1765 = vunpack.c.l.b16 %v1385
      %v1766 = vunpack.c.l.b16 %v1386
      %v1767 = vunpack.c.l.b16 %v1387
      %v1768 = vunpack.c.l.b16 %v1388
      %v1769 = vunpack.c.l.b16 %v1389
      %v1770 = vunpack.c.l.b16 %v1390
      %v1771 = vunpack.c.l.b16 %v1391
      %v1772 = vunpack.c.l.b16 %v1392
      %v1773 = vunpack.c.l.b16 %v1393
      %v1774 = vunpack.c.l.b16 %v1394
      %v1775 = vunpack.c.l.b16 %v1395
      %v1776 = vunpack.c.l.b16 %v1396
      %v1777 = vunpack.c.l.b16 %v1397
      %v1778 = vunpack.c.l.b16 %v1398
      %v1779 = vunpack.c.l.b16 %v1399
      %v1780 = vunpack.c.l.b16 %v1400
      %v1781 = vunpack.c.l.b16 %v1401
      %v1782 = vunpack.c.l.b16 %v1402
      %v1783 = vunpack.c.l.b16 %v1403
      %v1784 = vunpack.c.l.b16 %v1404
      %v1785 = vunpack.c.l.b16 %v1405
      %v1786 = vunpack.c.l.b16 %v1406
      %v1787 = vunpack.c.l.b16 %v1407
      %v1788 = vunpack.c.l.b16 %v1408
      %v1789 = vunpack.c.l.b16 %v1409
      %v1790 = vunpack.c.l.b16 %v1410
      %v1791 = vunpack.c.l.b16 %v1411
      %v1792 = vunpack.c.l.b16 %v1412
      %v1793 = vunpack.c.l.b16 %v1413
      %v1794 = vunpack.c.l.b16 %v1414
      %v1795 = vunpack.c.l.b16 %v1415
      %v1796 = vunpack.c.l.b16 %v1416
      %v1797 = vunpack.c.l.b16 %v1417
      %v1798 = vunpack.c.l.b16 %v1418
      %v1799 = vunpack.c.l.b16 %v1419
      %v1800 = vunpack.c.l.b16 %v1420
      %v1801 = vunpack.c.l.b16 %v1421
      %v1802 = vunpack.c.l.b16 %v1422
      %v1803 = vunpack.c.l.b16 %v1423
      %v1804 = vunpack.c.l.b16 %v1424
      %v1805 = vunpack.c.l.b16 %v1425
      %v1806 = vunpack.c.l.b16 %v1426
      %v1807 = vunpack.c.l.b16 %v1427
      %v1808 = vunpack.c.l.b16 %v1428
      %v1809 = vunpack.c.l.b16 %v1429
      %v1810 = vunpack.c.l.b16 %v1430
      %v1811 = vunpack.c.l.b16 %v1431
      %v1812 = vunpack.c.l.b16 %v1432
      %v1813 = vunpack.c.l.b16 %v1433
      %v1814 = vunpack.c.l.b16 %v1434
      %v1815 = vunpack.c.l.b16 %v1435
      %v1816 = vunpack.c.l.b16 %v1436
      %v1817 = vunpack.c.l.b16 %v1437
      %v1818 = vunpack.c.l.b16 %v1438
      %v1819 = vunpack.c.l.b16 %v1439
      %v1820 = vunpack.c.l.b16 %v1440
      %v1821 = vunpack.c.l.b16 %v1441
      %v1822 = vunpack.c.l.b16 %v1442
      %v1823 = vunpack.c.l.b16 %v1443
      %v1824 = vunpack.c.l.b16 %v1444
      %v1825 = vunpack.c.l.b16 %v1445
      %v1826 = vunpack.c.l.b16 %v1446
      %v1827 = vunpack.c.l.b16 %v1447
      %v1828 = vunpack.c.l.b16 %v1448
      %v1829 = vunpack.c.l.b16 %v1449
      %v1830 = vunpack.c.l.b16 %v1450
      %v1831 = vunpack.c.l.b16 %v1451
      %v1832 = vunpack.c.l.b16 %v1452
      %v1833 = vunpack.c.l.b16 %v1453
      %v1834 = vunpack.c.l.b16 %v1454
      %v1835 = vunpack.c.l.b16 %v1455
      %v1836 = vunpack.c.l.b16 %v1456
      %v1837 = vunpack.c.l.b16 %v1457
      %v1838 = vunpack.c.l.b16 %v1458
      %v1839 = vunpack.c.l.b16 %v1459
      %v1840 = vunpack.c.l.b16 %v1460
      %v1841 = vunpack.c.l.b16 %v1461
      %v1842 = vunpack.c.l.b16 %v1462
      %v1843 = vunpack.c.l.b16 %v1463
      %v1844 = vunpack.c.l.b16 %v1464
      %v1845 = vunpack.c.l.b16 %v1465
      %v1846 = vunpack.c.l.b16 %v1466
      %v1847 = vunpack.c.l.b16 %v1467
      %v1848 = vunpack.c.l.b16 %v1468
      %v1849 = vunpack.c.l.b16 %v1469
      %v1850 = vunpack.c.l.b16 %v1470
      %v1851 = vunpack.c.l.b16 %v1471
      %v1852 = vunpack.c.l.b16 %v1472
      %v1853 = vunpack.c.l.b16 %v1473
      %v1854 = vunpack.c.l.b16 %v1474
      %v1855 = vunpack.c.l.b16 %v1475
      %v1856 = vunpack.c.l.b16 %v1476
      %v1857 = vunpack.c.l.b16 %v1477
      %v1858 = vunpack.c.l.b16 %v1478
      %v1859 = vunpack.c.l.b16 %v1479
      %v1860 = vunpack.c.l.b16 %v1480
      %v1861 = vunpack.c.l.b16 %v1481
      %v1862 = vunpack.c.l.b16 %v1482
      %v1863 = vunpack.c.l.b16 %v1483
      %v1864 = vunpack.c.l.b16 %v1484
      %v1865 = vunpack.c.l.b16 %v1485
      %v1866 = vunpack.c.l.b16 %v1486
      %v1867 = vunpack.c.l.b16 %v1487
      %v1868 = vunpack.c.l.b16 %v1488
      %v1869 = vunpack.c.l.b16 %v1489
      %v1870 = vunpack.c.l.b16 %v1490
      %v1871 = vunpack.c.l.b16 %v1491
      %v1872 = vunpack.c.l.b16 %v1492
      %v1873 = vunpack.c.l.b16 %v1493
      %v1874 = vunpack.c.l.b16 %v1494
      %v1875 = vunpack.c.l.b16 %v1495
      %v1876 = vunpack.c.l.b16 %v1496
      %v1877 = vunpack.c.l.b16 %v1497
      %v1878 = vunpack.c.l.b16 %v1498
      %v1879 = vunpack.c.l.b16 %v1499
      %v1880 = vunpack.c.l.b16 %v1500
      %v1881 = vunpack.c.l.b16 %v1501
      %v1882 = vunpack.c.l.b16 %v1502
      %v1883 = vunpack.c.l.b16 %v1503
      %v1884 = vunpack.c.l.b16 %v1504
      %v1885 = vunpack.c.l.b16 %v1505
      %v1886 = vunpack.c.l.b16 %v1506
      %v1887 = vunpack.c.l.b16 %v1507
      %v1888 = vunpack.c.l.b16 %v1508
      %v1889 = vunpack.c.l.b16 %v1509
      %v1890 = vunpack.c.l.b16 %v1510
      %v1891 = vunpack.c.l.b16 %v1511
      %v1892 = vunpack.c.l.b16 %v1512
      %v1893 = vunpack.c.l.b16 %v1513
      %v1894 = vunpack.c.l.b16 %v1514
      %v1895 = vunpack.c.l.b16 %v1515
      %v1896 = vunpack.c.l.b16 %v1516
      %v1897 = vunpack.c.l.b16 %v1517
      %v1898 = vpack.c.b16 %v1755, %v1754
      %v1899 = vpack.c.b16 %v1757, %v1756
      %v1900 = vpack.c.b16 %v1759, %v1758
      %v1901 = vpack.c.b16 %v1761, %v1760
      %v1902 = vpack.c.b16 %v1763, %v1762
      %v1903 = vpack.c.b16 %v1765, %v1764
      %v1904 = vpack.c.b16 %v1767, %v1766
      %v1905 = vpack.c.b16 %v1769, %v1768
      %v1906 = vpack.c.b16 %v1771, %v1770
      %v1907 = vpack.c.b16 %v1773, %v1772
      %v1908 = vpack.c.b16 %v1775, %v1774
      %v1909 = vpack.c.b16 %v1777, %v1776
      %v1910 = vpack.c.b16 %v1779, %v1778
      %v1911 = vpack.c.b16 %v1781, %v1780
      %v1912 = vpack.c.b16 %v1783, %v1782
      %v1913 = vpack.c.b16 %v1785, %v1784
      %v1914 = vpack.c.b16 %v1787, %v1786
      %v1915 = vpack.c.b16 %v1789, %v1788
      %v1916 = vpack.c.b16 %v1791, %v1790
      %v1917 = vpack.c.b16 %v1793, %v1792
      %v1918 = vpack.c.b16 %v1795, %v1794
      %v1919 = vpack.c.b16 %v1797, %v1796
      %v1920 = vpack.c.b16 %v1799, %v1798
      %v1921 = vpack.c.b16 %v1801, %v1800
      %v1922 = vpack.c.b16 %v1803, %v1802
      %v1923 = vpack.c.b16 %v1805, %v1804
      %v1924 = vpack.c.b16 %v1807, %v1806
      %v1925 = vpack.c.b16 %v1809, %v1808
      %v1926 = vpack.c.b16 %v1811, %v1810
      %v1927 = vpack.c.b16 %v1813, %v1812
      %v1928 = vpack.c.b16 %v1815, %v1814
      %v1929 = vpack.c.b16 %v1817, %v1816
      %v1930 = vpack.c.b16 %v1819, %v1818
      %v1931 = vpack.c.b16 %v1821, %v1820
      %v1932 = vpack.c.b16 %v1823, %v1822
      %v1933 = vpack.c.b16 %v1825, %v1824
      %v1934 = vpack.c.b16 %v1827, %v1826
      %v1935 = vpack.c.b16 %v1829, %v1828
      %v1936 = vpack.c.b16 %v1831, %v1830
      %v1937 = vpack.c.b16 %v1833, %v1832
      %v1938 = vpack.c.b16 %v1835, %v1834
      %v1939 = vpack.c.b16 %v1837, %v1836
      %v1940 = vpack.c.b16 %v1839, %v1838
      %v1941 = vpack.c.b16 %v1841, %v1840
      %v1942 = vpack.c.b16 %v1843, %v1842
      %v1943 = vpack.c.b16 %v1845, %v1844
      %v1944 = vpack.c.b16 %v1847, %v1846
      %v1945 = vpack.c.b16 %v1849, %v1848
      %v1946 = vpack.c.b16 %v1851, %v1850
      %v1947 = vpack.c.b16 %v1853, %v1852
      %v1948 = vpack.c.b16 %v1855, %v1854
      %v1949 = vpack.c.b16 %v1857, %v1856
      %v1950 = vpack.c.b16 %v1859, %v1858
      %v1951 = vpack.c.b16 %v1861, %v1860
      %v1952 = vpack.c.b16 %v1863, %v1862
      %v1953 = vpack.c.b16 %v1865, %v1864
      %v1954 = vpack.c.b16 %v1867, %v1866
      %v1955 = vpack.c.b16 %v1869, %v1868
      %v1956 = vpack.c.b16 %v1871, %v1870
      %v1957 = vpack.c.b16 %v1873, %v1872
      %v1958 = vpack.c.b16 %v1875, %v1874
      %v1959 = vpack.c.b16 %v1877, %v1876
      %v1960 = vpack.c.b16 %v1879, %v1878
      %v1961 = vpack.c.b16 %v1881, %v1880
      %v1962 = vpack.c.b16 %v1883, %v1882
      %v1963 = vpack.c.b16 %v1885, %v1884
      %v1964 = vpack.c.b16 %v1887, %v1886
      %v1965 = vpack.c.b16 %v1889, %v1888
      %v1966 = vpack.c.b16 %v1891, %v1890
      %v1967 = vpack.c.b16 %v1893, %v1892
      %v1968 = vpack.c.b16 %v1895, %v1894
      %v1969 = vpack.c.b16 %v1897, %v1896
      %2042 = vmatprep.subr.bf16.mxu0 0
      %2043 = vmatpush1.bf16.msra.mxu0 %v1905
      %2044 = vmatprep.subr.bf16.mxu0 0
      %2045 = vmatpush1.bf16.msra.mxu0 %v1904
      %2046 = vmatprep.subr.bf16.mxu0 0
      %2047 = vmatpush1.bf16.msra.mxu0 %v1903
      %2048 = vmatprep.subr.bf16.mxu0 0
      %2049 = vmatpush1.bf16.msra.mxu0 %v1902
      %2050 = vmatprep.subr.bf16.mxu0 0
      %2051 = vmatpush1.bf16.msra.mxu0 %v1901
      %2052 = vmatprep.subr.bf16.mxu0 0
      %2053 = vmatpush1.bf16.msra.mxu0 %v1900
      %2054 = vmatprep.subr.bf16.mxu0 0
      %2055 = vmatpush1.bf16.msra.mxu0 %v1899
      %2056 = vmatprep.subr.bf16.mxu0 0
      %2057 = vmatpush1.bf16.msra.mxu0 %v1898
      %2058 = vmatprep.subr.bf16.mxu0 0
      %2059 = vmatpush2.bf16.msra.mxu0 %v1913
      %2060 = vmatprep.subr.bf16.mxu0 0
      %2061 = vmatpush2.bf16.msra.mxu0 %v1912
      %2062 = vmatprep.subr.bf16.mxu0 0
      %2063 = vmatpush2.bf16.msra.mxu0 %v1911
      %2064 = vmatprep.subr.bf16.mxu0 0
      %2065 = vmatpush2.bf16.msra.mxu0 %v1910
      %2066 = vmatprep.subr.bf16.mxu0 0
      %2067 = vmatpush2.bf16.msra.mxu0 %v1909
      %2068 = vmatprep.subr.bf16.mxu0 0
      %2069 = vmatpush2.bf16.msra.mxu0 %v1908
      %2070 = vmatprep.subr.bf16.mxu0 0
      %2071 = vmatpush2.bf16.msra.mxu0 %v1907
      %2072 = vmatprep.subr.bf16.mxu0 0
      %2073 = vmatpush2.bf16.msra.mxu0 %v1906
      %2074 = vmatprep.mubr.bf16.mxu0 %v1575
      %2075 = vmatmul.mubr.bf16.gmra.mxu0 %v1574
      %v2076 = vpop.f32.mrf.mxu0
      %v2077 = vadd.f32 0.0, %v2076
      %v2078 = vpop.f32.mrf.mxu0
      %v2079 = vpop.f32.mrf.mxu0
      %v2080 = vadd.f32 0.0, %v2079
      %v2081 = vpop.f32.mrf.mxu0
      %2082 = vmatprep.mubr.bf16.mxu0 %v1584
      %2083 = vmatmul.mubr.bf16.gmra.mxu0 %v1583
      %v2084 = vpop.f32.mrf.mxu0
      %v2085 = vadd.f32 0.0, %v2084
      %v2086 = vpop.f32.mrf.mxu0
      %v2087 = vpop.f32.mrf.mxu0
      %v2088 = vadd.f32 0.0, %v2087
      %v2089 = vpop.f32.mrf.mxu0
      %2090 = vdwg.mxu0
      %2091 = vmatprep.subr.bf16.mxu0 0
      %2092 = vmatpush1.bf16.msra.mxu0 %v1921
      %2093 = vmatprep.subr.bf16.mxu0 0
      %2094 = vmatpush1.bf16.msra.mxu0 %v1920
      %2095 = vmatprep.subr.bf16.mxu0 0
      %2096 = vmatpush1.bf16.msra.mxu0 %v1919
      %2097 = vmatprep.subr.bf16.mxu0 0
      %2098 = vmatpush1.bf16.msra.mxu0 %v1918
      %2099 = vmatprep.subr.bf16.mxu0 0
      %2100 = vmatpush1.bf16.msra.mxu0 %v1917
      %2101 = vmatprep.subr.bf16.mxu0 0
      %2102 = vmatpush1.bf16.msra.mxu0 %v1916
      %2103 = vmatprep.subr.bf16.mxu0 0
      %2104 = vmatpush1.bf16.msra.mxu0 %v1915
      %2105 = vmatprep.subr.bf16.mxu0 0
      %2106 = vmatpush1.bf16.msra.mxu0 %v1914
      %2107 = vmatprep.subr.bf16.mxu0 0
      %2108 = vmatpush2.bf16.msra.mxu0 %v1929
      %2109 = vmatprep.subr.bf16.mxu0 0
      %2110 = vmatpush2.bf16.msra.mxu0 %v1928
      %2111 = vmatprep.subr.bf16.mxu0 0
      %2112 = vmatpush2.bf16.msra.mxu0 %v1927
      %2113 = vmatprep.subr.bf16.mxu0 0
      %2114 = vmatpush2.bf16.msra.mxu0 %v1926
      %2115 = vmatprep.subr.bf16.mxu0 0
      %2116 = vmatpush2.bf16.msra.mxu0 %v1925
      %2117 = vmatprep.subr.bf16.mxu0 0
      %2118 = vmatpush2.bf16.msra.mxu0 %v1924
      %2119 = vmatprep.subr.bf16.mxu0 0
      %2120 = vmatpush2.bf16.msra.mxu0 %v1923
      %2121 = vmatprep.subr.bf16.mxu0 0
      %2122 = vmatpush2.bf16.msra.mxu0 %v1922
      %2123 = vmatprep.mubr.bf16.mxu0 %v1577
      %2124 = vmatmul.mubr.bf16.gmra.mxu0 %v1576
      %v2125 = vpop.f32.mrf.mxu0
      %v2126 = vadd.f32 %v2077, %v2125
      %v2127 = vpop.f32.mrf.mxu0
      %v2128 = vpop.f32.mrf.mxu0
      %v2129 = vadd.f32 %v2080, %v2128
      %v2130 = vpop.f32.mrf.mxu0
      %2131 = vmatprep.mubr.bf16.mxu0 %v1586
      %2132 = vmatmul.mubr.bf16.gmra.mxu0 %v1585
      %v2133 = vpop.f32.mrf.mxu0
      %v2134 = vadd.f32 %v2085, %v2133
      %v2135 = vpop.f32.mrf.mxu0
      %v2136 = vpop.f32.mrf.mxu0
      %v2137 = vadd.f32 %v2088, %v2136
      %v2138 = vpop.f32.mrf.mxu0
      %2139 = vdwg.mxu0
      %2140 = vmatprep.subr.bf16.mxu0 0
      %2141 = vmatpush1.bf16.msra.mxu0 %v1937
      %2142 = vmatprep.subr.bf16.mxu0 0
      %2143 = vmatpush1.bf16.msra.mxu0 %v1936
      %2144 = vmatprep.subr.bf16.mxu0 0
      %2145 = vmatpush1.bf16.msra.mxu0 %v1935
      %2146 = vmatprep.subr.bf16.mxu0 0
      %2147 = vmatpush1.bf16.msra.mxu0 %v1934
      %2148 = vmatprep.subr.bf16.mxu0 0
      %2149 = vmatpush1.bf16.msra.mxu0 %v1933
      %2150 = vmatprep.subr.bf16.mxu0 0
      %2151 = vmatpush1.bf16.msra.mxu0 %v1932
      %2152 = vmatprep.subr.bf16.mxu0 0
      %2153 = vmatpush1.bf16.msra.mxu0 %v1931
      %2154 = vmatprep.subr.bf16.mxu0 0
      %2155 = vmatpush1.bf16.msra.mxu0 %v1930
      %2156 = vmatprep.subr.bf16.mxu0 0
      %2157 = vmatpush2.bf16.msra.mxu0 %v1945
      %2158 = vmatprep.subr.bf16.mxu0 0
      %2159 = vmatpush2.bf16.msra.mxu0 %v1944
      %2160 = vmatprep.subr.bf16.mxu0 0
      %2161 = vmatpush2.bf16.msra.mxu0 %v1943
      %2162 = vmatprep.subr.bf16.mxu0 0
      %2163 = vmatpush2.bf16.msra.mxu0 %v1942
      %2164 = vmatprep.subr.bf16.mxu0 0
      %2165 = vmatpush2.bf16.msra.mxu0 %v1941
      %2166 = vmatprep.subr.bf16.mxu0 0
      %2167 = vmatpush2.bf16.msra.mxu0 %v1940
      %2168 = vmatprep.subr.bf16.mxu0 0
      %2169 = vmatpush2.bf16.msra.mxu0 %v1939
      %2170 = vmatprep.subr.bf16.mxu0 0
      %2171 = vmatpush2.bf16.msra.mxu0 %v1938
      %2172 = vmatprep.mubr.bf16.mxu0 %v1579
      %2173 = vmatmul.mubr.bf16.gmra.mxu0 %v1578
      %v2174 = vpop.f32.mrf.mxu0
      %v2175 = vadd.f32 %v2126, %v2174
      %v2176 = vpop.f32.mrf.mxu0
      %v2177 = vpop.f32.mrf.mxu0
      %v2178 = vadd.f32 %v2129, %v2177
      %v2179 = vpop.f32.mrf.mxu0
      %2180 = vmatprep.mubr.bf16.mxu0 %v1588
      %2181 = vmatmul.mubr.bf16.gmra.mxu0 %v1587
      %v2182 = vpop.f32.mrf.mxu0
      %v2183 = vadd.f32 %v2134, %v2182
      %v2184 = vpop.f32.mrf.mxu0
      %v2185 = vpop.f32.mrf.mxu0
      %v2186 = vadd.f32 %v2137, %v2185
      %v2187 = vpop.f32.mrf.mxu0
      %2188 = vdwg.mxu0
      %2189 = vmatprep.subr.bf16.mxu0 0
      %2190 = vmatpush1.bf16.msra.mxu0 %v1953
      %2191 = vmatprep.subr.bf16.mxu0 0
      %2192 = vmatpush1.bf16.msra.mxu0 %v1952
      %2193 = vmatprep.subr.bf16.mxu0 0
      %2194 = vmatpush1.bf16.msra.mxu0 %v1951
      %2195 = vmatprep.subr.bf16.mxu0 0
      %2196 = vmatpush1.bf16.msra.mxu0 %v1950
      %2197 = vmatprep.subr.bf16.mxu0 0
      %2198 = vmatpush1.bf16.msra.mxu0 %v1949
      %2199 = vmatprep.subr.bf16.mxu0 0
      %2200 = vmatpush1.bf16.msra.mxu0 %v1948
      %2201 = vmatprep.subr.bf16.mxu0 0
      %2202 = vmatpush1.bf16.msra.mxu0 %v1947
      %2203 = vmatprep.subr.bf16.mxu0 0
      %2204 = vmatpush1.bf16.msra.mxu0 %v1946
      %2205 = vmatprep.subr.bf16.mxu0 0
      %2206 = vmatpush2.bf16.msra.mxu0 %v1961
      %2207 = vmatprep.subr.bf16.mxu0 0
      %2208 = vmatpush2.bf16.msra.mxu0 %v1960
      %2209 = vmatprep.subr.bf16.mxu0 0
      %2210 = vmatpush2.bf16.msra.mxu0 %v1959
      %2211 = vmatprep.subr.bf16.mxu0 0
      %2212 = vmatpush2.bf16.msra.mxu0 %v1958
      %2213 = vmatprep.subr.bf16.mxu0 0
      %2214 = vmatpush2.bf16.msra.mxu0 %v1957
      %2215 = vmatprep.subr.bf16.mxu0 0
      %2216 = vmatpush2.bf16.msra.mxu0 %v1956
      %2217 = vmatprep.subr.bf16.mxu0 0
      %2218 = vmatpush2.bf16.msra.mxu0 %v1955
      %2219 = vmatprep.subr.bf16.mxu0 0
      %2220 = vmatpush2.bf16.msra.mxu0 %v1954
      %2221 = vmatprep.mubr.bf16.mxu0 %v1581
      %2222 = vmatmul.mubr.bf16.gmra.mxu0 %v1580
      %v2223 = vpop.f32.mrf.mxu0
      %v2224 = vadd.f32 %v2175, %v2223
      %v2225 = vpop.f32.mrf.mxu0
      %v2226 = vpop.f32.mrf.mxu0
      %v2227 = vadd.f32 %v2178, %v2226
      %v2228 = vpop.f32.mrf.mxu0
      %2229 = vmatprep.mubr.bf16.mxu0 %v1590
      %2230 = vmatmul.mubr.bf16.gmra.mxu0 %v1589
      %v2231 = vpop.f32.mrf.mxu0
      %v2232 = vadd.f32 %v2183, %v2231
      %v2233 = vpop.f32.mrf.mxu0
      %v2234 = vpop.f32.mrf.mxu0
      %v2235 = vadd.f32 %v2186, %v2234
      %v2236 = vpop.f32.mrf.mxu0
      %2237 = vdwg.mxu0
      %2238 = vmatprep.subr.bf16.mxu0 0
      %2239 = vmatpush1.bf16.msra.mxu0 %v1969
      %2240 = vmatprep.subr.bf16.mxu0 0
      %2241 = vmatpush1.bf16.msra.mxu0 %v1968
      %2242 = vmatprep.subr.bf16.mxu0 0
      %2243 = vmatpush1.bf16.msra.mxu0 %v1967
      %2244 = vmatprep.subr.bf16.mxu0 0
      %2245 = vmatpush1.bf16.msra.mxu0 %v1966
      %2246 = vmatprep.subr.bf16.mxu0 0
      %2247 = vmatpush1.bf16.msra.mxu0 %v1965
      %2248 = vmatprep.subr.bf16.mxu0 0
      %2249 = vmatpush1.bf16.msra.mxu0 %v1964
      %2250 = vmatprep.subr.bf16.mxu0 0
      %2251 = vmatpush1.bf16.msra.mxu0 %v1963
      %2252 = vmatprep.subr.bf16.mxu0 0
      %2253 = vmatpush1.bf16.msra.mxu0 %v1962
      %2254 = vmatprep.subr.bf16.mxu0 0
      %2255 = vmatpush2.bf16.msra.mxu0 0
      %2256 = vmatprep.subr.bf16.mxu0 0
      %2257 = vmatpush2.bf16.msra.mxu0 0
      %2258 = vmatprep.subr.bf16.mxu0 0
      %2259 = vmatpush2.bf16.msra.mxu0 0
      %2260 = vmatprep.subr.bf16.mxu0 0
      %2261 = vmatpush2.bf16.msra.mxu0 0
      %2262 = vmatprep.subr.bf16.mxu0 0
      %2263 = vmatpush2.bf16.msra.mxu0 0
      %2264 = vmatprep.subr.bf16.mxu0 0
      %2265 = vmatpush2.bf16.msra.mxu0 0
      %2266 = vmatprep.subr.bf16.mxu0 0
      %2267 = vmatpush2.bf16.msra.mxu0 0
      %2268 = vmatprep.subr.bf16.mxu0 0
      %2269 = vmatpush2.bf16.msra.mxu0 0
      %2270 = vmatprep.mubr.bf16.mxu0 0
      %2271 = vmatmul.mubr.bf16.gmra.mxu0 %v1582
      %v2272 = vpop.f32.mrf.mxu0
      %v2273 = vadd.f32 %v2224, %v2272
      %v2274 = vpop.f32.mrf.mxu0
      %v2275 = vpop.f32.mrf.mxu0
      %v2276 = vadd.f32 %v2227, %v2275
      %v2277 = vpop.f32.mrf.mxu0
      %2278 = vmatprep.mubr.bf16.mxu0 0
      %2279 = vmatmul.mubr.bf16.gmra.mxu0 %v1591
      %v2280 = vpop.f32.mrf.mxu0
      %v2281 = vadd.f32 %v2232, %v2280
      %v2282 = vpop.f32.mrf.mxu0
      %v2283 = vpop.f32.mrf.mxu0
      %v2284 = vadd.f32 %v2235, %v2283
      %v2285 = vpop.f32.mrf.mxu0
      %2286 = vdwg.mxu0
      %v2287 = vld [vmem:[%s5] sm:$0x1]
      %v2289 = vlaneseq
      %v2290 = vshrl.u32 %v2289, 7
      %v2291 = vsub.s32 0, %v2290
      %v2292 = vrot.slane %v2287, %v2291
      %v2294 = vmul.f32 %v2273, %v2292
      %v2295 = vmul.f32 %v2276, %v2292
      %v2296 = vmul.f32 %v2281, %v2292
      %v2297 = vmul.f32 %v2284, %v2292
      %v2298 = vld [vmem:[%s6] sm:$0x1]
      %v2300 = vlaneseq
      %v2301 = vshrl.u32 %v2300, 7
      %v2302 = vsub.s32 0, %v2301
      %v2303 = vrot.slane %v2298, %v2302
      %v2305 = vadd.f32 %v2294, %v2303
      %v2306 = vadd.f32 %v2295, %v2303
      %v2307 = vadd.f32 %v2296, %v2303
      %v2308 = vadd.f32 %v2297, %v2303
      %v2309 = vmul.f32 %v2305, 0.5
      %v2310 = vmul.f32 %v2306, 0.5
      %v2311 = vmul.f32 %v2307, 0.5
      %v2312 = vmul.f32 %v2308, 0.5
      %v2313 = vmul.f32 %v2305, %v639
      %v2314 = vmul.f32 %v2306, %v639
      %v2315 = vmul.f32 %v2307, %v639
      %v2316 = vmul.f32 %v2308, %v639
      %v2317 = verf.f32.pop %v2313
      %v2318 = verf.f32.pop %v2314
      %v2319 = verf.f32.pop %v2315
      %v2320 = verf.f32.pop %v2316
      %v2321 = vadd.f32 %v2317, 1.0
      %v2322 = vadd.f32 %v2318, 1.0
      %v2323 = vadd.f32 %v2319, 1.0
      %v2324 = vadd.f32 %v2320, 1.0
      %v2325 = vmul.f32 %v2309, %v2321
      %v2326 = vmul.f32 %v2310, %v2322
      %v2327 = vmul.f32 %v2311, %v2323
      %v2328 = vmul.f32 %v2312, %v2324
      %2329 = vst [vmem:[#allocation5] sm:$0xff] -1e+30
      %2330 = vst [vmem:[#allocation5 + $0x8] sm:$0xff] -1e+30
      %2331 = vst [vmem:[#allocation5 + $0x10] sm:$0xff] -1e+30
      %2332 = vst [vmem:[#allocation5 + $0x18] sm:$0xff] -1e+30
      %2333 = vst [vmem:[#allocation5 + $0x20] sm:$0xff] -1e+30
      %2334 = vst [vmem:[#allocation5 + $0x4] sm:$0xff] %v2325
      %2335 = vst [vmem:[#allocation5 + $0xc] sm:$0xff] %v2326
      %2336 = vst [vmem:[#allocation5 + $0x14] sm:$0xff] %v2327
      %2337 = vst [vmem:[#allocation5 + $0x1c] sm:$0xff] %v2328
      %v2338 = vld [vmem:[#allocation5] sm:$0xff]
      %v2339 = vld [vmem:[#allocation5 + $0x8] sm:$0xff]
      %v2340 = vld [vmem:[#allocation5 + $0x10] sm:$0xff]
      %v2341 = vld [vmem:[#allocation5 + $0x18] sm:$0xff]
      %v2342 = vmax.f32 %v2338, -1e+30
      %v2343 = vmax.f32 %v2339, -1e+30
      %v2344 = vmax.f32 %v2340, -1e+30
      %v2345 = vmax.f32 %v2341, -1e+30
      %v2346 = vld [vmem:[#allocation5 + $0x1] sm:$0xff]
      %v2347 = vld [vmem:[#allocation5 + $0x9] sm:$0xff]
      %v2348 = vld [vmem:[#allocation5 + $0x11] sm:$0xff]
      %v2349 = vld [vmem:[#allocation5 + $0x19] sm:$0xff]
      %v2350 = vmax.f32 %v2342, %v2346
      %v2351 = vmax.f32 %v2343, %v2347
      %v2352 = vmax.f32 %v2344, %v2348
      %v2353 = vmax.f32 %v2345, %v2349
      %v2354 = vld [vmem:[#allocation5 + $0x2] sm:$0xff]
      %v2355 = vld [vmem:[#allocation5 + $0xa] sm:$0xff]
      %v2356 = vld [vmem:[#allocation5 + $0x12] sm:$0xff]
      %v2357 = vld [vmem:[#allocation5 + $0x1a] sm:$0xff]
      %v2358 = vmax.f32 %v2350, %v2354
      %v2359 = vmax.f32 %v2351, %v2355
      %v2360 = vmax.f32 %v2352, %v2356
      %v2361 = vmax.f32 %v2353, %v2357
      %v2362 = vld [vmem:[#allocation5 + $0x3] sm:$0xff]
      %v2363 = vld [vmem:[#allocation5 + $0xb] sm:$0xff]
      %v2364 = vld [vmem:[#allocation5 + $0x13] sm:$0xff]
      %v2365 = vld [vmem:[#allocation5 + $0x1b] sm:$0xff]
      %v2366 = vmax.f32 %v2358, %v2362
      %v2367 = vmax.f32 %v2359, %v2363
      %v2368 = vmax.f32 %v2360, %v2364
      %v2369 = vmax.f32 %v2361, %v2365
      %v2370 = vld [vmem:[#allocation5 + $0x4] sm:$0xff]
      %v2371 = vld [vmem:[#allocation5 + $0xc] sm:$0xff]
      %v2372 = vld [vmem:[#allocation5 + $0x14] sm:$0xff]
      %v2373 = vld [vmem:[#allocation5 + $0x1c] sm:$0xff]
      %v2374 = vmax.f32 %v2366, %v2370
      %v2375 = vmax.f32 %v2367, %v2371
      %v2376 = vmax.f32 %v2368, %v2372
      %v2377 = vmax.f32 %v2369, %v2373
      %v2378 = vld [vmem:[#allocation5 + $0x5] sm:$0xff]
      %v2379 = vld [vmem:[#allocation5 + $0xd] sm:$0xff]
      %v2380 = vld [vmem:[#allocation5 + $0x15] sm:$0xff]
      %v2381 = vld [vmem:[#allocation5 + $0x1d] sm:$0xff]
      %v2382 = vmax.f32 %v2374, %v2378
      %v2383 = vmax.f32 %v2375, %v2379
      %v2384 = vmax.f32 %v2376, %v2380
      %v2385 = vmax.f32 %v2377, %v2381
      %v2386 = vld [vmem:[#allocation5 + $0x6] sm:$0xff]
      %v2387 = vld [vmem:[#allocation5 + $0xe] sm:$0xff]
      %v2388 = vld [vmem:[#allocation5 + $0x16] sm:$0xff]
      %v2389 = vld [vmem:[#allocation5 + $0x1e] sm:$0xff]
      %v2390 = vmax.f32 %v2382, %v2386
      %v2391 = vmax.f32 %v2383, %v2387
      %v2392 = vmax.f32 %v2384, %v2388
      %v2393 = vmax.f32 %v2385, %v2389
      %v2394 = vld [vmem:[#allocation5 + $0x7] sm:$0xff]
      %v2395 = vld [vmem:[#allocation5 + $0xf] sm:$0xff]
      %v2396 = vld [vmem:[#allocation5 + $0x17] sm:$0xff]
      %v2397 = vld [vmem:[#allocation5 + $0x1f] sm:$0xff]
      %v2398 = vmax.f32 %v2390, %v2394
      %v2399 = vmax.f32 %v2391, %v2395
      %v2400 = vmax.f32 %v2392, %v2396
      %v2401 = vmax.f32 %v2393, %v2397
      %v2402 = vld [vmem:[#allocation5 + $0x8] sm:$0xff]
      %v2403 = vld [vmem:[#allocation5 + $0x10] sm:$0xff]
      %v2404 = vld [vmem:[#allocation5 + $0x18] sm:$0xff]
      %v2405 = vld [vmem:[#allocation5 + $0x20] sm:$0xff]
      %v2406 = vmax.f32 %v2398, %v2402
      %v2407 = vmax.f32 %v2399, %v2403
      %v2408 = vmax.f32 %v2400, %v2404
      %v2409 = vmax.f32 %v2401, %v2405
      %vm2410 = vcmask 261120
      %v2411 = vsel %vm2410, %v852, 0
      %v2413 = vsel %vm2410, %v853, 0
      %2415 = vmatprep.subr.mxu0 0.0
      %2416 = vmatpush1.msra.mxu0 0.0
      %2417 = vmatprep.subr.mxu0 0.0
      %2418 = vmatpush1.msra.mxu0 0.0
      %2419 = vmatprep.subr.mxu0 0.0
      %2420 = vmatpush1.msra.mxu0 0.0
      %2421 = vmatprep.subr.mxu0 0.0
      %2422 = vmatpush1.msra.mxu0 0.0
      %2423 = vmatprep.subr.mxu0 0.0
      %2424 = vmatpush1.msra.mxu0 0.0
      %2425 = vmatprep.subr.mxu0 0.0
      %2426 = vmatpush1.msra.mxu0 0.0
      %2427 = vmatprep.subr.mxu0 0.0
      %2428 = vmatpush1.msra.mxu0 0.0
      %2429 = vmatprep.subr.mxu0 0.0
      %2430 = vmatpush1.msra.mxu0 0.0
      %2431 = vmatprep.subr.mxu0 0.0
      %2432 = vmatpush1.msra.mxu0 0.0
      %2433 = vmatprep.subr.mxu0 0.0
      %2434 = vmatpush1.msra.mxu0 0.0
      %2435 = vmatprep.subr.mxu0 0.0
      %2436 = vmatpush1.msra.mxu0 0.0
      %2437 = vmatprep.subr.mxu0 0.0
      %2438 = vmatpush1.msra.mxu0 0.0
      %2439 = vmatprep.subr.mxu0 0.0
      %2440 = vmatpush1.msra.mxu0 %v2409
      %2441 = vmatprep.subr.mxu0 0.0
      %2442 = vmatpush1.msra.mxu0 %v2408
      %2443 = vmatprep.subr.mxu0 0.0
      %2444 = vmatpush1.msra.mxu0 %v2407
      %2445 = vmatprep.subr.mxu0 0.0
      %2446 = vmatpush1.msra.mxu0 %v2406
      %2447 = vmatprep.subr.mxu0 0.0
      %2448 = vmatpush2.msra.mxu0 0.0
      %2449 = vmatprep.subr.mxu0 0.0
      %2450 = vmatpush2.msra.mxu0 0.0
      %2451 = vmatprep.subr.mxu0 0.0
      %2452 = vmatpush2.msra.mxu0 0.0
      %2453 = vmatprep.subr.mxu0 0.0
      %2454 = vmatpush2.msra.mxu0 0.0
      %2455 = vmatprep.subr.mxu0 0.0
      %2456 = vmatpush2.msra.mxu0 0.0
      %2457 = vmatprep.subr.mxu0 0.0
      %2458 = vmatpush2.msra.mxu0 0.0
      %2459 = vmatprep.subr.mxu0 0.0
      %2460 = vmatpush2.msra.mxu0 0.0
      %2461 = vmatprep.subr.mxu0 0.0
      %2462 = vmatpush2.msra.mxu0 0.0
      %2463 = vmatprep.subr.mxu0 0.0
      %2464 = vmatpush2.msra.mxu0 0.0
      %2465 = vmatprep.subr.mxu0 0.0
      %2466 = vmatpush2.msra.mxu0 0.0
      %2467 = vmatprep.subr.mxu0 0.0
      %2468 = vmatpush2.msra.mxu0 0.0
      %2469 = vmatprep.subr.mxu0 0.0
      %2470 = vmatpush2.msra.mxu0 0.0
      %2471 = vmatprep.subr.mxu0 0.0
      %2472 = vmatpush2.msra.mxu0 0.0
      %2473 = vmatprep.subr.mxu0 0.0
      %2474 = vmatpush2.msra.mxu0 0.0
      %2475 = vmatprep.subr.mxu0 0.0
      %2476 = vmatpush2.msra.mxu0 0.0
      %2477 = vmatprep.subr.mxu0 0.0
      %2478 = vmatpush2.msra.mxu0 0.0
      %2479 = vmatprep.mubr.f32.mxu0 0.0
      %2480 = vmatmul.mubr.f32.gmra.mxu0 %v2411
      %v2481 = vpop.f32.mrf.mxu0
      %v2482 = vadd.f32 0.0, %v2481
      %v2483 = vpop.f32.mrf.mxu0
      %2484 = vmatprep.mubr.f32.mxu0 0.0
      %2485 = vmatmul.mubr.f32.gmra.mxu0 %v2413
      %v2486 = vpop.f32.mrf.mxu0
      %v2487 = vadd.f32 0.0, %v2486
      %v2488 = vpop.f32.mrf.mxu0
      %2489 = vdwg.mxu0
      %2490 = vst [vmem:[#allocation6] sm:$0xf] 0
      %2491 = vst [vmem:[#allocation6 + $0x4] sm:$0xf] 0
      %2492 = vst [vmem:[#allocation6 + $0x8] sm:$0xf] 0
      %v2493 = vpack.c.bf16 %v2487, %v2482
      %v2495 = vunpack.c.l.b16 %v2493
      %v2496 = vunpack.c.h.b16 %v2493
      %v2497 = vpack.c.b16 %v2495, %v2495
      %v2498 = vpack.c.b16 %v2496, %v2496
      %v2499 = vrot.slane %v2497, 6
      %v2500 = vrot.slane %v2499, 4
      %v2501 = vrot.slane %v2498, 6
      %v2502 = vsel %vm973, %v2500, %v2501
      %v2503 = vrot.slane %v2501, 4
      %2507 = vst [vmem:[#allocation6] sm:$0xc] %v2499
      %2508 = vst [vmem:[#allocation6 + $0x4] sm:$0xf] %v2502
      %2509 = vst [vmem:[#allocation6 + $0x8] sm:$0x3] %v2503
      %v2510 = vld [vmem:[#allocation6] sm:$0xf]
      %v2511 = vld [vmem:[#allocation6 + $0x4] sm:$0xf]
      %2512 = vst [vmem:[#allocation7] sm:$0xf] %v2510
      %2513 = vst [vmem:[#allocation7 + $0x24] sm:$0xf] %v2511
      %v2514 = vld [vmem:[#allocation6] sm:$0xf]
      %v2515 = vld [vmem:[#allocation6 + $0x4] sm:$0xf]
      %v2516 = vld [vmem:[#allocation6 + $0x8] sm:$0x1]
      %v2518 = vshrl.u32 %v2514, 16
      %v2520 = vrot.slane %v2518, 4
      %v2521 = vshll.u32 %v2514, 16
      %v2523 = vrot.slane %v2521, 5
      %v2524 = vor.u32 %v2520, %v2523
      %v2525 = vrot.slane %v2524, 4
      %v2527 = vshll.u32 %v2515, 16
      %v2529 = vrot.slane %v2527, 5
      %v2530 = vsel %vm1010, %v2525, %v2529
      %v2531 = vshrl.u32 %v2515, 16
      %v2533 = vrot.slane %v2531, 4
      %v2534 = vor.u32 %v2533, %v2529
      %v2535 = vrot.slane %v2534, 4
      %v2537 = vshll.u32 %v2516, 16
      %v2539 = vrot.slane %v2537, 5
      %v2540 = vsel %vm1010, %v2535, %v2539
      %2543 = vst [vmem:[#allocation7 + $0x4] sm:$0xf] %v2530
      %2544 = vst [vmem:[#allocation7 + $0x28] sm:$0xf] %v2540
      %v2545 = vld [vmem:[#allocation6] sm:$0xe]
      %v2546 = vld [vmem:[#allocation6 + $0x4] sm:$0xf]
      %v2547 = vld [vmem:[#allocation6 + $0x8] sm:$0x1]
      %v2551 = vrot.slane %v2545, 5
      %v2552 = vrot.slane %v2551, 4
      %v2553 = vrot.slane %v2546, 5
      %v2554 = vsel %vm1075, %v2552, %v2553
      %v2555 = vrot.slane %v2553, 4
      %v2556 = vrot.slane %v2547, 5
      %v2557 = vsel %vm1075, %v2555, %v2556
      %2560 = vst [vmem:[#allocation7 + $0x8] sm:$0xf] %v2554
      %2561 = vst [vmem:[#allocation7 + $0x2c] sm:$0xf] %v2557
      %v2562 = vld [vmem:[#allocation6] sm:$0xe]
      %v2563 = vld [vmem:[#allocation6 + $0x4] sm:$0xf]
      %v2564 = vld [vmem:[#allocation6 + $0x8] sm:$0x3]
      %v2566 = vshrl.u32 %v2562, 16
      %v2568 = vrot.slane %v2566, 5
      %v2569 = vshll.u32 %v2562, 16
      %v2571 = vrot.slane %v2569, 6
      %v2572 = vor.u32 %v2568, %v2571
      %v2573 = vrot.slane %v2572, 4
      %v2575 = vshrl.u32 %v2563, 16
      %v2577 = vrot.slane %v2575, 5
      %v2578 = vshll.u32 %v2563, 16
      %v2580 = vrot.slane %v2578, 6
      %v2581 = vor.u32 %v2577, %v2580
      %v2582 = vsel %vm1104, %v2573, %v2581
      %v2583 = vrot.slane %v2581, 4
      %v2585 = vshrl.u32 %v2564, 16
      %v2587 = vrot.slane %v2585, 5
      %v2588 = vshll.u32 %v2564, 16
      %v2590 = vrot.slane %v2588, 6
      %v2591 = vor.u32 %v2587, %v2590
      %v2592 = vsel %vm1104, %v2583, %v2591
      %2595 = vst [vmem:[#allocation7 + $0xc] sm:$0xf] %v2582
      %2596 = vst [vmem:[#allocation7 + $0x30] sm:$0xf] %v2592
      %v2597 = vld [vmem:[#allocation6] sm:$0xc]
      %v2598 = vld [vmem:[#allocation6 + $0x4] sm:$0xf]
      %v2599 = vld [vmem:[#allocation6 + $0x8] sm:$0x3]
      %v2603 = vrot.slane %v2597, 6
      %v2604 = vrot.slane %v2603, 4
      %v2605 = vrot.slane %v2598, 6
      %v2606 = vsel %vm973, %v2604, %v2605
      %v2607 = vrot.slane %v2605, 4
      %v2608 = vrot.slane %v2599, 6
      %v2609 = vsel %vm973, %v2607, %v2608
      %2612 = vst [vmem:[#allocation7 + $0x10] sm:$0xf] %v2606
      %2613 = vst [vmem:[#allocation7 + $0x34] sm:$0xf] %v2609
      %v2614 = vld [vmem:[#allocation6] sm:$0xc]
      %v2615 = vld [vmem:[#allocation6 + $0x4] sm:$0xf]
      %v2616 = vld [vmem:[#allocation6 + $0x8] sm:$0x7]
      %v2618 = vshrl.u32 %v2614, 16
      %v2620 = vrot.slane %v2618, 6
      %v2621 = vshll.u32 %v2614, 16
      %v2623 = vrot.slane %v2621, 7
      %v2624 = vor.u32 %v2620, %v2623
      %v2625 = vrot.slane %v2624, 4
      %v2627 = vshrl.u32 %v2615, 16
      %v2629 = vrot.slane %v2627, 6
      %v2630 = vshll.u32 %v2615, 16
      %v2632 = vrot.slane %v2630, 7
      %v2633 = vor.u32 %v2629, %v2632
      %v2634 = vsel %vm1199, %v2625, %v2633
      %v2635 = vrot.slane %v2633, 4
      %v2637 = vshrl.u32 %v2616, 16
      %v2639 = vrot.slane %v2637, 6
      %v2640 = vshll.u32 %v2616, 16
      %v2642 = vrot.slane %v2640, 7
      %v2643 = vor.u32 %v2639, %v2642
      %v2644 = vsel %vm1199, %v2635, %v2643
      %2647 = vst [vmem:[#allocation7 + $0x14] sm:$0xf] %v2634
      %2648 = vst [vmem:[#allocation7 + $0x38] sm:$0xf] %v2644
      %v2649 = vld [vmem:[#allocation6] sm:$0x8]
      %v2650 = vld [vmem:[#allocation6 + $0x4] sm:$0xf]
      %v2651 = vld [vmem:[#allocation6 + $0x8] sm:$0x7]
      %v2655 = vrot.slane %v2649, 7
      %v2656 = vrot.slane %v2655, 4
      %v2657 = vrot.slane %v2650, 7
      %v2658 = vsel %vm1268, %v2656, %v2657
      %v2659 = vrot.slane %v2657, 4
      %v2660 = vrot.slane %v2651, 7
      %v2661 = vsel %vm1268, %v2659, %v2660
      %2664 = vst [vmem:[#allocation7 + $0x18] sm:$0xf] %v2658
      %2665 = vst [vmem:[#allocation7 + $0x3c] sm:$0xf] %v2661
      %v2666 = vld [vmem:[#allocation6] sm:$0x8]
      %v2667 = vld [vmem:[#allocation6 + $0x4] sm:$0xf]
      %v2668 = vld [vmem:[#allocation6 + $0x8] sm:$0xf]
      %v2670 = vshrl.u32 %v2666, 16
      %v2672 = vrot.slane %v2670, 7
      %v2673 = vrot.slane %v2672, 4
      %v2675 = vshrl.u32 %v2667, 16
      %v2677 = vrot.slane %v2675, 7
      %v2678 = vshll.u32 %v2667, 16
      %v2680 = vor.u32 %v2677, %v2678
      %v2681 = vsel %vm1297, %v2673, %v2680
      %v2682 = vrot.slane %v2677, 4
      %v2684 = vshrl.u32 %v2668, 16
      %v2686 = vrot.slane %v2684, 7
      %v2687 = vshll.u32 %v2668, 16
      %v2689 = vor.u32 %v2686, %v2687
      %v2690 = vsel %vm1297, %v2682, %v2689
      %2693 = vst [vmem:[#allocation7 + $0x1c] sm:$0xf] %v2681
      %2694 = vst [vmem:[#allocation7 + $0x40] sm:$0xf] %v2690
      %v2695 = vld [vmem:[#allocation6 + $0x4] sm:$0xf]
      %v2696 = vld [vmem:[#allocation6 + $0x8] sm:$0xf]
      %2697 = vst [vmem:[#allocation7 + $0x20] sm:$0xf] %v2695
      %2698 = vst [vmem:[#allocation7 + $0x44] sm:$0xf] %v2696
      %v2699 = vld [vmem:[#allocation7] sm:$0xff]
      %v2700 = vld [vmem:[#allocation7 + $0x8] sm:$0xff]
      %v2701 = vld [vmem:[#allocation7 + $0x10] sm:$0xff]
      %v2702 = vld [vmem:[#allocation7 + $0x18] sm:$0xff]
      %v2703 = vld [vmem:[#allocation7 + $0x20] sm:$0xf]
      %v2704 = vld [vmem:[#allocation7 + $0x24] sm:$0xff]
      %v2705 = vld [vmem:[#allocation7 + $0x2c] sm:$0xff]
      %v2706 = vld [vmem:[#allocation7 + $0x34] sm:$0xff]
      %v2707 = vld [vmem:[#allocation7 + $0x3c] sm:$0xff]
      %v2708 = vld [vmem:[#allocation7 + $0x44] sm:$0xf]
      %v2709 = vld [vmem:[%s7] sm:$0xff]
      %v2710 = vld [vmem:[%s7 + $0x8] sm:$0xff]
      %v2711 = vld [vmem:[%s7 + $0x10] sm:$0xff]
      %v2712 = vld [vmem:[%s7 + $0x18] sm:$0xff]
      %v2713 = vld [vmem:[%s7 + $0x20] sm:$0xff]
      %v2714 = vld [vmem:[%s7 + $0x28] sm:$0xff]
      %v2715 = vld [vmem:[%s7 + $0x30] sm:$0xff]
      %v2716 = vld [vmem:[%s7 + $0x38] sm:$0xff]
      %v2717 = vld [vmem:[%s7 + $0x40] sm:$0xff]
      %v2718 = vld [vmem:[%s7 + $0x48] sm:$0xff]
      %v2719 = vld [vmem:[%s7 + $0x50] sm:$0xff]
      %v2720 = vld [vmem:[%s7 + $0x58] sm:$0xff]
      %v2721 = vld [vmem:[%s7 + $0x60] sm:$0xff]
      %v2722 = vld [vmem:[%s7 + $0x68] sm:$0xff]
      %v2723 = vld [vmem:[%s7 + $0x70] sm:$0xff]
      %v2724 = vld [vmem:[%s7 + $0x78] sm:$0xff]
      %v2725 = vld [vmem:[%s7 + $0x80] sm:$0xff]
      %v2726 = vld [vmem:[%s7 + $0x88] sm:$0xff]
      %v2727 = vld [vmem:[%s7 + $0x90] sm:$0xff]
      %v2728 = vld [vmem:[%s7 + $0x98] sm:$0xff]
      %v2729 = vld [vmem:[%s7 + $0xa0] sm:$0xff]
      %v2730 = vld [vmem:[%s7 + $0xa8] sm:$0xff]
      %v2731 = vld [vmem:[%s7 + $0xb0] sm:$0xff]
      %v2732 = vld [vmem:[%s7 + $0xb8] sm:$0xff]
      %v2733 = vld [vmem:[%s7 + $0xc0] sm:$0xff]
      %v2734 = vld [vmem:[%s7 + $0xc8] sm:$0xff]
      %v2735 = vld [vmem:[%s7 + $0xd0] sm:$0xff]
      %v2736 = vld [vmem:[%s7 + $0xd8] sm:$0xff]
      %v2737 = vld [vmem:[%s7 + $0xe0] sm:$0xff]
      %v2738 = vld [vmem:[%s7 + $0xe8] sm:$0xff]
      %v2739 = vld [vmem:[%s7 + $0xf0] sm:$0xff]
      %v2740 = vld [vmem:[%s7 + $0xf8] sm:$0xff]
      %v2741 = vld [vmem:[%s7 + $0x100] sm:$0xff]
      %v2742 = vld [vmem:[%s7 + $0x108] sm:$0xff]
      %v2743 = vld [vmem:[%s7 + $0x110] sm:$0xff]
      %v2744 = vld [vmem:[%s7 + $0x118] sm:$0xff]
      %v2745 = vld [vmem:[%s7 + $0x120] sm:$0xff]
      %v2746 = vld [vmem:[%s7 + $0x128] sm:$0xff]
      %v2747 = vld [vmem:[%s7 + $0x130] sm:$0xff]
      %v2748 = vld [vmem:[%s7 + $0x138] sm:$0xff]
      %v2749 = vld [vmem:[%s7 + $0x140] sm:$0xff]
      %v2750 = vld [vmem:[%s7 + $0x148] sm:$0xff]
      %v2751 = vld [vmem:[%s7 + $0x150] sm:$0xff]
      %v2752 = vld [vmem:[%s7 + $0x158] sm:$0xff]
      %v2753 = vld [vmem:[%s7 + $0x160] sm:$0xff]
      %v2754 = vld [vmem:[%s7 + $0x168] sm:$0xff]
      %v2755 = vld [vmem:[%s7 + $0x170] sm:$0xff]
      %v2756 = vld [vmem:[%s7 + $0x178] sm:$0xff]
      %v2757 = vld [vmem:[%s7 + $0x180] sm:$0xff]
      %v2758 = vld [vmem:[%s7 + $0x188] sm:$0xff]
      %v2759 = vld [vmem:[%s7 + $0x190] sm:$0xff]
      %v2760 = vld [vmem:[%s7 + $0x198] sm:$0xff]
      %v2761 = vld [vmem:[%s7 + $0x1a0] sm:$0xff]
      %v2762 = vld [vmem:[%s7 + $0x1a8] sm:$0xff]
      %v2763 = vld [vmem:[%s7 + $0x1b0] sm:$0xff]
      %v2764 = vld [vmem:[%s7 + $0x1b8] sm:$0xff]
      %v2765 = vld [vmem:[%s7 + $0x1c0] sm:$0xff]
      %v2766 = vld [vmem:[%s7 + $0x1c8] sm:$0xff]
      %v2767 = vld [vmem:[%s7 + $0x1d0] sm:$0xff]
      %v2768 = vld [vmem:[%s7 + $0x1d8] sm:$0xff]
      %v2769 = vld [vmem:[%s7 + $0x1e0] sm:$0xff]
      %v2770 = vld [vmem:[%s7 + $0x1e8] sm:$0xff]
      %v2771 = vld [vmem:[%s7 + $0x1f0] sm:$0xff]
      %v2772 = vld [vmem:[%s7 + $0x1f8] sm:$0xff]
      %v2773 = vld [vmem:[%s7 + $0x200] sm:$0xff]
      %v2774 = vld [vmem:[%s7 + $0x208] sm:$0xff]
      %v2775 = vld [vmem:[%s7 + $0x210] sm:$0xff]
      %v2776 = vld [vmem:[%s7 + $0x218] sm:$0xff]
      %v2777 = vld [vmem:[%s7 + $0x220] sm:$0xff]
      %v2778 = vld [vmem:[%s7 + $0x228] sm:$0xff]
      %v2779 = vld [vmem:[%s7 + $0x230] sm:$0xff]
      %v2780 = vld [vmem:[%s7 + $0x238] sm:$0xff]
      %v2781 = vld [vmem:[%s7 + $0x240] sm:$0xff]
      %v2782 = vld [vmem:[%s7 + $0x248] sm:$0xff]
      %v2783 = vld [vmem:[%s7 + $0x250] sm:$0xff]
      %v2784 = vld [vmem:[%s7 + $0x258] sm:$0xff]
      %v2785 = vld [vmem:[%s7 + $0x260] sm:$0xff]
      %v2786 = vld [vmem:[%s7 + $0x268] sm:$0xff]
      %v2787 = vld [vmem:[%s7 + $0x270] sm:$0xff]
      %v2788 = vld [vmem:[%s7 + $0x278] sm:$0xff]
      %v2789 = vld [vmem:[%s7 + $0x280] sm:$0xff]
      %v2790 = vld [vmem:[%s7 + $0x288] sm:$0xff]
      %v2791 = vld [vmem:[%s7 + $0x290] sm:$0xff]
      %v2792 = vld [vmem:[%s7 + $0x298] sm:$0xff]
      %v2793 = vld [vmem:[%s7 + $0x2a0] sm:$0xff]
      %v2794 = vld [vmem:[%s7 + $0x2a8] sm:$0xff]
      %v2795 = vld [vmem:[%s7 + $0x2b0] sm:$0xff]
      %v2796 = vld [vmem:[%s7 + $0x2b8] sm:$0xff]
      %v2797 = vld [vmem:[%s7 + $0x2c0] sm:$0xff]
      %v2798 = vld [vmem:[%s7 + $0x2c8] sm:$0xff]
      %v2799 = vld [vmem:[%s7 + $0x2d0] sm:$0xff]
      %v2800 = vld [vmem:[%s7 + $0x2d8] sm:$0xff]
      %v2801 = vld [vmem:[%s7 + $0x2e0] sm:$0xff]
      %v2802 = vld [vmem:[%s7 + $0x2e8] sm:$0xff]
      %v2803 = vld [vmem:[%s7 + $0x2f0] sm:$0xff]
      %v2804 = vld [vmem:[%s7 + $0x2f8] sm:$0xff]
      %v2805 = vld [vmem:[%s7 + $0x300] sm:$0xff]
      %v2806 = vld [vmem:[%s7 + $0x308] sm:$0xff]
      %v2807 = vld [vmem:[%s7 + $0x310] sm:$0xff]
      %v2808 = vld [vmem:[%s7 + $0x318] sm:$0xff]
      %v2809 = vld [vmem:[%s7 + $0x320] sm:$0xff]
      %v2810 = vld [vmem:[%s7 + $0x328] sm:$0xff]
      %v2811 = vld [vmem:[%s7 + $0x330] sm:$0xff]
      %v2812 = vld [vmem:[%s7 + $0x338] sm:$0xff]
      %v2813 = vld [vmem:[%s7 + $0x340] sm:$0xff]
      %v2814 = vld [vmem:[%s7 + $0x348] sm:$0xff]
      %v2815 = vld [vmem:[%s7 + $0x350] sm:$0xff]
      %v2816 = vld [vmem:[%s7 + $0x358] sm:$0xff]
      %v2817 = vld [vmem:[%s7 + $0x360] sm:$0xff]
      %v2818 = vld [vmem:[%s7 + $0x368] sm:$0xff]
      %v2819 = vld [vmem:[%s7 + $0x370] sm:$0xff]
      %v2820 = vld [vmem:[%s7 + $0x378] sm:$0xff]
      %v2821 = vld [vmem:[%s7 + $0x380] sm:$0xff]
      %v2822 = vld [vmem:[%s7 + $0x388] sm:$0xff]
      %v2823 = vld [vmem:[%s7 + $0x390] sm:$0xff]
      %v2824 = vld [vmem:[%s7 + $0x398] sm:$0xff]
      %v2825 = vld [vmem:[%s7 + $0x3a0] sm:$0xff]
      %v2826 = vld [vmem:[%s7 + $0x3a8] sm:$0xff]
      %v2827 = vld [vmem:[%s7 + $0x3b0] sm:$0xff]
      %v2828 = vld [vmem:[%s7 + $0x3b8] sm:$0xff]
      %v2829 = vld [vmem:[%s7 + $0x3c0] sm:$0xff]
      %v2830 = vld [vmem:[%s7 + $0x3c8] sm:$0xff]
      %v2831 = vld [vmem:[%s7 + $0x3d0] sm:$0xff]
      %v2832 = vld [vmem:[%s7 + $0x3d8] sm:$0xff]
      %v2833 = vld [vmem:[%s7 + $0x3e0] sm:$0xff]
      %v2834 = vld [vmem:[%s7 + $0x3e8] sm:$0xff]
      %v2835 = vld [vmem:[%s7 + $0x3f0] sm:$0xff]
      %v2836 = vld [vmem:[%s7 + $0x3f8] sm:$0xff]
      %v2837 = vld [vmem:[%s7 + $0x400] sm:$0xff]
      %v2838 = vld [vmem:[%s7 + $0x408] sm:$0xff]
      %v2839 = vld [vmem:[%s7 + $0x410] sm:$0xff]
      %v2840 = vld [vmem:[%s7 + $0x418] sm:$0xff]
      %v2841 = vld [vmem:[%s7 + $0x420] sm:$0xff]
      %v2842 = vld [vmem:[%s7 + $0x428] sm:$0xff]
      %v2843 = vld [vmem:[%s7 + $0x430] sm:$0xff]
      %v2844 = vld [vmem:[%s7 + $0x438] sm:$0xff]
      %v2845 = vld [vmem:[%s7 + $0x440] sm:$0xff]
      %v2846 = vld [vmem:[%s7 + $0x448] sm:$0xff]
      %v2847 = vld [vmem:[%s7 + $0x450] sm:$0xff]
      %v2848 = vld [vmem:[%s7 + $0x458] sm:$0xff]
      %v2849 = vld [vmem:[%s7 + $0x460] sm:$0xff]
      %v2850 = vld [vmem:[%s7 + $0x468] sm:$0xff]
      %v2851 = vld [vmem:[%s7 + $0x470] sm:$0xff]
      %v2852 = vld [vmem:[%s7 + $0x478] sm:$0xff]
      %v2863 = vunpack.c.l.b16 %v2699
      %v2864 = vunpack.c.h.b16 %v2699
      %v2865 = vunpack.c.l.b16 %v2700
      %v2866 = vunpack.c.h.b16 %v2700
      %v2867 = vunpack.c.l.b16 %v2701
      %v2868 = vunpack.c.h.b16 %v2701
      %v2869 = vunpack.c.l.b16 %v2702
      %v2870 = vunpack.c.h.b16 %v2702
      %v2871 = vunpack.c.l.b16 %v2703
      %v2872 = vunpack.c.l.b16 %v2704
      %v2873 = vunpack.c.h.b16 %v2704
      %v2874 = vunpack.c.l.b16 %v2705
      %v2875 = vunpack.c.h.b16 %v2705
      %v2876 = vunpack.c.l.b16 %v2706
      %v2877 = vunpack.c.h.b16 %v2706
      %v2878 = vunpack.c.l.b16 %v2707
      %v2879 = vunpack.c.h.b16 %v2707
      %v2880 = vunpack.c.l.b16 %v2708
      %v2881 = vpack.c.b16 %v2872, %v2863
      %v2882 = vpack.c.b16 %v2873, %v2864
      %v2883 = vpack.c.b16 %v2874, %v2865
      %v2884 = vpack.c.b16 %v2875, %v2866
      %v2885 = vpack.c.b16 %v2876, %v2867
      %v2886 = vpack.c.b16 %v2877, %v2868
      %v2887 = vpack.c.b16 %v2878, %v2869
      %v2888 = vpack.c.b16 %v2879, %v2870
      %v2889 = vpack.c.b16 %v2880, %v2871
      %v3043 = vunpack.c.l.b16 %v2709
      %v3044 = vunpack.c.h.b16 %v2709
      %v3045 = vunpack.c.l.b16 %v2710
      %v3046 = vunpack.c.h.b16 %v2710
      %v3047 = vunpack.c.l.b16 %v2711
      %v3048 = vunpack.c.h.b16 %v2711
      %v3049 = vunpack.c.l.b16 %v2712
      %v3050 = vunpack.c.h.b16 %v2712
      %v3051 = vunpack.c.l.b16 %v2713
      %v3052 = vunpack.c.h.b16 %v2713
      %v3053 = vunpack.c.l.b16 %v2714
      %v3054 = vunpack.c.h.b16 %v2714
      %v3055 = vunpack.c.l.b16 %v2715
      %v3056 = vunpack.c.h.b16 %v2715
      %v3057 = vunpack.c.l.b16 %v2716
      %v3058 = vunpack.c.h.b16 %v2716
      %v3059 = vunpack.c.l.b16 %v2717
      %v3060 = vunpack.c.h.b16 %v2717
      %v3061 = vunpack.c.l.b16 %v2718
      %v3062 = vunpack.c.h.b16 %v2718
      %v3063 = vunpack.c.l.b16 %v2719
      %v3064 = vunpack.c.h.b16 %v2719
      %v3065 = vunpack.c.l.b16 %v2720
      %v3066 = vunpack.c.h.b16 %v2720
      %v3067 = vunpack.c.l.b16 %v2721
      %v3068 = vunpack.c.h.b16 %v2721
      %v3069 = vunpack.c.l.b16 %v2722
      %v3070 = vunpack.c.h.b16 %v2722
      %v3071 = vunpack.c.l.b16 %v2723
      %v3072 = vunpack.c.h.b16 %v2723
      %v3073 = vunpack.c.l.b16 %v2724
      %v3074 = vunpack.c.h.b16 %v2724
      %v3075 = vunpack.c.l.b16 %v2725
      %v3076 = vunpack.c.h.b16 %v2725
      %v3077 = vunpack.c.l.b16 %v2726
      %v3078 = vunpack.c.h.b16 %v2726
      %v3079 = vunpack.c.l.b16 %v2727
      %v3080 = vunpack.c.h.b16 %v2727
      %v3081 = vunpack.c.l.b16 %v2728
      %v3082 = vunpack.c.h.b16 %v2728
      %v3083 = vunpack.c.l.b16 %v2729
      %v3084 = vunpack.c.h.b16 %v2729
      %v3085 = vunpack.c.l.b16 %v2730
      %v3086 = vunpack.c.h.b16 %v2730
      %v3087 = vunpack.c.l.b16 %v2731
      %v3088 = vunpack.c.h.b16 %v2731
      %v3089 = vunpack.c.l.b16 %v2732
      %v3090 = vunpack.c.h.b16 %v2732
      %v3091 = vunpack.c.l.b16 %v2733
      %v3092 = vunpack.c.h.b16 %v2733
      %v3093 = vunpack.c.l.b16 %v2734
      %v3094 = vunpack.c.h.b16 %v2734
      %v3095 = vunpack.c.l.b16 %v2735
      %v3096 = vunpack.c.h.b16 %v2735
      %v3097 = vunpack.c.l.b16 %v2736
      %v3098 = vunpack.c.h.b16 %v2736
      %v3099 = vunpack.c.l.b16 %v2737
      %v3100 = vunpack.c.h.b16 %v2737
      %v3101 = vunpack.c.l.b16 %v2738
      %v3102 = vunpack.c.h.b16 %v2738
      %v3103 = vunpack.c.l.b16 %v2739
      %v3104 = vunpack.c.h.b16 %v2739
      %v3105 = vunpack.c.l.b16 %v2740
      %v3106 = vunpack.c.h.b16 %v2740
      %v3107 = vunpack.c.l.b16 %v2741
      %v3108 = vunpack.c.h.b16 %v2741
      %v3109 = vunpack.c.l.b16 %v2742
      %v3110 = vunpack.c.h.b16 %v2742
      %v3111 = vunpack.c.l.b16 %v2743
      %v3112 = vunpack.c.h.b16 %v2743
      %v3113 = vunpack.c.l.b16 %v2744
      %v3114 = vunpack.c.h.b16 %v2744
      %v3115 = vunpack.c.l.b16 %v2745
      %v3116 = vunpack.c.h.b16 %v2745
      %v3117 = vunpack.c.l.b16 %v2746
      %v3118 = vunpack.c.h.b16 %v2746
      %v3119 = vunpack.c.l.b16 %v2747
      %v3120 = vunpack.c.h.b16 %v2747
      %v3121 = vunpack.c.l.b16 %v2748
      %v3122 = vunpack.c.h.b16 %v2748
      %v3123 = vunpack.c.l.b16 %v2749
      %v3124 = vunpack.c.h.b16 %v2749
      %v3125 = vunpack.c.l.b16 %v2750
      %v3126 = vunpack.c.h.b16 %v2750
      %v3127 = vunpack.c.l.b16 %v2751
      %v3128 = vunpack.c.h.b16 %v2751
      %v3129 = vunpack.c.l.b16 %v2752
      %v3130 = vunpack.c.h.b16 %v2752
      %v3131 = vunpack.c.l.b16 %v2753
      %v3132 = vunpack.c.h.b16 %v2753
      %v3133 = vunpack.c.l.b16 %v2754
      %v3134 = vunpack.c.h.b16 %v2754
      %v3135 = vunpack.c.l.b16 %v2755
      %v3136 = vunpack.c.h.b16 %v2755
      %v3137 = vunpack.c.l.b16 %v2756
      %v3138 = vunpack.c.h.b16 %v2756
      %v3139 = vunpack.c.l.b16 %v2757
      %v3140 = vunpack.c.h.b16 %v2757
      %v3141 = vunpack.c.l.b16 %v2758
      %v3142 = vunpack.c.h.b16 %v2758
      %v3143 = vunpack.c.l.b16 %v2759
      %v3144 = vunpack.c.h.b16 %v2759
      %v3145 = vunpack.c.l.b16 %v2760
      %v3146 = vunpack.c.h.b16 %v2760
      %v3147 = vunpack.c.l.b16 %v2761
      %v3148 = vunpack.c.h.b16 %v2761
      %v3149 = vunpack.c.l.b16 %v2762
      %v3150 = vunpack.c.h.b16 %v2762
      %v3151 = vunpack.c.l.b16 %v2763
      %v3152 = vunpack.c.h.b16 %v2763
      %v3153 = vunpack.c.l.b16 %v2764
      %v3154 = vunpack.c.h.b16 %v2764
      %v3155 = vunpack.c.l.b16 %v2765
      %v3156 = vunpack.c.h.b16 %v2765
      %v3157 = vunpack.c.l.b16 %v2766
      %v3158 = vunpack.c.h.b16 %v2766
      %v3159 = vunpack.c.l.b16 %v2767
      %v3160 = vunpack.c.h.b16 %v2767
      %v3161 = vunpack.c.l.b16 %v2768
      %v3162 = vunpack.c.h.b16 %v2768
      %v3163 = vunpack.c.l.b16 %v2769
      %v3164 = vunpack.c.h.b16 %v2769
      %v3165 = vunpack.c.l.b16 %v2770
      %v3166 = vunpack.c.h.b16 %v2770
      %v3167 = vunpack.c.l.b16 %v2771
      %v3168 = vunpack.c.h.b16 %v2771
      %v3169 = vunpack.c.l.b16 %v2772
      %v3170 = vunpack.c.h.b16 %v2772
      %v3171 = vunpack.c.l.b16 %v2773
      %v3172 = vunpack.c.h.b16 %v2773
      %v3173 = vunpack.c.l.b16 %v2774
      %v3174 = vunpack.c.h.b16 %v2774
      %v3175 = vunpack.c.l.b16 %v2775
      %v3176 = vunpack.c.h.b16 %v2775
      %v3177 = vunpack.c.l.b16 %v2776
      %v3178 = vunpack.c.h.b16 %v2776
      %v3179 = vunpack.c.l.b16 %v2777
      %v3180 = vunpack.c.h.b16 %v2777
      %v3181 = vunpack.c.l.b16 %v2778
      %v3182 = vunpack.c.h.b16 %v2778
      %v3183 = vunpack.c.l.b16 %v2779
      %v3184 = vunpack.c.h.b16 %v2779
      %v3185 = vunpack.c.l.b16 %v2780
      %v3186 = vunpack.c.h.b16 %v2780
      %v3187 = vunpack.c.l.b16 %v2781
      %v3188 = vunpack.c.h.b16 %v2781
      %v3189 = vunpack.c.l.b16 %v2782
      %v3190 = vunpack.c.h.b16 %v2782
      %v3191 = vunpack.c.l.b16 %v2783
      %v3192 = vunpack.c.h.b16 %v2783
      %v3193 = vunpack.c.l.b16 %v2784
      %v3194 = vunpack.c.h.b16 %v2784
      %v3195 = vunpack.c.l.b16 %v2785
      %v3196 = vunpack.c.h.b16 %v2785
      %v3197 = vunpack.c.l.b16 %v2786
      %v3198 = vunpack.c.h.b16 %v2786
      %v3199 = vunpack.c.l.b16 %v2787
      %v3200 = vunpack.c.h.b16 %v2787
      %v3201 = vunpack.c.l.b16 %v2788
      %v3202 = vunpack.c.h.b16 %v2788
      %v3203 = vunpack.c.l.b16 %v2789
      %v3204 = vunpack.c.h.b16 %v2789
      %v3205 = vunpack.c.l.b16 %v2790
      %v3206 = vunpack.c.h.b16 %v2790
      %v3207 = vunpack.c.l.b16 %v2791
      %v3208 = vunpack.c.h.b16 %v2791
      %v3209 = vunpack.c.l.b16 %v2792
      %v3210 = vunpack.c.h.b16 %v2792
      %v3211 = vunpack.c.l.b16 %v2793
      %v3212 = vunpack.c.h.b16 %v2793
      %v3213 = vunpack.c.l.b16 %v2794
      %v3214 = vunpack.c.h.b16 %v2794
      %v3215 = vunpack.c.l.b16 %v2795
      %v3216 = vunpack.c.h.b16 %v2795
      %v3217 = vunpack.c.l.b16 %v2796
      %v3218 = vunpack.c.h.b16 %v2796
      %v3219 = vunpack.c.l.b16 %v2797
      %v3220 = vunpack.c.h.b16 %v2797
      %v3221 = vunpack.c.l.b16 %v2798
      %v3222 = vunpack.c.h.b16 %v2798
      %v3223 = vunpack.c.l.b16 %v2799
      %v3224 = vunpack.c.h.b16 %v2799
      %v3225 = vunpack.c.l.b16 %v2800
      %v3226 = vunpack.c.h.b16 %v2800
      %v3227 = vunpack.c.l.b16 %v2801
      %v3228 = vunpack.c.h.b16 %v2801
      %v3229 = vunpack.c.l.b16 %v2802
      %v3230 = vunpack.c.h.b16 %v2802
      %v3231 = vunpack.c.l.b16 %v2803
      %v3232 = vunpack.c.h.b16 %v2803
      %v3233 = vunpack.c.l.b16 %v2804
      %v3234 = vunpack.c.h.b16 %v2804
      %v3235 = vunpack.c.l.b16 %v2805
      %v3236 = vunpack.c.h.b16 %v2805
      %v3237 = vunpack.c.l.b16 %v2806
      %v3238 = vunpack.c.h.b16 %v2806
      %v3239 = vunpack.c.l.b16 %v2807
      %v3240 = vunpack.c.h.b16 %v2807
      %v3241 = vunpack.c.l.b16 %v2808
      %v3242 = vunpack.c.h.b16 %v2808
      %v3243 = vunpack.c.l.b16 %v2809
      %v3244 = vunpack.c.h.b16 %v2809
      %v3245 = vunpack.c.l.b16 %v2810
      %v3246 = vunpack.c.h.b16 %v2810
      %v3247 = vunpack.c.l.b16 %v2811
      %v3248 = vunpack.c.h.b16 %v2811
      %v3249 = vunpack.c.l.b16 %v2812
      %v3250 = vunpack.c.h.b16 %v2812
      %v3251 = vunpack.c.l.b16 %v2813
      %v3252 = vunpack.c.h.b16 %v2813
      %v3253 = vunpack.c.l.b16 %v2814
      %v3254 = vunpack.c.h.b16 %v2814
      %v3255 = vunpack.c.l.b16 %v2815
      %v3256 = vunpack.c.h.b16 %v2815
      %v3257 = vunpack.c.l.b16 %v2816
      %v3258 = vunpack.c.h.b16 %v2816
      %v3259 = vunpack.c.l.b16 %v2817
      %v3260 = vunpack.c.h.b16 %v2817
      %v3261 = vunpack.c.l.b16 %v2818
      %v3262 = vunpack.c.h.b16 %v2818
      %v3263 = vunpack.c.l.b16 %v2819
      %v3264 = vunpack.c.h.b16 %v2819
      %v3265 = vunpack.c.l.b16 %v2820
      %v3266 = vunpack.c.h.b16 %v2820
      %v3267 = vunpack.c.l.b16 %v2821
      %v3268 = vunpack.c.h.b16 %v2821
      %v3269 = vunpack.c.l.b16 %v2822
      %v3270 = vunpack.c.h.b16 %v2822
      %v3271 = vunpack.c.l.b16 %v2823
      %v3272 = vunpack.c.h.b16 %v2823
      %v3273 = vunpack.c.l.b16 %v2824
      %v3274 = vunpack.c.h.b16 %v2824
      %v3275 = vunpack.c.l.b16 %v2825
      %v3276 = vunpack.c.h.b16 %v2825
      %v3277 = vunpack.c.l.b16 %v2826
      %v3278 = vunpack.c.h.b16 %v2826
      %v3279 = vunpack.c.l.b16 %v2827
      %v3280 = vunpack.c.h.b16 %v2827
      %v3281 = vunpack.c.l.b16 %v2828
      %v3282 = vunpack.c.h.b16 %v2828
      %v3283 = vunpack.c.l.b16 %v2829
      %v3284 = vunpack.c.h.b16 %v2829
      %v3285 = vunpack.c.l.b16 %v2830
      %v3286 = vunpack.c.h.b16 %v2830
      %v3287 = vunpack.c.l.b16 %v2831
      %v3288 = vunpack.c.h.b16 %v2831
      %v3289 = vunpack.c.l.b16 %v2832
      %v3290 = vunpack.c.h.b16 %v2832
      %v3291 = vunpack.c.l.b16 %v2833
      %v3292 = vunpack.c.h.b16 %v2833
      %v3293 = vunpack.c.l.b16 %v2834
      %v3294 = vunpack.c.h.b16 %v2834
      %v3295 = vunpack.c.l.b16 %v2835
      %v3296 = vunpack.c.h.b16 %v2835
      %v3297 = vunpack.c.l.b16 %v2836
      %v3298 = vunpack.c.h.b16 %v2836
      %v3299 = vunpack.c.l.b16 %v2837
      %v3300 = vunpack.c.h.b16 %v2837
      %v3301 = vunpack.c.l.b16 %v2838
      %v3302 = vunpack.c.h.b16 %v2838
      %v3303 = vunpack.c.l.b16 %v2839
      %v3304 = vunpack.c.h.b16 %v2839
      %v3305 = vunpack.c.l.b16 %v2840
      %v3306 = vunpack.c.h.b16 %v2840
      %v3307 = vunpack.c.l.b16 %v2841
      %v3308 = vunpack.c.h.b16 %v2841
      %v3309 = vunpack.c.l.b16 %v2842
      %v3310 = vunpack.c.h.b16 %v2842
      %v3311 = vunpack.c.l.b16 %v2843
      %v3312 = vunpack.c.h.b16 %v2843
      %v3313 = vunpack.c.l.b16 %v2844
      %v3314 = vunpack.c.h.b16 %v2844
      %v3315 = vunpack.c.l.b16 %v2845
      %v3316 = vunpack.c.h.b16 %v2845
      %v3317 = vunpack.c.l.b16 %v2846
      %v3318 = vunpack.c.h.b16 %v2846
      %v3319 = vunpack.c.l.b16 %v2847
      %v3320 = vunpack.c.h.b16 %v2847
      %v3321 = vunpack.c.l.b16 %v2848
      %v3322 = vunpack.c.h.b16 %v2848
      %v3323 = vunpack.c.l.b16 %v2849
      %v3324 = vunpack.c.h.b16 %v2849
      %v3325 = vunpack.c.l.b16 %v2850
      %v3326 = vunpack.c.h.b16 %v2850
      %v3327 = vunpack.c.l.b16 %v2851
      %v3328 = vunpack.c.h.b16 %v2851
      %v3329 = vunpack.c.l.b16 %v2852
      %v3330 = vunpack.c.h.b16 %v2852
      %v3331 = vpack.c.b16 %v3045, %v3043
      %v3332 = vpack.c.b16 %v3046, %v3044
      %v3333 = vpack.c.b16 %v3049, %v3047
      %v3334 = vpack.c.b16 %v3050, %v3048
      %v3335 = vpack.c.b16 %v3053, %v3051
      %v3336 = vpack.c.b16 %v3054, %v3052
      %v3337 = vpack.c.b16 %v3057, %v3055
      %v3338 = vpack.c.b16 %v3058, %v3056
      %v3339 = vpack.c.b16 %v3061, %v3059
      %v3340 = vpack.c.b16 %v3062, %v3060
      %v3341 = vpack.c.b16 %v3065, %v3063
      %v3342 = vpack.c.b16 %v3066, %v3064
      %v3343 = vpack.c.b16 %v3069, %v3067
      %v3344 = vpack.c.b16 %v3070, %v3068
      %v3345 = vpack.c.b16 %v3073, %v3071
      %v3346 = vpack.c.b16 %v3074, %v3072
      %v3347 = vpack.c.b16 %v3077, %v3075
      %v3348 = vpack.c.b16 %v3078, %v3076
      %v3349 = vpack.c.b16 %v3081, %v3079
      %v3350 = vpack.c.b16 %v3082, %v3080
      %v3351 = vpack.c.b16 %v3085, %v3083
      %v3352 = vpack.c.b16 %v3086, %v3084
      %v3353 = vpack.c.b16 %v3089, %v3087
      %v3354 = vpack.c.b16 %v3090, %v3088
      %v3355 = vpack.c.b16 %v3093, %v3091
      %v3356 = vpack.c.b16 %v3094, %v3092
      %v3357 = vpack.c.b16 %v3097, %v3095
      %v3358 = vpack.c.b16 %v3098, %v3096
      %v3359 = vpack.c.b16 %v3101, %v3099
      %v3360 = vpack.c.b16 %v3102, %v3100
      %v3361 = vpack.c.b16 %v3105, %v3103
      %v3362 = vpack.c.b16 %v3106, %v3104
      %v3363 = vpack.c.b16 %v3109, %v3107
      %v3364 = vpack.c.b16 %v3110, %v3108
      %v3365 = vpack.c.b16 %v3113, %v3111
      %v3366 = vpack.c.b16 %v3114, %v3112
      %v3367 = vpack.c.b16 %v3117, %v3115
      %v3368 = vpack.c.b16 %v3118, %v3116
      %v3369 = vpack.c.b16 %v3121, %v3119
      %v3370 = vpack.c.b16 %v3122, %v3120
      %v3371 = vpack.c.b16 %v3125, %v3123
      %v3372 = vpack.c.b16 %v3126, %v3124
      %v3373 = vpack.c.b16 %v3129, %v3127
      %v3374 = vpack.c.b16 %v3130, %v3128
      %v3375 = vpack.c.b16 %v3133, %v3131
      %v3376 = vpack.c.b16 %v3134, %v3132
      %v3377 = vpack.c.b16 %v3137, %v3135
      %v3378 = vpack.c.b16 %v3138, %v3136
      %v3379 = vpack.c.b16 %v3141, %v3139
      %v3380 = vpack.c.b16 %v3142, %v3140
      %v3381 = vpack.c.b16 %v3145, %v3143
      %v3382 = vpack.c.b16 %v3146, %v3144
      %v3383 = vpack.c.b16 %v3149, %v3147
      %v3384 = vpack.c.b16 %v3150, %v3148
      %v3385 = vpack.c.b16 %v3153, %v3151
      %v3386 = vpack.c.b16 %v3154, %v3152
      %v3387 = vpack.c.b16 %v3157, %v3155
      %v3388 = vpack.c.b16 %v3158, %v3156
      %v3389 = vpack.c.b16 %v3161, %v3159
      %v3390 = vpack.c.b16 %v3162, %v3160
      %v3391 = vpack.c.b16 %v3165, %v3163
      %v3392 = vpack.c.b16 %v3166, %v3164
      %v3393 = vpack.c.b16 %v3169, %v3167
      %v3394 = vpack.c.b16 %v3170, %v3168
      %v3395 = vpack.c.b16 %v3173, %v3171
      %v3396 = vpack.c.b16 %v3174, %v3172
      %v3397 = vpack.c.b16 %v3177, %v3175
      %v3398 = vpack.c.b16 %v3178, %v3176
      %v3399 = vpack.c.b16 %v3181, %v3179
      %v3400 = vpack.c.b16 %v3182, %v3180
      %v3401 = vpack.c.b16 %v3185, %v3183
      %v3402 = vpack.c.b16 %v3186, %v3184
      %v3403 = vpack.c.b16 %v3189, %v3187
      %v3404 = vpack.c.b16 %v3190, %v3188
      %v3405 = vpack.c.b16 %v3193, %v3191
      %v3406 = vpack.c.b16 %v3194, %v3192
      %v3407 = vpack.c.b16 %v3197, %v3195
      %v3408 = vpack.c.b16 %v3198, %v3196
      %v3409 = vpack.c.b16 %v3201, %v3199
      %v3410 = vpack.c.b16 %v3202, %v3200
      %v3411 = vpack.c.b16 %v3205, %v3203
      %v3412 = vpack.c.b16 %v3206, %v3204
      %v3413 = vpack.c.b16 %v3209, %v3207
      %v3414 = vpack.c.b16 %v3210, %v3208
      %v3415 = vpack.c.b16 %v3213, %v3211
      %v3416 = vpack.c.b16 %v3214, %v3212
      %v3417 = vpack.c.b16 %v3217, %v3215
      %v3418 = vpack.c.b16 %v3218, %v3216
      %v3419 = vpack.c.b16 %v3221, %v3219
      %v3420 = vpack.c.b16 %v3222, %v3220
      %v3421 = vpack.c.b16 %v3225, %v3223
      %v3422 = vpack.c.b16 %v3226, %v3224
      %v3423 = vpack.c.b16 %v3229, %v3227
      %v3424 = vpack.c.b16 %v3230, %v3228
      %v3425 = vpack.c.b16 %v3233, %v3231
      %v3426 = vpack.c.b16 %v3234, %v3232
      %v3427 = vpack.c.b16 %v3237, %v3235
      %v3428 = vpack.c.b16 %v3238, %v3236
      %v3429 = vpack.c.b16 %v3241, %v3239
      %v3430 = vpack.c.b16 %v3242, %v3240
      %v3431 = vpack.c.b16 %v3245, %v3243
      %v3432 = vpack.c.b16 %v3246, %v3244
      %v3433 = vpack.c.b16 %v3249, %v3247
      %v3434 = vpack.c.b16 %v3250, %v3248
      %v3435 = vpack.c.b16 %v3253, %v3251
      %v3436 = vpack.c.b16 %v3254, %v3252
      %v3437 = vpack.c.b16 %v3257, %v3255
      %v3438 = vpack.c.b16 %v3258, %v3256
      %v3439 = vpack.c.b16 %v3261, %v3259
      %v3440 = vpack.c.b16 %v3262, %v3260
      %v3441 = vpack.c.b16 %v3265, %v3263
      %v3442 = vpack.c.b16 %v3266, %v3264
      %v3443 = vpack.c.b16 %v3269, %v3267
      %v3444 = vpack.c.b16 %v3270, %v3268
      %v3445 = vpack.c.b16 %v3273, %v3271
      %v3446 = vpack.c.b16 %v3274, %v3272
      %v3447 = vpack.c.b16 %v3277, %v3275
      %v3448 = vpack.c.b16 %v3278, %v3276
      %v3449 = vpack.c.b16 %v3281, %v3279
      %v3450 = vpack.c.b16 %v3282, %v3280
      %v3451 = vpack.c.b16 %v3285, %v3283
      %v3452 = vpack.c.b16 %v3286, %v3284
      %v3453 = vpack.c.b16 %v3289, %v3287
      %v3454 = vpack.c.b16 %v3290, %v3288
      %v3455 = vpack.c.b16 %v3293, %v3291
      %v3456 = vpack.c.b16 %v3294, %v3292
      %v3457 = vpack.c.b16 %v3297, %v3295
      %v3458 = vpack.c.b16 %v3298, %v3296
      %v3459 = vpack.c.b16 %v3301, %v3299
      %v3460 = vpack.c.b16 %v3302, %v3300
      %v3461 = vpack.c.b16 %v3305, %v3303
      %v3462 = vpack.c.b16 %v3306, %v3304
      %v3463 = vpack.c.b16 %v3309, %v3307
      %v3464 = vpack.c.b16 %v3310, %v3308
      %v3465 = vpack.c.b16 %v3313, %v3311
      %v3466 = vpack.c.b16 %v3314, %v3312
      %v3467 = vpack.c.b16 %v3317, %v3315
      %v3468 = vpack.c.b16 %v3318, %v3316
      %v3469 = vpack.c.b16 %v3321, %v3319
      %v3470 = vpack.c.b16 %v3322, %v3320
      %v3471 = vpack.c.b16 %v3325, %v3323
      %v3472 = vpack.c.b16 %v3326, %v3324
      %v3473 = vpack.c.b16 %v3329, %v3327
      %v3474 = vpack.c.b16 %v3330, %v3328
      %3619 = vmatprep.subr.bf16.mxu0 %v3346
      %3620 = vmatpush1.bf16.msra.mxu0 %v3345
      %3621 = vmatprep.subr.bf16.mxu0 %v3344
      %3622 = vmatpush1.bf16.msra.mxu0 %v3343
      %3623 = vmatprep.subr.bf16.mxu0 %v3342
      %3624 = vmatpush1.bf16.msra.mxu0 %v3341
      %3625 = vmatprep.subr.bf16.mxu0 %v3340
      %3626 = vmatpush1.bf16.msra.mxu0 %v3339
      %3627 = vmatprep.subr.bf16.mxu0 %v3338
      %3628 = vmatpush1.bf16.msra.mxu0 %v3337
      %3629 = vmatprep.subr.bf16.mxu0 %v3336
      %3630 = vmatpush1.bf16.msra.mxu0 %v3335
      %3631 = vmatprep.subr.bf16.mxu0 %v3334
      %3632 = vmatpush1.bf16.msra.mxu0 %v3333
      %3633 = vmatprep.subr.bf16.mxu0 %v3332
      %3634 = vmatpush1.bf16.msra.mxu0 %v3331
      %3635 = vmatprep.subr.bf16.mxu0 %v3362
      %3636 = vmatpush2.bf16.msra.mxu0 %v3361
      %3637 = vmatprep.subr.bf16.mxu0 %v3360
      %3638 = vmatpush2.bf16.msra.mxu0 %v3359
      %3639 = vmatprep.subr.bf16.mxu0 %v3358
      %3640 = vmatpush2.bf16.msra.mxu0 %v3357
      %3641 = vmatprep.subr.bf16.mxu0 %v3356
      %3642 = vmatpush2.bf16.msra.mxu0 %v3355
      %3643 = vmatprep.subr.bf16.mxu0 %v3354
      %3644 = vmatpush2.bf16.msra.mxu0 %v3353
      %3645 = vmatprep.subr.bf16.mxu0 %v3352
      %3646 = vmatpush2.bf16.msra.mxu0 %v3351
      %3647 = vmatprep.subr.bf16.mxu0 %v3350
      %3648 = vmatpush2.bf16.msra.mxu0 %v3349
      %3649 = vmatprep.subr.bf16.mxu0 %v3348
      %3650 = vmatpush2.bf16.msra.mxu0 %v3347
      %3651 = vmatprep.mubr.bf16.mxu0 %v2882
      %3652 = vmatmul.mubr.bf16.gmra.mxu0 %v2881
      %v3653 = vpop.f32.mrf.mxu0
      %v3654 = vadd.f32 0.0, %v3653
      %v3655 = vpop.f32.mrf.mxu0
      %v3656 = vadd.f32 0.0, %v3655
      %v3657 = vpop.f32.mrf.mxu0
      %v3658 = vadd.f32 0.0, %v3657
      %v3659 = vpop.f32.mrf.mxu0
      %v3660 = vadd.f32 0.0, %v3659
      %3661 = vdwg.mxu0
      %3662 = vmatprep.subr.bf16.mxu0 %v3378
      %3663 = vmatpush1.bf16.msra.mxu0 %v3377
      %3664 = vmatprep.subr.bf16.mxu0 %v3376
      %3665 = vmatpush1.bf16.msra.mxu0 %v3375
      %3666 = vmatprep.subr.bf16.mxu0 %v3374
      %3667 = vmatpush1.bf16.msra.mxu0 %v3373
      %3668 = vmatprep.subr.bf16.mxu0 %v3372
      %3669 = vmatpush1.bf16.msra.mxu0 %v3371
      %3670 = vmatprep.subr.bf16.mxu0 %v3370
      %3671 = vmatpush1.bf16.msra.mxu0 %v3369
      %3672 = vmatprep.subr.bf16.mxu0 %v3368
      %3673 = vmatpush1.bf16.msra.mxu0 %v3367
      %3674 = vmatprep.subr.bf16.mxu0 %v3366
      %3675 = vmatpush1.bf16.msra.mxu0 %v3365
      %3676 = vmatprep.subr.bf16.mxu0 %v3364
      %3677 = vmatpush1.bf16.msra.mxu0 %v3363
      %3678 = vmatprep.subr.bf16.mxu0 %v3394
      %3679 = vmatpush2.bf16.msra.mxu0 %v3393
      %3680 = vmatprep.subr.bf16.mxu0 %v3392
      %3681 = vmatpush2.bf16.msra.mxu0 %v3391
      %3682 = vmatprep.subr.bf16.mxu0 %v3390
      %3683 = vmatpush2.bf16.msra.mxu0 %v3389
      %3684 = vmatprep.subr.bf16.mxu0 %v3388
      %3685 = vmatpush2.bf16.msra.mxu0 %v3387
      %3686 = vmatprep.subr.bf16.mxu0 %v3386
      %3687 = vmatpush2.bf16.msra.mxu0 %v3385
      %3688 = vmatprep.subr.bf16.mxu0 %v3384
      %3689 = vmatpush2.bf16.msra.mxu0 %v3383
      %3690 = vmatprep.subr.bf16.mxu0 %v3382
      %3691 = vmatpush2.bf16.msra.mxu0 %v3381
      %3692 = vmatprep.subr.bf16.mxu0 %v3380
      %3693 = vmatpush2.bf16.msra.mxu0 %v3379
      %3694 = vmatprep.mubr.bf16.mxu0 %v2884
      %3695 = vmatmul.mubr.bf16.gmra.mxu0 %v2883
      %v3696 = vpop.f32.mrf.mxu0
      %v3697 = vadd.f32 %v3654, %v3696
      %v3698 = vpop.f32.mrf.mxu0
      %v3699 = vadd.f32 %v3656, %v3698
      %v3700 = vpop.f32.mrf.mxu0
      %v3701 = vadd.f32 %v3658, %v3700
      %v3702 = vpop.f32.mrf.mxu0
      %v3703 = vadd.f32 %v3660, %v3702
      %3704 = vdwg.mxu0
      %3705 = vmatprep.subr.bf16.mxu0 %v3410
      %3706 = vmatpush1.bf16.msra.mxu0 %v3409
      %3707 = vmatprep.subr.bf16.mxu0 %v3408
      %3708 = vmatpush1.bf16.msra.mxu0 %v3407
      %3709 = vmatprep.subr.bf16.mxu0 %v3406
      %3710 = vmatpush1.bf16.msra.mxu0 %v3405
      %3711 = vmatprep.subr.bf16.mxu0 %v3404
      %3712 = vmatpush1.bf16.msra.mxu0 %v3403
      %3713 = vmatprep.subr.bf16.mxu0 %v3402
      %3714 = vmatpush1.bf16.msra.mxu0 %v3401
      %3715 = vmatprep.subr.bf16.mxu0 %v3400
      %3716 = vmatpush1.bf16.msra.mxu0 %v3399
      %3717 = vmatprep.subr.bf16.mxu0 %v3398
      %3718 = vmatpush1.bf16.msra.mxu0 %v3397
      %3719 = vmatprep.subr.bf16.mxu0 %v3396
      %3720 = vmatpush1.bf16.msra.mxu0 %v3395
      %3721 = vmatprep.subr.bf16.mxu0 %v3426
      %3722 = vmatpush2.bf16.msra.mxu0 %v3425
      %3723 = vmatprep.subr.bf16.mxu0 %v3424
      %3724 = vmatpush2.bf16.msra.mxu0 %v3423
      %3725 = vmatprep.subr.bf16.mxu0 %v3422
      %3726 = vmatpush2.bf16.msra.mxu0 %v3421
      %3727 = vmatprep.subr.bf16.mxu0 %v3420
      %3728 = vmatpush2.bf16.msra.mxu0 %v3419
      %3729 = vmatprep.subr.bf16.mxu0 %v3418
      %3730 = vmatpush2.bf16.msra.mxu0 %v3417
      %3731 = vmatprep.subr.bf16.mxu0 %v3416
      %3732 = vmatpush2.bf16.msra.mxu0 %v3415
      %3733 = vmatprep.subr.bf16.mxu0 %v3414
      %3734 = vmatpush2.bf16.msra.mxu0 %v3413
      %3735 = vmatprep.subr.bf16.mxu0 %v3412
      %3736 = vmatpush2.bf16.msra.mxu0 %v3411
      %3737 = vmatprep.mubr.bf16.mxu0 %v2886
      %3738 = vmatmul.mubr.bf16.gmra.mxu0 %v2885
      %v3739 = vpop.f32.mrf.mxu0
      %v3740 = vadd.f32 %v3697, %v3739
      %v3741 = vpop.f32.mrf.mxu0
      %v3742 = vadd.f32 %v3699, %v3741
      %v3743 = vpop.f32.mrf.mxu0
      %v3744 = vadd.f32 %v3701, %v3743
      %v3745 = vpop.f32.mrf.mxu0
      %v3746 = vadd.f32 %v3703, %v3745
      %3747 = vdwg.mxu0
      %3748 = vmatprep.subr.bf16.mxu0 %v3442
      %3749 = vmatpush1.bf16.msra.mxu0 %v3441
      %3750 = vmatprep.subr.bf16.mxu0 %v3440
      %3751 = vmatpush1.bf16.msra.mxu0 %v3439
      %3752 = vmatprep.subr.bf16.mxu0 %v3438
      %3753 = vmatpush1.bf16.msra.mxu0 %v3437
      %3754 = vmatprep.subr.bf16.mxu0 %v3436
      %3755 = vmatpush1.bf16.msra.mxu0 %v3435
      %3756 = vmatprep.subr.bf16.mxu0 %v3434
      %3757 = vmatpush1.bf16.msra.mxu0 %v3433
      %3758 = vmatprep.subr.bf16.mxu0 %v3432
      %3759 = vmatpush1.bf16.msra.mxu0 %v3431
      %3760 = vmatprep.subr.bf16.mxu0 %v3430
      %3761 = vmatpush1.bf16.msra.mxu0 %v3429
      %3762 = vmatprep.subr.bf16.mxu0 %v3428
      %3763 = vmatpush1.bf16.msra.mxu0 %v3427
      %3764 = vmatprep.subr.bf16.mxu0 %v3458
      %3765 = vmatpush2.bf16.msra.mxu0 %v3457
      %3766 = vmatprep.subr.bf16.mxu0 %v3456
      %3767 = vmatpush2.bf16.msra.mxu0 %v3455
      %3768 = vmatprep.subr.bf16.mxu0 %v3454
      %3769 = vmatpush2.bf16.msra.mxu0 %v3453
      %3770 = vmatprep.subr.bf16.mxu0 %v3452
      %3771 = vmatpush2.bf16.msra.mxu0 %v3451
      %3772 = vmatprep.subr.bf16.mxu0 %v3450
      %3773 = vmatpush2.bf16.msra.mxu0 %v3449
      %3774 = vmatprep.subr.bf16.mxu0 %v3448
      %3775 = vmatpush2.bf16.msra.mxu0 %v3447
      %3776 = vmatprep.subr.bf16.mxu0 %v3446
      %3777 = vmatpush2.bf16.msra.mxu0 %v3445
      %3778 = vmatprep.subr.bf16.mxu0 %v3444
      %3779 = vmatpush2.bf16.msra.mxu0 %v3443
      %3780 = vmatprep.mubr.bf16.mxu0 %v2888
      %3781 = vmatmul.mubr.bf16.gmra.mxu0 %v2887
      %v3782 = vpop.f32.mrf.mxu0
      %v3783 = vadd.f32 %v3740, %v3782
      %v3784 = vpop.f32.mrf.mxu0
      %v3785 = vadd.f32 %v3742, %v3784
      %v3786 = vpop.f32.mrf.mxu0
      %v3787 = vadd.f32 %v3744, %v3786
      %v3788 = vpop.f32.mrf.mxu0
      %v3789 = vadd.f32 %v3746, %v3788
      %3790 = vdwg.mxu0
      %3791 = vmatprep.subr.bf16.mxu0 %v3474
      %3792 = vmatpush1.bf16.msra.mxu0 %v3473
      %3793 = vmatprep.subr.bf16.mxu0 %v3472
      %3794 = vmatpush1.bf16.msra.mxu0 %v3471
      %3795 = vmatprep.subr.bf16.mxu0 %v3470
      %3796 = vmatpush1.bf16.msra.mxu0 %v3469
      %3797 = vmatprep.subr.bf16.mxu0 %v3468
      %3798 = vmatpush1.bf16.msra.mxu0 %v3467
      %3799 = vmatprep.subr.bf16.mxu0 %v3466
      %3800 = vmatpush1.bf16.msra.mxu0 %v3465
      %3801 = vmatprep.subr.bf16.mxu0 %v3464
      %3802 = vmatpush1.bf16.msra.mxu0 %v3463
      %3803 = vmatprep.subr.bf16.mxu0 %v3462
      %3804 = vmatpush1.bf16.msra.mxu0 %v3461
      %3805 = vmatprep.subr.bf16.mxu0 %v3460
      %3806 = vmatpush1.bf16.msra.mxu0 %v3459
      %3807 = vmatprep.subr.bf16.mxu0 0
      %3808 = vmatpush2.bf16.msra.mxu0 0
      %3809 = vmatprep.subr.bf16.mxu0 0
      %3810 = vmatpush2.bf16.msra.mxu0 0
      %3811 = vmatprep.subr.bf16.mxu0 0
      %3812 = vmatpush2.bf16.msra.mxu0 0
      %3813 = vmatprep.subr.bf16.mxu0 0
      %3814 = vmatpush2.bf16.msra.mxu0 0
      %3815 = vmatprep.subr.bf16.mxu0 0
      %3816 = vmatpush2.bf16.msra.mxu0 0
      %3817 = vmatprep.subr.bf16.mxu0 0
      %3818 = vmatpush2.bf16.msra.mxu0 0
      %3819 = vmatprep.subr.bf16.mxu0 0
      %3820 = vmatpush2.bf16.msra.mxu0 0
      %3821 = vmatprep.subr.bf16.mxu0 0
      %3822 = vmatpush2.bf16.msra.mxu0 0
      %3823 = vmatprep.mubr.bf16.mxu0 0
      %3824 = vmatmul.mubr.bf16.gmra.mxu0 %v2889
      %v3825 = vpop.f32.mrf.mxu0
      %v3826 = vadd.f32 %v3783, %v3825
      %v3827 = vpop.f32.mrf.mxu0
      %v3828 = vadd.f32 %v3785, %v3827
      %v3829 = vpop.f32.mrf.mxu0
      %v3830 = vadd.f32 %v3787, %v3829
      %v3831 = vpop.f32.mrf.mxu0
      %v3832 = vadd.f32 %v3789, %v3831
      %3833 = vdwg.mxu0
      %v3834 = vld [vmem:[%s8] sm:$0x3]
      %v3836 = vlaneseq
      %v3837 = vshrl.u32 %v3836, 7
      %v3838 = vsub.s32 0, %v3837
      %v3839 = vrot.slane %v3834, %v3838
      %v3840 = vlaneseq
      %v3841 = vshrl.u32 %v3840, 7
      %v3842 = vsub.s32 1, %v3841
      %v3843 = vrot.slane %v3834, %v3842
      %v3846 = vmul.f32 %v3826, %v3839
      %v3847 = vmul.f32 %v3828, %v3843
      %v3848 = vmul.f32 %v3830, %v3839
      %v3849 = vmul.f32 %v3832, %v3843
      %v3850 = vld [vmem:[%s9] sm:$0x3]
      %v3852 = vlaneseq
      %v3853 = vshrl.u32 %v3852, 7
      %v3854 = vsub.s32 0, %v3853
      %v3855 = vrot.slane %v3850, %v3854
      %v3856 = vlaneseq
      %v3857 = vshrl.u32 %v3856, 7
      %v3858 = vsub.s32 1, %v3857
      %v3859 = vrot.slane %v3850, %v3858
      %v3862 = vadd.f32 %v3846, %v3855
      %v3863 = vadd.f32 %v3847, %v3859
      %v3864 = vadd.f32 %v3848, %v3855
      %v3865 = vadd.f32 %v3849, %v3859
      %v3866 = vmul.f32 %v3862, 0.5
      %v3867 = vmul.f32 %v3863, 0.5
      %v3868 = vmul.f32 %v3864, 0.5
      %v3869 = vmul.f32 %v3865, 0.5
      %v3870 = vmul.f32 %v3862, %v639
      %v3871 = vmul.f32 %v3863, %v639
      %v3872 = vmul.f32 %v3864, %v639
      %v3873 = vmul.f32 %v3865, %v639
      %v3874 = verf.f32.pop %v3870
      %v3875 = verf.f32.pop %v3871
      %v3876 = verf.f32.pop %v3872
      %v3877 = verf.f32.pop %v3873
      %v3878 = vadd.f32 %v3874, 1.0
      %v3879 = vadd.f32 %v3875, 1.0
      %v3880 = vadd.f32 %v3876, 1.0
      %v3881 = vadd.f32 %v3877, 1.0
      %v3882 = vmul.f32 %v3866, %v3878
      %v3883 = vmul.f32 %v3867, %v3879
      %v3884 = vmul.f32 %v3868, %v3880
      %v3885 = vmul.f32 %v3869, %v3881
      %3886 = vst [vmem:[#allocation8] sm:$0xff] -1e+30
      %3887 = vst [vmem:[#allocation8 + $0x8] sm:$0xff] -1e+30
      %3888 = vst [vmem:[#allocation8 + $0x10] sm:$0xff] -1e+30
      %3889 = vst [vmem:[#allocation8 + $0x18] sm:$0xff] -1e+30
      %3890 = vst [vmem:[#allocation8 + $0x20] sm:$0xff] -1e+30
      %3891 = vst [vmem:[#allocation8 + $0x28] sm:$0xff] -1e+30
      %vm3896 = vcmask 1043456
      %v3897 = vrot.slane %v3882, 4
      %v3898 = vrot.slane %v3883, 4
      %v3899 = vrot.slane %v3884, 4
      %v3900 = vsel %vm3896, %v3897, %v3899
      %v3901 = vrot.slane %v3885, 4
      %v3902 = vsel %vm3896, %v3898, %v3901
      %3909 = vst [vmem:[#allocation8] sm:$0xf0] %v3897
      %3910 = vst [vmem:[#allocation8 + $0x8] sm:$0xf0] %v3898
      %3911 = vst [vmem:[#allocation8 + $0x10] sm:$0xff] %v3900
      %3912 = vst [vmem:[#allocation8 + $0x18] sm:$0xff] %v3902
      %3913 = vst [vmem:[#allocation8 + $0x20] sm:$0xf] %v3899
      %3914 = vst [vmem:[#allocation8 + $0x28] sm:$0xf] %v3901
      %v3915 = vld [vmem:[#allocation8] sm:$0xff]
      %v3916 = vld [vmem:[#allocation8 + $0x8] sm:$0xff]
      %v3917 = vld [vmem:[#allocation8 + $0x10] sm:$0xff]
      %v3918 = vld [vmem:[#allocation8 + $0x18] sm:$0xff]
      %v3919 = vmax.f32 %v3915, -1e+30
      %v3920 = vmax.f32 %v3916, -1e+30
      %v3921 = vmax.f32 %v3917, -1e+30
      %v3922 = vmax.f32 %v3918, -1e+30
      %v3923 = vld [vmem:[#allocation8] sm:$0xfe]
      %v3924 = vld [vmem:[#allocation8 + $0x8] sm:$0xfe]
      %v3925 = vld [vmem:[#allocation8 + $0x10] sm:$0xff]
      %v3926 = vld [vmem:[#allocation8 + $0x18] sm:$0xff]
      %v3927 = vld [vmem:[#allocation8 + $0x20] sm:$0x1]
      %v3928 = vld [vmem:[#allocation8 + $0x28] sm:$0x1]
      %vm3935 = vcmask 1046528
      %v3936 = vrot.slane %v3923, 1
      %v3937 = vrot.slane %v3925, 1
      %v3938 = vsel %vm3935, %v3936, %v3937
      %v3939 = vrot.slane %v3924, 1
      %v3940 = vrot.slane %v3926, 1
      %v3941 = vsel %vm3935, %v3939, %v3940
      %v3942 = vrot.slane %v3927, 1
      %v3943 = vsel %vm3935, %v3937, %v3942
      %v3944 = vrot.slane %v3928, 1
      %v3945 = vsel %vm3935, %v3940, %v3944
      %v3950 = vmax.f32 %v3919, %v3938
      %v3951 = vmax.f32 %v3920, %v3941
      %v3952 = vmax.f32 %v3921, %v3943
      %v3953 = vmax.f32 %v3922, %v3945
      %v3954 = vld [vmem:[#allocation8] sm:$0xfc]
      %v3955 = vld [vmem:[#allocation8 + $0x8] sm:$0xfc]
      %v3956 = vld [vmem:[#allocation8 + $0x20] sm:$0x3]
      %v3957 = vld [vmem:[#allocation8 + $0x28] sm:$0x3]
      %vm3962 = vcmask 1045504
      %v3963 = vrot.slane %v3954, 2
      %v3964 = vrot.slane %v3925, 2
      %v3965 = vsel %vm3962, %v3963, %v3964
      %v3966 = vrot.slane %v3955, 2
      %v3967 = vrot.slane %v3926, 2
      %v3968 = vsel %vm3962, %v3966, %v3967
      %v3969 = vrot.slane %v3956, 2
      %v3970 = vsel %vm3962, %v3964, %v3969
      %v3971 = vrot.slane %v3957, 2
      %v3972 = vsel %vm3962, %v3967, %v3971
      %v3977 = vmax.f32 %v3950, %v3965
      %v3978 = vmax.f32 %v3951, %v3968
      %v3979 = vmax.f32 %v3952, %v3970
      %v3980 = vmax.f32 %v3953, %v3972
      %v3981 = vld [vmem:[#allocation8] sm:$0xf8]
      %v3982 = vld [vmem:[#allocation8 + $0x8] sm:$0xf8]
      %v3983 = vld [vmem:[#allocation8 + $0x20] sm:$0x7]
      %v3984 = vld [vmem:[#allocation8 + $0x28] sm:$0x7]
      %vm3989 = vcmask 1044480
      %v3990 = vrot.slane %v3981, 3
      %v3991 = vrot.slane %v3925, 3
      %v3992 = vsel %vm3989, %v3990, %v3991
      %v3993 = vrot.slane %v3982, 3
      %v3994 = vrot.slane %v3926, 3
      %v3995 = vsel %vm3989, %v3993, %v3994
      %v3996 = vrot.slane %v3983, 3
      %v3997 = vsel %vm3989, %v3991, %v3996
      %v3998 = vrot.slane %v3984, 3
      %v3999 = vsel %vm3989, %v3994, %v3998
      %v4004 = vmax.f32 %v3977, %v3992
      %v4005 = vmax.f32 %v3978, %v3995
      %v4006 = vmax.f32 %v3979, %v3997
      %v4007 = vmax.f32 %v3980, %v3999
      %v4008 = vld [vmem:[#allocation8] sm:$0xf0]
      %v4009 = vld [vmem:[#allocation8 + $0x8] sm:$0xf0]
      %v4010 = vld [vmem:[#allocation8 + $0x20] sm:$0xf]
      %v4011 = vld [vmem:[#allocation8 + $0x28] sm:$0xf]
      %v4016 = vrot.slane %v4008, 4
      %v4017 = vrot.slane %v3925, 4
      %v4018 = vsel %vm3896, %v4016, %v4017
      %v4019 = vrot.slane %v4009, 4
      %v4020 = vrot.slane %v3926, 4
      %v4021 = vsel %vm3896, %v4019, %v4020
      %v4022 = vrot.slane %v4010, 4
      %v4023 = vsel %vm3896, %v4017, %v4022
      %v4024 = vrot.slane %v4011, 4
      %v4025 = vsel %vm3896, %v4020, %v4024
      %v4030 = vmax.f32 %v4004, %v4018
      %v4031 = vmax.f32 %v4005, %v4021
      %v4032 = vmax.f32 %v4006, %v4023
      %v4033 = vmax.f32 %v4007, %v4025
      %v4034 = vld [vmem:[#allocation8] sm:$0xe0]
      %v4035 = vld [vmem:[#allocation8 + $0x8] sm:$0xe0]
      %v4036 = vld [vmem:[#allocation8 + $0x20] sm:$0x1f]
      %v4037 = vld [vmem:[#allocation8 + $0x28] sm:$0x1f]
      %vm4042 = vcmask 1042432
      %v4043 = vrot.slane %v4034, 5
      %v4044 = vrot.slane %v3925, 5
      %v4045 = vsel %vm4042, %v4043, %v4044
      %v4046 = vrot.slane %v4035, 5
      %v4047 = vrot.slane %v3926, 5
      %v4048 = vsel %vm4042, %v4046, %v4047
      %v4049 = vrot.slane %v4036, 5
      %v4050 = vsel %vm4042, %v4044, %v4049
      %v4051 = vrot.slane %v4037, 5
      %v4052 = vsel %vm4042, %v4047, %v4051
      %v4057 = vmax.f32 %v4030, %v4045
      %v4058 = vmax.f32 %v4031, %v4048
      %v4059 = vmax.f32 %v4032, %v4050
      %v4060 = vmax.f32 %v4033, %v4052
      %v4061 = vld [vmem:[#allocation8] sm:$0xc0]
      %v4062 = vld [vmem:[#allocation8 + $0x8] sm:$0xc0]
      %v4063 = vld [vmem:[#allocation8 + $0x20] sm:$0x3f]
      %v4064 = vld [vmem:[#allocation8 + $0x28] sm:$0x3f]
      %vm4069 = vcmask 1041408
      %v4070 = vrot.slane %v4061, 6
      %v4071 = vrot.slane %v3925, 6
      %v4072 = vsel %vm4069, %v4070, %v4071
      %v4073 = vrot.slane %v4062, 6
      %v4074 = vrot.slane %v3926, 6
      %v4075 = vsel %vm4069, %v4073, %v4074
      %v4076 = vrot.slane %v4063, 6
      %v4077 = vsel %vm4069, %v4071, %v4076
      %v4078 = vrot.slane %v4064, 6
      %v4079 = vsel %vm4069, %v4074, %v4078
      %v4084 = vmax.f32 %v4057, %v4072
      %v4085 = vmax.f32 %v4058, %v4075
      %v4086 = vmax.f32 %v4059, %v4077
      %v4087 = vmax.f32 %v4060, %v4079
      %v4088 = vld [vmem:[#allocation8] sm:$0x80]
      %v4089 = vld [vmem:[#allocation8 + $0x8] sm:$0x80]
      %v4090 = vld [vmem:[#allocation8 + $0x20] sm:$0x7f]
      %v4091 = vld [vmem:[#allocation8 + $0x28] sm:$0x7f]
      %vm4096 = vcmask 1040384
      %v4097 = vrot.slane %v4088, 7
      %v4098 = vrot.slane %v3925, 7
      %v4099 = vsel %vm4096, %v4097, %v4098
      %v4100 = vrot.slane %v4089, 7
      %v4101 = vrot.slane %v3926, 7
      %v4102 = vsel %vm4096, %v4100, %v4101
      %v4103 = vrot.slane %v4090, 7
      %v4104 = vsel %vm4096, %v4098, %v4103
      %v4105 = vrot.slane %v4091, 7
      %v4106 = vsel %vm4096, %v4101, %v4105
      %v4111 = vmax.f32 %v4084, %v4099
      %v4112 = vmax.f32 %v4085, %v4102
      %v4113 = vmax.f32 %v4086, %v4104
      %v4114 = vmax.f32 %v4087, %v4106
      %v4115 = vld [vmem:[#allocation8 + $0x20] sm:$0xff]
      %v4116 = vld [vmem:[#allocation8 + $0x28] sm:$0xff]
      %v4117 = vmax.f32 %v4111, %v3925
      %v4118 = vmax.f32 %v4112, %v3926
      %v4119 = vmax.f32 %v4113, %v4115
      %v4120 = vmax.f32 %v4114, %v4116
      %vm4121 = vcmask 130048
      %v4122 = vsel %vm4121, %v852, 0
      %4124 = vmatprep.subr.mxu0 0.0
      %4125 = vmatpush1.msra.mxu0 0.0
      %4126 = vmatprep.subr.mxu0 0.0
      %4127 = vmatpush1.msra.mxu0 0.0
      %4128 = vmatprep.subr.mxu0 0.0
      %4129 = vmatpush1.msra.mxu0 0.0
      %4130 = vmatprep.subr.mxu0 0.0
      %4131 = vmatpush1.msra.mxu0 0.0
      %4132 = vmatprep.subr.mxu0 0.0
      %4133 = vmatpush1.msra.mxu0 0.0
      %4134 = vmatprep.subr.mxu0 0.0
      %4135 = vmatpush1.msra.mxu0 0.0
      %4136 = vmatprep.subr.mxu0 0.0
      %4137 = vmatpush1.msra.mxu0 0.0
      %4138 = vmatprep.subr.mxu0 0.0
      %4139 = vmatpush1.msra.mxu0 0.0
      %4140 = vmatprep.subr.mxu0 0.0
      %4141 = vmatpush1.msra.mxu0 0.0
      %4142 = vmatprep.subr.mxu0 0.0
      %4143 = vmatpush1.msra.mxu0 0.0
      %4144 = vmatprep.subr.mxu0 0.0
      %4145 = vmatpush1.msra.mxu0 0.0
      %4146 = vmatprep.subr.mxu0 0.0
      %4147 = vmatpush1.msra.mxu0 0.0
      %4148 = vmatprep.subr.mxu0 0.0
      %4149 = vmatpush1.msra.mxu0 0.0
      %4150 = vmatprep.subr.mxu0 0.0
      %4151 = vmatpush1.msra.mxu0 0.0
      %4152 = vmatprep.subr.mxu0 %v4120
      %4153 = vmatpush1.msra.mxu0 %v4119
      %4154 = vmatprep.subr.mxu0 %v4118
      %4155 = vmatpush1.msra.mxu0 %v4117
      %4156 = vmatprep.subr.mxu0 0.0
      %4157 = vmatpush2.msra.mxu0 0.0
      %4158 = vmatprep.subr.mxu0 0.0
      %4159 = vmatpush2.msra.mxu0 0.0
      %4160 = vmatprep.subr.mxu0 0.0
      %4161 = vmatpush2.msra.mxu0 0.0
      %4162 = vmatprep.subr.mxu0 0.0
      %4163 = vmatpush2.msra.mxu0 0.0
      %4164 = vmatprep.subr.mxu0 0.0
      %4165 = vmatpush2.msra.mxu0 0.0
      %4166 = vmatprep.subr.mxu0 0.0
      %4167 = vmatpush2.msra.mxu0 0.0
      %4168 = vmatprep.subr.mxu0 0.0
      %4169 = vmatpush2.msra.mxu0 0.0
      %4170 = vmatprep.subr.mxu0 0.0
      %4171 = vmatpush2.msra.mxu0 0.0
      %4172 = vmatprep.subr.mxu0 0.0
      %4173 = vmatpush2.msra.mxu0 0.0
      %4174 = vmatprep.subr.mxu0 0.0
      %4175 = vmatpush2.msra.mxu0 0.0
      %4176 = vmatprep.subr.mxu0 0.0
      %4177 = vmatpush2.msra.mxu0 0.0
      %4178 = vmatprep.subr.mxu0 0.0
      %4179 = vmatpush2.msra.mxu0 0.0
      %4180 = vmatprep.subr.mxu0 0.0
      %4181 = vmatpush2.msra.mxu0 0.0
      %4182 = vmatprep.subr.mxu0 0.0
      %4183 = vmatpush2.msra.mxu0 0.0
      %4184 = vmatprep.subr.mxu0 0.0
      %4185 = vmatpush2.msra.mxu0 0.0
      %4186 = vmatprep.subr.mxu0 0.0
      %4187 = vmatpush2.msra.mxu0 0.0
      %4188 = vmatprep.mubr.f32.mxu0 0.0
      %4189 = vmatmul.mubr.f32.gmra.mxu0 %v4122
      %v4190 = vpop.f32.mrf.mxu0
      %v4191 = vadd.f32 0.0, %v4190
      %v4192 = vpop.f32.mrf.mxu0
      %v4193 = vadd.f32 0.0, %v4192
      %4194 = vdwg.mxu0
      %4195 = vst [vmem:[#allocation9] sm:$0xff] 0
      %4196 = vst [vmem:[#allocation9 + $0x8] sm:$0xff] 0
      %v4197 = vpack.c.bf16 %v4191, %v4191
      %v4198 = vpack.c.bf16 %v4193, %v4193
      %v4201 = vunpack.c.l.b16 %v4197
      %v4202 = vunpack.c.l.b16 %v4198
      %v4203 = vpack.c.b16 %v4202, %v4201
      %v4204 = vrot.slane %v4203, 6
      %v4205 = vrot.slane %v4204, 4
      %4208 = vst [vmem:[#allocation9] sm:$0xcc] %v4204
      %4209 = vst [vmem:[#allocation9 + $0x8] sm:$0x33] %v4205
      %v4210 = vld [vmem:[#allocation9] sm:$0xff]
      %4211 = vst [vmem:[#allocation10] sm:$0xff] %v4210
      %v4212 = vld [vmem:[#allocation9] sm:$0xff]
      %v4213 = vld [vmem:[#allocation9 + $0x8] sm:$0x11]
      %v4215 = vshrl.u32 %v4212, 16
      %v4217 = vrot.slane %v4215, 4
      %v4218 = vshll.u32 %v4212, 16
      %v4220 = vrot.slane %v4218, 5
      %v4221 = vor.u32 %v4217, %v4220
      %v4222 = vrot.slane %v4221, 4
      %v4224 = vshll.u32 %v4213, 16
      %v4226 = vrot.slane %v4224, 5
      %v4227 = vsel %vm1010, %v4222, %v4226
      %4229 = vst [vmem:[#allocation10 + $0x8] sm:$0xff] %v4227
      %v4230 = vld [vmem:[#allocation9] sm:$0xee]
      %v4231 = vld [vmem:[#allocation9 + $0x8] sm:$0x11]
      %v4234 = vrot.slane %v4230, 5
      %v4235 = vrot.slane %v4234, 4
      %v4236 = vrot.slane %v4231, 5
      %v4237 = vsel %vm1075, %v4235, %v4236
      %4239 = vst [vmem:[#allocation10 + $0x10] sm:$0xff] %v4237
      %v4240 = vld [vmem:[#allocation9] sm:$0xee]
      %v4241 = vld [vmem:[#allocation9 + $0x8] sm:$0x33]
      %v4243 = vshrl.u32 %v4240, 16
      %v4245 = vrot.slane %v4243, 5
      %v4246 = vshll.u32 %v4240, 16
      %v4248 = vrot.slane %v4246, 6
      %v4249 = vor.u32 %v4245, %v4248
      %v4250 = vrot.slane %v4249, 4
      %v4252 = vshrl.u32 %v4241, 16
      %v4254 = vrot.slane %v4252, 5
      %v4255 = vshll.u32 %v4241, 16
      %v4257 = vrot.slane %v4255, 6
      %v4258 = vor.u32 %v4254, %v4257
      %v4259 = vsel %vm1104, %v4250, %v4258
      %4261 = vst [vmem:[#allocation10 + $0x18] sm:$0xff] %v4259
      %v4262 = vld [vmem:[#allocation9] sm:$0xcc]
      %v4263 = vld [vmem:[#allocation9 + $0x8] sm:$0x33]
      %v4266 = vrot.slane %v4262, 6
      %v4267 = vrot.slane %v4266, 4
      %v4268 = vrot.slane %v4263, 6
      %v4269 = vsel %vm973, %v4267, %v4268
      %4271 = vst [vmem:[#allocation10 + $0x20] sm:$0xff] %v4269
      %v4272 = vld [vmem:[#allocation9] sm:$0xcc]
      %v4273 = vld [vmem:[#allocation9 + $0x8] sm:$0x77]
      %v4275 = vshrl.u32 %v4272, 16
      %v4277 = vrot.slane %v4275, 6
      %v4278 = vshll.u32 %v4272, 16
      %v4280 = vrot.slane %v4278, 7
      %v4281 = vor.u32 %v4277, %v4280
      %v4282 = vrot.slane %v4281, 4
      %v4284 = vshrl.u32 %v4273, 16
      %v4286 = vrot.slane %v4284, 6
      %v4287 = vshll.u32 %v4273, 16
      %v4289 = vrot.slane %v4287, 7
      %v4290 = vor.u32 %v4286, %v4289
      %v4291 = vsel %vm1199, %v4282, %v4290
      %4293 = vst [vmem:[#allocation10 + $0x28] sm:$0xff] %v4291
      %v4294 = vld [vmem:[#allocation9] sm:$0x88]
      %v4295 = vld [vmem:[#allocation9 + $0x8] sm:$0x77]
      %v4298 = vrot.slane %v4294, 7
      %v4299 = vrot.slane %v4298, 4
      %v4300 = vrot.slane %v4295, 7
      %v4301 = vsel %vm1268, %v4299, %v4300
      %4303 = vst [vmem:[#allocation10 + $0x30] sm:$0xff] %v4301
      %v4304 = vld [vmem:[#allocation9] sm:$0x88]
      %v4305 = vld [vmem:[#allocation9 + $0x8] sm:$0xff]
      %v4307 = vshrl.u32 %v4304, 16
      %v4309 = vrot.slane %v4307, 7
      %v4310 = vrot.slane %v4309, 4
      %v4312 = vshrl.u32 %v4305, 16
      %v4314 = vrot.slane %v4312, 7
      %v4315 = vshll.u32 %v4305, 16
      %v4317 = vor.u32 %v4314, %v4315
      %v4318 = vsel %vm1297, %v4310, %v4317
      %4320 = vst [vmem:[#allocation10 + $0x38] sm:$0xff] %v4318
      %v4321 = vld [vmem:[#allocation9 + $0x8] sm:$0xff]
      %4322 = vst [vmem:[#allocation10 + $0x40] sm:$0xff] %v4321
      %v4323 = vld [vmem:[#allocation10] sm:$0xff]
      %v4324 = vld [vmem:[#allocation10 + $0x8] sm:$0xff]
      %v4325 = vld [vmem:[#allocation10 + $0x10] sm:$0xff]
      %v4326 = vld [vmem:[#allocation10 + $0x18] sm:$0xff]
      %v4327 = vld [vmem:[#allocation10 + $0x20] sm:$0xff]
      %v4328 = vld [vmem:[#allocation10 + $0x28] sm:$0xff]
      %v4329 = vld [vmem:[#allocation10 + $0x30] sm:$0xff]
      %v4330 = vld [vmem:[#allocation10 + $0x38] sm:$0xff]
      %v4331 = vld [vmem:[#allocation10 + $0x40] sm:$0xff]
      %v4332 = vld [vmem:[%s10] sm:$0xff]
      %v4333 = vld [vmem:[%s10 + $0x8] sm:$0xff]
      %v4334 = vld [vmem:[%s10 + $0x10] sm:$0xff]
      %v4335 = vld [vmem:[%s10 + $0x18] sm:$0xff]
      %v4336 = vld [vmem:[%s10 + $0x20] sm:$0xff]
      %v4337 = vld [vmem:[%s10 + $0x28] sm:$0xff]
      %v4338 = vld [vmem:[%s10 + $0x30] sm:$0xff]
      %v4339 = vld [vmem:[%s10 + $0x38] sm:$0xff]
      %v4340 = vld [vmem:[%s10 + $0x40] sm:$0xff]
      %v4341 = vld [vmem:[%s10 + $0x48] sm:$0xff]
      %v4342 = vld [vmem:[%s10 + $0x50] sm:$0xff]
      %v4343 = vld [vmem:[%s10 + $0x58] sm:$0xff]
      %v4344 = vld [vmem:[%s10 + $0x60] sm:$0xff]
      %v4345 = vld [vmem:[%s10 + $0x68] sm:$0xff]
      %v4346 = vld [vmem:[%s10 + $0x70] sm:$0xff]
      %v4347 = vld [vmem:[%s10 + $0x78] sm:$0xff]
      %v4348 = vld [vmem:[%s10 + $0x80] sm:$0xff]
      %v4349 = vld [vmem:[%s10 + $0x88] sm:$0xff]
      %v4350 = vld [vmem:[%s10 + $0x90] sm:$0xff]
      %v4351 = vld [vmem:[%s10 + $0x98] sm:$0xff]
      %v4352 = vld [vmem:[%s10 + $0xa0] sm:$0xff]
      %v4353 = vld [vmem:[%s10 + $0xa8] sm:$0xff]
      %v4354 = vld [vmem:[%s10 + $0xb0] sm:$0xff]
      %v4355 = vld [vmem:[%s10 + $0xb8] sm:$0xff]
      %v4356 = vld [vmem:[%s10 + $0xc0] sm:$0xff]
      %v4357 = vld [vmem:[%s10 + $0xc8] sm:$0xff]
      %v4358 = vld [vmem:[%s10 + $0xd0] sm:$0xff]
      %v4359 = vld [vmem:[%s10 + $0xd8] sm:$0xff]
      %v4360 = vld [vmem:[%s10 + $0xe0] sm:$0xff]
      %v4361 = vld [vmem:[%s10 + $0xe8] sm:$0xff]
      %v4362 = vld [vmem:[%s10 + $0xf0] sm:$0xff]
      %v4363 = vld [vmem:[%s10 + $0xf8] sm:$0xff]
      %v4364 = vld [vmem:[%s10 + $0x100] sm:$0xff]
      %v4365 = vld [vmem:[%s10 + $0x108] sm:$0xff]
      %v4366 = vld [vmem:[%s10 + $0x110] sm:$0xff]
      %v4367 = vld [vmem:[%s10 + $0x118] sm:$0xff]
      %v4368 = vld [vmem:[%s10 + $0x120] sm:$0xff]
      %v4369 = vld [vmem:[%s10 + $0x128] sm:$0xff]
      %v4370 = vld [vmem:[%s10 + $0x130] sm:$0xff]
      %v4371 = vld [vmem:[%s10 + $0x138] sm:$0xff]
      %v4372 = vld [vmem:[%s10 + $0x140] sm:$0xff]
      %v4373 = vld [vmem:[%s10 + $0x148] sm:$0xff]
      %v4374 = vld [vmem:[%s10 + $0x150] sm:$0xff]
      %v4375 = vld [vmem:[%s10 + $0x158] sm:$0xff]
      %v4376 = vld [vmem:[%s10 + $0x160] sm:$0xff]
      %v4377 = vld [vmem:[%s10 + $0x168] sm:$0xff]
      %v4378 = vld [vmem:[%s10 + $0x170] sm:$0xff]
      %v4379 = vld [vmem:[%s10 + $0x178] sm:$0xff]
      %v4380 = vld [vmem:[%s10 + $0x180] sm:$0xff]
      %v4381 = vld [vmem:[%s10 + $0x188] sm:$0xff]
      %v4382 = vld [vmem:[%s10 + $0x190] sm:$0xff]
      %v4383 = vld [vmem:[%s10 + $0x198] sm:$0xff]
      %v4384 = vld [vmem:[%s10 + $0x1a0] sm:$0xff]
      %v4385 = vld [vmem:[%s10 + $0x1a8] sm:$0xff]
      %v4386 = vld [vmem:[%s10 + $0x1b0] sm:$0xff]
      %v4387 = vld [vmem:[%s10 + $0x1b8] sm:$0xff]
      %v4388 = vld [vmem:[%s10 + $0x1c0] sm:$0xff]
      %v4389 = vld [vmem:[%s10 + $0x1c8] sm:$0xff]
      %v4390 = vld [vmem:[%s10 + $0x1d0] sm:$0xff]
      %v4391 = vld [vmem:[%s10 + $0x1d8] sm:$0xff]
      %v4392 = vld [vmem:[%s10 + $0x1e0] sm:$0xff]
      %v4393 = vld [vmem:[%s10 + $0x1e8] sm:$0xff]
      %v4394 = vld [vmem:[%s10 + $0x1f0] sm:$0xff]
      %v4395 = vld [vmem:[%s10 + $0x1f8] sm:$0xff]
      %v4396 = vld [vmem:[%s10 + $0x200] sm:$0xff]
      %v4397 = vld [vmem:[%s10 + $0x208] sm:$0xff]
      %v4398 = vld [vmem:[%s10 + $0x210] sm:$0xff]
      %v4399 = vld [vmem:[%s10 + $0x218] sm:$0xff]
      %v4400 = vld [vmem:[%s10 + $0x220] sm:$0xff]
      %v4401 = vld [vmem:[%s10 + $0x228] sm:$0xff]
      %v4402 = vld [vmem:[%s10 + $0x230] sm:$0xff]
      %v4403 = vld [vmem:[%s10 + $0x238] sm:$0xff]
      %v4404 = vld [vmem:[%s10 + $0x240] sm:$0xff]
      %v4405 = vld [vmem:[%s10 + $0x248] sm:$0xff]
      %v4406 = vld [vmem:[%s10 + $0x250] sm:$0xff]
      %v4407 = vld [vmem:[%s10 + $0x258] sm:$0xff]
      %v4408 = vld [vmem:[%s10 + $0x260] sm:$0xff]
      %v4409 = vld [vmem:[%s10 + $0x268] sm:$0xff]
      %v4410 = vld [vmem:[%s10 + $0x270] sm:$0xff]
      %v4411 = vld [vmem:[%s10 + $0x278] sm:$0xff]
      %v4412 = vld [vmem:[%s10 + $0x280] sm:$0xff]
      %v4413 = vld [vmem:[%s10 + $0x288] sm:$0xff]
      %v4414 = vld [vmem:[%s10 + $0x290] sm:$0xff]
      %v4415 = vld [vmem:[%s10 + $0x298] sm:$0xff]
      %v4416 = vld [vmem:[%s10 + $0x2a0] sm:$0xff]
      %v4417 = vld [vmem:[%s10 + $0x2a8] sm:$0xff]
      %v4418 = vld [vmem:[%s10 + $0x2b0] sm:$0xff]
      %v4419 = vld [vmem:[%s10 + $0x2b8] sm:$0xff]
      %v4420 = vld [vmem:[%s10 + $0x2c0] sm:$0xff]
      %v4421 = vld [vmem:[%s10 + $0x2c8] sm:$0xff]
      %v4422 = vld [vmem:[%s10 + $0x2d0] sm:$0xff]
      %v4423 = vld [vmem:[%s10 + $0x2d8] sm:$0xff]
      %v4424 = vld [vmem:[%s10 + $0x2e0] sm:$0xff]
      %v4425 = vld [vmem:[%s10 + $0x2e8] sm:$0xff]
      %v4426 = vld [vmem:[%s10 + $0x2f0] sm:$0xff]
      %v4427 = vld [vmem:[%s10 + $0x2f8] sm:$0xff]
      %v4428 = vld [vmem:[%s10 + $0x300] sm:$0xff]
      %v4429 = vld [vmem:[%s10 + $0x308] sm:$0xff]
      %v4430 = vld [vmem:[%s10 + $0x310] sm:$0xff]
      %v4431 = vld [vmem:[%s10 + $0x318] sm:$0xff]
      %v4432 = vld [vmem:[%s10 + $0x320] sm:$0xff]
      %v4433 = vld [vmem:[%s10 + $0x328] sm:$0xff]
      %v4434 = vld [vmem:[%s10 + $0x330] sm:$0xff]
      %v4435 = vld [vmem:[%s10 + $0x338] sm:$0xff]
      %v4436 = vld [vmem:[%s10 + $0x340] sm:$0xff]
      %v4437 = vld [vmem:[%s10 + $0x348] sm:$0xff]
      %v4438 = vld [vmem:[%s10 + $0x350] sm:$0xff]
      %v4439 = vld [vmem:[%s10 + $0x358] sm:$0xff]
      %v4440 = vld [vmem:[%s10 + $0x360] sm:$0xff]
      %v4441 = vld [vmem:[%s10 + $0x368] sm:$0xff]
      %v4442 = vld [vmem:[%s10 + $0x370] sm:$0xff]
      %v4443 = vld [vmem:[%s10 + $0x378] sm:$0xff]
      %v4444 = vld [vmem:[%s10 + $0x380] sm:$0xff]
      %v4445 = vld [vmem:[%s10 + $0x388] sm:$0xff]
      %v4446 = vld [vmem:[%s10 + $0x390] sm:$0xff]
      %v4447 = vld [vmem:[%s10 + $0x398] sm:$0xff]
      %v4448 = vld [vmem:[%s10 + $0x3a0] sm:$0xff]
      %v4449 = vld [vmem:[%s10 + $0x3a8] sm:$0xff]
      %v4450 = vld [vmem:[%s10 + $0x3b0] sm:$0xff]
      %v4451 = vld [vmem:[%s10 + $0x3b8] sm:$0xff]
      %v4452 = vld [vmem:[%s10 + $0x3c0] sm:$0xff]
      %v4453 = vld [vmem:[%s10 + $0x3c8] sm:$0xff]
      %v4454 = vld [vmem:[%s10 + $0x3d0] sm:$0xff]
      %v4455 = vld [vmem:[%s10 + $0x3d8] sm:$0xff]
      %v4456 = vld [vmem:[%s10 + $0x3e0] sm:$0xff]
      %v4457 = vld [vmem:[%s10 + $0x3e8] sm:$0xff]
      %v4458 = vld [vmem:[%s10 + $0x3f0] sm:$0xff]
      %v4459 = vld [vmem:[%s10 + $0x3f8] sm:$0xff]
      %v4460 = vld [vmem:[%s10 + $0x400] sm:$0xff]
      %v4461 = vld [vmem:[%s10 + $0x408] sm:$0xff]
      %v4462 = vld [vmem:[%s10 + $0x410] sm:$0xff]
      %v4463 = vld [vmem:[%s10 + $0x418] sm:$0xff]
      %v4464 = vld [vmem:[%s10 + $0x420] sm:$0xff]
      %v4465 = vld [vmem:[%s10 + $0x428] sm:$0xff]
      %v4466 = vld [vmem:[%s10 + $0x430] sm:$0xff]
      %v4467 = vld [vmem:[%s10 + $0x438] sm:$0xff]
      %v4468 = vld [vmem:[%s10 + $0x440] sm:$0xff]
      %v4469 = vld [vmem:[%s10 + $0x448] sm:$0xff]
      %v4470 = vld [vmem:[%s10 + $0x450] sm:$0xff]
      %v4471 = vld [vmem:[%s10 + $0x458] sm:$0xff]
      %v4472 = vld [vmem:[%s10 + $0x460] sm:$0xff]
      %v4473 = vld [vmem:[%s10 + $0x468] sm:$0xff]
      %v4474 = vld [vmem:[%s10 + $0x470] sm:$0xff]
      %v4475 = vld [vmem:[%s10 + $0x478] sm:$0xff]
      %v4476 = vld [vmem:[%s10 + $0x480] sm:$0xff]
      %v4477 = vld [vmem:[%s10 + $0x488] sm:$0xff]
      %v4478 = vld [vmem:[%s10 + $0x490] sm:$0xff]
      %v4479 = vld [vmem:[%s10 + $0x498] sm:$0xff]
      %v4480 = vld [vmem:[%s10 + $0x4a0] sm:$0xff]
      %v4481 = vld [vmem:[%s10 + $0x4a8] sm:$0xff]
      %v4482 = vld [vmem:[%s10 + $0x4b0] sm:$0xff]
      %v4483 = vld [vmem:[%s10 + $0x4b8] sm:$0xff]
      %v4484 = vld [vmem:[%s10 + $0x4c0] sm:$0xff]
      %v4485 = vld [vmem:[%s10 + $0x4c8] sm:$0xff]
      %v4486 = vld [vmem:[%s10 + $0x4d0] sm:$0xff]
      %v4487 = vld [vmem:[%s10 + $0x4d8] sm:$0xff]
      %v4488 = vld [vmem:[%s10 + $0x4e0] sm:$0xff]
      %v4489 = vld [vmem:[%s10 + $0x4e8] sm:$0xff]
      %v4490 = vld [vmem:[%s10 + $0x4f0] sm:$0xff]
      %v4491 = vld [vmem:[%s10 + $0x4f8] sm:$0xff]
      %v4492 = vld [vmem:[%s10 + $0x500] sm:$0xff]
      %v4493 = vld [vmem:[%s10 + $0x508] sm:$0xff]
      %v4494 = vld [vmem:[%s10 + $0x510] sm:$0xff]
      %v4495 = vld [vmem:[%s10 + $0x518] sm:$0xff]
      %v4496 = vld [vmem:[%s10 + $0x520] sm:$0xff]
      %v4497 = vld [vmem:[%s10 + $0x528] sm:$0xff]
      %v4498 = vld [vmem:[%s10 + $0x530] sm:$0xff]
      %v4499 = vld [vmem:[%s10 + $0x538] sm:$0xff]
      %v4500 = vld [vmem:[%s10 + $0x540] sm:$0xff]
      %v4501 = vld [vmem:[%s10 + $0x548] sm:$0xff]
      %v4502 = vld [vmem:[%s10 + $0x550] sm:$0xff]
      %v4503 = vld [vmem:[%s10 + $0x558] sm:$0xff]
      %v4504 = vld [vmem:[%s10 + $0x560] sm:$0xff]
      %v4505 = vld [vmem:[%s10 + $0x568] sm:$0xff]
      %v4506 = vld [vmem:[%s10 + $0x570] sm:$0xff]
      %v4507 = vld [vmem:[%s10 + $0x578] sm:$0xff]
      %v4508 = vld [vmem:[%s10 + $0x580] sm:$0xff]
      %v4509 = vld [vmem:[%s10 + $0x588] sm:$0xff]
      %v4510 = vld [vmem:[%s10 + $0x590] sm:$0xff]
      %v4511 = vld [vmem:[%s10 + $0x598] sm:$0xff]
      %v4512 = vld [vmem:[%s10 + $0x5a0] sm:$0xff]
      %v4513 = vld [vmem:[%s10 + $0x5a8] sm:$0xff]
      %v4514 = vld [vmem:[%s10 + $0x5b0] sm:$0xff]
      %v4515 = vld [vmem:[%s10 + $0x5b8] sm:$0xff]
      %v4516 = vld [vmem:[%s10 + $0x5c0] sm:$0xff]
      %v4517 = vld [vmem:[%s10 + $0x5c8] sm:$0xff]
      %v4518 = vld [vmem:[%s10 + $0x5d0] sm:$0xff]
      %v4519 = vld [vmem:[%s10 + $0x5d8] sm:$0xff]
      %v4520 = vld [vmem:[%s10 + $0x5e0] sm:$0xff]
      %v4521 = vld [vmem:[%s10 + $0x5e8] sm:$0xff]
      %v4522 = vld [vmem:[%s10 + $0x5f0] sm:$0xff]
      %v4523 = vld [vmem:[%s10 + $0x5f8] sm:$0xff]
      %v4524 = vld [vmem:[%s10 + $0x600] sm:$0xff]
      %v4525 = vld [vmem:[%s10 + $0x608] sm:$0xff]
      %v4526 = vld [vmem:[%s10 + $0x610] sm:$0xff]
      %v4527 = vld [vmem:[%s10 + $0x618] sm:$0xff]
      %v4528 = vld [vmem:[%s10 + $0x620] sm:$0xff]
      %v4529 = vld [vmem:[%s10 + $0x628] sm:$0xff]
      %v4530 = vld [vmem:[%s10 + $0x630] sm:$0xff]
      %v4531 = vld [vmem:[%s10 + $0x638] sm:$0xff]
      %v4532 = vld [vmem:[%s10 + $0x640] sm:$0xff]
      %v4533 = vld [vmem:[%s10 + $0x648] sm:$0xff]
      %v4534 = vld [vmem:[%s10 + $0x650] sm:$0xff]
      %v4535 = vld [vmem:[%s10 + $0x658] sm:$0xff]
      %v4536 = vld [vmem:[%s10 + $0x660] sm:$0xff]
      %v4537 = vld [vmem:[%s10 + $0x668] sm:$0xff]
      %v4538 = vld [vmem:[%s10 + $0x670] sm:$0xff]
      %v4539 = vld [vmem:[%s10 + $0x678] sm:$0xff]
      %v4540 = vld [vmem:[%s10 + $0x680] sm:$0xff]
      %v4541 = vld [vmem:[%s10 + $0x688] sm:$0xff]
      %v4542 = vld [vmem:[%s10 + $0x690] sm:$0xff]
      %v4543 = vld [vmem:[%s10 + $0x698] sm:$0xff]
      %v4544 = vld [vmem:[%s10 + $0x6a0] sm:$0xff]
      %v4545 = vld [vmem:[%s10 + $0x6a8] sm:$0xff]
      %v4546 = vld [vmem:[%s10 + $0x6b0] sm:$0xff]
      %v4547 = vld [vmem:[%s10 + $0x6b8] sm:$0xff]
      %v4548 = vld [vmem:[%s10 + $0x6c0] sm:$0xff]
      %v4549 = vld [vmem:[%s10 + $0x6c8] sm:$0xff]
      %v4550 = vld [vmem:[%s10 + $0x6d0] sm:$0xff]
      %v4551 = vld [vmem:[%s10 + $0x6d8] sm:$0xff]
      %v4552 = vld [vmem:[%s10 + $0x6e0] sm:$0xff]
      %v4553 = vld [vmem:[%s10 + $0x6e8] sm:$0xff]
      %v4554 = vld [vmem:[%s10 + $0x6f0] sm:$0xff]
      %v4555 = vld [vmem:[%s10 + $0x6f8] sm:$0xff]
      %v4556 = vld [vmem:[%s10 + $0x700] sm:$0xff]
      %v4557 = vld [vmem:[%s10 + $0x708] sm:$0xff]
      %v4558 = vld [vmem:[%s10 + $0x710] sm:$0xff]
      %v4559 = vld [vmem:[%s10 + $0x718] sm:$0xff]
      %v4560 = vld [vmem:[%s10 + $0x720] sm:$0xff]
      %v4561 = vld [vmem:[%s10 + $0x728] sm:$0xff]
      %v4562 = vld [vmem:[%s10 + $0x730] sm:$0xff]
      %v4563 = vld [vmem:[%s10 + $0x738] sm:$0xff]
      %v4564 = vld [vmem:[%s10 + $0x740] sm:$0xff]
      %v4565 = vld [vmem:[%s10 + $0x748] sm:$0xff]
      %v4566 = vld [vmem:[%s10 + $0x750] sm:$0xff]
      %v4567 = vld [vmem:[%s10 + $0x758] sm:$0xff]
      %v4568 = vld [vmem:[%s10 + $0x760] sm:$0xff]
      %v4569 = vld [vmem:[%s10 + $0x768] sm:$0xff]
      %v4570 = vld [vmem:[%s10 + $0x770] sm:$0xff]
      %v4571 = vld [vmem:[%s10 + $0x778] sm:$0xff]
      %v4572 = vld [vmem:[%s10 + $0x780] sm:$0xff]
      %v4573 = vld [vmem:[%s10 + $0x788] sm:$0xff]
      %v4574 = vld [vmem:[%s10 + $0x790] sm:$0xff]
      %v4575 = vld [vmem:[%s10 + $0x798] sm:$0xff]
      %v4576 = vld [vmem:[%s10 + $0x7a0] sm:$0xff]
      %v4577 = vld [vmem:[%s10 + $0x7a8] sm:$0xff]
      %v4578 = vld [vmem:[%s10 + $0x7b0] sm:$0xff]
      %v4579 = vld [vmem:[%s10 + $0x7b8] sm:$0xff]
      %v4580 = vld [vmem:[%s10 + $0x7c0] sm:$0xff]
      %v4581 = vld [vmem:[%s10 + $0x7c8] sm:$0xff]
      %v4582 = vld [vmem:[%s10 + $0x7d0] sm:$0xff]
      %v4583 = vld [vmem:[%s10 + $0x7d8] sm:$0xff]
      %v4584 = vld [vmem:[%s10 + $0x7e0] sm:$0xff]
      %v4585 = vld [vmem:[%s10 + $0x7e8] sm:$0xff]
      %v4586 = vld [vmem:[%s10 + $0x7f0] sm:$0xff]
      %v4587 = vld [vmem:[%s10 + $0x7f8] sm:$0xff]
      %v4588 = vld [vmem:[%s10 + $0x800] sm:$0xff]
      %v4589 = vld [vmem:[%s10 + $0x808] sm:$0xff]
      %v4590 = vld [vmem:[%s10 + $0x810] sm:$0xff]
      %v4591 = vld [vmem:[%s10 + $0x818] sm:$0xff]
      %v4592 = vld [vmem:[%s10 + $0x820] sm:$0xff]
      %v4593 = vld [vmem:[%s10 + $0x828] sm:$0xff]
      %v4594 = vld [vmem:[%s10 + $0x830] sm:$0xff]
      %v4595 = vld [vmem:[%s10 + $0x838] sm:$0xff]
      %v4596 = vld [vmem:[%s10 + $0x840] sm:$0xff]
      %v4597 = vld [vmem:[%s10 + $0x848] sm:$0xff]
      %v4598 = vld [vmem:[%s10 + $0x850] sm:$0xff]
      %v4599 = vld [vmem:[%s10 + $0x858] sm:$0xff]
      %v4600 = vld [vmem:[%s10 + $0x860] sm:$0xff]
      %v4601 = vld [vmem:[%s10 + $0x868] sm:$0xff]
      %v4602 = vld [vmem:[%s10 + $0x870] sm:$0xff]
      %v4603 = vld [vmem:[%s10 + $0x878] sm:$0xff]
      %v4604 = vld [vmem:[%s10 + $0x880] sm:$0xff]
      %v4605 = vld [vmem:[%s10 + $0x888] sm:$0xff]
      %v4606 = vld [vmem:[%s10 + $0x890] sm:$0xff]
      %v4607 = vld [vmem:[%s10 + $0x898] sm:$0xff]
      %v4608 = vld [vmem:[%s10 + $0x8a0] sm:$0xff]
      %v4609 = vld [vmem:[%s10 + $0x8a8] sm:$0xff]
      %v4610 = vld [vmem:[%s10 + $0x8b0] sm:$0xff]
      %v4611 = vld [vmem:[%s10 + $0x8b8] sm:$0xff]
      %v4612 = vld [vmem:[%s10 + $0x8c0] sm:$0xff]
      %v4613 = vld [vmem:[%s10 + $0x8c8] sm:$0xff]
      %v4614 = vld [vmem:[%s10 + $0x8d0] sm:$0xff]
      %v4615 = vld [vmem:[%s10 + $0x8d8] sm:$0xff]
      %v4616 = vld [vmem:[%s10 + $0x8e0] sm:$0xff]
      %v4617 = vld [vmem:[%s10 + $0x8e8] sm:$0xff]
      %v4618 = vld [vmem:[%s10 + $0x8f0] sm:$0xff]
      %v4619 = vld [vmem:[%s10 + $0x8f8] sm:$0xff]
      %v4620 = vld [vmem:[%s10 + $0x900] sm:$0xff]
      %v4621 = vld [vmem:[%s10 + $0x908] sm:$0xff]
      %v4622 = vld [vmem:[%s10 + $0x910] sm:$0xff]
      %v4623 = vld [vmem:[%s10 + $0x918] sm:$0xff]
      %v4624 = vld [vmem:[%s10 + $0x920] sm:$0xff]
      %v4625 = vld [vmem:[%s10 + $0x928] sm:$0xff]
      %v4626 = vld [vmem:[%s10 + $0x930] sm:$0xff]
      %v4627 = vld [vmem:[%s10 + $0x938] sm:$0xff]
      %v4628 = vld [vmem:[%s10 + $0x940] sm:$0xff]
      %v4629 = vld [vmem:[%s10 + $0x948] sm:$0xff]
      %v4630 = vld [vmem:[%s10 + $0x950] sm:$0xff]
      %v4631 = vld [vmem:[%s10 + $0x958] sm:$0xff]
      %v4632 = vld [vmem:[%s10 + $0x960] sm:$0xff]
      %v4633 = vld [vmem:[%s10 + $0x968] sm:$0xff]
      %v4634 = vld [vmem:[%s10 + $0x970] sm:$0xff]
      %v4635 = vld [vmem:[%s10 + $0x978] sm:$0xff]
      %v4636 = vld [vmem:[%s10 + $0x980] sm:$0xff]
      %v4637 = vld [vmem:[%s10 + $0x988] sm:$0xff]
      %v4638 = vld [vmem:[%s10 + $0x990] sm:$0xff]
      %v4639 = vld [vmem:[%s10 + $0x998] sm:$0xff]
      %v4640 = vld [vmem:[%s10 + $0x9a0] sm:$0xff]
      %v4641 = vld [vmem:[%s10 + $0x9a8] sm:$0xff]
      %v4642 = vld [vmem:[%s10 + $0x9b0] sm:$0xff]
      %v4643 = vld [vmem:[%s10 + $0x9b8] sm:$0xff]
      %v4644 = vld [vmem:[%s10 + $0x9c0] sm:$0xff]
      %v4645 = vld [vmem:[%s10 + $0x9c8] sm:$0xff]
      %v4646 = vld [vmem:[%s10 + $0x9d0] sm:$0xff]
      %v4647 = vld [vmem:[%s10 + $0x9d8] sm:$0xff]
      %v4648 = vld [vmem:[%s10 + $0x9e0] sm:$0xff]
      %v4649 = vld [vmem:[%s10 + $0x9e8] sm:$0xff]
      %v4650 = vld [vmem:[%s10 + $0x9f0] sm:$0xff]
      %v4651 = vld [vmem:[%s10 + $0x9f8] sm:$0xff]
      %v4652 = vld [vmem:[%s10 + $0xa00] sm:$0xff]
      %v4653 = vld [vmem:[%s10 + $0xa08] sm:$0xff]
      %v4654 = vld [vmem:[%s10 + $0xa10] sm:$0xff]
      %v4655 = vld [vmem:[%s10 + $0xa18] sm:$0xff]
      %v4656 = vld [vmem:[%s10 + $0xa20] sm:$0xff]
      %v4657 = vld [vmem:[%s10 + $0xa28] sm:$0xff]
      %v4658 = vld [vmem:[%s10 + $0xa30] sm:$0xff]
      %v4659 = vld [vmem:[%s10 + $0xa38] sm:$0xff]
      %v4660 = vld [vmem:[%s10 + $0xa40] sm:$0xff]
      %v4661 = vld [vmem:[%s10 + $0xa48] sm:$0xff]
      %v4662 = vld [vmem:[%s10 + $0xa50] sm:$0xff]
      %v4663 = vld [vmem:[%s10 + $0xa58] sm:$0xff]
      %v4664 = vld [vmem:[%s10 + $0xa60] sm:$0xff]
      %v4665 = vld [vmem:[%s10 + $0xa68] sm:$0xff]
      %v4666 = vld [vmem:[%s10 + $0xa70] sm:$0xff]
      %v4667 = vld [vmem:[%s10 + $0xa78] sm:$0xff]
      %v4668 = vld [vmem:[%s10 + $0xa80] sm:$0xff]
      %v4669 = vld [vmem:[%s10 + $0xa88] sm:$0xff]
      %v4670 = vld [vmem:[%s10 + $0xa90] sm:$0xff]
      %v4671 = vld [vmem:[%s10 + $0xa98] sm:$0xff]
      %v4672 = vld [vmem:[%s10 + $0xaa0] sm:$0xff]
      %v4673 = vld [vmem:[%s10 + $0xaa8] sm:$0xff]
      %v4674 = vld [vmem:[%s10 + $0xab0] sm:$0xff]
      %v4675 = vld [vmem:[%s10 + $0xab8] sm:$0xff]
      %v4676 = vld [vmem:[%s10 + $0xac0] sm:$0xff]
      %v4677 = vld [vmem:[%s10 + $0xac8] sm:$0xff]
      %v4678 = vld [vmem:[%s10 + $0xad0] sm:$0xff]
      %v4679 = vld [vmem:[%s10 + $0xad8] sm:$0xff]
      %v4680 = vld [vmem:[%s10 + $0xae0] sm:$0xff]
      %v4681 = vld [vmem:[%s10 + $0xae8] sm:$0xff]
      %v4682 = vld [vmem:[%s10 + $0xaf0] sm:$0xff]
      %v4683 = vld [vmem:[%s10 + $0xaf8] sm:$0xff]
      %v4684 = vld [vmem:[%s10 + $0xb00] sm:$0xff]
      %v4685 = vld [vmem:[%s10 + $0xb08] sm:$0xff]
      %v4686 = vld [vmem:[%s10 + $0xb10] sm:$0xff]
      %v4687 = vld [vmem:[%s10 + $0xb18] sm:$0xff]
      %v4688 = vld [vmem:[%s10 + $0xb20] sm:$0xff]
      %v4689 = vld [vmem:[%s10 + $0xb28] sm:$0xff]
      %v4690 = vld [vmem:[%s10 + $0xb30] sm:$0xff]
      %v4691 = vld [vmem:[%s10 + $0xb38] sm:$0xff]
      %v4692 = vld [vmem:[%s10 + $0xb40] sm:$0xff]
      %v4693 = vld [vmem:[%s10 + $0xb48] sm:$0xff]
      %v4694 = vld [vmem:[%s10 + $0xb50] sm:$0xff]
      %v4695 = vld [vmem:[%s10 + $0xb58] sm:$0xff]
      %v4696 = vld [vmem:[%s10 + $0xb60] sm:$0xff]
      %v4697 = vld [vmem:[%s10 + $0xb68] sm:$0xff]
      %v4698 = vld [vmem:[%s10 + $0xb70] sm:$0xff]
      %v4699 = vld [vmem:[%s10 + $0xb78] sm:$0xff]
      %v4700 = vld [vmem:[%s10 + $0xb80] sm:$0xff]
      %v4701 = vld [vmem:[%s10 + $0xb88] sm:$0xff]
      %v4702 = vld [vmem:[%s10 + $0xb90] sm:$0xff]
      %v4703 = vld [vmem:[%s10 + $0xb98] sm:$0xff]
      %v4704 = vld [vmem:[%s10 + $0xba0] sm:$0xff]
      %v4705 = vld [vmem:[%s10 + $0xba8] sm:$0xff]
      %v4706 = vld [vmem:[%s10 + $0xbb0] sm:$0xff]
      %v4707 = vld [vmem:[%s10 + $0xbb8] sm:$0xff]
      %v4708 = vld [vmem:[%s10 + $0xbc0] sm:$0xff]
      %v4709 = vld [vmem:[%s10 + $0xbc8] sm:$0xff]
      %v4710 = vld [vmem:[%s10 + $0xbd0] sm:$0xff]
      %v4711 = vld [vmem:[%s10 + $0xbd8] sm:$0xff]
      %v4712 = vld [vmem:[%s10 + $0xbe0] sm:$0xff]
      %v4713 = vld [vmem:[%s10 + $0xbe8] sm:$0xff]
      %v4714 = vld [vmem:[%s10 + $0xbf0] sm:$0xff]
      %v4715 = vld [vmem:[%s10 + $0xbf8] sm:$0xff]
      %v4716 = vld [vmem:[%s10 + $0xc00] sm:$0xff]
      %v4717 = vld [vmem:[%s10 + $0xc08] sm:$0xff]
      %v4718 = vld [vmem:[%s10 + $0xc10] sm:$0xff]
      %v4719 = vld [vmem:[%s10 + $0xc18] sm:$0xff]
      %v4720 = vld [vmem:[%s10 + $0xc20] sm:$0xff]
      %v4721 = vld [vmem:[%s10 + $0xc28] sm:$0xff]
      %v4722 = vld [vmem:[%s10 + $0xc30] sm:$0xff]
      %v4723 = vld [vmem:[%s10 + $0xc38] sm:$0xff]
      %v4724 = vld [vmem:[%s10 + $0xc40] sm:$0xff]
      %v4725 = vld [vmem:[%s10 + $0xc48] sm:$0xff]
      %v4726 = vld [vmem:[%s10 + $0xc50] sm:$0xff]
      %v4727 = vld [vmem:[%s10 + $0xc58] sm:$0xff]
      %v4728 = vld [vmem:[%s10 + $0xc60] sm:$0xff]
      %v4729 = vld [vmem:[%s10 + $0xc68] sm:$0xff]
      %v4730 = vld [vmem:[%s10 + $0xc70] sm:$0xff]
      %v4731 = vld [vmem:[%s10 + $0xc78] sm:$0xff]
      %v4732 = vld [vmem:[%s10 + $0xc80] sm:$0xff]
      %v4733 = vld [vmem:[%s10 + $0xc88] sm:$0xff]
      %v4734 = vld [vmem:[%s10 + $0xc90] sm:$0xff]
      %v4735 = vld [vmem:[%s10 + $0xc98] sm:$0xff]
      %v4736 = vld [vmem:[%s10 + $0xca0] sm:$0xff]
      %v4737 = vld [vmem:[%s10 + $0xca8] sm:$0xff]
      %v4738 = vld [vmem:[%s10 + $0xcb0] sm:$0xff]
      %v4739 = vld [vmem:[%s10 + $0xcb8] sm:$0xff]
      %v4740 = vld [vmem:[%s10 + $0xcc0] sm:$0xff]
      %v4741 = vld [vmem:[%s10 + $0xcc8] sm:$0xff]
      %v4742 = vld [vmem:[%s10 + $0xcd0] sm:$0xff]
      %v4743 = vld [vmem:[%s10 + $0xcd8] sm:$0xff]
      %v4744 = vld [vmem:[%s10 + $0xce0] sm:$0xff]
      %v4745 = vld [vmem:[%s10 + $0xce8] sm:$0xff]
      %v4746 = vld [vmem:[%s10 + $0xcf0] sm:$0xff]
      %v4747 = vld [vmem:[%s10 + $0xcf8] sm:$0xff]
      %v4748 = vld [vmem:[%s10 + $0xd00] sm:$0xff]
      %v4749 = vld [vmem:[%s10 + $0xd08] sm:$0xff]
      %v4750 = vld [vmem:[%s10 + $0xd10] sm:$0xff]
      %v4751 = vld [vmem:[%s10 + $0xd18] sm:$0xff]
      %v4752 = vld [vmem:[%s10 + $0xd20] sm:$0xff]
      %v4753 = vld [vmem:[%s10 + $0xd28] sm:$0xff]
      %v4754 = vld [vmem:[%s10 + $0xd30] sm:$0xff]
      %v4755 = vld [vmem:[%s10 + $0xd38] sm:$0xff]
      %v4756 = vld [vmem:[%s10 + $0xd40] sm:$0xff]
      %v4757 = vld [vmem:[%s10 + $0xd48] sm:$0xff]
      %v4758 = vld [vmem:[%s10 + $0xd50] sm:$0xff]
      %v4759 = vld [vmem:[%s10 + $0xd58] sm:$0xff]
      %v4760 = vld [vmem:[%s10 + $0xd60] sm:$0xff]
      %v4761 = vld [vmem:[%s10 + $0xd68] sm:$0xff]
      %v4762 = vld [vmem:[%s10 + $0xd70] sm:$0xff]
      %v4763 = vld [vmem:[%s10 + $0xd78] sm:$0xff]
      %v4764 = vld [vmem:[%s10 + $0xd80] sm:$0xff]
      %v4765 = vld [vmem:[%s10 + $0xd88] sm:$0xff]
      %v4766 = vld [vmem:[%s10 + $0xd90] sm:$0xff]
      %v4767 = vld [vmem:[%s10 + $0xd98] sm:$0xff]
      %v4768 = vld [vmem:[%s10 + $0xda0] sm:$0xff]
      %v4769 = vld [vmem:[%s10 + $0xda8] sm:$0xff]
      %v4770 = vld [vmem:[%s10 + $0xdb0] sm:$0xff]
      %v4771 = vld [vmem:[%s10 + $0xdb8] sm:$0xff]
      %v4772 = vld [vmem:[%s10 + $0xdc0] sm:$0xff]
      %v4773 = vld [vmem:[%s10 + $0xdc8] sm:$0xff]
      %v4774 = vld [vmem:[%s10 + $0xdd0] sm:$0xff]
      %v4775 = vld [vmem:[%s10 + $0xdd8] sm:$0xff]
      %v4776 = vld [vmem:[%s10 + $0xde0] sm:$0xff]
      %v4777 = vld [vmem:[%s10 + $0xde8] sm:$0xff]
      %v4778 = vld [vmem:[%s10 + $0xdf0] sm:$0xff]
      %v4779 = vld [vmem:[%s10 + $0xdf8] sm:$0xff]
      %v4780 = vld [vmem:[%s10 + $0xe00] sm:$0xff]
      %v4781 = vld [vmem:[%s10 + $0xe08] sm:$0xff]
      %v4782 = vld [vmem:[%s10 + $0xe10] sm:$0xff]
      %v4783 = vld [vmem:[%s10 + $0xe18] sm:$0xff]
      %v4784 = vld [vmem:[%s10 + $0xe20] sm:$0xff]
      %v4785 = vld [vmem:[%s10 + $0xe28] sm:$0xff]
      %v4786 = vld [vmem:[%s10 + $0xe30] sm:$0xff]
      %v4787 = vld [vmem:[%s10 + $0xe38] sm:$0xff]
      %v4788 = vld [vmem:[%s10 + $0xe40] sm:$0xff]
      %v4789 = vld [vmem:[%s10 + $0xe48] sm:$0xff]
      %v4790 = vld [vmem:[%s10 + $0xe50] sm:$0xff]
      %v4791 = vld [vmem:[%s10 + $0xe58] sm:$0xff]
      %v4792 = vld [vmem:[%s10 + $0xe60] sm:$0xff]
      %v4793 = vld [vmem:[%s10 + $0xe68] sm:$0xff]
      %v4794 = vld [vmem:[%s10 + $0xe70] sm:$0xff]
      %v4795 = vld [vmem:[%s10 + $0xe78] sm:$0xff]
      %v4796 = vld [vmem:[%s10 + $0xe80] sm:$0xff]
      %v4797 = vld [vmem:[%s10 + $0xe88] sm:$0xff]
      %v4798 = vld [vmem:[%s10 + $0xe90] sm:$0xff]
      %v4799 = vld [vmem:[%s10 + $0xe98] sm:$0xff]
      %v4800 = vld [vmem:[%s10 + $0xea0] sm:$0xff]
      %v4801 = vld [vmem:[%s10 + $0xea8] sm:$0xff]
      %v4802 = vld [vmem:[%s10 + $0xeb0] sm:$0xff]
      %v4803 = vld [vmem:[%s10 + $0xeb8] sm:$0xff]
      %v4804 = vld [vmem:[%s10 + $0xec0] sm:$0xff]
      %v4805 = vld [vmem:[%s10 + $0xec8] sm:$0xff]
      %v4806 = vld [vmem:[%s10 + $0xed0] sm:$0xff]
      %v4807 = vld [vmem:[%s10 + $0xed8] sm:$0xff]
      %v4808 = vld [vmem:[%s10 + $0xee0] sm:$0xff]
      %v4809 = vld [vmem:[%s10 + $0xee8] sm:$0xff]
      %v4810 = vld [vmem:[%s10 + $0xef0] sm:$0xff]
      %v4811 = vld [vmem:[%s10 + $0xef8] sm:$0xff]
      %v4812 = vld [vmem:[%s10 + $0xf00] sm:$0xff]
      %v4813 = vld [vmem:[%s10 + $0xf08] sm:$0xff]
      %v4814 = vld [vmem:[%s10 + $0xf10] sm:$0xff]
      %v4815 = vld [vmem:[%s10 + $0xf18] sm:$0xff]
      %v4816 = vld [vmem:[%s10 + $0xf20] sm:$0xff]
      %v4817 = vld [vmem:[%s10 + $0xf28] sm:$0xff]
      %v4818 = vld [vmem:[%s10 + $0xf30] sm:$0xff]
      %v4819 = vld [vmem:[%s10 + $0xf38] sm:$0xff]
      %v4820 = vld [vmem:[%s10 + $0xf40] sm:$0xff]
      %v4821 = vld [vmem:[%s10 + $0xf48] sm:$0xff]
      %v4822 = vld [vmem:[%s10 + $0xf50] sm:$0xff]
      %v4823 = vld [vmem:[%s10 + $0xf58] sm:$0xff]
      %v4824 = vld [vmem:[%s10 + $0xf60] sm:$0xff]
      %v4825 = vld [vmem:[%s10 + $0xf68] sm:$0xff]
      %v4826 = vld [vmem:[%s10 + $0xf70] sm:$0xff]
      %v4827 = vld [vmem:[%s10 + $0xf78] sm:$0xff]
      %v4828 = vld [vmem:[%s10 + $0xf80] sm:$0xff]
      %v4829 = vld [vmem:[%s10 + $0xf88] sm:$0xff]
      %v4830 = vld [vmem:[%s10 + $0xf90] sm:$0xff]
      %v4831 = vld [vmem:[%s10 + $0xf98] sm:$0xff]
      %v4832 = vld [vmem:[%s10 + $0xfa0] sm:$0xff]
      %v4833 = vld [vmem:[%s10 + $0xfa8] sm:$0xff]
      %v4834 = vld [vmem:[%s10 + $0xfb0] sm:$0xff]
      %v4835 = vld [vmem:[%s10 + $0xfb8] sm:$0xff]
      %v4836 = vld [vmem:[%s10 + $0xfc0] sm:$0xff]
      %v4837 = vld [vmem:[%s10 + $0xfc8] sm:$0xff]
      %v4838 = vld [vmem:[%s10 + $0xfd0] sm:$0xff]
      %v4839 = vld [vmem:[%s10 + $0xfd8] sm:$0xff]
      %v4840 = vld [vmem:[%s10 + $0xfe0] sm:$0xff]
      %v4841 = vld [vmem:[%s10 + $0xfe8] sm:$0xff]
      %v4842 = vld [vmem:[%s10 + $0xff0] sm:$0xff]
      %v4843 = vld [vmem:[%s10 + $0xff8] sm:$0xff]
      %v4844 = vld [vmem:[%s10 + $0x1000] sm:$0xff]
      %v4845 = vld [vmem:[%s10 + $0x1008] sm:$0xff]
      %v4846 = vld [vmem:[%s10 + $0x1010] sm:$0xff]
      %v4847 = vld [vmem:[%s10 + $0x1018] sm:$0xff]
      %v4848 = vld [vmem:[%s10 + $0x1020] sm:$0xff]
      %v4849 = vld [vmem:[%s10 + $0x1028] sm:$0xff]
      %v4850 = vld [vmem:[%s10 + $0x1030] sm:$0xff]
      %v4851 = vld [vmem:[%s10 + $0x1038] sm:$0xff]
      %v4852 = vld [vmem:[%s10 + $0x1040] sm:$0xff]
      %v4853 = vld [vmem:[%s10 + $0x1048] sm:$0xff]
      %v4854 = vld [vmem:[%s10 + $0x1050] sm:$0xff]
      %v4855 = vld [vmem:[%s10 + $0x1058] sm:$0xff]
      %v4856 = vld [vmem:[%s10 + $0x1060] sm:$0xff]
      %v4857 = vld [vmem:[%s10 + $0x1068] sm:$0xff]
      %v4858 = vld [vmem:[%s10 + $0x1070] sm:$0xff]
      %v4859 = vld [vmem:[%s10 + $0x1078] sm:$0xff]
      %v4860 = vld [vmem:[%s10 + $0x1080] sm:$0xff]
      %v4861 = vld [vmem:[%s10 + $0x1088] sm:$0xff]
      %v4862 = vld [vmem:[%s10 + $0x1090] sm:$0xff]
      %v4863 = vld [vmem:[%s10 + $0x1098] sm:$0xff]
      %v4864 = vld [vmem:[%s10 + $0x10a0] sm:$0xff]
      %v4865 = vld [vmem:[%s10 + $0x10a8] sm:$0xff]
      %v4866 = vld [vmem:[%s10 + $0x10b0] sm:$0xff]
      %v4867 = vld [vmem:[%s10 + $0x10b8] sm:$0xff]
      %v4868 = vld [vmem:[%s10 + $0x10c0] sm:$0xff]
      %v4869 = vld [vmem:[%s10 + $0x10c8] sm:$0xff]
      %v4870 = vld [vmem:[%s10 + $0x10d0] sm:$0xff]
      %v4871 = vld [vmem:[%s10 + $0x10d8] sm:$0xff]
      %v4872 = vld [vmem:[%s10 + $0x10e0] sm:$0xff]
      %v4873 = vld [vmem:[%s10 + $0x10e8] sm:$0xff]
      %v4874 = vld [vmem:[%s10 + $0x10f0] sm:$0xff]
      %v4875 = vld [vmem:[%s10 + $0x10f8] sm:$0xff]
      %v4876 = vld [vmem:[%s10 + $0x1100] sm:$0xff]
      %v4877 = vld [vmem:[%s10 + $0x1108] sm:$0xff]
      %v4878 = vld [vmem:[%s10 + $0x1110] sm:$0xff]
      %v4879 = vld [vmem:[%s10 + $0x1118] sm:$0xff]
      %v4880 = vld [vmem:[%s10 + $0x1120] sm:$0xff]
      %v4881 = vld [vmem:[%s10 + $0x1128] sm:$0xff]
      %v4882 = vld [vmem:[%s10 + $0x1130] sm:$0xff]
      %v4883 = vld [vmem:[%s10 + $0x1138] sm:$0xff]
      %v4884 = vld [vmem:[%s10 + $0x1140] sm:$0xff]
      %v4885 = vld [vmem:[%s10 + $0x1148] sm:$0xff]
      %v4886 = vld [vmem:[%s10 + $0x1150] sm:$0xff]
      %v4887 = vld [vmem:[%s10 + $0x1158] sm:$0xff]
      %v4888 = vld [vmem:[%s10 + $0x1160] sm:$0xff]
      %v4889 = vld [vmem:[%s10 + $0x1168] sm:$0xff]
      %v4890 = vld [vmem:[%s10 + $0x1170] sm:$0xff]
      %v4891 = vld [vmem:[%s10 + $0x1178] sm:$0xff]
      %v4892 = vld [vmem:[%s10 + $0x1180] sm:$0xff]
      %v4893 = vld [vmem:[%s10 + $0x1188] sm:$0xff]
      %v4894 = vld [vmem:[%s10 + $0x1190] sm:$0xff]
      %v4895 = vld [vmem:[%s10 + $0x1198] sm:$0xff]
      %v4896 = vld [vmem:[%s10 + $0x11a0] sm:$0xff]
      %v4897 = vld [vmem:[%s10 + $0x11a8] sm:$0xff]
      %v4898 = vld [vmem:[%s10 + $0x11b0] sm:$0xff]
      %v4899 = vld [vmem:[%s10 + $0x11b8] sm:$0xff]
      %v4900 = vld [vmem:[%s10 + $0x11c0] sm:$0xff]
      %v4901 = vld [vmem:[%s10 + $0x11c8] sm:$0xff]
      %v4902 = vld [vmem:[%s10 + $0x11d0] sm:$0xff]
      %v4903 = vld [vmem:[%s10 + $0x11d8] sm:$0xff]
      %v4904 = vld [vmem:[%s10 + $0x11e0] sm:$0xff]
      %v4905 = vld [vmem:[%s10 + $0x11e8] sm:$0xff]
      %v4906 = vld [vmem:[%s10 + $0x11f0] sm:$0xff]
      %v4907 = vld [vmem:[%s10 + $0x11f8] sm:$0xff]
      %v4917 = vunpack.c.l.b16 %v4323
      %v4918 = vunpack.c.h.b16 %v4323
      %v4919 = vunpack.c.l.b16 %v4324
      %v4920 = vunpack.c.h.b16 %v4324
      %v4921 = vunpack.c.l.b16 %v4325
      %v4922 = vunpack.c.h.b16 %v4325
      %v4923 = vunpack.c.l.b16 %v4326
      %v4924 = vunpack.c.h.b16 %v4326
      %v4925 = vunpack.c.l.b16 %v4327
      %v4926 = vunpack.c.h.b16 %v4327
      %v4927 = vunpack.c.l.b16 %v4328
      %v4928 = vunpack.c.h.b16 %v4328
      %v4929 = vunpack.c.l.b16 %v4329
      %v4930 = vunpack.c.h.b16 %v4329
      %v4931 = vunpack.c.l.b16 %v4330
      %v4932 = vunpack.c.h.b16 %v4330
      %v4933 = vunpack.c.l.b16 %v4331
      %v4934 = vunpack.c.h.b16 %v4331
      %v4935 = vpack.c.b16 %v4917, %v4917
      %v4936 = vpack.c.b16 %v4918, %v4918
      %v4937 = vpack.c.b16 %v4919, %v4919
      %v4938 = vpack.c.b16 %v4920, %v4920
      %v4939 = vpack.c.b16 %v4921, %v4921
      %v4940 = vpack.c.b16 %v4922, %v4922
      %v4941 = vpack.c.b16 %v4923, %v4923
      %v4942 = vpack.c.b16 %v4924, %v4924
      %v4943 = vpack.c.b16 %v4925, %v4925
      %v4944 = vpack.c.b16 %v4926, %v4926
      %v4945 = vpack.c.b16 %v4927, %v4927
      %v4946 = vpack.c.b16 %v4928, %v4928
      %v4947 = vpack.c.b16 %v4929, %v4929
      %v4948 = vpack.c.b16 %v4930, %v4930
      %v4949 = vpack.c.b16 %v4931, %v4931
      %v4950 = vpack.c.b16 %v4932, %v4932
      %v4951 = vpack.c.b16 %v4933, %v4933
      %v4952 = vpack.c.b16 %v4934, %v4934
      %v5547 = vunpack.c.l.b16 %v4332
      %v5548 = vunpack.c.h.b16 %v4332
      %v5549 = vunpack.c.l.b16 %v4333
      %v5550 = vunpack.c.h.b16 %v4333
      %v5551 = vunpack.c.l.b16 %v4334
      %v5552 = vunpack.c.h.b16 %v4334
      %v5553 = vunpack.c.l.b16 %v4335
      %v5554 = vunpack.c.h.b16 %v4335
      %v5555 = vunpack.c.l.b16 %v4336
      %v5556 = vunpack.c.h.b16 %v4336
      %v5557 = vunpack.c.l.b16 %v4337
      %v5558 = vunpack.c.h.b16 %v4337
      %v5559 = vunpack.c.l.b16 %v4338
      %v5560 = vunpack.c.h.b16 %v4338
      %v5561 = vunpack.c.l.b16 %v4339
      %v5562 = vunpack.c.h.b16 %v4339
      %v5563 = vunpack.c.l.b16 %v4340
      %v5564 = vunpack.c.h.b16 %v4340
      %v5565 = vunpack.c.l.b16 %v4341
      %v5566 = vunpack.c.h.b16 %v4341
      %v5567 = vunpack.c.l.b16 %v4342
      %v5568 = vunpack.c.h.b16 %v4342
      %v5569 = vunpack.c.l.b16 %v4343
      %v5570 = vunpack.c.h.b16 %v4343
      %v5571 = vunpack.c.l.b16 %v4344
      %v5572 = vunpack.c.h.b16 %v4344
      %v5573 = vunpack.c.l.b16 %v4345
      %v5574 = vunpack.c.h.b16 %v4345
      %v5575 = vunpack.c.l.b16 %v4346
      %v5576 = vunpack.c.h.b16 %v4346
      %v5577 = vunpack.c.l.b16 %v4347
      %v5578 = vunpack.c.h.b16 %v4347
      %v5579 = vunpack.c.l.b16 %v4348
      %v5580 = vunpack.c.h.b16 %v4348
      %v5581 = vunpack.c.l.b16 %v4349
      %v5582 = vunpack.c.h.b16 %v4349
      %v5583 = vunpack.c.l.b16 %v4350
      %v5584 = vunpack.c.h.b16 %v4350
      %v5585 = vunpack.c.l.b16 %v4351
      %v5586 = vunpack.c.h.b16 %v4351
      %v5587 = vunpack.c.l.b16 %v4352
      %v5588 = vunpack.c.h.b16 %v4352
      %v5589 = vunpack.c.l.b16 %v4353
      %v5590 = vunpack.c.h.b16 %v4353
      %v5591 = vunpack.c.l.b16 %v4354
      %v5592 = vunpack.c.h.b16 %v4354
      %v5593 = vunpack.c.l.b16 %v4355
      %v5594 = vunpack.c.h.b16 %v4355
      %v5595 = vunpack.c.l.b16 %v4356
      %v5596 = vunpack.c.h.b16 %v4356
      %v5597 = vunpack.c.l.b16 %v4357
      %v5598 = vunpack.c.h.b16 %v4357
      %v5599 = vunpack.c.l.b16 %v4358
      %v5600 = vunpack.c.h.b16 %v4358
      %v5601 = vunpack.c.l.b16 %v4359
      %v5602 = vunpack.c.h.b16 %v4359
      %v5603 = vunpack.c.l.b16 %v4360
      %v5604 = vunpack.c.h.b16 %v4360
      %v5605 = vunpack.c.l.b16 %v4361
      %v5606 = vunpack.c.h.b16 %v4361
      %v5607 = vunpack.c.l.b16 %v4362
      %v5608 = vunpack.c.h.b16 %v4362
      %v5609 = vunpack.c.l.b16 %v4363
      %v5610 = vunpack.c.h.b16 %v4363
      %v5611 = vunpack.c.l.b16 %v4364
      %v5612 = vunpack.c.h.b16 %v4364
      %v5613 = vunpack.c.l.b16 %v4365
      %v5614 = vunpack.c.h.b16 %v4365
      %v5615 = vunpack.c.l.b16 %v4366
      %v5616 = vunpack.c.h.b16 %v4366
      %v5617 = vunpack.c.l.b16 %v4367
      %v5618 = vunpack.c.h.b16 %v4367
      %v5619 = vunpack.c.l.b16 %v4368
      %v5620 = vunpack.c.h.b16 %v4368
      %v5621 = vunpack.c.l.b16 %v4369
      %v5622 = vunpack.c.h.b16 %v4369
      %v5623 = vunpack.c.l.b16 %v4370
      %v5624 = vunpack.c.h.b16 %v4370
      %v5625 = vunpack.c.l.b16 %v4371
      %v5626 = vunpack.c.h.b16 %v4371
      %v5627 = vunpack.c.l.b16 %v4372
      %v5628 = vunpack.c.h.b16 %v4372
      %v5629 = vunpack.c.l.b16 %v4373
      %v5630 = vunpack.c.h.b16 %v4373
      %v5631 = vunpack.c.l.b16 %v4374
      %v5632 = vunpack.c.h.b16 %v4374
      %v5633 = vunpack.c.l.b16 %v4375
      %v5634 = vunpack.c.h.b16 %v4375
      %v5635 = vunpack.c.l.b16 %v4376
      %v5636 = vunpack.c.h.b16 %v4376
      %v5637 = vunpack.c.l.b16 %v4377
      %v5638 = vunpack.c.h.b16 %v4377
      %v5639 = vunpack.c.l.b16 %v4378
      %v5640 = vunpack.c.h.b16 %v4378
      %v5641 = vunpack.c.l.b16 %v4379
      %v5642 = vunpack.c.h.b16 %v4379
      %v5643 = vunpack.c.l.b16 %v4380
      %v5644 = vunpack.c.h.b16 %v4380
      %v5645 = vunpack.c.l.b16 %v4381
      %v5646 = vunpack.c.h.b16 %v4381
      %v5647 = vunpack.c.l.b16 %v4382
      %v5648 = vunpack.c.h.b16 %v4382
      %v5649 = vunpack.c.l.b16 %v4383
      %v5650 = vunpack.c.h.b16 %v4383
      %v5651 = vunpack.c.l.b16 %v4384
      %v5652 = vunpack.c.h.b16 %v4384
      %v5653 = vunpack.c.l.b16 %v4385
      %v5654 = vunpack.c.h.b16 %v4385
      %v5655 = vunpack.c.l.b16 %v4386
      %v5656 = vunpack.c.h.b16 %v4386
      %v5657 = vunpack.c.l.b16 %v4387
      %v5658 = vunpack.c.h.b16 %v4387
      %v5659 = vunpack.c.l.b16 %v4388
      %v5660 = vunpack.c.h.b16 %v4388
      %v5661 = vunpack.c.l.b16 %v4389
      %v5662 = vunpack.c.h.b16 %v4389
      %v5663 = vunpack.c.l.b16 %v4390
      %v5664 = vunpack.c.h.b16 %v4390
      %v5665 = vunpack.c.l.b16 %v4391
      %v5666 = vunpack.c.h.b16 %v4391
      %v5667 = vunpack.c.l.b16 %v4392
      %v5668 = vunpack.c.h.b16 %v4392
      %v5669 = vunpack.c.l.b16 %v4393
      %v5670 = vunpack.c.h.b16 %v4393
      %v5671 = vunpack.c.l.b16 %v4394
      %v5672 = vunpack.c.h.b16 %v4394
      %v5673 = vunpack.c.l.b16 %v4395
      %v5674 = vunpack.c.h.b16 %v4395
      %v5675 = vunpack.c.l.b16 %v4396
      %v5676 = vunpack.c.h.b16 %v4396
      %v5677 = vunpack.c.l.b16 %v4397
      %v5678 = vunpack.c.h.b16 %v4397
      %v5679 = vunpack.c.l.b16 %v4398
      %v5680 = vunpack.c.h.b16 %v4398
      %v5681 = vunpack.c.l.b16 %v4399
      %v5682 = vunpack.c.h.b16 %v4399
      %v5683 = vunpack.c.l.b16 %v4400
      %v5684 = vunpack.c.h.b16 %v4400
      %v5685 = vunpack.c.l.b16 %v4401
      %v5686 = vunpack.c.h.b16 %v4401
      %v5687 = vunpack.c.l.b16 %v4402
      %v5688 = vunpack.c.h.b16 %v4402
      %v5689 = vunpack.c.l.b16 %v4403
      %v5690 = vunpack.c.h.b16 %v4403
      %v5691 = vunpack.c.l.b16 %v4404
      %v5692 = vunpack.c.h.b16 %v4404
      %v5693 = vunpack.c.l.b16 %v4405
      %v5694 = vunpack.c.h.b16 %v4405
      %v5695 = vunpack.c.l.b16 %v4406
      %v5696 = vunpack.c.h.b16 %v4406
      %v5697 = vunpack.c.l.b16 %v4407
      %v5698 = vunpack.c.h.b16 %v4407
      %v5699 = vunpack.c.l.b16 %v4408
      %v5700 = vunpack.c.h.b16 %v4408
      %v5701 = vunpack.c.l.b16 %v4409
      %v5702 = vunpack.c.h.b16 %v4409
      %v5703 = vunpack.c.l.b16 %v4410
      %v5704 = vunpack.c.h.b16 %v4410
      %v5705 = vunpack.c.l.b16 %v4411
      %v5706 = vunpack.c.h.b16 %v4411
      %v5707 = vunpack.c.l.b16 %v4412
      %v5708 = vunpack.c.h.b16 %v4412
      %v5709 = vunpack.c.l.b16 %v4413
      %v5710 = vunpack.c.h.b16 %v4413
      %v5711 = vunpack.c.l.b16 %v4414
      %v5712 = vunpack.c.h.b16 %v4414
      %v5713 = vunpack.c.l.b16 %v4415
      %v5714 = vunpack.c.h.b16 %v4415
      %v5715 = vunpack.c.l.b16 %v4416
      %v5716 = vunpack.c.h.b16 %v4416
      %v5717 = vunpack.c.l.b16 %v4417
      %v5718 = vunpack.c.h.b16 %v4417
      %v5719 = vunpack.c.l.b16 %v4418
      %v5720 = vunpack.c.h.b16 %v4418
      %v5721 = vunpack.c.l.b16 %v4419
      %v5722 = vunpack.c.h.b16 %v4419
      %v5723 = vunpack.c.l.b16 %v4420
      %v5724 = vunpack.c.h.b16 %v4420
      %v5725 = vunpack.c.l.b16 %v4421
      %v5726 = vunpack.c.h.b16 %v4421
      %v5727 = vunpack.c.l.b16 %v4422
      %v5728 = vunpack.c.h.b16 %v4422
      %v5729 = vunpack.c.l.b16 %v4423
      %v5730 = vunpack.c.h.b16 %v4423
      %v5731 = vunpack.c.l.b16 %v4424
      %v5732 = vunpack.c.h.b16 %v4424
      %v5733 = vunpack.c.l.b16 %v4425
      %v5734 = vunpack.c.h.b16 %v4425
      %v5735 = vunpack.c.l.b16 %v4426
      %v5736 = vunpack.c.h.b16 %v4426
      %v5737 = vunpack.c.l.b16 %v4427
      %v5738 = vunpack.c.h.b16 %v4427
      %v5739 = vunpack.c.l.b16 %v4428
      %v5740 = vunpack.c.h.b16 %v4428
      %v5741 = vunpack.c.l.b16 %v4429
      %v5742 = vunpack.c.h.b16 %v4429
      %v5743 = vunpack.c.l.b16 %v4430
      %v5744 = vunpack.c.h.b16 %v4430
      %v5745 = vunpack.c.l.b16 %v4431
      %v5746 = vunpack.c.h.b16 %v4431
      %v5747 = vunpack.c.l.b16 %v4432
      %v5748 = vunpack.c.h.b16 %v4432
      %v5749 = vunpack.c.l.b16 %v4433
      %v5750 = vunpack.c.h.b16 %v4433
      %v5751 = vunpack.c.l.b16 %v4434
      %v5752 = vunpack.c.h.b16 %v4434
      %v5753 = vunpack.c.l.b16 %v4435
      %v5754 = vunpack.c.h.b16 %v4435
      %v5755 = vunpack.c.l.b16 %v4436
      %v5756 = vunpack.c.h.b16 %v4436
      %v5757 = vunpack.c.l.b16 %v4437
      %v5758 = vunpack.c.h.b16 %v4437
      %v5759 = vunpack.c.l.b16 %v4438
      %v5760 = vunpack.c.h.b16 %v4438
      %v5761 = vunpack.c.l.b16 %v4439
      %v5762 = vunpack.c.h.b16 %v4439
      %v5763 = vunpack.c.l.b16 %v4440
      %v5764 = vunpack.c.h.b16 %v4440
      %v5765 = vunpack.c.l.b16 %v4441
      %v5766 = vunpack.c.h.b16 %v4441
      %v5767 = vunpack.c.l.b16 %v4442
      %v5768 = vunpack.c.h.b16 %v4442
      %v5769 = vunpack.c.l.b16 %v4443
      %v5770 = vunpack.c.h.b16 %v4443
      %v5771 = vunpack.c.l.b16 %v4444
      %v5772 = vunpack.c.h.b16 %v4444
      %v5773 = vunpack.c.l.b16 %v4445
      %v5774 = vunpack.c.h.b16 %v4445
      %v5775 = vunpack.c.l.b16 %v4446
      %v5776 = vunpack.c.h.b16 %v4446
      %v5777 = vunpack.c.l.b16 %v4447
      %v5778 = vunpack.c.h.b16 %v4447
      %v5779 = vunpack.c.l.b16 %v4448
      %v5780 = vunpack.c.h.b16 %v4448
      %v5781 = vunpack.c.l.b16 %v4449
      %v5782 = vunpack.c.h.b16 %v4449
      %v5783 = vunpack.c.l.b16 %v4450
      %v5784 = vunpack.c.h.b16 %v4450
      %v5785 = vunpack.c.l.b16 %v4451
      %v5786 = vunpack.c.h.b16 %v4451
      %v5787 = vunpack.c.l.b16 %v4452
      %v5788 = vunpack.c.h.b16 %v4452
      %v5789 = vunpack.c.l.b16 %v4453
      %v5790 = vunpack.c.h.b16 %v4453
      %v5791 = vunpack.c.l.b16 %v4454
      %v5792 = vunpack.c.h.b16 %v4454
      %v5793 = vunpack.c.l.b16 %v4455
      %v5794 = vunpack.c.h.b16 %v4455
      %v5795 = vunpack.c.l.b16 %v4456
      %v5796 = vunpack.c.h.b16 %v4456
      %v5797 = vunpack.c.l.b16 %v4457
      %v5798 = vunpack.c.h.b16 %v4457
      %v5799 = vunpack.c.l.b16 %v4458
      %v5800 = vunpack.c.h.b16 %v4458
      %v5801 = vunpack.c.l.b16 %v4459
      %v5802 = vunpack.c.h.b16 %v4459
      %v5803 = vunpack.c.l.b16 %v4460
      %v5804 = vunpack.c.h.b16 %v4460
      %v5805 = vunpack.c.l.b16 %v4461
      %v5806 = vunpack.c.h.b16 %v4461
      %v5807 = vunpack.c.l.b16 %v4462
      %v5808 = vunpack.c.h.b16 %v4462
      %v5809 = vunpack.c.l.b16 %v4463
      %v5810 = vunpack.c.h.b16 %v4463
      %v5811 = vunpack.c.l.b16 %v4464
      %v5812 = vunpack.c.h.b16 %v4464
      %v5813 = vunpack.c.l.b16 %v4465
      %v5814 = vunpack.c.h.b16 %v4465
      %v5815 = vunpack.c.l.b16 %v4466
      %v5816 = vunpack.c.h.b16 %v4466
      %v5817 = vunpack.c.l.b16 %v4467
      %v5818 = vunpack.c.h.b16 %v4467
      %v5819 = vunpack.c.l.b16 %v4468
      %v5820 = vunpack.c.h.b16 %v4468
      %v5821 = vunpack.c.l.b16 %v4469
      %v5822 = vunpack.c.h.b16 %v4469
      %v5823 = vunpack.c.l.b16 %v4470
      %v5824 = vunpack.c.h.b16 %v4470
      %v5825 = vunpack.c.l.b16 %v4471
      %v5826 = vunpack.c.h.b16 %v4471
      %v5827 = vunpack.c.l.b16 %v4472
      %v5828 = vunpack.c.h.b16 %v4472
      %v5829 = vunpack.c.l.b16 %v4473
      %v5830 = vunpack.c.h.b16 %v4473
      %v5831 = vunpack.c.l.b16 %v4474
      %v5832 = vunpack.c.h.b16 %v4474
      %v5833 = vunpack.c.l.b16 %v4475
      %v5834 = vunpack.c.h.b16 %v4475
      %v5835 = vunpack.c.l.b16 %v4476
      %v5836 = vunpack.c.h.b16 %v4476
      %v5837 = vunpack.c.l.b16 %v4477
      %v5838 = vunpack.c.h.b16 %v4477
      %v5839 = vunpack.c.l.b16 %v4478
      %v5840 = vunpack.c.h.b16 %v4478
      %v5841 = vunpack.c.l.b16 %v4479
      %v5842 = vunpack.c.h.b16 %v4479
      %v5843 = vunpack.c.l.b16 %v4480
      %v5844 = vunpack.c.h.b16 %v4480
      %v5845 = vunpack.c.l.b16 %v4481
      %v5846 = vunpack.c.h.b16 %v4481
      %v5847 = vunpack.c.l.b16 %v4482
      %v5848 = vunpack.c.h.b16 %v4482
      %v5849 = vunpack.c.l.b16 %v4483
      %v5850 = vunpack.c.h.b16 %v4483
      %v5851 = vunpack.c.l.b16 %v4484
      %v5852 = vunpack.c.h.b16 %v4484
      %v5853 = vunpack.c.l.b16 %v4485
      %v5854 = vunpack.c.h.b16 %v4485
      %v5855 = vunpack.c.l.b16 %v4486
      %v5856 = vunpack.c.h.b16 %v4486
      %v5857 = vunpack.c.l.b16 %v4487
      %v5858 = vunpack.c.h.b16 %v4487
      %v5859 = vunpack.c.l.b16 %v4488
      %v5860 = vunpack.c.h.b16 %v4488
      %v5861 = vunpack.c.l.b16 %v4489
      %v5862 = vunpack.c.h.b16 %v4489
      %v5863 = vunpack.c.l.b16 %v4490
      %v5864 = vunpack.c.h.b16 %v4490
      %v5865 = vunpack.c.l.b16 %v4491
      %v5866 = vunpack.c.h.b16 %v4491
      %v5867 = vunpack.c.l.b16 %v4492
      %v5868 = vunpack.c.h.b16 %v4492
      %v5869 = vunpack.c.l.b16 %v4493
      %v5870 = vunpack.c.h.b16 %v4493
      %v5871 = vunpack.c.l.b16 %v4494
      %v5872 = vunpack.c.h.b16 %v4494
      %v5873 = vunpack.c.l.b16 %v4495
      %v5874 = vunpack.c.h.b16 %v4495
      %v5875 = vunpack.c.l.b16 %v4496
      %v5876 = vunpack.c.h.b16 %v4496
      %v5877 = vunpack.c.l.b16 %v4497
      %v5878 = vunpack.c.h.b16 %v4497
      %v5879 = vunpack.c.l.b16 %v4498
      %v5880 = vunpack.c.h.b16 %v4498
      %v5881 = vunpack.c.l.b16 %v4499
      %v5882 = vunpack.c.h.b16 %v4499
      %v5883 = vunpack.c.l.b16 %v4500
      %v5884 = vunpack.c.h.b16 %v4500
      %v5885 = vunpack.c.l.b16 %v4501
      %v5886 = vunpack.c.h.b16 %v4501
      %v5887 = vunpack.c.l.b16 %v4502
      %v5888 = vunpack.c.h.b16 %v4502
      %v5889 = vunpack.c.l.b16 %v4503
      %v5890 = vunpack.c.h.b16 %v4503
      %v5891 = vunpack.c.l.b16 %v4504
      %v5892 = vunpack.c.h.b16 %v4504
      %v5893 = vunpack.c.l.b16 %v4505
      %v5894 = vunpack.c.h.b16 %v4505
      %v5895 = vunpack.c.l.b16 %v4506
      %v5896 = vunpack.c.h.b16 %v4506
      %v5897 = vunpack.c.l.b16 %v4507
      %v5898 = vunpack.c.h.b16 %v4507
      %v5899 = vunpack.c.l.b16 %v4508
      %v5900 = vunpack.c.h.b16 %v4508
      %v5901 = vunpack.c.l.b16 %v4509
      %v5902 = vunpack.c.h.b16 %v4509
      %v5903 = vunpack.c.l.b16 %v4510
      %v5904 = vunpack.c.h.b16 %v4510
      %v5905 = vunpack.c.l.b16 %v4511
      %v5906 = vunpack.c.h.b16 %v4511
      %v5907 = vunpack.c.l.b16 %v4512
      %v5908 = vunpack.c.h.b16 %v4512
      %v5909 = vunpack.c.l.b16 %v4513
      %v5910 = vunpack.c.h.b16 %v4513
      %v5911 = vunpack.c.l.b16 %v4514
      %v5912 = vunpack.c.h.b16 %v4514
      %v5913 = vunpack.c.l.b16 %v4515
      %v5914 = vunpack.c.h.b16 %v4515
      %v5915 = vunpack.c.l.b16 %v4516
      %v5916 = vunpack.c.h.b16 %v4516
      %v5917 = vunpack.c.l.b16 %v4517
      %v5918 = vunpack.c.h.b16 %v4517
      %v5919 = vunpack.c.l.b16 %v4518
      %v5920 = vunpack.c.h.b16 %v4518
      %v5921 = vunpack.c.l.b16 %v4519
      %v5922 = vunpack.c.h.b16 %v4519
      %v5923 = vunpack.c.l.b16 %v4520
      %v5924 = vunpack.c.h.b16 %v4520
      %v5925 = vunpack.c.l.b16 %v4521
      %v5926 = vunpack.c.h.b16 %v4521
      %v5927 = vunpack.c.l.b16 %v4522
      %v5928 = vunpack.c.h.b16 %v4522
      %v5929 = vunpack.c.l.b16 %v4523
      %v5930 = vunpack.c.h.b16 %v4523
      %v5931 = vunpack.c.l.b16 %v4524
      %v5932 = vunpack.c.h.b16 %v4524
      %v5933 = vunpack.c.l.b16 %v4525
      %v5934 = vunpack.c.h.b16 %v4525
      %v5935 = vunpack.c.l.b16 %v4526
      %v5936 = vunpack.c.h.b16 %v4526
      %v5937 = vunpack.c.l.b16 %v4527
      %v5938 = vunpack.c.h.b16 %v4527
      %v5939 = vunpack.c.l.b16 %v4528
      %v5940 = vunpack.c.h.b16 %v4528
      %v5941 = vunpack.c.l.b16 %v4529
      %v5942 = vunpack.c.h.b16 %v4529
      %v5943 = vunpack.c.l.b16 %v4530
      %v5944 = vunpack.c.h.b16 %v4530
      %v5945 = vunpack.c.l.b16 %v4531
      %v5946 = vunpack.c.h.b16 %v4531
      %v5947 = vunpack.c.l.b16 %v4532
      %v5948 = vunpack.c.h.b16 %v4532
      %v5949 = vunpack.c.l.b16 %v4533
      %v5950 = vunpack.c.h.b16 %v4533
      %v5951 = vunpack.c.l.b16 %v4534
      %v5952 = vunpack.c.h.b16 %v4534
      %v5953 = vunpack.c.l.b16 %v4535
      %v5954 = vunpack.c.h.b16 %v4535
      %v5955 = vunpack.c.l.b16 %v4536
      %v5956 = vunpack.c.h.b16 %v4536
      %v5957 = vunpack.c.l.b16 %v4537
      %v5958 = vunpack.c.h.b16 %v4537
      %v5959 = vunpack.c.l.b16 %v4538
      %v5960 = vunpack.c.h.b16 %v4538
      %v5961 = vunpack.c.l.b16 %v4539
      %v5962 = vunpack.c.h.b16 %v4539
      %v5963 = vunpack.c.l.b16 %v4540
      %v5964 = vunpack.c.h.b16 %v4540
      %v5965 = vunpack.c.l.b16 %v4541
      %v5966 = vunpack.c.h.b16 %v4541
      %v5967 = vunpack.c.l.b16 %v4542
      %v5968 = vunpack.c.h.b16 %v4542
      %v5969 = vunpack.c.l.b16 %v4543
      %v5970 = vunpack.c.h.b16 %v4543
      %v5971 = vunpack.c.l.b16 %v4544
      %v5972 = vunpack.c.h.b16 %v4544
      %v5973 = vunpack.c.l.b16 %v4545
      %v5974 = vunpack.c.h.b16 %v4545
      %v5975 = vunpack.c.l.b16 %v4546
      %v5976 = vunpack.c.h.b16 %v4546
      %v5977 = vunpack.c.l.b16 %v4547
      %v5978 = vunpack.c.h.b16 %v4547
      %v5979 = vunpack.c.l.b16 %v4548
      %v5980 = vunpack.c.h.b16 %v4548
      %v5981 = vunpack.c.l.b16 %v4549
      %v5982 = vunpack.c.h.b16 %v4549
      %v5983 = vunpack.c.l.b16 %v4550
      %v5984 = vunpack.c.h.b16 %v4550
      %v5985 = vunpack.c.l.b16 %v4551
      %v5986 = vunpack.c.h.b16 %v4551
      %v5987 = vunpack.c.l.b16 %v4552
      %v5988 = vunpack.c.h.b16 %v4552
      %v5989 = vunpack.c.l.b16 %v4553
      %v5990 = vunpack.c.h.b16 %v4553
      %v5991 = vunpack.c.l.b16 %v4554
      %v5992 = vunpack.c.h.b16 %v4554
      %v5993 = vunpack.c.l.b16 %v4555
      %v5994 = vunpack.c.h.b16 %v4555
      %v5995 = vunpack.c.l.b16 %v4556
      %v5996 = vunpack.c.h.b16 %v4556
      %v5997 = vunpack.c.l.b16 %v4557
      %v5998 = vunpack.c.h.b16 %v4557
      %v5999 = vunpack.c.l.b16 %v4558
      %v6000 = vunpack.c.h.b16 %v4558
      %v6001 = vunpack.c.l.b16 %v4559
      %v6002 = vunpack.c.h.b16 %v4559
      %v6003 = vunpack.c.l.b16 %v4560
      %v6004 = vunpack.c.h.b16 %v4560
      %v6005 = vunpack.c.l.b16 %v4561
      %v6006 = vunpack.c.h.b16 %v4561
      %v6007 = vunpack.c.l.b16 %v4562
      %v6008 = vunpack.c.h.b16 %v4562
      %v6009 = vunpack.c.l.b16 %v4563
      %v6010 = vunpack.c.h.b16 %v4563
      %v6011 = vunpack.c.l.b16 %v4564
      %v6012 = vunpack.c.h.b16 %v4564
      %v6013 = vunpack.c.l.b16 %v4565
      %v6014 = vunpack.c.h.b16 %v4565
      %v6015 = vunpack.c.l.b16 %v4566
      %v6016 = vunpack.c.h.b16 %v4566
      %v6017 = vunpack.c.l.b16 %v4567
      %v6018 = vunpack.c.h.b16 %v4567
      %v6019 = vunpack.c.l.b16 %v4568
      %v6020 = vunpack.c.h.b16 %v4568
      %v6021 = vunpack.c.l.b16 %v4569
      %v6022 = vunpack.c.h.b16 %v4569
      %v6023 = vunpack.c.l.b16 %v4570
      %v6024 = vunpack.c.h.b16 %v4570
      %v6025 = vunpack.c.l.b16 %v4571
      %v6026 = vunpack.c.h.b16 %v4571
      %v6027 = vunpack.c.l.b16 %v4572
      %v6028 = vunpack.c.h.b16 %v4572
      %v6029 = vunpack.c.l.b16 %v4573
      %v6030 = vunpack.c.h.b16 %v4573
      %v6031 = vunpack.c.l.b16 %v4574
      %v6032 = vunpack.c.h.b16 %v4574
      %v6033 = vunpack.c.l.b16 %v4575
      %v6034 = vunpack.c.h.b16 %v4575
      %v6035 = vunpack.c.l.b16 %v4576
      %v6036 = vunpack.c.h.b16 %v4576
      %v6037 = vunpack.c.l.b16 %v4577
      %v6038 = vunpack.c.h.b16 %v4577
      %v6039 = vunpack.c.l.b16 %v4578
      %v6040 = vunpack.c.h.b16 %v4578
      %v6041 = vunpack.c.l.b16 %v4579
      %v6042 = vunpack.c.h.b16 %v4579
      %v6043 = vunpack.c.l.b16 %v4580
      %v6044 = vunpack.c.h.b16 %v4580
      %v6045 = vunpack.c.l.b16 %v4581
      %v6046 = vunpack.c.h.b16 %v4581
      %v6047 = vunpack.c.l.b16 %v4582
      %v6048 = vunpack.c.h.b16 %v4582
      %v6049 = vunpack.c.l.b16 %v4583
      %v6050 = vunpack.c.h.b16 %v4583
      %v6051 = vunpack.c.l.b16 %v4584
      %v6052 = vunpack.c.h.b16 %v4584
      %v6053 = vunpack.c.l.b16 %v4585
      %v6054 = vunpack.c.h.b16 %v4585
      %v6055 = vunpack.c.l.b16 %v4586
      %v6056 = vunpack.c.h.b16 %v4586
      %v6057 = vunpack.c.l.b16 %v4587
      %v6058 = vunpack.c.h.b16 %v4587
      %v6059 = vunpack.c.l.b16 %v4588
      %v6060 = vunpack.c.h.b16 %v4588
      %v6061 = vunpack.c.l.b16 %v4589
      %v6062 = vunpack.c.h.b16 %v4589
      %v6063 = vunpack.c.l.b16 %v4590
      %v6064 = vunpack.c.h.b16 %v4590
      %v6065 = vunpack.c.l.b16 %v4591
      %v6066 = vunpack.c.h.b16 %v4591
      %v6067 = vunpack.c.l.b16 %v4592
      %v6068 = vunpack.c.h.b16 %v4592
      %v6069 = vunpack.c.l.b16 %v4593
      %v6070 = vunpack.c.h.b16 %v4593
      %v6071 = vunpack.c.l.b16 %v4594
      %v6072 = vunpack.c.h.b16 %v4594
      %v6073 = vunpack.c.l.b16 %v4595
      %v6074 = vunpack.c.h.b16 %v4595
      %v6075 = vunpack.c.l.b16 %v4596
      %v6076 = vunpack.c.h.b16 %v4596
      %v6077 = vunpack.c.l.b16 %v4597
      %v6078 = vunpack.c.h.b16 %v4597
      %v6079 = vunpack.c.l.b16 %v4598
      %v6080 = vunpack.c.h.b16 %v4598
      %v6081 = vunpack.c.l.b16 %v4599
      %v6082 = vunpack.c.h.b16 %v4599
      %v6083 = vunpack.c.l.b16 %v4600
      %v6084 = vunpack.c.h.b16 %v4600
      %v6085 = vunpack.c.l.b16 %v4601
      %v6086 = vunpack.c.h.b16 %v4601
      %v6087 = vunpack.c.l.b16 %v4602
      %v6088 = vunpack.c.h.b16 %v4602
      %v6089 = vunpack.c.l.b16 %v4603
      %v6090 = vunpack.c.h.b16 %v4603
      %v6091 = vunpack.c.l.b16 %v4604
      %v6092 = vunpack.c.h.b16 %v4604
      %v6093 = vunpack.c.l.b16 %v4605
      %v6094 = vunpack.c.h.b16 %v4605
      %v6095 = vunpack.c.l.b16 %v4606
      %v6096 = vunpack.c.h.b16 %v4606
      %v6097 = vunpack.c.l.b16 %v4607
      %v6098 = vunpack.c.h.b16 %v4607
      %v6099 = vunpack.c.l.b16 %v4608
      %v6100 = vunpack.c.h.b16 %v4608
      %v6101 = vunpack.c.l.b16 %v4609
      %v6102 = vunpack.c.h.b16 %v4609
      %v6103 = vunpack.c.l.b16 %v4610
      %v6104 = vunpack.c.h.b16 %v4610
      %v6105 = vunpack.c.l.b16 %v4611
      %v6106 = vunpack.c.h.b16 %v4611
      %v6107 = vunpack.c.l.b16 %v4612
      %v6108 = vunpack.c.h.b16 %v4612
      %v6109 = vunpack.c.l.b16 %v4613
      %v6110 = vunpack.c.h.b16 %v4613
      %v6111 = vunpack.c.l.b16 %v4614
      %v6112 = vunpack.c.h.b16 %v4614
      %v6113 = vunpack.c.l.b16 %v4615
      %v6114 = vunpack.c.h.b16 %v4615
      %v6115 = vunpack.c.l.b16 %v4616
      %v6116 = vunpack.c.h.b16 %v4616
      %v6117 = vunpack.c.l.b16 %v4617
      %v6118 = vunpack.c.h.b16 %v4617
      %v6119 = vunpack.c.l.b16 %v4618
      %v6120 = vunpack.c.h.b16 %v4618
      %v6121 = vunpack.c.l.b16 %v4619
      %v6122 = vunpack.c.h.b16 %v4619
      %v6123 = vunpack.c.l.b16 %v4620
      %v6124 = vunpack.c.h.b16 %v4620
      %v6125 = vunpack.c.l.b16 %v4621
      %v6126 = vunpack.c.h.b16 %v4621
      %v6127 = vunpack.c.l.b16 %v4622
      %v6128 = vunpack.c.h.b16 %v4622
      %v6129 = vunpack.c.l.b16 %v4623
      %v6130 = vunpack.c.h.b16 %v4623
      %v6131 = vunpack.c.l.b16 %v4624
      %v6132 = vunpack.c.h.b16 %v4624
      %v6133 = vunpack.c.l.b16 %v4625
      %v6134 = vunpack.c.h.b16 %v4625
      %v6135 = vunpack.c.l.b16 %v4626
      %v6136 = vunpack.c.h.b16 %v4626
      %v6137 = vunpack.c.l.b16 %v4627
      %v6138 = vunpack.c.h.b16 %v4627
      %v6139 = vunpack.c.l.b16 %v4628
      %v6140 = vunpack.c.h.b16 %v4628
      %v6141 = vunpack.c.l.b16 %v4629
      %v6142 = vunpack.c.h.b16 %v4629
      %v6143 = vunpack.c.l.b16 %v4630
      %v6144 = vunpack.c.h.b16 %v4630
      %v6145 = vunpack.c.l.b16 %v4631
      %v6146 = vunpack.c.h.b16 %v4631
      %v6147 = vunpack.c.l.b16 %v4632
      %v6148 = vunpack.c.h.b16 %v4632
      %v6149 = vunpack.c.l.b16 %v4633
      %v6150 = vunpack.c.h.b16 %v4633
      %v6151 = vunpack.c.l.b16 %v4634
      %v6152 = vunpack.c.h.b16 %v4634
      %v6153 = vunpack.c.l.b16 %v4635
      %v6154 = vunpack.c.h.b16 %v4635
      %v6155 = vunpack.c.l.b16 %v4636
      %v6156 = vunpack.c.h.b16 %v4636
      %v6157 = vunpack.c.l.b16 %v4637
      %v6158 = vunpack.c.h.b16 %v4637
      %v6159 = vunpack.c.l.b16 %v4638
      %v6160 = vunpack.c.h.b16 %v4638
      %v6161 = vunpack.c.l.b16 %v4639
      %v6162 = vunpack.c.h.b16 %v4639
      %v6163 = vunpack.c.l.b16 %v4640
      %v6164 = vunpack.c.h.b16 %v4640
      %v6165 = vunpack.c.l.b16 %v4641
      %v6166 = vunpack.c.h.b16 %v4641
      %v6167 = vunpack.c.l.b16 %v4642
      %v6168 = vunpack.c.h.b16 %v4642
      %v6169 = vunpack.c.l.b16 %v4643
      %v6170 = vunpack.c.h.b16 %v4643
      %v6171 = vunpack.c.l.b16 %v4644
      %v6172 = vunpack.c.h.b16 %v4644
      %v6173 = vunpack.c.l.b16 %v4645
      %v6174 = vunpack.c.h.b16 %v4645
      %v6175 = vunpack.c.l.b16 %v4646
      %v6176 = vunpack.c.h.b16 %v4646
      %v6177 = vunpack.c.l.b16 %v4647
      %v6178 = vunpack.c.h.b16 %v4647
      %v6179 = vunpack.c.l.b16 %v4648
      %v6180 = vunpack.c.h.b16 %v4648
      %v6181 = vunpack.c.l.b16 %v4649
      %v6182 = vunpack.c.h.b16 %v4649
      %v6183 = vunpack.c.l.b16 %v4650
      %v6184 = vunpack.c.h.b16 %v4650
      %v6185 = vunpack.c.l.b16 %v4651
      %v6186 = vunpack.c.h.b16 %v4651
      %v6187 = vunpack.c.l.b16 %v4652
      %v6188 = vunpack.c.h.b16 %v4652
      %v6189 = vunpack.c.l.b16 %v4653
      %v6190 = vunpack.c.h.b16 %v4653
      %v6191 = vunpack.c.l.b16 %v4654
      %v6192 = vunpack.c.h.b16 %v4654
      %v6193 = vunpack.c.l.b16 %v4655
      %v6194 = vunpack.c.h.b16 %v4655
      %v6195 = vunpack.c.l.b16 %v4656
      %v6196 = vunpack.c.h.b16 %v4656
      %v6197 = vunpack.c.l.b16 %v4657
      %v6198 = vunpack.c.h.b16 %v4657
      %v6199 = vunpack.c.l.b16 %v4658
      %v6200 = vunpack.c.h.b16 %v4658
      %v6201 = vunpack.c.l.b16 %v4659
      %v6202 = vunpack.c.h.b16 %v4659
      %v6203 = vunpack.c.l.b16 %v4660
      %v6204 = vunpack.c.h.b16 %v4660
      %v6205 = vunpack.c.l.b16 %v4661
      %v6206 = vunpack.c.h.b16 %v4661
      %v6207 = vunpack.c.l.b16 %v4662
      %v6208 = vunpack.c.h.b16 %v4662
      %v6209 = vunpack.c.l.b16 %v4663
      %v6210 = vunpack.c.h.b16 %v4663
      %v6211 = vunpack.c.l.b16 %v4664
      %v6212 = vunpack.c.h.b16 %v4664
      %v6213 = vunpack.c.l.b16 %v4665
      %v6214 = vunpack.c.h.b16 %v4665
      %v6215 = vunpack.c.l.b16 %v4666
      %v6216 = vunpack.c.h.b16 %v4666
      %v6217 = vunpack.c.l.b16 %v4667
      %v6218 = vunpack.c.h.b16 %v4667
      %v6219 = vunpack.c.l.b16 %v4668
      %v6220 = vunpack.c.h.b16 %v4668
      %v6221 = vunpack.c.l.b16 %v4669
      %v6222 = vunpack.c.h.b16 %v4669
      %v6223 = vunpack.c.l.b16 %v4670
      %v6224 = vunpack.c.h.b16 %v4670
      %v6225 = vunpack.c.l.b16 %v4671
      %v6226 = vunpack.c.h.b16 %v4671
      %v6227 = vunpack.c.l.b16 %v4672
      %v6228 = vunpack.c.h.b16 %v4672
      %v6229 = vunpack.c.l.b16 %v4673
      %v6230 = vunpack.c.h.b16 %v4673
      %v6231 = vunpack.c.l.b16 %v4674
      %v6232 = vunpack.c.h.b16 %v4674
      %v6233 = vunpack.c.l.b16 %v4675
      %v6234 = vunpack.c.h.b16 %v4675
      %v6235 = vunpack.c.l.b16 %v4676
      %v6236 = vunpack.c.h.b16 %v4676
      %v6237 = vunpack.c.l.b16 %v4677
      %v6238 = vunpack.c.h.b16 %v4677
      %v6239 = vunpack.c.l.b16 %v4678
      %v6240 = vunpack.c.h.b16 %v4678
      %v6241 = vunpack.c.l.b16 %v4679
      %v6242 = vunpack.c.h.b16 %v4679
      %v6243 = vunpack.c.l.b16 %v4680
      %v6244 = vunpack.c.h.b16 %v4680
      %v6245 = vunpack.c.l.b16 %v4681
      %v6246 = vunpack.c.h.b16 %v4681
      %v6247 = vunpack.c.l.b16 %v4682
      %v6248 = vunpack.c.h.b16 %v4682
      %v6249 = vunpack.c.l.b16 %v4683
      %v6250 = vunpack.c.h.b16 %v4683
      %v6251 = vunpack.c.l.b16 %v4684
      %v6252 = vunpack.c.h.b16 %v4684
      %v6253 = vunpack.c.l.b16 %v4685
      %v6254 = vunpack.c.h.b16 %v4685
      %v6255 = vunpack.c.l.b16 %v4686
      %v6256 = vunpack.c.h.b16 %v4686
      %v6257 = vunpack.c.l.b16 %v4687
      %v6258 = vunpack.c.h.b16 %v4687
      %v6259 = vunpack.c.l.b16 %v4688
      %v6260 = vunpack.c.h.b16 %v4688
      %v6261 = vunpack.c.l.b16 %v4689
      %v6262 = vunpack.c.h.b16 %v4689
      %v6263 = vunpack.c.l.b16 %v4690
      %v6264 = vunpack.c.h.b16 %v4690
      %v6265 = vunpack.c.l.b16 %v4691
      %v6266 = vunpack.c.h.b16 %v4691
      %v6267 = vunpack.c.l.b16 %v4692
      %v6268 = vunpack.c.h.b16 %v4692
      %v6269 = vunpack.c.l.b16 %v4693
      %v6270 = vunpack.c.h.b16 %v4693
      %v6271 = vunpack.c.l.b16 %v4694
      %v6272 = vunpack.c.h.b16 %v4694
      %v6273 = vunpack.c.l.b16 %v4695
      %v6274 = vunpack.c.h.b16 %v4695
      %v6275 = vunpack.c.l.b16 %v4696
      %v6276 = vunpack.c.h.b16 %v4696
      %v6277 = vunpack.c.l.b16 %v4697
      %v6278 = vunpack.c.h.b16 %v4697
      %v6279 = vunpack.c.l.b16 %v4698
      %v6280 = vunpack.c.h.b16 %v4698
      %v6281 = vunpack.c.l.b16 %v4699
      %v6282 = vunpack.c.h.b16 %v4699
      %v6283 = vunpack.c.l.b16 %v4700
      %v6284 = vunpack.c.h.b16 %v4700
      %v6285 = vunpack.c.l.b16 %v4701
      %v6286 = vunpack.c.h.b16 %v4701
      %v6287 = vunpack.c.l.b16 %v4702
      %v6288 = vunpack.c.h.b16 %v4702
      %v6289 = vunpack.c.l.b16 %v4703
      %v6290 = vunpack.c.h.b16 %v4703
      %v6291 = vunpack.c.l.b16 %v4704
      %v6292 = vunpack.c.h.b16 %v4704
      %v6293 = vunpack.c.l.b16 %v4705
      %v6294 = vunpack.c.h.b16 %v4705
      %v6295 = vunpack.c.l.b16 %v4706
      %v6296 = vunpack.c.h.b16 %v4706
      %v6297 = vunpack.c.l.b16 %v4707
      %v6298 = vunpack.c.h.b16 %v4707
      %v6299 = vunpack.c.l.b16 %v4708
      %v6300 = vunpack.c.h.b16 %v4708
      %v6301 = vunpack.c.l.b16 %v4709
      %v6302 = vunpack.c.h.b16 %v4709
      %v6303 = vunpack.c.l.b16 %v4710
      %v6304 = vunpack.c.h.b16 %v4710
      %v6305 = vunpack.c.l.b16 %v4711
      %v6306 = vunpack.c.h.b16 %v4711
      %v6307 = vunpack.c.l.b16 %v4712
      %v6308 = vunpack.c.h.b16 %v4712
      %v6309 = vunpack.c.l.b16 %v4713
      %v6310 = vunpack.c.h.b16 %v4713
      %v6311 = vunpack.c.l.b16 %v4714
      %v6312 = vunpack.c.h.b16 %v4714
      %v6313 = vunpack.c.l.b16 %v4715
      %v6314 = vunpack.c.h.b16 %v4715
      %v6315 = vunpack.c.l.b16 %v4716
      %v6316 = vunpack.c.h.b16 %v4716
      %v6317 = vunpack.c.l.b16 %v4717
      %v6318 = vunpack.c.h.b16 %v4717
      %v6319 = vunpack.c.l.b16 %v4718
      %v6320 = vunpack.c.h.b16 %v4718
      %v6321 = vunpack.c.l.b16 %v4719
      %v6322 = vunpack.c.h.b16 %v4719
      %v6323 = vunpack.c.l.b16 %v4720
      %v6324 = vunpack.c.h.b16 %v4720
      %v6325 = vunpack.c.l.b16 %v4721
      %v6326 = vunpack.c.h.b16 %v4721
      %v6327 = vunpack.c.l.b16 %v4722
      %v6328 = vunpack.c.h.b16 %v4722
      %v6329 = vunpack.c.l.b16 %v4723
      %v6330 = vunpack.c.h.b16 %v4723
      %v6331 = vunpack.c.l.b16 %v4724
      %v6332 = vunpack.c.h.b16 %v4724
      %v6333 = vunpack.c.l.b16 %v4725
      %v6334 = vunpack.c.h.b16 %v4725
      %v6335 = vunpack.c.l.b16 %v4726
      %v6336 = vunpack.c.h.b16 %v4726
      %v6337 = vunpack.c.l.b16 %v4727
      %v6338 = vunpack.c.h.b16 %v4727
      %v6339 = vunpack.c.l.b16 %v4728
      %v6340 = vunpack.c.h.b16 %v4728
      %v6341 = vunpack.c.l.b16 %v4729
      %v6342 = vunpack.c.h.b16 %v4729
      %v6343 = vunpack.c.l.b16 %v4730
      %v6344 = vunpack.c.h.b16 %v4730
      %v6345 = vunpack.c.l.b16 %v4731
      %v6346 = vunpack.c.h.b16 %v4731
      %v6347 = vunpack.c.l.b16 %v4732
      %v6348 = vunpack.c.h.b16 %v4732
      %v6349 = vunpack.c.l.b16 %v4733
      %v6350 = vunpack.c.h.b16 %v4733
      %v6351 = vunpack.c.l.b16 %v4734
      %v6352 = vunpack.c.h.b16 %v4734
      %v6353 = vunpack.c.l.b16 %v4735
      %v6354 = vunpack.c.h.b16 %v4735
      %v6355 = vunpack.c.l.b16 %v4736
      %v6356 = vunpack.c.h.b16 %v4736
      %v6357 = vunpack.c.l.b16 %v4737
      %v6358 = vunpack.c.h.b16 %v4737
      %v6359 = vunpack.c.l.b16 %v4738
      %v6360 = vunpack.c.h.b16 %v4738
      %v6361 = vunpack.c.l.b16 %v4739
      %v6362 = vunpack.c.h.b16 %v4739
      %v6363 = vunpack.c.l.b16 %v4740
      %v6364 = vunpack.c.h.b16 %v4740
      %v6365 = vunpack.c.l.b16 %v4741
      %v6366 = vunpack.c.h.b16 %v4741
      %v6367 = vunpack.c.l.b16 %v4742
      %v6368 = vunpack.c.h.b16 %v4742
      %v6369 = vunpack.c.l.b16 %v4743
      %v6370 = vunpack.c.h.b16 %v4743
      %v6371 = vunpack.c.l.b16 %v4744
      %v6372 = vunpack.c.h.b16 %v4744
      %v6373 = vunpack.c.l.b16 %v4745
      %v6374 = vunpack.c.h.b16 %v4745
      %v6375 = vunpack.c.l.b16 %v4746
      %v6376 = vunpack.c.h.b16 %v4746
      %v6377 = vunpack.c.l.b16 %v4747
      %v6378 = vunpack.c.h.b16 %v4747
      %v6379 = vunpack.c.l.b16 %v4748
      %v6380 = vunpack.c.h.b16 %v4748
      %v6381 = vunpack.c.l.b16 %v4749
      %v6382 = vunpack.c.h.b16 %v4749
      %v6383 = vunpack.c.l.b16 %v4750
      %v6384 = vunpack.c.h.b16 %v4750
      %v6385 = vunpack.c.l.b16 %v4751
      %v6386 = vunpack.c.h.b16 %v4751
      %v6387 = vunpack.c.l.b16 %v4752
      %v6388 = vunpack.c.h.b16 %v4752
      %v6389 = vunpack.c.l.b16 %v4753
      %v6390 = vunpack.c.h.b16 %v4753
      %v6391 = vunpack.c.l.b16 %v4754
      %v6392 = vunpack.c.h.b16 %v4754
      %v6393 = vunpack.c.l.b16 %v4755
      %v6394 = vunpack.c.h.b16 %v4755
      %v6395 = vunpack.c.l.b16 %v4756
      %v6396 = vunpack.c.h.b16 %v4756
      %v6397 = vunpack.c.l.b16 %v4757
      %v6398 = vunpack.c.h.b16 %v4757
      %v6399 = vunpack.c.l.b16 %v4758
      %v6400 = vunpack.c.h.b16 %v4758
      %v6401 = vunpack.c.l.b16 %v4759
      %v6402 = vunpack.c.h.b16 %v4759
      %v6403 = vunpack.c.l.b16 %v4760
      %v6404 = vunpack.c.h.b16 %v4760
      %v6405 = vunpack.c.l.b16 %v4761
      %v6406 = vunpack.c.h.b16 %v4761
      %v6407 = vunpack.c.l.b16 %v4762
      %v6408 = vunpack.c.h.b16 %v4762
      %v6409 = vunpack.c.l.b16 %v4763
      %v6410 = vunpack.c.h.b16 %v4763
      %v6411 = vunpack.c.l.b16 %v4764
      %v6412 = vunpack.c.h.b16 %v4764
      %v6413 = vunpack.c.l.b16 %v4765
      %v6414 = vunpack.c.h.b16 %v4765
      %v6415 = vunpack.c.l.b16 %v4766
      %v6416 = vunpack.c.h.b16 %v4766
      %v6417 = vunpack.c.l.b16 %v4767
      %v6418 = vunpack.c.h.b16 %v4767
      %v6419 = vunpack.c.l.b16 %v4768
      %v6420 = vunpack.c.h.b16 %v4768
      %v6421 = vunpack.c.l.b16 %v4769
      %v6422 = vunpack.c.h.b16 %v4769
      %v6423 = vunpack.c.l.b16 %v4770
      %v6424 = vunpack.c.h.b16 %v4770
      %v6425 = vunpack.c.l.b16 %v4771
      %v6426 = vunpack.c.h.b16 %v4771
      %v6427 = vunpack.c.l.b16 %v4772
      %v6428 = vunpack.c.h.b16 %v4772
      %v6429 = vunpack.c.l.b16 %v4773
      %v6430 = vunpack.c.h.b16 %v4773
      %v6431 = vunpack.c.l.b16 %v4774
      %v6432 = vunpack.c.h.b16 %v4774
      %v6433 = vunpack.c.l.b16 %v4775
      %v6434 = vunpack.c.h.b16 %v4775
      %v6435 = vunpack.c.l.b16 %v4776
      %v6436 = vunpack.c.h.b16 %v4776
      %v6437 = vunpack.c.l.b16 %v4777
      %v6438 = vunpack.c.h.b16 %v4777
      %v6439 = vunpack.c.l.b16 %v4778
      %v6440 = vunpack.c.h.b16 %v4778
      %v6441 = vunpack.c.l.b16 %v4779
      %v6442 = vunpack.c.h.b16 %v4779
      %v6443 = vunpack.c.l.b16 %v4780
      %v6444 = vunpack.c.h.b16 %v4780
      %v6445 = vunpack.c.l.b16 %v4781
      %v6446 = vunpack.c.h.b16 %v4781
      %v6447 = vunpack.c.l.b16 %v4782
      %v6448 = vunpack.c.h.b16 %v4782
      %v6449 = vunpack.c.l.b16 %v4783
      %v6450 = vunpack.c.h.b16 %v4783
      %v6451 = vunpack.c.l.b16 %v4784
      %v6452 = vunpack.c.h.b16 %v4784
      %v6453 = vunpack.c.l.b16 %v4785
      %v6454 = vunpack.c.h.b16 %v4785
      %v6455 = vunpack.c.l.b16 %v4786
      %v6456 = vunpack.c.h.b16 %v4786
      %v6457 = vunpack.c.l.b16 %v4787
      %v6458 = vunpack.c.h.b16 %v4787
      %v6459 = vunpack.c.l.b16 %v4788
      %v6460 = vunpack.c.h.b16 %v4788
      %v6461 = vunpack.c.l.b16 %v4789
      %v6462 = vunpack.c.h.b16 %v4789
      %v6463 = vunpack.c.l.b16 %v4790
      %v6464 = vunpack.c.h.b16 %v4790
      %v6465 = vunpack.c.l.b16 %v4791
      %v6466 = vunpack.c.h.b16 %v4791
      %v6467 = vunpack.c.l.b16 %v4792
      %v6468 = vunpack.c.h.b16 %v4792
      %v6469 = vunpack.c.l.b16 %v4793
      %v6470 = vunpack.c.h.b16 %v4793
      %v6471 = vunpack.c.l.b16 %v4794
      %v6472 = vunpack.c.h.b16 %v4794
      %v6473 = vunpack.c.l.b16 %v4795
      %v6474 = vunpack.c.h.b16 %v4795
      %v6475 = vunpack.c.l.b16 %v4796
      %v6476 = vunpack.c.h.b16 %v4796
      %v6477 = vunpack.c.l.b16 %v4797
      %v6478 = vunpack.c.h.b16 %v4797
      %v6479 = vunpack.c.l.b16 %v4798
      %v6480 = vunpack.c.h.b16 %v4798
      %v6481 = vunpack.c.l.b16 %v4799
      %v6482 = vunpack.c.h.b16 %v4799
      %v6483 = vunpack.c.l.b16 %v4800
      %v6484 = vunpack.c.h.b16 %v4800
      %v6485 = vunpack.c.l.b16 %v4801
      %v6486 = vunpack.c.h.b16 %v4801
      %v6487 = vunpack.c.l.b16 %v4802
      %v6488 = vunpack.c.h.b16 %v4802
      %v6489 = vunpack.c.l.b16 %v4803
      %v6490 = vunpack.c.h.b16 %v4803
      %v6491 = vunpack.c.l.b16 %v4804
      %v6492 = vunpack.c.h.b16 %v4804
      %v6493 = vunpack.c.l.b16 %v4805
      %v6494 = vunpack.c.h.b16 %v4805
      %v6495 = vunpack.c.l.b16 %v4806
      %v6496 = vunpack.c.h.b16 %v4806
      %v6497 = vunpack.c.l.b16 %v4807
      %v6498 = vunpack.c.h.b16 %v4807
      %v6499 = vunpack.c.l.b16 %v4808
      %v6500 = vunpack.c.h.b16 %v4808
      %v6501 = vunpack.c.l.b16 %v4809
      %v6502 = vunpack.c.h.b16 %v4809
      %v6503 = vunpack.c.l.b16 %v4810
      %v6504 = vunpack.c.h.b16 %v4810
      %v6505 = vunpack.c.l.b16 %v4811
      %v6506 = vunpack.c.h.b16 %v4811
      %v6507 = vunpack.c.l.b16 %v4812
      %v6508 = vunpack.c.h.b16 %v4812
      %v6509 = vunpack.c.l.b16 %v4813
      %v6510 = vunpack.c.h.b16 %v4813
      %v6511 = vunpack.c.l.b16 %v4814
      %v6512 = vunpack.c.h.b16 %v4814
      %v6513 = vunpack.c.l.b16 %v4815
      %v6514 = vunpack.c.h.b16 %v4815
      %v6515 = vunpack.c.l.b16 %v4816
      %v6516 = vunpack.c.h.b16 %v4816
      %v6517 = vunpack.c.l.b16 %v4817
      %v6518 = vunpack.c.h.b16 %v4817
      %v6519 = vunpack.c.l.b16 %v4818
      %v6520 = vunpack.c.h.b16 %v4818
      %v6521 = vunpack.c.l.b16 %v4819
      %v6522 = vunpack.c.h.b16 %v4819
      %v6523 = vunpack.c.l.b16 %v4820
      %v6524 = vunpack.c.h.b16 %v4820
      %v6525 = vunpack.c.l.b16 %v4821
      %v6526 = vunpack.c.h.b16 %v4821
      %v6527 = vunpack.c.l.b16 %v4822
      %v6528 = vunpack.c.h.b16 %v4822
      %v6529 = vunpack.c.l.b16 %v4823
      %v6530 = vunpack.c.h.b16 %v4823
      %v6531 = vunpack.c.l.b16 %v4824
      %v6532 = vunpack.c.h.b16 %v4824
      %v6533 = vunpack.c.l.b16 %v4825
      %v6534 = vunpack.c.h.b16 %v4825
      %v6535 = vunpack.c.l.b16 %v4826
      %v6536 = vunpack.c.h.b16 %v4826
      %v6537 = vunpack.c.l.b16 %v4827
      %v6538 = vunpack.c.h.b16 %v4827
      %v6539 = vunpack.c.l.b16 %v4828
      %v6540 = vunpack.c.h.b16 %v4828
      %v6541 = vunpack.c.l.b16 %v4829
      %v6542 = vunpack.c.h.b16 %v4829
      %v6543 = vunpack.c.l.b16 %v4830
      %v6544 = vunpack.c.h.b16 %v4830
      %v6545 = vunpack.c.l.b16 %v4831
      %v6546 = vunpack.c.h.b16 %v4831
      %v6547 = vunpack.c.l.b16 %v4832
      %v6548 = vunpack.c.h.b16 %v4832
      %v6549 = vunpack.c.l.b16 %v4833
      %v6550 = vunpack.c.h.b16 %v4833
      %v6551 = vunpack.c.l.b16 %v4834
      %v6552 = vunpack.c.h.b16 %v4834
      %v6553 = vunpack.c.l.b16 %v4835
      %v6554 = vunpack.c.h.b16 %v4835
      %v6555 = vunpack.c.l.b16 %v4836
      %v6556 = vunpack.c.h.b16 %v4836
      %v6557 = vunpack.c.l.b16 %v4837
      %v6558 = vunpack.c.h.b16 %v4837
      %v6559 = vunpack.c.l.b16 %v4838
      %v6560 = vunpack.c.h.b16 %v4838
      %v6561 = vunpack.c.l.b16 %v4839
      %v6562 = vunpack.c.h.b16 %v4839
      %v6563 = vunpack.c.l.b16 %v4840
      %v6564 = vunpack.c.h.b16 %v4840
      %v6565 = vunpack.c.l.b16 %v4841
      %v6566 = vunpack.c.h.b16 %v4841
      %v6567 = vunpack.c.l.b16 %v4842
      %v6568 = vunpack.c.h.b16 %v4842
      %v6569 = vunpack.c.l.b16 %v4843
      %v6570 = vunpack.c.h.b16 %v4843
      %v6571 = vunpack.c.l.b16 %v4844
      %v6572 = vunpack.c.h.b16 %v4844
      %v6573 = vunpack.c.l.b16 %v4845
      %v6574 = vunpack.c.h.b16 %v4845
      %v6575 = vunpack.c.l.b16 %v4846
      %v6576 = vunpack.c.h.b16 %v4846
      %v6577 = vunpack.c.l.b16 %v4847
      %v6578 = vunpack.c.h.b16 %v4847
      %v6579 = vunpack.c.l.b16 %v4848
      %v6580 = vunpack.c.h.b16 %v4848
      %v6581 = vunpack.c.l.b16 %v4849
      %v6582 = vunpack.c.h.b16 %v4849
      %v6583 = vunpack.c.l.b16 %v4850
      %v6584 = vunpack.c.h.b16 %v4850
      %v6585 = vunpack.c.l.b16 %v4851
      %v6586 = vunpack.c.h.b16 %v4851
      %v6587 = vunpack.c.l.b16 %v4852
      %v6588 = vunpack.c.h.b16 %v4852
      %v6589 = vunpack.c.l.b16 %v4853
      %v6590 = vunpack.c.h.b16 %v4853
      %v6591 = vunpack.c.l.b16 %v4854
      %v6592 = vunpack.c.h.b16 %v4854
      %v6593 = vunpack.c.l.b16 %v4855
      %v6594 = vunpack.c.h.b16 %v4855
      %v6595 = vunpack.c.l.b16 %v4856
      %v6596 = vunpack.c.h.b16 %v4856
      %v6597 = vunpack.c.l.b16 %v4857
      %v6598 = vunpack.c.h.b16 %v4857
      %v6599 = vunpack.c.l.b16 %v4858
      %v6600 = vunpack.c.h.b16 %v4858
      %v6601 = vunpack.c.l.b16 %v4859
      %v6602 = vunpack.c.h.b16 %v4859
      %v6603 = vunpack.c.l.b16 %v4860
      %v6604 = vunpack.c.h.b16 %v4860
      %v6605 = vunpack.c.l.b16 %v4861
      %v6606 = vunpack.c.h.b16 %v4861
      %v6607 = vunpack.c.l.b16 %v4862
      %v6608 = vunpack.c.h.b16 %v4862
      %v6609 = vunpack.c.l.b16 %v4863
      %v6610 = vunpack.c.h.b16 %v4863
      %v6611 = vunpack.c.l.b16 %v4864
      %v6612 = vunpack.c.h.b16 %v4864
      %v6613 = vunpack.c.l.b16 %v4865
      %v6614 = vunpack.c.h.b16 %v4865
      %v6615 = vunpack.c.l.b16 %v4866
      %v6616 = vunpack.c.h.b16 %v4866
      %v6617 = vunpack.c.l.b16 %v4867
      %v6618 = vunpack.c.h.b16 %v4867
      %v6619 = vunpack.c.l.b16 %v4868
      %v6620 = vunpack.c.h.b16 %v4868
      %v6621 = vunpack.c.l.b16 %v4869
      %v6622 = vunpack.c.h.b16 %v4869
      %v6623 = vunpack.c.l.b16 %v4870
      %v6624 = vunpack.c.h.b16 %v4870
      %v6625 = vunpack.c.l.b16 %v4871
      %v6626 = vunpack.c.h.b16 %v4871
      %v6627 = vunpack.c.l.b16 %v4872
      %v6628 = vunpack.c.h.b16 %v4872
      %v6629 = vunpack.c.l.b16 %v4873
      %v6630 = vunpack.c.h.b16 %v4873
      %v6631 = vunpack.c.l.b16 %v4874
      %v6632 = vunpack.c.h.b16 %v4874
      %v6633 = vunpack.c.l.b16 %v4875
      %v6634 = vunpack.c.h.b16 %v4875
      %v6635 = vunpack.c.l.b16 %v4876
      %v6636 = vunpack.c.h.b16 %v4876
      %v6637 = vunpack.c.l.b16 %v4877
      %v6638 = vunpack.c.h.b16 %v4877
      %v6639 = vunpack.c.l.b16 %v4878
      %v6640 = vunpack.c.h.b16 %v4878
      %v6641 = vunpack.c.l.b16 %v4879
      %v6642 = vunpack.c.h.b16 %v4879
      %v6643 = vunpack.c.l.b16 %v4880
      %v6644 = vunpack.c.h.b16 %v4880
      %v6645 = vunpack.c.l.b16 %v4881
      %v6646 = vunpack.c.h.b16 %v4881
      %v6647 = vunpack.c.l.b16 %v4882
      %v6648 = vunpack.c.h.b16 %v4882
      %v6649 = vunpack.c.l.b16 %v4883
      %v6650 = vunpack.c.h.b16 %v4883
      %v6651 = vunpack.c.l.b16 %v4884
      %v6652 = vunpack.c.h.b16 %v4884
      %v6653 = vunpack.c.l.b16 %v4885
      %v6654 = vunpack.c.h.b16 %v4885
      %v6655 = vunpack.c.l.b16 %v4886
      %v6656 = vunpack.c.h.b16 %v4886
      %v6657 = vunpack.c.l.b16 %v4887
      %v6658 = vunpack.c.h.b16 %v4887
      %v6659 = vunpack.c.l.b16 %v4888
      %v6660 = vunpack.c.h.b16 %v4888
      %v6661 = vunpack.c.l.b16 %v4889
      %v6662 = vunpack.c.h.b16 %v4889
      %v6663 = vunpack.c.l.b16 %v4890
      %v6664 = vunpack.c.h.b16 %v4890
      %v6665 = vunpack.c.l.b16 %v4891
      %v6666 = vunpack.c.h.b16 %v4891
      %v6667 = vunpack.c.l.b16 %v4892
      %v6668 = vunpack.c.h.b16 %v4892
      %v6669 = vunpack.c.l.b16 %v4893
      %v6670 = vunpack.c.h.b16 %v4893
      %v6671 = vunpack.c.l.b16 %v4894
      %v6672 = vunpack.c.h.b16 %v4894
      %v6673 = vunpack.c.l.b16 %v4895
      %v6674 = vunpack.c.h.b16 %v4895
      %v6675 = vunpack.c.l.b16 %v4896
      %v6676 = vunpack.c.h.b16 %v4896
      %v6677 = vunpack.c.l.b16 %v4897
      %v6678 = vunpack.c.h.b16 %v4897
      %v6679 = vunpack.c.l.b16 %v4898
      %v6680 = vunpack.c.h.b16 %v4898
      %v6681 = vunpack.c.l.b16 %v4899
      %v6682 = vunpack.c.h.b16 %v4899
      %v6683 = vunpack.c.l.b16 %v4900
      %v6684 = vunpack.c.h.b16 %v4900
      %v6685 = vunpack.c.l.b16 %v4901
      %v6686 = vunpack.c.h.b16 %v4901
      %v6687 = vunpack.c.l.b16 %v4902
      %v6688 = vunpack.c.h.b16 %v4902
      %v6689 = vunpack.c.l.b16 %v4903
      %v6690 = vunpack.c.h.b16 %v4903
      %v6691 = vunpack.c.l.b16 %v4904
      %v6692 = vunpack.c.h.b16 %v4904
      %v6693 = vunpack.c.l.b16 %v4905
      %v6694 = vunpack.c.h.b16 %v4905
      %v6695 = vunpack.c.l.b16 %v4906
      %v6696 = vunpack.c.h.b16 %v4906
      %v6697 = vunpack.c.l.b16 %v4907
      %v6698 = vunpack.c.h.b16 %v4907
      %v6699 = vpack.c.b16 %v5551, %v5547
      %v6700 = vpack.c.b16 %v5552, %v5548
      %v6701 = vpack.c.b16 %v5553, %v5549
      %v6702 = vpack.c.b16 %v5554, %v5550
      %v6703 = vpack.c.b16 %v5559, %v5555
      %v6704 = vpack.c.b16 %v5560, %v5556
      %v6705 = vpack.c.b16 %v5561, %v5557
      %v6706 = vpack.c.b16 %v5562, %v5558
      %v6707 = vpack.c.b16 %v5567, %v5563
      %v6708 = vpack.c.b16 %v5568, %v5564
      %v6709 = vpack.c.b16 %v5569, %v5565
      %v6710 = vpack.c.b16 %v5570, %v5566
      %v6711 = vpack.c.b16 %v5575, %v5571
      %v6712 = vpack.c.b16 %v5576, %v5572
      %v6713 = vpack.c.b16 %v5577, %v5573
      %v6714 = vpack.c.b16 %v5578, %v5574
      %v6715 = vpack.c.b16 %v5583, %v5579
      %v6716 = vpack.c.b16 %v5584, %v5580
      %v6717 = vpack.c.b16 %v5585, %v5581
      %v6718 = vpack.c.b16 %v5586, %v5582
      %v6719 = vpack.c.b16 %v5591, %v5587
      %v6720 = vpack.c.b16 %v5592, %v5588
      %v6721 = vpack.c.b16 %v5593, %v5589
      %v6722 = vpack.c.b16 %v5594, %v5590
      %v6723 = vpack.c.b16 %v5599, %v5595
      %v6724 = vpack.c.b16 %v5600, %v5596
      %v6725 = vpack.c.b16 %v5601, %v5597
      %v6726 = vpack.c.b16 %v5602, %v5598
      %v6727 = vpack.c.b16 %v5607, %v5603
      %v6728 = vpack.c.b16 %v5608, %v5604
      %v6729 = vpack.c.b16 %v5609, %v5605
      %v6730 = vpack.c.b16 %v5610, %v5606
      %v6731 = vpack.c.b16 %v5615, %v5611
      %v6732 = vpack.c.b16 %v5616, %v5612
      %v6733 = vpack.c.b16 %v5617, %v5613
      %v6734 = vpack.c.b16 %v5618, %v5614
      %v6735 = vpack.c.b16 %v5623, %v5619
      %v6736 = vpack.c.b16 %v5624, %v5620
      %v6737 = vpack.c.b16 %v5625, %v5621
      %v6738 = vpack.c.b16 %v5626, %v5622
      %v6739 = vpack.c.b16 %v5631, %v5627
      %v6740 = vpack.c.b16 %v5632, %v5628
      %v6741 = vpack.c.b16 %v5633, %v5629
      %v6742 = vpack.c.b16 %v5634, %v5630
      %v6743 = vpack.c.b16 %v5639, %v5635
      %v6744 = vpack.c.b16 %v5640, %v5636
      %v6745 = vpack.c.b16 %v5641, %v5637
      %v6746 = vpack.c.b16 %v5642, %v5638
      %v6747 = vpack.c.b16 %v5647, %v5643
      %v6748 = vpack.c.b16 %v5648, %v5644
      %v6749 = vpack.c.b16 %v5649, %v5645
      %v6750 = vpack.c.b16 %v5650, %v5646
      %v6751 = vpack.c.b16 %v5655, %v5651
      %v6752 = vpack.c.b16 %v5656, %v5652
      %v6753 = vpack.c.b16 %v5657, %v5653
      %v6754 = vpack.c.b16 %v5658, %v5654
      %v6755 = vpack.c.b16 %v5663, %v5659
      %v6756 = vpack.c.b16 %v5664, %v5660
      %v6757 = vpack.c.b16 %v5665, %v5661
      %v6758 = vpack.c.b16 %v5666, %v5662
      %v6759 = vpack.c.b16 %v5671, %v5667
      %v6760 = vpack.c.b16 %v5672, %v5668
      %v6761 = vpack.c.b16 %v5673, %v5669
      %v6762 = vpack.c.b16 %v5674, %v5670
      %v6763 = vpack.c.b16 %v5679, %v5675
      %v6764 = vpack.c.b16 %v5680, %v5676
      %v6765 = vpack.c.b16 %v5681, %v5677
      %v6766 = vpack.c.b16 %v5682, %v5678
      %v6767 = vpack.c.b16 %v5687, %v5683
      %v6768 = vpack.c.b16 %v5688, %v5684
      %v6769 = vpack.c.b16 %v5689, %v5685
      %v6770 = vpack.c.b16 %v5690, %v5686
      %v6771 = vpack.c.b16 %v5695, %v5691
      %v6772 = vpack.c.b16 %v5696, %v5692
      %v6773 = vpack.c.b16 %v5697, %v5693
      %v6774 = vpack.c.b16 %v5698, %v5694
      %v6775 = vpack.c.b16 %v5703, %v5699
      %v6776 = vpack.c.b16 %v5704, %v5700
      %v6777 = vpack.c.b16 %v5705, %v5701
      %v6778 = vpack.c.b16 %v5706, %v5702
      %v6779 = vpack.c.b16 %v5711, %v5707
      %v6780 = vpack.c.b16 %v5712, %v5708
      %v6781 = vpack.c.b16 %v5713, %v5709
      %v6782 = vpack.c.b16 %v5714, %v5710
      %v6783 = vpack.c.b16 %v5719, %v5715
      %v6784 = vpack.c.b16 %v5720, %v5716
      %v6785 = vpack.c.b16 %v5721, %v5717
      %v6786 = vpack.c.b16 %v5722, %v5718
      %v6787 = vpack.c.b16 %v5727, %v5723
      %v6788 = vpack.c.b16 %v5728, %v5724
      %v6789 = vpack.c.b16 %v5729, %v5725
      %v6790 = vpack.c.b16 %v5730, %v5726
      %v6791 = vpack.c.b16 %v5735, %v5731
      %v6792 = vpack.c.b16 %v5736, %v5732
      %v6793 = vpack.c.b16 %v5737, %v5733
      %v6794 = vpack.c.b16 %v5738, %v5734
      %v6795 = vpack.c.b16 %v5743, %v5739
      %v6796 = vpack.c.b16 %v5744, %v5740
      %v6797 = vpack.c.b16 %v5745, %v5741
      %v6798 = vpack.c.b16 %v5746, %v5742
      %v6799 = vpack.c.b16 %v5751, %v5747
      %v6800 = vpack.c.b16 %v5752, %v5748
      %v6801 = vpack.c.b16 %v5753, %v5749
      %v6802 = vpack.c.b16 %v5754, %v5750
      %v6803 = vpack.c.b16 %v5759, %v5755
      %v6804 = vpack.c.b16 %v5760, %v5756
      %v6805 = vpack.c.b16 %v5761, %v5757
      %v6806 = vpack.c.b16 %v5762, %v5758
      %v6807 = vpack.c.b16 %v5767, %v5763
      %v6808 = vpack.c.b16 %v5768, %v5764
      %v6809 = vpack.c.b16 %v5769, %v5765
      %v6810 = vpack.c.b16 %v5770, %v5766
      %v6811 = vpack.c.b16 %v5775, %v5771
      %v6812 = vpack.c.b16 %v5776, %v5772
      %v6813 = vpack.c.b16 %v5777, %v5773
      %v6814 = vpack.c.b16 %v5778, %v5774
      %v6815 = vpack.c.b16 %v5783, %v5779
      %v6816 = vpack.c.b16 %v5784, %v5780
      %v6817 = vpack.c.b16 %v5785, %v5781
      %v6818 = vpack.c.b16 %v5786, %v5782
      %v6819 = vpack.c.b16 %v5791, %v5787
      %v6820 = vpack.c.b16 %v5792, %v5788
      %v6821 = vpack.c.b16 %v5793, %v5789
      %v6822 = vpack.c.b16 %v5794, %v5790
      %v6823 = vpack.c.b16 %v5799, %v5795
      %v6824 = vpack.c.b16 %v5800, %v5796
      %v6825 = vpack.c.b16 %v5801, %v5797
      %v6826 = vpack.c.b16 %v5802, %v5798
      %v6827 = vpack.c.b16 %v5807, %v5803
      %v6828 = vpack.c.b16 %v5808, %v5804
      %v6829 = vpack.c.b16 %v5809, %v5805
      %v6830 = vpack.c.b16 %v5810, %v5806
      %v6831 = vpack.c.b16 %v5815, %v5811
      %v6832 = vpack.c.b16 %v5816, %v5812
      %v6833 = vpack.c.b16 %v5817, %v5813
      %v6834 = vpack.c.b16 %v5818, %v5814
      %v6835 = vpack.c.b16 %v5823, %v5819
      %v6836 = vpack.c.b16 %v5824, %v5820
      %v6837 = vpack.c.b16 %v5825, %v5821
      %v6838 = vpack.c.b16 %v5826, %v5822
      %v6839 = vpack.c.b16 %v5831, %v5827
      %v6840 = vpack.c.b16 %v5832, %v5828
      %v6841 = vpack.c.b16 %v5833, %v5829
      %v6842 = vpack.c.b16 %v5834, %v5830
      %v6843 = vpack.c.b16 %v5839, %v5835
      %v6844 = vpack.c.b16 %v5840, %v5836
      %v6845 = vpack.c.b16 %v5841, %v5837
      %v6846 = vpack.c.b16 %v5842, %v5838
      %v6847 = vpack.c.b16 %v5847, %v5843
      %v6848 = vpack.c.b16 %v5848, %v5844
      %v6849 = vpack.c.b16 %v5849, %v5845
      %v6850 = vpack.c.b16 %v5850, %v5846
      %v6851 = vpack.c.b16 %v5855, %v5851
      %v6852 = vpack.c.b16 %v5856, %v5852
      %v6853 = vpack.c.b16 %v5857, %v5853
      %v6854 = vpack.c.b16 %v5858, %v5854
      %v6855 = vpack.c.b16 %v5863, %v5859
      %v6856 = vpack.c.b16 %v5864, %v5860
      %v6857 = vpack.c.b16 %v5865, %v5861
      %v6858 = vpack.c.b16 %v5866, %v5862
      %v6859 = vpack.c.b16 %v5871, %v5867
      %v6860 = vpack.c.b16 %v5872, %v5868
      %v6861 = vpack.c.b16 %v5873, %v5869
      %v6862 = vpack.c.b16 %v5874, %v5870
      %v6863 = vpack.c.b16 %v5879, %v5875
      %v6864 = vpack.c.b16 %v5880, %v5876
      %v6865 = vpack.c.b16 %v5881, %v5877
      %v6866 = vpack.c.b16 %v5882, %v5878
      %v6867 = vpack.c.b16 %v5887, %v5883
      %v6868 = vpack.c.b16 %v5888, %v5884
      %v6869 = vpack.c.b16 %v5889, %v5885
      %v6870 = vpack.c.b16 %v5890, %v5886
      %v6871 = vpack.c.b16 %v5895, %v5891
      %v6872 = vpack.c.b16 %v5896, %v5892
      %v6873 = vpack.c.b16 %v5897, %v5893
      %v6874 = vpack.c.b16 %v5898, %v5894
      %v6875 = vpack.c.b16 %v5903, %v5899
      %v6876 = vpack.c.b16 %v5904, %v5900
      %v6877 = vpack.c.b16 %v5905, %v5901
      %v6878 = vpack.c.b16 %v5906, %v5902
      %v6879 = vpack.c.b16 %v5911, %v5907
      %v6880 = vpack.c.b16 %v5912, %v5908
      %v6881 = vpack.c.b16 %v5913, %v5909
      %v6882 = vpack.c.b16 %v5914, %v5910
      %v6883 = vpack.c.b16 %v5919, %v5915
      %v6884 = vpack.c.b16 %v5920, %v5916
      %v6885 = vpack.c.b16 %v5921, %v5917
      %v6886 = vpack.c.b16 %v5922, %v5918
      %v6887 = vpack.c.b16 %v5927, %v5923
      %v6888 = vpack.c.b16 %v5928, %v5924
      %v6889 = vpack.c.b16 %v5929, %v5925
      %v6890 = vpack.c.b16 %v5930, %v5926
      %v6891 = vpack.c.b16 %v5935, %v5931
      %v6892 = vpack.c.b16 %v5936, %v5932
      %v6893 = vpack.c.b16 %v5937, %v5933
      %v6894 = vpack.c.b16 %v5938, %v5934
      %v6895 = vpack.c.b16 %v5943, %v5939
      %v6896 = vpack.c.b16 %v5944, %v5940
      %v6897 = vpack.c.b16 %v5945, %v5941
      %v6898 = vpack.c.b16 %v5946, %v5942
      %v6899 = vpack.c.b16 %v5951, %v5947
      %v6900 = vpack.c.b16 %v5952, %v5948
      %v6901 = vpack.c.b16 %v5953, %v5949
      %v6902 = vpack.c.b16 %v5954, %v5950
      %v6903 = vpack.c.b16 %v5959, %v5955
      %v6904 = vpack.c.b16 %v5960, %v5956
      %v6905 = vpack.c.b16 %v5961, %v5957
      %v6906 = vpack.c.b16 %v5962, %v5958
      %v6907 = vpack.c.b16 %v5967, %v5963
      %v6908 = vpack.c.b16 %v5968, %v5964
      %v6909 = vpack.c.b16 %v5969, %v5965
      %v6910 = vpack.c.b16 %v5970, %v5966
      %v6911 = vpack.c.b16 %v5975, %v5971
      %v6912 = vpack.c.b16 %v5976, %v5972
      %v6913 = vpack.c.b16 %v5977, %v5973
      %v6914 = vpack.c.b16 %v5978, %v5974
      %v6915 = vpack.c.b16 %v5983, %v5979
      %v6916 = vpack.c.b16 %v5984, %v5980
      %v6917 = vpack.c.b16 %v5985, %v5981
      %v6918 = vpack.c.b16 %v5986, %v5982
      %v6919 = vpack.c.b16 %v5991, %v5987
      %v6920 = vpack.c.b16 %v5992, %v5988
      %v6921 = vpack.c.b16 %v5993, %v5989
      %v6922 = vpack.c.b16 %v5994, %v5990
      %v6923 = vpack.c.b16 %v5999, %v5995
      %v6924 = vpack.c.b16 %v6000, %v5996
      %v6925 = vpack.c.b16 %v6001, %v5997
      %v6926 = vpack.c.b16 %v6002, %v5998
      %v6927 = vpack.c.b16 %v6007, %v6003
      %v6928 = vpack.c.b16 %v6008, %v6004
      %v6929 = vpack.c.b16 %v6009, %v6005
      %v6930 = vpack.c.b16 %v6010, %v6006
      %v6931 = vpack.c.b16 %v6015, %v6011
      %v6932 = vpack.c.b16 %v6016, %v6012
      %v6933 = vpack.c.b16 %v6017, %v6013
      %v6934 = vpack.c.b16 %v6018, %v6014
      %v6935 = vpack.c.b16 %v6023, %v6019
      %v6936 = vpack.c.b16 %v6024, %v6020
      %v6937 = vpack.c.b16 %v6025, %v6021
      %v6938 = vpack.c.b16 %v6026, %v6022
      %v6939 = vpack.c.b16 %v6031, %v6027
      %v6940 = vpack.c.b16 %v6032, %v6028
      %v6941 = vpack.c.b16 %v6033, %v6029
      %v6942 = vpack.c.b16 %v6034, %v6030
      %v6943 = vpack.c.b16 %v6039, %v6035
      %v6944 = vpack.c.b16 %v6040, %v6036
      %v6945 = vpack.c.b16 %v6041, %v6037
      %v6946 = vpack.c.b16 %v6042, %v6038
      %v6947 = vpack.c.b16 %v6047, %v6043
      %v6948 = vpack.c.b16 %v6048, %v6044
      %v6949 = vpack.c.b16 %v6049, %v6045
      %v6950 = vpack.c.b16 %v6050, %v6046
      %v6951 = vpack.c.b16 %v6055, %v6051
      %v6952 = vpack.c.b16 %v6056, %v6052
      %v6953 = vpack.c.b16 %v6057, %v6053
      %v6954 = vpack.c.b16 %v6058, %v6054
      %v6955 = vpack.c.b16 %v6063, %v6059
      %v6956 = vpack.c.b16 %v6064, %v6060
      %v6957 = vpack.c.b16 %v6065, %v6061
      %v6958 = vpack.c.b16 %v6066, %v6062
      %v6959 = vpack.c.b16 %v6071, %v6067
      %v6960 = vpack.c.b16 %v6072, %v6068
      %v6961 = vpack.c.b16 %v6073, %v6069
      %v6962 = vpack.c.b16 %v6074, %v6070
      %v6963 = vpack.c.b16 %v6079, %v6075
      %v6964 = vpack.c.b16 %v6080, %v6076
      %v6965 = vpack.c.b16 %v6081, %v6077
      %v6966 = vpack.c.b16 %v6082, %v6078
      %v6967 = vpack.c.b16 %v6087, %v6083
      %v6968 = vpack.c.b16 %v6088, %v6084
      %v6969 = vpack.c.b16 %v6089, %v6085
      %v6970 = vpack.c.b16 %v6090, %v6086
      %v6971 = vpack.c.b16 %v6095, %v6091
      %v6972 = vpack.c.b16 %v6096, %v6092
      %v6973 = vpack.c.b16 %v6097, %v6093
      %v6974 = vpack.c.b16 %v6098, %v6094
      %v6975 = vpack.c.b16 %v6103, %v6099
      %v6976 = vpack.c.b16 %v6104, %v6100
      %v6977 = vpack.c.b16 %v6105, %v6101
      %v6978 = vpack.c.b16 %v6106, %v6102
      %v6979 = vpack.c.b16 %v6111, %v6107
      %v6980 = vpack.c.b16 %v6112, %v6108
      %v6981 = vpack.c.b16 %v6113, %v6109
      %v6982 = vpack.c.b16 %v6114, %v6110
      %v6983 = vpack.c.b16 %v6119, %v6115
      %v6984 = vpack.c.b16 %v6120, %v6116
      %v6985 = vpack.c.b16 %v6121, %v6117
      %v6986 = vpack.c.b16 %v6122, %v6118
      %v6987 = vpack.c.b16 %v6127, %v6123
      %v6988 = vpack.c.b16 %v6128, %v6124
      %v6989 = vpack.c.b16 %v6129, %v6125
      %v6990 = vpack.c.b16 %v6130, %v6126
      %v6991 = vpack.c.b16 %v6135, %v6131
      %v6992 = vpack.c.b16 %v6136, %v6132
      %v6993 = vpack.c.b16 %v6137, %v6133
      %v6994 = vpack.c.b16 %v6138, %v6134
      %v6995 = vpack.c.b16 %v6143, %v6139
      %v6996 = vpack.c.b16 %v6144, %v6140
      %v6997 = vpack.c.b16 %v6145, %v6141
      %v6998 = vpack.c.b16 %v6146, %v6142
      %v6999 = vpack.c.b16 %v6151, %v6147
      %v7000 = vpack.c.b16 %v6152, %v6148
      %v7001 = vpack.c.b16 %v6153, %v6149
      %v7002 = vpack.c.b16 %v6154, %v6150
      %v7003 = vpack.c.b16 %v6159, %v6155
      %v7004 = vpack.c.b16 %v6160, %v6156
      %v7005 = vpack.c.b16 %v6161, %v6157
      %v7006 = vpack.c.b16 %v6162, %v6158
      %v7007 = vpack.c.b16 %v6167, %v6163
      %v7008 = vpack.c.b16 %v6168, %v6164
      %v7009 = vpack.c.b16 %v6169, %v6165
      %v7010 = vpack.c.b16 %v6170, %v6166
      %v7011 = vpack.c.b16 %v6175, %v6171
      %v7012 = vpack.c.b16 %v6176, %v6172
      %v7013 = vpack.c.b16 %v6177, %v6173
      %v7014 = vpack.c.b16 %v6178, %v6174
      %v7015 = vpack.c.b16 %v6183, %v6179
      %v7016 = vpack.c.b16 %v6184, %v6180
      %v7017 = vpack.c.b16 %v6185, %v6181
      %v7018 = vpack.c.b16 %v6186, %v6182
      %v7019 = vpack.c.b16 %v6191, %v6187
      %v7020 = vpack.c.b16 %v6192, %v6188
      %v7021 = vpack.c.b16 %v6193, %v6189
      %v7022 = vpack.c.b16 %v6194, %v6190
      %v7023 = vpack.c.b16 %v6199, %v6195
      %v7024 = vpack.c.b16 %v6200, %v6196
      %v7025 = vpack.c.b16 %v6201, %v6197
      %v7026 = vpack.c.b16 %v6202, %v6198
      %v7027 = vpack.c.b16 %v6207, %v6203
      %v7028 = vpack.c.b16 %v6208, %v6204
      %v7029 = vpack.c.b16 %v6209, %v6205
      %v7030 = vpack.c.b16 %v6210, %v6206
      %v7031 = vpack.c.b16 %v6215, %v6211
      %v7032 = vpack.c.b16 %v6216, %v6212
      %v7033 = vpack.c.b16 %v6217, %v6213
      %v7034 = vpack.c.b16 %v6218, %v6214
      %v7035 = vpack.c.b16 %v6223, %v6219
      %v7036 = vpack.c.b16 %v6224, %v6220
      %v7037 = vpack.c.b16 %v6225, %v6221
      %v7038 = vpack.c.b16 %v6226, %v6222
      %v7039 = vpack.c.b16 %v6231, %v6227
      %v7040 = vpack.c.b16 %v6232, %v6228
      %v7041 = vpack.c.b16 %v6233, %v6229
      %v7042 = vpack.c.b16 %v6234, %v6230
      %v7043 = vpack.c.b16 %v6239, %v6235
      %v7044 = vpack.c.b16 %v6240, %v6236
      %v7045 = vpack.c.b16 %v6241, %v6237
      %v7046 = vpack.c.b16 %v6242, %v6238
      %v7047 = vpack.c.b16 %v6247, %v6243
      %v7048 = vpack.c.b16 %v6248, %v6244
      %v7049 = vpack.c.b16 %v6249, %v6245
      %v7050 = vpack.c.b16 %v6250, %v6246
      %v7051 = vpack.c.b16 %v6255, %v6251
      %v7052 = vpack.c.b16 %v6256, %v6252
      %v7053 = vpack.c.b16 %v6257, %v6253
      %v7054 = vpack.c.b16 %v6258, %v6254
      %v7055 = vpack.c.b16 %v6263, %v6259
      %v7056 = vpack.c.b16 %v6264, %v6260
      %v7057 = vpack.c.b16 %v6265, %v6261
      %v7058 = vpack.c.b16 %v6266, %v6262
      %v7059 = vpack.c.b16 %v6271, %v6267
      %v7060 = vpack.c.b16 %v6272, %v6268
      %v7061 = vpack.c.b16 %v6273, %v6269
      %v7062 = vpack.c.b16 %v6274, %v6270
      %v7063 = vpack.c.b16 %v6279, %v6275
      %v7064 = vpack.c.b16 %v6280, %v6276
      %v7065 = vpack.c.b16 %v6281, %v6277
      %v7066 = vpack.c.b16 %v6282, %v6278
      %v7067 = vpack.c.b16 %v6287, %v6283
      %v7068 = vpack.c.b16 %v6288, %v6284
      %v7069 = vpack.c.b16 %v6289, %v6285
      %v7070 = vpack.c.b16 %v6290, %v6286
      %v7071 = vpack.c.b16 %v6295, %v6291
      %v7072 = vpack.c.b16 %v6296, %v6292
      %v7073 = vpack.c.b16 %v6297, %v6293
      %v7074 = vpack.c.b16 %v6298, %v6294
      %v7075 = vpack.c.b16 %v6303, %v6299
      %v7076 = vpack.c.b16 %v6304, %v6300
      %v7077 = vpack.c.b16 %v6305, %v6301
      %v7078 = vpack.c.b16 %v6306, %v6302
      %v7079 = vpack.c.b16 %v6311, %v6307
      %v7080 = vpack.c.b16 %v6312, %v6308
      %v7081 = vpack.c.b16 %v6313, %v6309
      %v7082 = vpack.c.b16 %v6314, %v6310
      %v7083 = vpack.c.b16 %v6319, %v6315
      %v7084 = vpack.c.b16 %v6320, %v6316
      %v7085 = vpack.c.b16 %v6321, %v6317
      %v7086 = vpack.c.b16 %v6322, %v6318
      %v7087 = vpack.c.b16 %v6327, %v6323
      %v7088 = vpack.c.b16 %v6328, %v6324
      %v7089 = vpack.c.b16 %v6329, %v6325
      %v7090 = vpack.c.b16 %v6330, %v6326
      %v7091 = vpack.c.b16 %v6335, %v6331
      %v7092 = vpack.c.b16 %v6336, %v6332
      %v7093 = vpack.c.b16 %v6337, %v6333
      %v7094 = vpack.c.b16 %v6338, %v6334
      %v7095 = vpack.c.b16 %v6343, %v6339
      %v7096 = vpack.c.b16 %v6344, %v6340
      %v7097 = vpack.c.b16 %v6345, %v6341
      %v7098 = vpack.c.b16 %v6346, %v6342
      %v7099 = vpack.c.b16 %v6351, %v6347
      %v7100 = vpack.c.b16 %v6352, %v6348
      %v7101 = vpack.c.b16 %v6353, %v6349
      %v7102 = vpack.c.b16 %v6354, %v6350
      %v7103 = vpack.c.b16 %v6359, %v6355
      %v7104 = vpack.c.b16 %v6360, %v6356
      %v7105 = vpack.c.b16 %v6361, %v6357
      %v7106 = vpack.c.b16 %v6362, %v6358
      %v7107 = vpack.c.b16 %v6367, %v6363
      %v7108 = vpack.c.b16 %v6368, %v6364
      %v7109 = vpack.c.b16 %v6369, %v6365
      %v7110 = vpack.c.b16 %v6370, %v6366
      %v7111 = vpack.c.b16 %v6375, %v6371
      %v7112 = vpack.c.b16 %v6376, %v6372
      %v7113 = vpack.c.b16 %v6377, %v6373
      %v7114 = vpack.c.b16 %v6378, %v6374
      %v7115 = vpack.c.b16 %v6383, %v6379
      %v7116 = vpack.c.b16 %v6384, %v6380
      %v7117 = vpack.c.b16 %v6385, %v6381
      %v7118 = vpack.c.b16 %v6386, %v6382
      %v7119 = vpack.c.b16 %v6391, %v6387
      %v7120 = vpack.c.b16 %v6392, %v6388
      %v7121 = vpack.c.b16 %v6393, %v6389
      %v7122 = vpack.c.b16 %v6394, %v6390
      %v7123 = vpack.c.b16 %v6399, %v6395
      %v7124 = vpack.c.b16 %v6400, %v6396
      %v7125 = vpack.c.b16 %v6401, %v6397
      %v7126 = vpack.c.b16 %v6402, %v6398
      %v7127 = vpack.c.b16 %v6407, %v6403
      %v7128 = vpack.c.b16 %v6408, %v6404
      %v7129 = vpack.c.b16 %v6409, %v6405
      %v7130 = vpack.c.b16 %v6410, %v6406
      %v7131 = vpack.c.b16 %v6415, %v6411
      %v7132 = vpack.c.b16 %v6416, %v6412
      %v7133 = vpack.c.b16 %v6417, %v6413
      %v7134 = vpack.c.b16 %v6418, %v6414
      %v7135 = vpack.c.b16 %v6423, %v6419
      %v7136 = vpack.c.b16 %v6424, %v6420
      %v7137 = vpack.c.b16 %v6425, %v6421
      %v7138 = vpack.c.b16 %v6426, %v6422
      %v7139 = vpack.c.b16 %v6431, %v6427
      %v7140 = vpack.c.b16 %v6432, %v6428
      %v7141 = vpack.c.b16 %v6433, %v6429
      %v7142 = vpack.c.b16 %v6434, %v6430
      %v7143 = vpack.c.b16 %v6439, %v6435
      %v7144 = vpack.c.b16 %v6440, %v6436
      %v7145 = vpack.c.b16 %v6441, %v6437
      %v7146 = vpack.c.b16 %v6442, %v6438
      %v7147 = vpack.c.b16 %v6447, %v6443
      %v7148 = vpack.c.b16 %v6448, %v6444
      %v7149 = vpack.c.b16 %v6449, %v6445
      %v7150 = vpack.c.b16 %v6450, %v6446
      %v7151 = vpack.c.b16 %v6455, %v6451
      %v7152 = vpack.c.b16 %v6456, %v6452
      %v7153 = vpack.c.b16 %v6457, %v6453
      %v7154 = vpack.c.b16 %v6458, %v6454
      %v7155 = vpack.c.b16 %v6463, %v6459
      %v7156 = vpack.c.b16 %v6464, %v6460
      %v7157 = vpack.c.b16 %v6465, %v6461
      %v7158 = vpack.c.b16 %v6466, %v6462
      %v7159 = vpack.c.b16 %v6471, %v6467
      %v7160 = vpack.c.b16 %v6472, %v6468
      %v7161 = vpack.c.b16 %v6473, %v6469
      %v7162 = vpack.c.b16 %v6474, %v6470
      %v7163 = vpack.c.b16 %v6479, %v6475
      %v7164 = vpack.c.b16 %v6480, %v6476
      %v7165 = vpack.c.b16 %v6481, %v6477
      %v7166 = vpack.c.b16 %v6482, %v6478
      %v7167 = vpack.c.b16 %v6487, %v6483
      %v7168 = vpack.c.b16 %v6488, %v6484
      %v7169 = vpack.c.b16 %v6489, %v6485
      %v7170 = vpack.c.b16 %v6490, %v6486
      %v7171 = vpack.c.b16 %v6495, %v6491
      %v7172 = vpack.c.b16 %v6496, %v6492
      %v7173 = vpack.c.b16 %v6497, %v6493
      %v7174 = vpack.c.b16 %v6498, %v6494
      %v7175 = vpack.c.b16 %v6503, %v6499
      %v7176 = vpack.c.b16 %v6504, %v6500
      %v7177 = vpack.c.b16 %v6505, %v6501
      %v7178 = vpack.c.b16 %v6506, %v6502
      %v7179 = vpack.c.b16 %v6511, %v6507
      %v7180 = vpack.c.b16 %v6512, %v6508
      %v7181 = vpack.c.b16 %v6513, %v6509
      %v7182 = vpack.c.b16 %v6514, %v6510
      %v7183 = vpack.c.b16 %v6519, %v6515
      %v7184 = vpack.c.b16 %v6520, %v6516
      %v7185 = vpack.c.b16 %v6521, %v6517
      %v7186 = vpack.c.b16 %v6522, %v6518
      %v7187 = vpack.c.b16 %v6527, %v6523
      %v7188 = vpack.c.b16 %v6528, %v6524
      %v7189 = vpack.c.b16 %v6529, %v6525
      %v7190 = vpack.c.b16 %v6530, %v6526
      %v7191 = vpack.c.b16 %v6535, %v6531
      %v7192 = vpack.c.b16 %v6536, %v6532
      %v7193 = vpack.c.b16 %v6537, %v6533
      %v7194 = vpack.c.b16 %v6538, %v6534
      %v7195 = vpack.c.b16 %v6543, %v6539
      %v7196 = vpack.c.b16 %v6544, %v6540
      %v7197 = vpack.c.b16 %v6545, %v6541
      %v7198 = vpack.c.b16 %v6546, %v6542
      %v7199 = vpack.c.b16 %v6551, %v6547
      %v7200 = vpack.c.b16 %v6552, %v6548
      %v7201 = vpack.c.b16 %v6553, %v6549
      %v7202 = vpack.c.b16 %v6554, %v6550
      %v7203 = vpack.c.b16 %v6559, %v6555
      %v7204 = vpack.c.b16 %v6560, %v6556
      %v7205 = vpack.c.b16 %v6561, %v6557
      %v7206 = vpack.c.b16 %v6562, %v6558
      %v7207 = vpack.c.b16 %v6567, %v6563
      %v7208 = vpack.c.b16 %v6568, %v6564
      %v7209 = vpack.c.b16 %v6569, %v6565
      %v7210 = vpack.c.b16 %v6570, %v6566
      %v7211 = vpack.c.b16 %v6575, %v6571
      %v7212 = vpack.c.b16 %v6576, %v6572
      %v7213 = vpack.c.b16 %v6577, %v6573
      %v7214 = vpack.c.b16 %v6578, %v6574
      %v7215 = vpack.c.b16 %v6583, %v6579
      %v7216 = vpack.c.b16 %v6584, %v6580
      %v7217 = vpack.c.b16 %v6585, %v6581
      %v7218 = vpack.c.b16 %v6586, %v6582
      %v7219 = vpack.c.b16 %v6591, %v6587
      %v7220 = vpack.c.b16 %v6592, %v6588
      %v7221 = vpack.c.b16 %v6593, %v6589
      %v7222 = vpack.c.b16 %v6594, %v6590
      %v7223 = vpack.c.b16 %v6599, %v6595
      %v7224 = vpack.c.b16 %v6600, %v6596
      %v7225 = vpack.c.b16 %v6601, %v6597
      %v7226 = vpack.c.b16 %v6602, %v6598
      %v7227 = vpack.c.b16 %v6607, %v6603
      %v7228 = vpack.c.b16 %v6608, %v6604
      %v7229 = vpack.c.b16 %v6609, %v6605
      %v7230 = vpack.c.b16 %v6610, %v6606
      %v7231 = vpack.c.b16 %v6615, %v6611
      %v7232 = vpack.c.b16 %v6616, %v6612
      %v7233 = vpack.c.b16 %v6617, %v6613
      %v7234 = vpack.c.b16 %v6618, %v6614
      %v7235 = vpack.c.b16 %v6623, %v6619
      %v7236 = vpack.c.b16 %v6624, %v6620
      %v7237 = vpack.c.b16 %v6625, %v6621
      %v7238 = vpack.c.b16 %v6626, %v6622
      %v7239 = vpack.c.b16 %v6631, %v6627
      %v7240 = vpack.c.b16 %v6632, %v6628
      %v7241 = vpack.c.b16 %v6633, %v6629
      %v7242 = vpack.c.b16 %v6634, %v6630
      %v7243 = vpack.c.b16 %v6639, %v6635
      %v7244 = vpack.c.b16 %v6640, %v6636
      %v7245 = vpack.c.b16 %v6641, %v6637
      %v7246 = vpack.c.b16 %v6642, %v6638
      %v7247 = vpack.c.b16 %v6647, %v6643
      %v7248 = vpack.c.b16 %v6648, %v6644
      %v7249 = vpack.c.b16 %v6649, %v6645
      %v7250 = vpack.c.b16 %v6650, %v6646
      %v7251 = vpack.c.b16 %v6655, %v6651
      %v7252 = vpack.c.b16 %v6656, %v6652
      %v7253 = vpack.c.b16 %v6657, %v6653
      %v7254 = vpack.c.b16 %v6658, %v6654
      %v7255 = vpack.c.b16 %v6663, %v6659
      %v7256 = vpack.c.b16 %v6664, %v6660
      %v7257 = vpack.c.b16 %v6665, %v6661
      %v7258 = vpack.c.b16 %v6666, %v6662
      %v7259 = vpack.c.b16 %v6671, %v6667
      %v7260 = vpack.c.b16 %v6672, %v6668
      %v7261 = vpack.c.b16 %v6673, %v6669
      %v7262 = vpack.c.b16 %v6674, %v6670
      %v7263 = vpack.c.b16 %v6679, %v6675
      %v7264 = vpack.c.b16 %v6680, %v6676
      %v7265 = vpack.c.b16 %v6681, %v6677
      %v7266 = vpack.c.b16 %v6682, %v6678
      %v7267 = vpack.c.b16 %v6687, %v6683
      %v7268 = vpack.c.b16 %v6688, %v6684
      %v7269 = vpack.c.b16 %v6689, %v6685
      %v7270 = vpack.c.b16 %v6690, %v6686
      %v7271 = vpack.c.b16 %v6695, %v6691
      %v7272 = vpack.c.b16 %v6696, %v6692
      %v7273 = vpack.c.b16 %v6697, %v6693
      %v7274 = vpack.c.b16 %v6698, %v6694
      %7851 = vmatprep.subr.bf16.mxu0 %v6728
      %7852 = vmatpush1.bf16.msra.mxu0 %v6727
      %7853 = vmatprep.subr.bf16.mxu0 %v6724
      %7854 = vmatpush1.bf16.msra.mxu0 %v6723
      %7855 = vmatprep.subr.bf16.mxu0 %v6720
      %7856 = vmatpush1.bf16.msra.mxu0 %v6719
      %7857 = vmatprep.subr.bf16.mxu0 %v6716
      %7858 = vmatpush1.bf16.msra.mxu0 %v6715
      %7859 = vmatprep.subr.bf16.mxu0 %v6712
      %7860 = vmatpush1.bf16.msra.mxu0 %v6711
      %7861 = vmatprep.subr.bf16.mxu0 %v6708
      %7862 = vmatpush1.bf16.msra.mxu0 %v6707
      %7863 = vmatprep.subr.bf16.mxu0 %v6704
      %7864 = vmatpush1.bf16.msra.mxu0 %v6703
      %7865 = vmatprep.subr.bf16.mxu0 %v6700
      %7866 = vmatpush1.bf16.msra.mxu0 %v6699
      %7867 = vmatprep.subr.bf16.mxu0 %v6760
      %7868 = vmatpush2.bf16.msra.mxu0 %v6759
      %7869 = vmatprep.subr.bf16.mxu0 %v6756
      %7870 = vmatpush2.bf16.msra.mxu0 %v6755
      %7871 = vmatprep.subr.bf16.mxu0 %v6752
      %7872 = vmatpush2.bf16.msra.mxu0 %v6751
      %7873 = vmatprep.subr.bf16.mxu0 %v6748
      %7874 = vmatpush2.bf16.msra.mxu0 %v6747
      %7875 = vmatprep.subr.bf16.mxu0 %v6744
      %7876 = vmatpush2.bf16.msra.mxu0 %v6743
      %7877 = vmatprep.subr.bf16.mxu0 %v6740
      %7878 = vmatpush2.bf16.msra.mxu0 %v6739
      %7879 = vmatprep.subr.bf16.mxu0 %v6736
      %7880 = vmatpush2.bf16.msra.mxu0 %v6735
      %7881 = vmatprep.subr.bf16.mxu0 %v6732
      %7882 = vmatpush2.bf16.msra.mxu0 %v6731
      %7883 = vmatprep.mubr.bf16.mxu0 %v4936
      %7884 = vmatmul.mubr.bf16.gmra.mxu0 %v4935
      %v7885 = vpop.f32.mrf.mxu0
      %v7886 = vadd.f32 0.0, %v7885
      %v7887 = vpop.f32.mrf.mxu0
      %v7888 = vadd.f32 0.0, %v7887
      %v7889 = vpop.f32.mrf.mxu0
      %v7890 = vpop.f32.mrf.mxu0
      %7891 = vdwg.mxu0
      %7892 = vmatprep.subr.bf16.mxu0 %v6792
      %7893 = vmatpush1.bf16.msra.mxu0 %v6791
      %7894 = vmatprep.subr.bf16.mxu0 %v6788
      %7895 = vmatpush1.bf16.msra.mxu0 %v6787
      %7896 = vmatprep.subr.bf16.mxu0 %v6784
      %7897 = vmatpush1.bf16.msra.mxu0 %v6783
      %7898 = vmatprep.subr.bf16.mxu0 %v6780
      %7899 = vmatpush1.bf16.msra.mxu0 %v6779
      %7900 = vmatprep.subr.bf16.mxu0 %v6776
      %7901 = vmatpush1.bf16.msra.mxu0 %v6775
      %7902 = vmatprep.subr.bf16.mxu0 %v6772
      %7903 = vmatpush1.bf16.msra.mxu0 %v6771
      %7904 = vmatprep.subr.bf16.mxu0 %v6768
      %7905 = vmatpush1.bf16.msra.mxu0 %v6767
      %7906 = vmatprep.subr.bf16.mxu0 %v6764
      %7907 = vmatpush1.bf16.msra.mxu0 %v6763
      %7908 = vmatprep.subr.bf16.mxu0 %v6824
      %7909 = vmatpush2.bf16.msra.mxu0 %v6823
      %7910 = vmatprep.subr.bf16.mxu0 %v6820
      %7911 = vmatpush2.bf16.msra.mxu0 %v6819
      %7912 = vmatprep.subr.bf16.mxu0 %v6816
      %7913 = vmatpush2.bf16.msra.mxu0 %v6815
      %7914 = vmatprep.subr.bf16.mxu0 %v6812
      %7915 = vmatpush2.bf16.msra.mxu0 %v6811
      %7916 = vmatprep.subr.bf16.mxu0 %v6808
      %7917 = vmatpush2.bf16.msra.mxu0 %v6807
      %7918 = vmatprep.subr.bf16.mxu0 %v6804
      %7919 = vmatpush2.bf16.msra.mxu0 %v6803
      %7920 = vmatprep.subr.bf16.mxu0 %v6800
      %7921 = vmatpush2.bf16.msra.mxu0 %v6799
      %7922 = vmatprep.subr.bf16.mxu0 %v6796
      %7923 = vmatpush2.bf16.msra.mxu0 %v6795
      %7924 = vmatprep.mubr.bf16.mxu0 %v4938
      %7925 = vmatmul.mubr.bf16.gmra.mxu0 %v4937
      %v7926 = vpop.f32.mrf.mxu0
      %v7927 = vadd.f32 %v7886, %v7926
      %v7928 = vpop.f32.mrf.mxu0
      %v7929 = vadd.f32 %v7888, %v7928
      %v7930 = vpop.f32.mrf.mxu0
      %v7931 = vpop.f32.mrf.mxu0
      %7932 = vdwg.mxu0
      %7933 = vmatprep.subr.bf16.mxu0 %v6856
      %7934 = vmatpush1.bf16.msra.mxu0 %v6855
      %7935 = vmatprep.subr.bf16.mxu0 %v6852
      %7936 = vmatpush1.bf16.msra.mxu0 %v6851
      %7937 = vmatprep.subr.bf16.mxu0 %v6848
      %7938 = vmatpush1.bf16.msra.mxu0 %v6847
      %7939 = vmatprep.subr.bf16.mxu0 %v6844
      %7940 = vmatpush1.bf16.msra.mxu0 %v6843
      %7941 = vmatprep.subr.bf16.mxu0 %v6840
      %7942 = vmatpush1.bf16.msra.mxu0 %v6839
      %7943 = vmatprep.subr.bf16.mxu0 %v6836
      %7944 = vmatpush1.bf16.msra.mxu0 %v6835
      %7945 = vmatprep.subr.bf16.mxu0 %v6832
      %7946 = vmatpush1.bf16.msra.mxu0 %v6831
      %7947 = vmatprep.subr.bf16.mxu0 %v6828
      %7948 = vmatpush1.bf16.msra.mxu0 %v6827
      %7949 = vmatprep.subr.bf16.mxu0 %v6888
      %7950 = vmatpush2.bf16.msra.mxu0 %v6887
      %7951 = vmatprep.subr.bf16.mxu0 %v6884
      %7952 = vmatpush2.bf16.msra.mxu0 %v6883
      %7953 = vmatprep.subr.bf16.mxu0 %v6880
      %7954 = vmatpush2.bf16.msra.mxu0 %v6879
      %7955 = vmatprep.subr.bf16.mxu0 %v6876
      %7956 = vmatpush2.bf16.msra.mxu0 %v6875
      %7957 = vmatprep.subr.bf16.mxu0 %v6872
      %7958 = vmatpush2.bf16.msra.mxu0 %v6871
      %7959 = vmatprep.subr.bf16.mxu0 %v6868
      %7960 = vmatpush2.bf16.msra.mxu0 %v6867
      %7961 = vmatprep.subr.bf16.mxu0 %v6864
      %7962 = vmatpush2.bf16.msra.mxu0 %v6863
      %7963 = vmatprep.subr.bf16.mxu0 %v6860
      %7964 = vmatpush2.bf16.msra.mxu0 %v6859
      %7965 = vmatprep.mubr.bf16.mxu0 %v4940
      %7966 = vmatmul.mubr.bf16.gmra.mxu0 %v4939
      %v7967 = vpop.f32.mrf.mxu0
      %v7968 = vadd.f32 %v7927, %v7967
      %v7969 = vpop.f32.mrf.mxu0
      %v7970 = vadd.f32 %v7929, %v7969
      %v7971 = vpop.f32.mrf.mxu0
      %v7972 = vpop.f32.mrf.mxu0
      %7973 = vdwg.mxu0
      %7974 = vmatprep.subr.bf16.mxu0 %v6920
      %7975 = vmatpush1.bf16.msra.mxu0 %v6919
      %7976 = vmatprep.subr.bf16.mxu0 %v6916
      %7977 = vmatpush1.bf16.msra.mxu0 %v6915
      %7978 = vmatprep.subr.bf16.mxu0 %v6912
      %7979 = vmatpush1.bf16.msra.mxu0 %v6911
      %7980 = vmatprep.subr.bf16.mxu0 %v6908
      %7981 = vmatpush1.bf16.msra.mxu0 %v6907
      %7982 = vmatprep.subr.bf16.mxu0 %v6904
      %7983 = vmatpush1.bf16.msra.mxu0 %v6903
      %7984 = vmatprep.subr.bf16.mxu0 %v6900
      %7985 = vmatpush1.bf16.msra.mxu0 %v6899
      %7986 = vmatprep.subr.bf16.mxu0 %v6896
      %7987 = vmatpush1.bf16.msra.mxu0 %v6895
      %7988 = vmatprep.subr.bf16.mxu0 %v6892
      %7989 = vmatpush1.bf16.msra.mxu0 %v6891
      %7990 = vmatprep.subr.bf16.mxu0 %v6952
      %7991 = vmatpush2.bf16.msra.mxu0 %v6951
      %7992 = vmatprep.subr.bf16.mxu0 %v6948
      %7993 = vmatpush2.bf16.msra.mxu0 %v6947
      %7994 = vmatprep.subr.bf16.mxu0 %v6944
      %7995 = vmatpush2.bf16.msra.mxu0 %v6943
      %7996 = vmatprep.subr.bf16.mxu0 %v6940
      %7997 = vmatpush2.bf16.msra.mxu0 %v6939
      %7998 = vmatprep.subr.bf16.mxu0 %v6936
      %7999 = vmatpush2.bf16.msra.mxu0 %v6935
      %8000 = vmatprep.subr.bf16.mxu0 %v6932
      %8001 = vmatpush2.bf16.msra.mxu0 %v6931
      %8002 = vmatprep.subr.bf16.mxu0 %v6928
      %8003 = vmatpush2.bf16.msra.mxu0 %v6927
      %8004 = vmatprep.subr.bf16.mxu0 %v6924
      %8005 = vmatpush2.bf16.msra.mxu0 %v6923
      %8006 = vmatprep.mubr.bf16.mxu0 %v4942
      %8007 = vmatmul.mubr.bf16.gmra.mxu0 %v4941
      %v8008 = vpop.f32.mrf.mxu0
      %v8009 = vadd.f32 %v7968, %v8008
      %v8010 = vpop.f32.mrf.mxu0
      %v8011 = vadd.f32 %v7970, %v8010
      %v8012 = vpop.f32.mrf.mxu0
      %v8013 = vpop.f32.mrf.mxu0
      %8014 = vdwg.mxu0
      %8015 = vmatprep.subr.bf16.mxu0 %v6984
      %8016 = vmatpush1.bf16.msra.mxu0 %v6983
      %8017 = vmatprep.subr.bf16.mxu0 %v6980
      %8018 = vmatpush1.bf16.msra.mxu0 %v6979
      %8019 = vmatprep.subr.bf16.mxu0 %v6976
      %8020 = vmatpush1.bf16.msra.mxu0 %v6975
      %8021 = vmatprep.subr.bf16.mxu0 %v6972
      %8022 = vmatpush1.bf16.msra.mxu0 %v6971
      %8023 = vmatprep.subr.bf16.mxu0 %v6968
      %8024 = vmatpush1.bf16.msra.mxu0 %v6967
      %8025 = vmatprep.subr.bf16.mxu0 %v6964
      %8026 = vmatpush1.bf16.msra.mxu0 %v6963
      %8027 = vmatprep.subr.bf16.mxu0 %v6960
      %8028 = vmatpush1.bf16.msra.mxu0 %v6959
      %8029 = vmatprep.subr.bf16.mxu0 %v6956
      %8030 = vmatpush1.bf16.msra.mxu0 %v6955
      %8031 = vmatprep.subr.bf16.mxu0 %v7016
      %8032 = vmatpush2.bf16.msra.mxu0 %v7015
      %8033 = vmatprep.subr.bf16.mxu0 %v7012
      %8034 = vmatpush2.bf16.msra.mxu0 %v7011
      %8035 = vmatprep.subr.bf16.mxu0 %v7008
      %8036 = vmatpush2.bf16.msra.mxu0 %v7007
      %8037 = vmatprep.subr.bf16.mxu0 %v7004
      %8038 = vmatpush2.bf16.msra.mxu0 %v7003
      %8039 = vmatprep.subr.bf16.mxu0 %v7000
      %8040 = vmatpush2.bf16.msra.mxu0 %v6999
      %8041 = vmatprep.subr.bf16.mxu0 %v6996
      %8042 = vmatpush2.bf16.msra.mxu0 %v6995
      %8043 = vmatprep.subr.bf16.mxu0 %v6992
      %8044 = vmatpush2.bf16.msra.mxu0 %v6991
      %8045 = vmatprep.subr.bf16.mxu0 %v6988
      %8046 = vmatpush2.bf16.msra.mxu0 %v6987
      %8047 = vmatprep.mubr.bf16.mxu0 %v4944
      %8048 = vmatmul.mubr.bf16.gmra.mxu0 %v4943
      %v8049 = vpop.f32.mrf.mxu0
      %v8050 = vadd.f32 %v8009, %v8049
      %v8051 = vpop.f32.mrf.mxu0
      %v8052 = vadd.f32 %v8011, %v8051
      %v8053 = vpop.f32.mrf.mxu0
      %v8054 = vpop.f32.mrf.mxu0
      %8055 = vdwg.mxu0
      %8056 = vmatprep.subr.bf16.mxu0 %v7048
      %8057 = vmatpush1.bf16.msra.mxu0 %v7047
      %8058 = vmatprep.subr.bf16.mxu0 %v7044
      %8059 = vmatpush1.bf16.msra.mxu0 %v7043
      %8060 = vmatprep.subr.bf16.mxu0 %v7040
      %8061 = vmatpush1.bf16.msra.mxu0 %v7039
      %8062 = vmatprep.subr.bf16.mxu0 %v7036
      %8063 = vmatpush1.bf16.msra.mxu0 %v7035
      %8064 = vmatprep.subr.bf16.mxu0 %v7032
      %8065 = vmatpush1.bf16.msra.mxu0 %v7031
      %8066 = vmatprep.subr.bf16.mxu0 %v7028
      %8067 = vmatpush1.bf16.msra.mxu0 %v7027
      %8068 = vmatprep.subr.bf16.mxu0 %v7024
      %8069 = vmatpush1.bf16.msra.mxu0 %v7023
      %8070 = vmatprep.subr.bf16.mxu0 %v7020
      %8071 = vmatpush1.bf16.msra.mxu0 %v7019
      %8072 = vmatprep.subr.bf16.mxu0 %v7080
      %8073 = vmatpush2.bf16.msra.mxu0 %v7079
      %8074 = vmatprep.subr.bf16.mxu0 %v7076
      %8075 = vmatpush2.bf16.msra.mxu0 %v7075
      %8076 = vmatprep.subr.bf16.mxu0 %v7072
      %8077 = vmatpush2.bf16.msra.mxu0 %v7071
      %8078 = vmatprep.subr.bf16.mxu0 %v7068
      %8079 = vmatpush2.bf16.msra.mxu0 %v7067
      %8080 = vmatprep.subr.bf16.mxu0 %v7064
      %8081 = vmatpush2.bf16.msra.mxu0 %v7063
      %8082 = vmatprep.subr.bf16.mxu0 %v7060
      %8083 = vmatpush2.bf16.msra.mxu0 %v7059
      %8084 = vmatprep.subr.bf16.mxu0 %v7056
      %8085 = vmatpush2.bf16.msra.mxu0 %v7055
      %8086 = vmatprep.subr.bf16.mxu0 %v7052
      %8087 = vmatpush2.bf16.msra.mxu0 %v7051
      %8088 = vmatprep.mubr.bf16.mxu0 %v4946
      %8089 = vmatmul.mubr.bf16.gmra.mxu0 %v4945
      %v8090 = vpop.f32.mrf.mxu0
      %v8091 = vadd.f32 %v8050, %v8090
      %v8092 = vpop.f32.mrf.mxu0
      %v8093 = vadd.f32 %v8052, %v8092
      %v8094 = vpop.f32.mrf.mxu0
      %v8095 = vpop.f32.mrf.mxu0
      %8096 = vdwg.mxu0
      %8097 = vmatprep.subr.bf16.mxu0 %v7112
      %8098 = vmatpush1.bf16.msra.mxu0 %v7111
      %8099 = vmatprep.subr.bf16.mxu0 %v7108
      %8100 = vmatpush1.bf16.msra.mxu0 %v7107
      %8101 = vmatprep.subr.bf16.mxu0 %v7104
      %8102 = vmatpush1.bf16.msra.mxu0 %v7103
      %8103 = vmatprep.subr.bf16.mxu0 %v7100
      %8104 = vmatpush1.bf16.msra.mxu0 %v7099
      %8105 = vmatprep.subr.bf16.mxu0 %v7096
      %8106 = vmatpush1.bf16.msra.mxu0 %v7095
      %8107 = vmatprep.subr.bf16.mxu0 %v7092
      %8108 = vmatpush1.bf16.msra.mxu0 %v7091
      %8109 = vmatprep.subr.bf16.mxu0 %v7088
      %8110 = vmatpush1.bf16.msra.mxu0 %v7087
      %8111 = vmatprep.subr.bf16.mxu0 %v7084
      %8112 = vmatpush1.bf16.msra.mxu0 %v7083
      %8113 = vmatprep.subr.bf16.mxu0 %v7144
      %8114 = vmatpush2.bf16.msra.mxu0 %v7143
      %8115 = vmatprep.subr.bf16.mxu0 %v7140
      %8116 = vmatpush2.bf16.msra.mxu0 %v7139
      %8117 = vmatprep.subr.bf16.mxu0 %v7136
      %8118 = vmatpush2.bf16.msra.mxu0 %v7135
      %8119 = vmatprep.subr.bf16.mxu0 %v7132
      %8120 = vmatpush2.bf16.msra.mxu0 %v7131
      %8121 = vmatprep.subr.bf16.mxu0 %v7128
      %8122 = vmatpush2.bf16.msra.mxu0 %v7127
      %8123 = vmatprep.subr.bf16.mxu0 %v7124
      %8124 = vmatpush2.bf16.msra.mxu0 %v7123
      %8125 = vmatprep.subr.bf16.mxu0 %v7120
      %8126 = vmatpush2.bf16.msra.mxu0 %v7119
      %8127 = vmatprep.subr.bf16.mxu0 %v7116
      %8128 = vmatpush2.bf16.msra.mxu0 %v7115
      %8129 = vmatprep.mubr.bf16.mxu0 %v4948
      %8130 = vmatmul.mubr.bf16.gmra.mxu0 %v4947
      %v8131 = vpop.f32.mrf.mxu0
      %v8132 = vadd.f32 %v8091, %v8131
      %v8133 = vpop.f32.mrf.mxu0
      %v8134 = vadd.f32 %v8093, %v8133
      %v8135 = vpop.f32.mrf.mxu0
      %v8136 = vpop.f32.mrf.mxu0
      %8137 = vdwg.mxu0
      %8138 = vmatprep.subr.bf16.mxu0 %v7176
      %8139 = vmatpush1.bf16.msra.mxu0 %v7175
      %8140 = vmatprep.subr.bf16.mxu0 %v7172
      %8141 = vmatpush1.bf16.msra.mxu0 %v7171
      %8142 = vmatprep.subr.bf16.mxu0 %v7168
      %8143 = vmatpush1.bf16.msra.mxu0 %v7167
      %8144 = vmatprep.subr.bf16.mxu0 %v7164
      %8145 = vmatpush1.bf16.msra.mxu0 %v7163
      %8146 = vmatprep.subr.bf16.mxu0 %v7160
      %8147 = vmatpush1.bf16.msra.mxu0 %v7159
      %8148 = vmatprep.subr.bf16.mxu0 %v7156
      %8149 = vmatpush1.bf16.msra.mxu0 %v7155
      %8150 = vmatprep.subr.bf16.mxu0 %v7152
      %8151 = vmatpush1.bf16.msra.mxu0 %v7151
      %8152 = vmatprep.subr.bf16.mxu0 %v7148
      %8153 = vmatpush1.bf16.msra.mxu0 %v7147
      %8154 = vmatprep.subr.bf16.mxu0 %v7208
      %8155 = vmatpush2.bf16.msra.mxu0 %v7207
      %8156 = vmatprep.subr.bf16.mxu0 %v7204
      %8157 = vmatpush2.bf16.msra.mxu0 %v7203
      %8158 = vmatprep.subr.bf16.mxu0 %v7200
      %8159 = vmatpush2.bf16.msra.mxu0 %v7199
      %8160 = vmatprep.subr.bf16.mxu0 %v7196
      %8161 = vmatpush2.bf16.msra.mxu0 %v7195
      %8162 = vmatprep.subr.bf16.mxu0 %v7192
      %8163 = vmatpush2.bf16.msra.mxu0 %v7191
      %8164 = vmatprep.subr.bf16.mxu0 %v7188
      %8165 = vmatpush2.bf16.msra.mxu0 %v7187
      %8166 = vmatprep.subr.bf16.mxu0 %v7184
      %8167 = vmatpush2.bf16.msra.mxu0 %v7183
      %8168 = vmatprep.subr.bf16.mxu0 %v7180
      %8169 = vmatpush2.bf16.msra.mxu0 %v7179
      %8170 = vmatprep.mubr.bf16.mxu0 %v4950
      %8171 = vmatmul.mubr.bf16.gmra.mxu0 %v4949
      %v8172 = vpop.f32.mrf.mxu0
      %v8173 = vadd.f32 %v8132, %v8172
      %v8174 = vpop.f32.mrf.mxu0
      %v8175 = vadd.f32 %v8134, %v8174
      %v8176 = vpop.f32.mrf.mxu0
      %v8177 = vpop.f32.mrf.mxu0
      %8178 = vdwg.mxu0
      %8179 = vmatprep.subr.bf16.mxu0 %v7240
      %8180 = vmatpush1.bf16.msra.mxu0 %v7239
      %8181 = vmatprep.subr.bf16.mxu0 %v7236
      %8182 = vmatpush1.bf16.msra.mxu0 %v7235
      %8183 = vmatprep.subr.bf16.mxu0 %v7232
      %8184 = vmatpush1.bf16.msra.mxu0 %v7231
      %8185 = vmatprep.subr.bf16.mxu0 %v7228
      %8186 = vmatpush1.bf16.msra.mxu0 %v7227
      %8187 = vmatprep.subr.bf16.mxu0 %v7224
      %8188 = vmatpush1.bf16.msra.mxu0 %v7223
      %8189 = vmatprep.subr.bf16.mxu0 %v7220
      %8190 = vmatpush1.bf16.msra.mxu0 %v7219
      %8191 = vmatprep.subr.bf16.mxu0 %v7216
      %8192 = vmatpush1.bf16.msra.mxu0 %v7215
      %8193 = vmatprep.subr.bf16.mxu0 %v7212
      %8194 = vmatpush1.bf16.msra.mxu0 %v7211
      %8195 = vmatprep.subr.bf16.mxu0 %v7272
      %8196 = vmatpush2.bf16.msra.mxu0 %v7271
      %8197 = vmatprep.subr.bf16.mxu0 %v7268
      %8198 = vmatpush2.bf16.msra.mxu0 %v7267
      %8199 = vmatprep.subr.bf16.mxu0 %v7264
      %8200 = vmatpush2.bf16.msra.mxu0 %v7263
      %8201 = vmatprep.subr.bf16.mxu0 %v7260
      %8202 = vmatpush2.bf16.msra.mxu0 %v7259
      %8203 = vmatprep.subr.bf16.mxu0 %v7256
      %8204 = vmatpush2.bf16.msra.mxu0 %v7255
      %8205 = vmatprep.subr.bf16.mxu0 %v7252
      %8206 = vmatpush2.bf16.msra.mxu0 %v7251
      %8207 = vmatprep.subr.bf16.mxu0 %v7248
      %8208 = vmatpush2.bf16.msra.mxu0 %v7247
      %8209 = vmatprep.subr.bf16.mxu0 %v7244
      %8210 = vmatpush2.bf16.msra.mxu0 %v7243
      %8211 = vmatprep.mubr.bf16.mxu0 %v4952
      %8212 = vmatmul.mubr.bf16.gmra.mxu0 %v4951
      %v8213 = vpop.f32.mrf.mxu0
      %v8214 = vadd.f32 %v8173, %v8213
      %v8215 = vpop.f32.mrf.mxu0
      %v8216 = vadd.f32 %v8175, %v8215
      %v8217 = vpop.f32.mrf.mxu0
      %v8218 = vpop.f32.mrf.mxu0
      %8219 = vdwg.mxu0
      %8220 = vmatprep.subr.bf16.mxu0 %v6730
      %8221 = vmatpush1.bf16.msra.mxu0 %v6729
      %8222 = vmatprep.subr.bf16.mxu0 %v6726
      %8223 = vmatpush1.bf16.msra.mxu0 %v6725
      %8224 = vmatprep.subr.bf16.mxu0 %v6722
      %8225 = vmatpush1.bf16.msra.mxu0 %v6721
      %8226 = vmatprep.subr.bf16.mxu0 %v6718
      %8227 = vmatpush1.bf16.msra.mxu0 %v6717
      %8228 = vmatprep.subr.bf16.mxu0 %v6714
      %8229 = vmatpush1.bf16.msra.mxu0 %v6713
      %8230 = vmatprep.subr.bf16.mxu0 %v6710
      %8231 = vmatpush1.bf16.msra.mxu0 %v6709
      %8232 = vmatprep.subr.bf16.mxu0 %v6706
      %8233 = vmatpush1.bf16.msra.mxu0 %v6705
      %8234 = vmatprep.subr.bf16.mxu0 %v6702
      %8235 = vmatpush1.bf16.msra.mxu0 %v6701
      %8236 = vmatprep.subr.bf16.mxu0 %v6762
      %8237 = vmatpush2.bf16.msra.mxu0 %v6761
      %8238 = vmatprep.subr.bf16.mxu0 %v6758
      %8239 = vmatpush2.bf16.msra.mxu0 %v6757
      %8240 = vmatprep.subr.bf16.mxu0 %v6754
      %8241 = vmatpush2.bf16.msra.mxu0 %v6753
      %8242 = vmatprep.subr.bf16.mxu0 %v6750
      %8243 = vmatpush2.bf16.msra.mxu0 %v6749
      %8244 = vmatprep.subr.bf16.mxu0 %v6746
      %8245 = vmatpush2.bf16.msra.mxu0 %v6745
      %8246 = vmatprep.subr.bf16.mxu0 %v6742
      %8247 = vmatpush2.bf16.msra.mxu0 %v6741
      %8248 = vmatprep.subr.bf16.mxu0 %v6738
      %8249 = vmatpush2.bf16.msra.mxu0 %v6737
      %8250 = vmatprep.subr.bf16.mxu0 %v6734
      %8251 = vmatpush2.bf16.msra.mxu0 %v6733
      %8252 = vmatprep.mubr.bf16.mxu0 %v4936
      %8253 = vmatmul.mubr.bf16.gmra.mxu0 %v4935
      %v8254 = vpop.f32.mrf.mxu0
      %v8255 = vadd.f32 0.0, %v8254
      %v8256 = vpop.f32.mrf.mxu0
      %v8257 = vadd.f32 0.0, %v8256
      %v8258 = vpop.f32.mrf.mxu0
      %v8259 = vpop.f32.mrf.mxu0
      %8260 = vdwg.mxu0
      %8261 = vmatprep.subr.bf16.mxu0 %v6794
      %8262 = vmatpush1.bf16.msra.mxu0 %v6793
      %8263 = vmatprep.subr.bf16.mxu0 %v6790
      %8264 = vmatpush1.bf16.msra.mxu0 %v6789
      %8265 = vmatprep.subr.bf16.mxu0 %v6786
      %8266 = vmatpush1.bf16.msra.mxu0 %v6785
      %8267 = vmatprep.subr.bf16.mxu0 %v6782
      %8268 = vmatpush1.bf16.msra.mxu0 %v6781
      %8269 = vmatprep.subr.bf16.mxu0 %v6778
      %8270 = vmatpush1.bf16.msra.mxu0 %v6777
      %8271 = vmatprep.subr.bf16.mxu0 %v6774
      %8272 = vmatpush1.bf16.msra.mxu0 %v6773
      %8273 = vmatprep.subr.bf16.mxu0 %v6770
      %8274 = vmatpush1.bf16.msra.mxu0 %v6769
      %8275 = vmatprep.subr.bf16.mxu0 %v6766
      %8276 = vmatpush1.bf16.msra.mxu0 %v6765
      %8277 = vmatprep.subr.bf16.mxu0 %v6826
      %8278 = vmatpush2.bf16.msra.mxu0 %v6825
      %8279 = vmatprep.subr.bf16.mxu0 %v6822
      %8280 = vmatpush2.bf16.msra.mxu0 %v6821
      %8281 = vmatprep.subr.bf16.mxu0 %v6818
      %8282 = vmatpush2.bf16.msra.mxu0 %v6817
      %8283 = vmatprep.subr.bf16.mxu0 %v6814
      %8284 = vmatpush2.bf16.msra.mxu0 %v6813
      %8285 = vmatprep.subr.bf16.mxu0 %v6810
      %8286 = vmatpush2.bf16.msra.mxu0 %v6809
      %8287 = vmatprep.subr.bf16.mxu0 %v6806
      %8288 = vmatpush2.bf16.msra.mxu0 %v6805
      %8289 = vmatprep.subr.bf16.mxu0 %v6802
      %8290 = vmatpush2.bf16.msra.mxu0 %v6801
      %8291 = vmatprep.subr.bf16.mxu0 %v6798
      %8292 = vmatpush2.bf16.msra.mxu0 %v6797
      %8293 = vmatprep.mubr.bf16.mxu0 %v4938
      %8294 = vmatmul.mubr.bf16.gmra.mxu0 %v4937
      %v8295 = vpop.f32.mrf.mxu0
      %v8296 = vadd.f32 %v8255, %v8295
      %v8297 = vpop.f32.mrf.mxu0
      %v8298 = vadd.f32 %v8257, %v8297
      %v8299 = vpop.f32.mrf.mxu0
      %v8300 = vpop.f32.mrf.mxu0
      %8301 = vdwg.mxu0
      %8302 = vmatprep.subr.bf16.mxu0 %v6858
      %8303 = vmatpush1.bf16.msra.mxu0 %v6857
      %8304 = vmatprep.subr.bf16.mxu0 %v6854
      %8305 = vmatpush1.bf16.msra.mxu0 %v6853
      %8306 = vmatprep.subr.bf16.mxu0 %v6850
      %8307 = vmatpush1.bf16.msra.mxu0 %v6849
      %8308 = vmatprep.subr.bf16.mxu0 %v6846
      %8309 = vmatpush1.bf16.msra.mxu0 %v6845
      %8310 = vmatprep.subr.bf16.mxu0 %v6842
      %8311 = vmatpush1.bf16.msra.mxu0 %v6841
      %8312 = vmatprep.subr.bf16.mxu0 %v6838
      %8313 = vmatpush1.bf16.msra.mxu0 %v6837
      %8314 = vmatprep.subr.bf16.mxu0 %v6834
      %8315 = vmatpush1.bf16.msra.mxu0 %v6833
      %8316 = vmatprep.subr.bf16.mxu0 %v6830
      %8317 = vmatpush1.bf16.msra.mxu0 %v6829
      %8318 = vmatprep.subr.bf16.mxu0 %v6890
      %8319 = vmatpush2.bf16.msra.mxu0 %v6889
      %8320 = vmatprep.subr.bf16.mxu0 %v6886
      %8321 = vmatpush2.bf16.msra.mxu0 %v6885
      %8322 = vmatprep.subr.bf16.mxu0 %v6882
      %8323 = vmatpush2.bf16.msra.mxu0 %v6881
      %8324 = vmatprep.subr.bf16.mxu0 %v6878
      %8325 = vmatpush2.bf16.msra.mxu0 %v6877
      %8326 = vmatprep.subr.bf16.mxu0 %v6874
      %8327 = vmatpush2.bf16.msra.mxu0 %v6873
      %8328 = vmatprep.subr.bf16.mxu0 %v6870
      %8329 = vmatpush2.bf16.msra.mxu0 %v6869
      %8330 = vmatprep.subr.bf16.mxu0 %v6866
      %8331 = vmatpush2.bf16.msra.mxu0 %v6865
      %8332 = vmatprep.subr.bf16.mxu0 %v6862
      %8333 = vmatpush2.bf16.msra.mxu0 %v6861
      %8334 = vmatprep.mubr.bf16.mxu0 %v4940
      %8335 = vmatmul.mubr.bf16.gmra.mxu0 %v4939
      %v8336 = vpop.f32.mrf.mxu0
      %v8337 = vadd.f32 %v8296, %v8336
      %v8338 = vpop.f32.mrf.mxu0
      %v8339 = vadd.f32 %v8298, %v8338
      %v8340 = vpop.f32.mrf.mxu0
      %v8341 = vpop.f32.mrf.mxu0
      %8342 = vdwg.mxu0
      %8343 = vmatprep.subr.bf16.mxu0 %v6922
      %8344 = vmatpush1.bf16.msra.mxu0 %v6921
      %8345 = vmatprep.subr.bf16.mxu0 %v6918
      %8346 = vmatpush1.bf16.msra.mxu0 %v6917
      %8347 = vmatprep.subr.bf16.mxu0 %v6914
      %8348 = vmatpush1.bf16.msra.mxu0 %v6913
      %8349 = vmatprep.subr.bf16.mxu0 %v6910
      %8350 = vmatpush1.bf16.msra.mxu0 %v6909
      %8351 = vmatprep.subr.bf16.mxu0 %v6906
      %8352 = vmatpush1.bf16.msra.mxu0 %v6905
      %8353 = vmatprep.subr.bf16.mxu0 %v6902
      %8354 = vmatpush1.bf16.msra.mxu0 %v6901
      %8355 = vmatprep.subr.bf16.mxu0 %v6898
      %8356 = vmatpush1.bf16.msra.mxu0 %v6897
      %8357 = vmatprep.subr.bf16.mxu0 %v6894
      %8358 = vmatpush1.bf16.msra.mxu0 %v6893
      %8359 = vmatprep.subr.bf16.mxu0 %v6954
      %8360 = vmatpush2.bf16.msra.mxu0 %v6953
      %8361 = vmatprep.subr.bf16.mxu0 %v6950
      %8362 = vmatpush2.bf16.msra.mxu0 %v6949
      %8363 = vmatprep.subr.bf16.mxu0 %v6946
      %8364 = vmatpush2.bf16.msra.mxu0 %v6945
      %8365 = vmatprep.subr.bf16.mxu0 %v6942
      %8366 = vmatpush2.bf16.msra.mxu0 %v6941
      %8367 = vmatprep.subr.bf16.mxu0 %v6938
      %8368 = vmatpush2.bf16.msra.mxu0 %v6937
      %8369 = vmatprep.subr.bf16.mxu0 %v6934
      %8370 = vmatpush2.bf16.msra.mxu0 %v6933
      %8371 = vmatprep.subr.bf16.mxu0 %v6930
      %8372 = vmatpush2.bf16.msra.mxu0 %v6929
      %8373 = vmatprep.subr.bf16.mxu0 %v6926
      %8374 = vmatpush2.bf16.msra.mxu0 %v6925
      %8375 = vmatprep.mubr.bf16.mxu0 %v4942
      %8376 = vmatmul.mubr.bf16.gmra.mxu0 %v4941
      %v8377 = vpop.f32.mrf.mxu0
      %v8378 = vadd.f32 %v8337, %v8377
      %v8379 = vpop.f32.mrf.mxu0
      %v8380 = vadd.f32 %v8339, %v8379
      %v8381 = vpop.f32.mrf.mxu0
      %v8382 = vpop.f32.mrf.mxu0
      %8383 = vdwg.mxu0
      %8384 = vmatprep.subr.bf16.mxu0 %v6986
      %8385 = vmatpush1.bf16.msra.mxu0 %v6985
      %8386 = vmatprep.subr.bf16.mxu0 %v6982
      %8387 = vmatpush1.bf16.msra.mxu0 %v6981
      %8388 = vmatprep.subr.bf16.mxu0 %v6978
      %8389 = vmatpush1.bf16.msra.mxu0 %v6977
      %8390 = vmatprep.subr.bf16.mxu0 %v6974
      %8391 = vmatpush1.bf16.msra.mxu0 %v6973
      %8392 = vmatprep.subr.bf16.mxu0 %v6970
      %8393 = vmatpush1.bf16.msra.mxu0 %v6969
      %8394 = vmatprep.subr.bf16.mxu0 %v6966
      %8395 = vmatpush1.bf16.msra.mxu0 %v6965
      %8396 = vmatprep.subr.bf16.mxu0 %v6962
      %8397 = vmatpush1.bf16.msra.mxu0 %v6961
      %8398 = vmatprep.subr.bf16.mxu0 %v6958
      %8399 = vmatpush1.bf16.msra.mxu0 %v6957
      %8400 = vmatprep.subr.bf16.mxu0 %v7018
      %8401 = vmatpush2.bf16.msra.mxu0 %v7017
      %8402 = vmatprep.subr.bf16.mxu0 %v7014
      %8403 = vmatpush2.bf16.msra.mxu0 %v7013
      %8404 = vmatprep.subr.bf16.mxu0 %v7010
      %8405 = vmatpush2.bf16.msra.mxu0 %v7009
      %8406 = vmatprep.subr.bf16.mxu0 %v7006
      %8407 = vmatpush2.bf16.msra.mxu0 %v7005
      %8408 = vmatprep.subr.bf16.mxu0 %v7002
      %8409 = vmatpush2.bf16.msra.mxu0 %v7001
      %8410 = vmatprep.subr.bf16.mxu0 %v6998
      %8411 = vmatpush2.bf16.msra.mxu0 %v6997
      %8412 = vmatprep.subr.bf16.mxu0 %v6994
      %8413 = vmatpush2.bf16.msra.mxu0 %v6993
      %8414 = vmatprep.subr.bf16.mxu0 %v6990
      %8415 = vmatpush2.bf16.msra.mxu0 %v6989
      %8416 = vmatprep.mubr.bf16.mxu0 %v4944
      %8417 = vmatmul.mubr.bf16.gmra.mxu0 %v4943
      %v8418 = vpop.f32.mrf.mxu0
      %v8419 = vadd.f32 %v8378, %v8418
      %v8420 = vpop.f32.mrf.mxu0
      %v8421 = vadd.f32 %v8380, %v8420
      %v8422 = vpop.f32.mrf.mxu0
      %v8423 = vpop.f32.mrf.mxu0
      %8424 = vdwg.mxu0
      %8425 = vmatprep.subr.bf16.mxu0 %v7050
      %8426 = vmatpush1.bf16.msra.mxu0 %v7049
      %8427 = vmatprep.subr.bf16.mxu0 %v7046
      %8428 = vmatpush1.bf16.msra.mxu0 %v7045
      %8429 = vmatprep.subr.bf16.mxu0 %v7042
      %8430 = vmatpush1.bf16.msra.mxu0 %v7041
      %8431 = vmatprep.subr.bf16.mxu0 %v7038
      %8432 = vmatpush1.bf16.msra.mxu0 %v7037
      %8433 = vmatprep.subr.bf16.mxu0 %v7034
      %8434 = vmatpush1.bf16.msra.mxu0 %v7033
      %8435 = vmatprep.subr.bf16.mxu0 %v7030
      %8436 = vmatpush1.bf16.msra.mxu0 %v7029
      %8437 = vmatprep.subr.bf16.mxu0 %v7026
      %8438 = vmatpush1.bf16.msra.mxu0 %v7025
      %8439 = vmatprep.subr.bf16.mxu0 %v7022
      %8440 = vmatpush1.bf16.msra.mxu0 %v7021
      %8441 = vmatprep.subr.bf16.mxu0 %v7082
      %8442 = vmatpush2.bf16.msra.mxu0 %v7081
      %8443 = vmatprep.subr.bf16.mxu0 %v7078
      %8444 = vmatpush2.bf16.msra.mxu0 %v7077
      %8445 = vmatprep.subr.bf16.mxu0 %v7074
      %8446 = vmatpush2.bf16.msra.mxu0 %v7073
      %8447 = vmatprep.subr.bf16.mxu0 %v7070
      %8448 = vmatpush2.bf16.msra.mxu0 %v7069
      %8449 = vmatprep.subr.bf16.mxu0 %v7066
      %8450 = vmatpush2.bf16.msra.mxu0 %v7065
      %8451 = vmatprep.subr.bf16.mxu0 %v7062
      %8452 = vmatpush2.bf16.msra.mxu0 %v7061
      %8453 = vmatprep.subr.bf16.mxu0 %v7058
      %8454 = vmatpush2.bf16.msra.mxu0 %v7057
      %8455 = vmatprep.subr.bf16.mxu0 %v7054
      %8456 = vmatpush2.bf16.msra.mxu0 %v7053
      %8457 = vmatprep.mubr.bf16.mxu0 %v4946
      %8458 = vmatmul.mubr.bf16.gmra.mxu0 %v4945
      %v8459 = vpop.f32.mrf.mxu0
      %v8460 = vadd.f32 %v8419, %v8459
      %v8461 = vpop.f32.mrf.mxu0
      %v8462 = vadd.f32 %v8421, %v8461
      %v8463 = vpop.f32.mrf.mxu0
      %v8464 = vpop.f32.mrf.mxu0
      %8465 = vdwg.mxu0
      %8466 = vmatprep.subr.bf16.mxu0 %v7114
      %8467 = vmatpush1.bf16.msra.mxu0 %v7113
      %8468 = vmatprep.subr.bf16.mxu0 %v7110
      %8469 = vmatpush1.bf16.msra.mxu0 %v7109
      %8470 = vmatprep.subr.bf16.mxu0 %v7106
      %8471 = vmatpush1.bf16.msra.mxu0 %v7105
      %8472 = vmatprep.subr.bf16.mxu0 %v7102
      %8473 = vmatpush1.bf16.msra.mxu0 %v7101
      %8474 = vmatprep.subr.bf16.mxu0 %v7098
      %8475 = vmatpush1.bf16.msra.mxu0 %v7097
      %8476 = vmatprep.subr.bf16.mxu0 %v7094
      %8477 = vmatpush1.bf16.msra.mxu0 %v7093
      %8478 = vmatprep.subr.bf16.mxu0 %v7090
      %8479 = vmatpush1.bf16.msra.mxu0 %v7089
      %8480 = vmatprep.subr.bf16.mxu0 %v7086
      %8481 = vmatpush1.bf16.msra.mxu0 %v7085
      %8482 = vmatprep.subr.bf16.mxu0 %v7146
      %8483 = vmatpush2.bf16.msra.mxu0 %v7145
      %8484 = vmatprep.subr.bf16.mxu0 %v7142
      %8485 = vmatpush2.bf16.msra.mxu0 %v7141
      %8486 = vmatprep.subr.bf16.mxu0 %v7138
      %8487 = vmatpush2.bf16.msra.mxu0 %v7137
      %8488 = vmatprep.subr.bf16.mxu0 %v7134
      %8489 = vmatpush2.bf16.msra.mxu0 %v7133
      %8490 = vmatprep.subr.bf16.mxu0 %v7130
      %8491 = vmatpush2.bf16.msra.mxu0 %v7129
      %8492 = vmatprep.subr.bf16.mxu0 %v7126
      %8493 = vmatpush2.bf16.msra.mxu0 %v7125
      %8494 = vmatprep.subr.bf16.mxu0 %v7122
      %8495 = vmatpush2.bf16.msra.mxu0 %v7121
      %8496 = vmatprep.subr.bf16.mxu0 %v7118
      %8497 = vmatpush2.bf16.msra.mxu0 %v7117
      %8498 = vmatprep.mubr.bf16.mxu0 %v4948
      %8499 = vmatmul.mubr.bf16.gmra.mxu0 %v4947
      %v8500 = vpop.f32.mrf.mxu0
      %v8501 = vadd.f32 %v8460, %v8500
      %v8502 = vpop.f32.mrf.mxu0
      %v8503 = vadd.f32 %v8462, %v8502
      %v8504 = vpop.f32.mrf.mxu0
      %v8505 = vpop.f32.mrf.mxu0
      %8506 = vdwg.mxu0
      %8507 = vmatprep.subr.bf16.mxu0 %v7178
      %8508 = vmatpush1.bf16.msra.mxu0 %v7177
      %8509 = vmatprep.subr.bf16.mxu0 %v7174
      %8510 = vmatpush1.bf16.msra.mxu0 %v7173
      %8511 = vmatprep.subr.bf16.mxu0 %v7170
      %8512 = vmatpush1.bf16.msra.mxu0 %v7169
      %8513 = vmatprep.subr.bf16.mxu0 %v7166
      %8514 = vmatpush1.bf16.msra.mxu0 %v7165
      %8515 = vmatprep.subr.bf16.mxu0 %v7162
      %8516 = vmatpush1.bf16.msra.mxu0 %v7161
      %8517 = vmatprep.subr.bf16.mxu0 %v7158
      %8518 = vmatpush1.bf16.msra.mxu0 %v7157
      %8519 = vmatprep.subr.bf16.mxu0 %v7154
      %8520 = vmatpush1.bf16.msra.mxu0 %v7153
      %8521 = vmatprep.subr.bf16.mxu0 %v7150
      %8522 = vmatpush1.bf16.msra.mxu0 %v7149
      %8523 = vmatprep.subr.bf16.mxu0 %v7210
      %8524 = vmatpush2.bf16.msra.mxu0 %v7209
      %8525 = vmatprep.subr.bf16.mxu0 %v7206
      %8526 = vmatpush2.bf16.msra.mxu0 %v7205
      %8527 = vmatprep.subr.bf16.mxu0 %v7202
      %8528 = vmatpush2.bf16.msra.mxu0 %v7201
      %8529 = vmatprep.subr.bf16.mxu0 %v7198
      %8530 = vmatpush2.bf16.msra.mxu0 %v7197
      %8531 = vmatprep.subr.bf16.mxu0 %v7194
      %8532 = vmatpush2.bf16.msra.mxu0 %v7193
      %8533 = vmatprep.subr.bf16.mxu0 %v7190
      %8534 = vmatpush2.bf16.msra.mxu0 %v7189
      %8535 = vmatprep.subr.bf16.mxu0 %v7186
      %8536 = vmatpush2.bf16.msra.mxu0 %v7185
      %8537 = vmatprep.subr.bf16.mxu0 %v7182
      %8538 = vmatpush2.bf16.msra.mxu0 %v7181
      %8539 = vmatprep.mubr.bf16.mxu0 %v4950
      %8540 = vmatmul.mubr.bf16.gmra.mxu0 %v4949
      %v8541 = vpop.f32.mrf.mxu0
      %v8542 = vadd.f32 %v8501, %v8541
      %v8543 = vpop.f32.mrf.mxu0
      %v8544 = vadd.f32 %v8503, %v8543
      %v8545 = vpop.f32.mrf.mxu0
      %v8546 = vpop.f32.mrf.mxu0
      %8547 = vdwg.mxu0
      %8548 = vmatprep.subr.bf16.mxu0 %v7242
      %8549 = vmatpush1.bf16.msra.mxu0 %v7241
      %8550 = vmatprep.subr.bf16.mxu0 %v7238
      %8551 = vmatpush1.bf16.msra.mxu0 %v7237
      %8552 = vmatprep.subr.bf16.mxu0 %v7234
      %8553 = vmatpush1.bf16.msra.mxu0 %v7233
      %8554 = vmatprep.subr.bf16.mxu0 %v7230
      %8555 = vmatpush1.bf16.msra.mxu0 %v7229
      %8556 = vmatprep.subr.bf16.mxu0 %v7226
      %8557 = vmatpush1.bf16.msra.mxu0 %v7225
      %8558 = vmatprep.subr.bf16.mxu0 %v7222
      %8559 = vmatpush1.bf16.msra.mxu0 %v7221
      %8560 = vmatprep.subr.bf16.mxu0 %v7218
      %8561 = vmatpush1.bf16.msra.mxu0 %v7217
      %8562 = vmatprep.subr.bf16.mxu0 %v7214
      %8563 = vmatpush1.bf16.msra.mxu0 %v7213
      %8564 = vmatprep.subr.bf16.mxu0 %v7274
      %8565 = vmatpush2.bf16.msra.mxu0 %v7273
      %8566 = vmatprep.subr.bf16.mxu0 %v7270
      %8567 = vmatpush2.bf16.msra.mxu0 %v7269
      %8568 = vmatprep.subr.bf16.mxu0 %v7266
      %8569 = vmatpush2.bf16.msra.mxu0 %v7265
      %8570 = vmatprep.subr.bf16.mxu0 %v7262
      %8571 = vmatpush2.bf16.msra.mxu0 %v7261
      %8572 = vmatprep.subr.bf16.mxu0 %v7258
      %8573 = vmatpush2.bf16.msra.mxu0 %v7257
      %8574 = vmatprep.subr.bf16.mxu0 %v7254
      %8575 = vmatpush2.bf16.msra.mxu0 %v7253
      %8576 = vmatprep.subr.bf16.mxu0 %v7250
      %8577 = vmatpush2.bf16.msra.mxu0 %v7249
      %8578 = vmatprep.subr.bf16.mxu0 %v7246
      %8579 = vmatpush2.bf16.msra.mxu0 %v7245
      %8580 = vmatprep.mubr.bf16.mxu0 %v4952
      %8581 = vmatmul.mubr.bf16.gmra.mxu0 %v4951
      %v8582 = vpop.f32.mrf.mxu0
      %v8583 = vadd.f32 %v8542, %v8582
      %v8584 = vpop.f32.mrf.mxu0
      %v8585 = vadd.f32 %v8544, %v8584
      %v8586 = vpop.f32.mrf.mxu0
      %v8587 = vpop.f32.mrf.mxu0
      %8588 = vdwg.mxu0
      %v8589 = vld [vmem:[%s11] sm:$0xf]
      %v8591 = vlaneseq
      %v8592 = vshrl.u32 %v8591, 7
      %v8593 = vsub.s32 0, %v8592
      %v8594 = vrot.slane %v8589, %v8593
      %v8595 = vlaneseq
      %v8596 = vshrl.u32 %v8595, 7
      %v8597 = vsub.s32 1, %v8596
      %v8598 = vrot.slane %v8589, %v8597
      %v8599 = vlaneseq
      %v8600 = vshrl.u32 %v8599, 7
      %v8601 = vsub.s32 2, %v8600
      %v8602 = vrot.slane %v8589, %v8601
      %v8603 = vlaneseq
      %v8604 = vshrl.u32 %v8603, 7
      %v8605 = vsub.s32 3, %v8604
      %v8606 = vrot.slane %v8589, %v8605
      %v8611 = vmul.f32 %v8214, %v8594
      %v8612 = vmul.f32 %v8216, %v8598
      %v8613 = vmul.f32 %v8583, %v8602
      %v8614 = vmul.f32 %v8585, %v8606
      %v8615 = vld [vmem:[%s12] sm:$0xf]
      %v8617 = vlaneseq
      %v8618 = vshrl.u32 %v8617, 7
      %v8619 = vsub.s32 0, %v8618
      %v8620 = vrot.slane %v8615, %v8619
      %v8621 = vlaneseq
      %v8622 = vshrl.u32 %v8621, 7
      %v8623 = vsub.s32 1, %v8622
      %v8624 = vrot.slane %v8615, %v8623
      %v8625 = vlaneseq
      %v8626 = vshrl.u32 %v8625, 7
      %v8627 = vsub.s32 2, %v8626
      %v8628 = vrot.slane %v8615, %v8627
      %v8629 = vlaneseq
      %v8630 = vshrl.u32 %v8629, 7
      %v8631 = vsub.s32 3, %v8630
      %v8632 = vrot.slane %v8615, %v8631
      %v8637 = vadd.f32 %v8611, %v8620
      %v8638 = vadd.f32 %v8612, %v8624
      %v8639 = vadd.f32 %v8613, %v8628
      %v8640 = vadd.f32 %v8614, %v8632
      %v8641 = vmul.f32 %v8637, 0.5
      %v8642 = vmul.f32 %v8638, 0.5
      %v8643 = vmul.f32 %v8639, 0.5
      %v8644 = vmul.f32 %v8640, 0.5
      %v8645 = vmul.f32 %v8637, %v639
      %v8646 = vmul.f32 %v8638, %v639
      %v8647 = vmul.f32 %v8639, %v639
      %v8648 = vmul.f32 %v8640, %v639
      %v8649 = verf.f32.pop %v8645
      %v8650 = verf.f32.pop %v8646
      %v8651 = verf.f32.pop %v8647
      %v8652 = verf.f32.pop %v8648
      %v8653 = vadd.f32 %v8649, 1.0
      %v8654 = vadd.f32 %v8650, 1.0
      %v8655 = vadd.f32 %v8651, 1.0
      %v8656 = vadd.f32 %v8652, 1.0
      %v8657 = vmul.f32 %v8641, %v8653
      %v8658 = vmul.f32 %v8642, %v8654
      %v8659 = vmul.f32 %v8643, %v8655
      %v8660 = vmul.f32 %v8644, %v8656
      %8661 = vst [vmem:[#allocation11] sm:$0xff] -1e+30
      %8662 = vst [vmem:[#allocation11 + $0x8] sm:$0xff] -1e+30
      %8663 = vst [vmem:[#allocation11 + $0x10] sm:$0xff] -1e+30
      %8664 = vst [vmem:[#allocation11 + $0x18] sm:$0xff] -1e+30
      %8665 = vst [vmem:[#allocation11 + $0x20] sm:$0xff] -1e+30
      %8666 = vst [vmem:[#allocation11 + $0x28] sm:$0xff] -1e+30
      %8667 = vst [vmem:[#allocation11 + $0x30] sm:$0xff] -1e+30
      %8668 = vst [vmem:[#allocation11 + $0x38] sm:$0xff] -1e+30
      %v8673 = vrot.slane %v8657, 4
      %v8674 = vrot.slane %v8658, 4
      %v8675 = vrot.slane %v8659, 4
      %v8676 = vrot.slane %v8660, 4
      %8681 = vst [vmem:[#allocation11] sm:$0xf0] %v8673
      %8682 = vst [vmem:[#allocation11 + $0x8] sm:$0xf0] %v8674
      %8683 = vst [vmem:[#allocation11 + $0x10] sm:$0xf0] %v8675
      %8684 = vst [vmem:[#allocation11 + $0x18] sm:$0xf0] %v8676
      %8685 = vst [vmem:[#allocation11 + $0x20] sm:$0xf] %v8673
      %8686 = vst [vmem:[#allocation11 + $0x28] sm:$0xf] %v8674
      %8687 = vst [vmem:[#allocation11 + $0x30] sm:$0xf] %v8675
      %8688 = vst [vmem:[#allocation11 + $0x38] sm:$0xf] %v8676
      %v8689 = vld [vmem:[#allocation11] sm:$0xff]
      %v8690 = vld [vmem:[#allocation11 + $0x8] sm:$0xff]
      %v8691 = vld [vmem:[#allocation11 + $0x10] sm:$0xff]
      %v8692 = vld [vmem:[#allocation11 + $0x18] sm:$0xff]
      %v8693 = vmax.f32 %v8689, -1e+30
      %v8694 = vmax.f32 %v8690, -1e+30
      %v8695 = vmax.f32 %v8691, -1e+30
      %v8696 = vmax.f32 %v8692, -1e+30
      %v8697 = vld [vmem:[#allocation11] sm:$0xfe]
      %v8698 = vld [vmem:[#allocation11 + $0x8] sm:$0xfe]
      %v8699 = vld [vmem:[#allocation11 + $0x10] sm:$0xfe]
      %v8700 = vld [vmem:[#allocation11 + $0x18] sm:$0xfe]
      %v8701 = vld [vmem:[#allocation11 + $0x20] sm:$0x1]
      %v8702 = vld [vmem:[#allocation11 + $0x28] sm:$0x1]
      %v8703 = vld [vmem:[#allocation11 + $0x30] sm:$0x1]
      %v8704 = vld [vmem:[#allocation11 + $0x38] sm:$0x1]
      %v8713 = vrot.slane %v8697, 1
      %v8714 = vrot.slane %v8701, 1
      %v8715 = vsel %vm3935, %v8713, %v8714
      %v8716 = vrot.slane %v8698, 1
      %v8717 = vrot.slane %v8702, 1
      %v8718 = vsel %vm3935, %v8716, %v8717
      %v8719 = vrot.slane %v8699, 1
      %v8720 = vrot.slane %v8703, 1
      %v8721 = vsel %vm3935, %v8719, %v8720
      %v8722 = vrot.slane %v8700, 1
      %v8723 = vrot.slane %v8704, 1
      %v8724 = vsel %vm3935, %v8722, %v8723
      %v8729 = vmax.f32 %v8693, %v8715
      %v8730 = vmax.f32 %v8694, %v8718
      %v8731 = vmax.f32 %v8695, %v8721
      %v8732 = vmax.f32 %v8696, %v8724
      %v8733 = vld [vmem:[#allocation11] sm:$0xfc]
      %v8734 = vld [vmem:[#allocation11 + $0x8] sm:$0xfc]
      %v8735 = vld [vmem:[#allocation11 + $0x10] sm:$0xfc]
      %v8736 = vld [vmem:[#allocation11 + $0x18] sm:$0xfc]
      %v8737 = vld [vmem:[#allocation11 + $0x20] sm:$0x3]
      %v8738 = vld [vmem:[#allocation11 + $0x28] sm:$0x3]
      %v8739 = vld [vmem:[#allocation11 + $0x30] sm:$0x3]
      %v8740 = vld [vmem:[#allocation11 + $0x38] sm:$0x3]
      %v8749 = vrot.slane %v8733, 2
      %v8750 = vrot.slane %v8737, 2
      %v8751 = vsel %vm3962, %v8749, %v8750
      %v8752 = vrot.slane %v8734, 2
      %v8753 = vrot.slane %v8738, 2
      %v8754 = vsel %vm3962, %v8752, %v8753
      %v8755 = vrot.slane %v8735, 2
      %v8756 = vrot.slane %v8739, 2
      %v8757 = vsel %vm3962, %v8755, %v8756
      %v8758 = vrot.slane %v8736, 2
      %v8759 = vrot.slane %v8740, 2
      %v8760 = vsel %vm3962, %v8758, %v8759
      %v8765 = vmax.f32 %v8729, %v8751
      %v8766 = vmax.f32 %v8730, %v8754
      %v8767 = vmax.f32 %v8731, %v8757
      %v8768 = vmax.f32 %v8732, %v8760
      %v8769 = vld [vmem:[#allocation11] sm:$0xf8]
      %v8770 = vld [vmem:[#allocation11 + $0x8] sm:$0xf8]
      %v8771 = vld [vmem:[#allocation11 + $0x10] sm:$0xf8]
      %v8772 = vld [vmem:[#allocation11 + $0x18] sm:$0xf8]
      %v8773 = vld [vmem:[#allocation11 + $0x20] sm:$0x7]
      %v8774 = vld [vmem:[#allocation11 + $0x28] sm:$0x7]
      %v8775 = vld [vmem:[#allocation11 + $0x30] sm:$0x7]
      %v8776 = vld [vmem:[#allocation11 + $0x38] sm:$0x7]
      %v8785 = vrot.slane %v8769, 3
      %v8786 = vrot.slane %v8773, 3
      %v8787 = vsel %vm3989, %v8785, %v8786
      %v8788 = vrot.slane %v8770, 3
      %v8789 = vrot.slane %v8774, 3
      %v8790 = vsel %vm3989, %v8788, %v8789
      %v8791 = vrot.slane %v8771, 3
      %v8792 = vrot.slane %v8775, 3
      %v8793 = vsel %vm3989, %v8791, %v8792
      %v8794 = vrot.slane %v8772, 3
      %v8795 = vrot.slane %v8776, 3
      %v8796 = vsel %vm3989, %v8794, %v8795
      %v8801 = vmax.f32 %v8765, %v8787
      %v8802 = vmax.f32 %v8766, %v8790
      %v8803 = vmax.f32 %v8767, %v8793
      %v8804 = vmax.f32 %v8768, %v8796
      %v8805 = vld [vmem:[#allocation11] sm:$0xf0]
      %v8806 = vld [vmem:[#allocation11 + $0x8] sm:$0xf0]
      %v8807 = vld [vmem:[#allocation11 + $0x10] sm:$0xf0]
      %v8808 = vld [vmem:[#allocation11 + $0x18] sm:$0xf0]
      %v8809 = vld [vmem:[#allocation11 + $0x20] sm:$0xf]
      %v8810 = vld [vmem:[#allocation11 + $0x28] sm:$0xf]
      %v8811 = vld [vmem:[#allocation11 + $0x30] sm:$0xf]
      %v8812 = vld [vmem:[#allocation11 + $0x38] sm:$0xf]
      %v8821 = vrot.slane %v8805, 4
      %v8822 = vrot.slane %v8809, 4
      %v8823 = vsel %vm3896, %v8821, %v8822
      %v8824 = vrot.slane %v8806, 4
      %v8825 = vrot.slane %v8810, 4
      %v8826 = vsel %vm3896, %v8824, %v8825
      %v8827 = vrot.slane %v8807, 4
      %v8828 = vrot.slane %v8811, 4
      %v8829 = vsel %vm3896, %v8827, %v8828
      %v8830 = vrot.slane %v8808, 4
      %v8831 = vrot.slane %v8812, 4
      %v8832 = vsel %vm3896, %v8830, %v8831
      %v8837 = vmax.f32 %v8801, %v8823
      %v8838 = vmax.f32 %v8802, %v8826
      %v8839 = vmax.f32 %v8803, %v8829
      %v8840 = vmax.f32 %v8804, %v8832
      %v8841 = vld [vmem:[#allocation11] sm:$0xe0]
      %v8842 = vld [vmem:[#allocation11 + $0x8] sm:$0xe0]
      %v8843 = vld [vmem:[#allocation11 + $0x10] sm:$0xe0]
      %v8844 = vld [vmem:[#allocation11 + $0x18] sm:$0xe0]
      %v8845 = vld [vmem:[#allocation11 + $0x20] sm:$0x1f]
      %v8846 = vld [vmem:[#allocation11 + $0x28] sm:$0x1f]
      %v8847 = vld [vmem:[#allocation11 + $0x30] sm:$0x1f]
      %v8848 = vld [vmem:[#allocation11 + $0x38] sm:$0x1f]
      %v8857 = vrot.slane %v8841, 5
      %v8858 = vrot.slane %v8845, 5
      %v8859 = vsel %vm4042, %v8857, %v8858
      %v8860 = vrot.slane %v8842, 5
      %v8861 = vrot.slane %v8846, 5
      %v8862 = vsel %vm4042, %v8860, %v8861
      %v8863 = vrot.slane %v8843, 5
      %v8864 = vrot.slane %v8847, 5
      %v8865 = vsel %vm4042, %v8863, %v8864
      %v8866 = vrot.slane %v8844, 5
      %v8867 = vrot.slane %v8848, 5
      %v8868 = vsel %vm4042, %v8866, %v8867
      %v8873 = vmax.f32 %v8837, %v8859
      %v8874 = vmax.f32 %v8838, %v8862
      %v8875 = vmax.f32 %v8839, %v8865
      %v8876 = vmax.f32 %v8840, %v8868
      %v8877 = vld [vmem:[#allocation11] sm:$0xc0]
      %v8878 = vld [vmem:[#allocation11 + $0x8] sm:$0xc0]
      %v8879 = vld [vmem:[#allocation11 + $0x10] sm:$0xc0]
      %v8880 = vld [vmem:[#allocation11 + $0x18] sm:$0xc0]
      %v8881 = vld [vmem:[#allocation11 + $0x20] sm:$0x3f]
      %v8882 = vld [vmem:[#allocation11 + $0x28] sm:$0x3f]
      %v8883 = vld [vmem:[#allocation11 + $0x30] sm:$0x3f]
      %v8884 = vld [vmem:[#allocation11 + $0x38] sm:$0x3f]
      %v8893 = vrot.slane %v8877, 6
      %v8894 = vrot.slane %v8881, 6
      %v8895 = vsel %vm4069, %v8893, %v8894
      %v8896 = vrot.slane %v8878, 6
      %v8897 = vrot.slane %v8882, 6
      %v8898 = vsel %vm4069, %v8896, %v8897
      %v8899 = vrot.slane %v8879, 6
      %v8900 = vrot.slane %v8883, 6
      %v8901 = vsel %vm4069, %v8899, %v8900
      %v8902 = vrot.slane %v8880, 6
      %v8903 = vrot.slane %v8884, 6
      %v8904 = vsel %vm4069, %v8902, %v8903
      %v8909 = vmax.f32 %v8873, %v8895
      %v8910 = vmax.f32 %v8874, %v8898
      %v8911 = vmax.f32 %v8875, %v8901
      %v8912 = vmax.f32 %v8876, %v8904
      %v8913 = vld [vmem:[#allocation11] sm:$0x80]
      %v8914 = vld [vmem:[#allocation11 + $0x8] sm:$0x80]
      %v8915 = vld [vmem:[#allocation11 + $0x10] sm:$0x80]
      %v8916 = vld [vmem:[#allocation11 + $0x18] sm:$0x80]
      %v8917 = vld [vmem:[#allocation11 + $0x20] sm:$0x7f]
      %v8918 = vld [vmem:[#allocation11 + $0x28] sm:$0x7f]
      %v8919 = vld [vmem:[#allocation11 + $0x30] sm:$0x7f]
      %v8920 = vld [vmem:[#allocation11 + $0x38] sm:$0x7f]
      %v8929 = vrot.slane %v8913, 7
      %v8930 = vrot.slane %v8917, 7
      %v8931 = vsel %vm4096, %v8929, %v8930
      %v8932 = vrot.slane %v8914, 7
      %v8933 = vrot.slane %v8918, 7
      %v8934 = vsel %vm4096, %v8932, %v8933
      %v8935 = vrot.slane %v8915, 7
      %v8936 = vrot.slane %v8919, 7
      %v8937 = vsel %vm4096, %v8935, %v8936
      %v8938 = vrot.slane %v8916, 7
      %v8939 = vrot.slane %v8920, 7
      %v8940 = vsel %vm4096, %v8938, %v8939
      %v8945 = vmax.f32 %v8909, %v8931
      %v8946 = vmax.f32 %v8910, %v8934
      %v8947 = vmax.f32 %v8911, %v8937
      %v8948 = vmax.f32 %v8912, %v8940
      %v8949 = vld [vmem:[#allocation11 + $0x20] sm:$0xff]
      %v8950 = vld [vmem:[#allocation11 + $0x28] sm:$0xff]
      %v8951 = vld [vmem:[#allocation11 + $0x30] sm:$0xff]
      %v8952 = vld [vmem:[#allocation11 + $0x38] sm:$0xff]
      %v8953 = vmax.f32 %v8945, %v8949
      %v8954 = vmax.f32 %v8946, %v8950
      %v8955 = vmax.f32 %v8947, %v8951
      %v8956 = vmax.f32 %v8948, %v8952
      %vm8957 = vcmask 64512
      %v8958 = vsel %vm8957, %v852, 0
      %8960 = vmatprep.subr.mxu0 0.0
      %8961 = vmatpush1.msra.mxu0 0.0
      %8962 = vmatprep.subr.mxu0 0.0
      %8963 = vmatpush1.msra.mxu0 0.0
      %8964 = vmatprep.subr.mxu0 0.0
      %8965 = vmatpush1.msra.mxu0 0.0
      %8966 = vmatprep.subr.mxu0 0.0
      %8967 = vmatpush1.msra.mxu0 0.0
      %8968 = vmatprep.subr.mxu0 0.0
      %8969 = vmatpush1.msra.mxu0 0.0
      %8970 = vmatprep.subr.mxu0 0.0
      %8971 = vmatpush1.msra.mxu0 0.0
      %8972 = vmatprep.subr.mxu0 0.0
      %8973 = vmatpush1.msra.mxu0 0.0
      %8974 = vmatprep.subr.mxu0 0.0
      %8975 = vmatpush1.msra.mxu0 0.0
      %8976 = vmatprep.subr.mxu0 0.0
      %8977 = vmatpush1.msra.mxu0 0.0
      %8978 = vmatprep.subr.mxu0 0.0
      %8979 = vmatpush1.msra.mxu0 0.0
      %8980 = vmatprep.subr.mxu0 0.0
      %8981 = vmatpush1.msra.mxu0 0.0
      %8982 = vmatprep.subr.mxu0 0.0
      %8983 = vmatpush1.msra.mxu0 0.0
      %8984 = vmatprep.subr.mxu0 0.0
      %8985 = vmatpush1.msra.mxu0 0.0
      %8986 = vmatprep.subr.mxu0 0.0
      %8987 = vmatpush1.msra.mxu0 0.0
      %8988 = vmatprep.subr.mxu0 0.0
      %8989 = vmatpush1.msra.mxu0 0.0
      %8990 = vmatprep.subr.mxu0 %v8954
      %8991 = vmatpush1.msra.mxu0 %v8953
      %8992 = vmatprep.subr.mxu0 0.0
      %8993 = vmatpush2.msra.mxu0 0.0
      %8994 = vmatprep.subr.mxu0 0.0
      %8995 = vmatpush2.msra.mxu0 0.0
      %8996 = vmatprep.subr.mxu0 0.0
      %8997 = vmatpush2.msra.mxu0 0.0
      %8998 = vmatprep.subr.mxu0 0.0
      %8999 = vmatpush2.msra.mxu0 0.0
      %9000 = vmatprep.subr.mxu0 0.0
      %9001 = vmatpush2.msra.mxu0 0.0
      %9002 = vmatprep.subr.mxu0 0.0
      %9003 = vmatpush2.msra.mxu0 0.0
      %9004 = vmatprep.subr.mxu0 0.0
      %9005 = vmatpush2.msra.mxu0 0.0
      %9006 = vmatprep.subr.mxu0 0.0
      %9007 = vmatpush2.msra.mxu0 0.0
      %9008 = vmatprep.subr.mxu0 0.0
      %9009 = vmatpush2.msra.mxu0 0.0
      %9010 = vmatprep.subr.mxu0 0.0
      %9011 = vmatpush2.msra.mxu0 0.0
      %9012 = vmatprep.subr.mxu0 0.0
      %9013 = vmatpush2.msra.mxu0 0.0
      %9014 = vmatprep.subr.mxu0 0.0
      %9015 = vmatpush2.msra.mxu0 0.0
      %9016 = vmatprep.subr.mxu0 0.0
      %9017 = vmatpush2.msra.mxu0 0.0
      %9018 = vmatprep.subr.mxu0 0.0
      %9019 = vmatpush2.msra.mxu0 0.0
      %9020 = vmatprep.subr.mxu0 0.0
      %9021 = vmatpush2.msra.mxu0 0.0
      %9022 = vmatprep.subr.mxu0 0.0
      %9023 = vmatpush2.msra.mxu0 0.0
      %9024 = vmatprep.mubr.f32.mxu0 0.0
      %9025 = vmatmul.mubr.f32.gmra.mxu0 %v8958
      %v9026 = vpop.f32.mrf.mxu0
      %v9027 = vadd.f32 0.0, %v9026
      %v9028 = vpop.f32.mrf.mxu0
      %v9029 = vadd.f32 0.0, %v9028
      %9030 = vdwg.mxu0
      %9031 = vmatprep.subr.mxu0 0.0
      %9032 = vmatpush1.msra.mxu0 0.0
      %9033 = vmatprep.subr.mxu0 0.0
      %9034 = vmatpush1.msra.mxu0 0.0
      %9035 = vmatprep.subr.mxu0 0.0
      %9036 = vmatpush1.msra.mxu0 0.0
      %9037 = vmatprep.subr.mxu0 0.0
      %9038 = vmatpush1.msra.mxu0 0.0
      %9039 = vmatprep.subr.mxu0 0.0
      %9040 = vmatpush1.msra.mxu0 0.0
      %9041 = vmatprep.subr.mxu0 0.0
      %9042 = vmatpush1.msra.mxu0 0.0
      %9043 = vmatprep.subr.mxu0 0.0
      %9044 = vmatpush1.msra.mxu0 0.0
      %9045 = vmatprep.subr.mxu0 0.0
      %9046 = vmatpush1.msra.mxu0 0.0
      %9047 = vmatprep.subr.mxu0 0.0
      %9048 = vmatpush1.msra.mxu0 0.0
      %9049 = vmatprep.subr.mxu0 0.0
      %9050 = vmatpush1.msra.mxu0 0.0
      %9051 = vmatprep.subr.mxu0 0.0
      %9052 = vmatpush1.msra.mxu0 0.0
      %9053 = vmatprep.subr.mxu0 0.0
      %9054 = vmatpush1.msra.mxu0 0.0
      %9055 = vmatprep.subr.mxu0 0.0
      %9056 = vmatpush1.msra.mxu0 0.0
      %9057 = vmatprep.subr.mxu0 0.0
      %9058 = vmatpush1.msra.mxu0 0.0
      %9059 = vmatprep.subr.mxu0 0.0
      %9060 = vmatpush1.msra.mxu0 0.0
      %9061 = vmatprep.subr.mxu0 %v8956
      %9062 = vmatpush1.msra.mxu0 %v8955
      %9063 = vmatprep.subr.mxu0 0.0
      %9064 = vmatpush2.msra.mxu0 0.0
      %9065 = vmatprep.subr.mxu0 0.0
      %9066 = vmatpush2.msra.mxu0 0.0
      %9067 = vmatprep.subr.mxu0 0.0
      %9068 = vmatpush2.msra.mxu0 0.0
      %9069 = vmatprep.subr.mxu0 0.0
      %9070 = vmatpush2.msra.mxu0 0.0
      %9071 = vmatprep.subr.mxu0 0.0
      %9072 = vmatpush2.msra.mxu0 0.0
      %9073 = vmatprep.subr.mxu0 0.0
      %9074 = vmatpush2.msra.mxu0 0.0
      %9075 = vmatprep.subr.mxu0 0.0
      %9076 = vmatpush2.msra.mxu0 0.0
      %9077 = vmatprep.subr.mxu0 0.0
      %9078 = vmatpush2.msra.mxu0 0.0
      %9079 = vmatprep.subr.mxu0 0.0
      %9080 = vmatpush2.msra.mxu0 0.0
      %9081 = vmatprep.subr.mxu0 0.0
      %9082 = vmatpush2.msra.mxu0 0.0
      %9083 = vmatprep.subr.mxu0 0.0
      %9084 = vmatpush2.msra.mxu0 0.0
      %9085 = vmatprep.subr.mxu0 0.0
      %9086 = vmatpush2.msra.mxu0 0.0
      %9087 = vmatprep.subr.mxu0 0.0
      %9088 = vmatpush2.msra.mxu0 0.0
      %9089 = vmatprep.subr.mxu0 0.0
      %9090 = vmatpush2.msra.mxu0 0.0
      %9091 = vmatprep.subr.mxu0 0.0
      %9092 = vmatpush2.msra.mxu0 0.0
      %9093 = vmatprep.subr.mxu0 0.0
      %9094 = vmatpush2.msra.mxu0 0.0
      %9095 = vmatprep.mubr.f32.mxu0 0.0
      %9096 = vmatmul.mubr.f32.gmra.mxu0 %v8958
      %v9097 = vpop.f32.mrf.mxu0
      %v9098 = vadd.f32 0.0, %v9097
      %v9099 = vpop.f32.mrf.mxu0
      %v9100 = vadd.f32 0.0, %v9099
      %9101 = vdwg.mxu0
      %v9102 = vsel %vm3896, %v9027, 0.0
      %v9103 = vrot.slane %v9102, 4
      %v9104 = vadd.f32 %v9102, %v9103
      %v9105 = vrot.slane %v9104, 2
      %v9106 = vadd.f32 %v9104, %v9105
      %v9107 = vrot.slane %v9106, 1
      %v9108 = vadd.f32 %v9106, %v9107
      %v9109 = vsel %vm3896, %v9029, 0.0
      %v9110 = vrot.slane %v9109, 4
      %v9111 = vadd.f32 %v9109, %v9110
      %v9112 = vrot.slane %v9111, 2
      %v9113 = vadd.f32 %v9111, %v9112
      %v9114 = vrot.slane %v9113, 1
      %v9115 = vadd.f32 %v9113, %v9114
      %v9116 = vsel %vm3896, %v9098, 0.0
      %v9117 = vrot.slane %v9116, 4
      %v9118 = vadd.f32 %v9116, %v9117
      %v9119 = vrot.slane %v9118, 2
      %v9120 = vadd.f32 %v9118, %v9119
      %v9121 = vrot.slane %v9120, 1
      %v9122 = vadd.f32 %v9120, %v9121
      %v9123 = vsel %vm3896, %v9100, 0.0
      %v9124 = vrot.slane %v9123, 4
      %v9125 = vadd.f32 %v9123, %v9124
      %v9126 = vrot.slane %v9125, 2
      %v9127 = vadd.f32 %v9125, %v9126
      %v9128 = vrot.slane %v9127, 1
      %v9129 = vadd.f32 %v9127, %v9128
      %v9130 = vrcp.pop 4.0
      %v9131 = vmul.f32 %v9108, %v9130
      %v9132 = vmul.f32 %v9115, %v9130
      %v9133 = vmul.f32 %v9122, %v9130
      %v9134 = vmul.f32 %v9129, %v9130
      %v9139 = vcombine.low %v9131, %v9132
      %v9140 = vcombine.low %v9133, %v9134
      %v9142 = vunpack.c.l.s4 1966171168
      %v9143 = vunpack.c.0.s8 %v9142
      %v9144 = vlaneseq
      %v9145 = vshrl.u32 %v9144, 7
      %v9146 = vsub.s32 %v9143, %v9145
      %v9147 = vrot.slane %v9139, %v9146
      %v9149 = vunpack.c.l.s4 1966171168
      %v9150 = vunpack.c.0.s8 %v9149
      %v9151 = vlaneseq
      %v9152 = vshrl.u32 %v9151, 7
      %v9153 = vsub.s32 %v9150, %v9152
      %v9154 = vrot.slane %v9140, %v9153
      %v9155 = vcombine.low %v9147, %v9154
      %v9157 = vunpack.c.l.s4 1966171168
      %v9158 = vunpack.c.0.s8 %v9157
      %v9159 = vlaneseq
      %v9160 = vshrl.u32 %v9159, 7
      %v9161 = vsub.s32 %v9158, %v9160
      %v9162 = vrot.slane %v9155, %v9161
      %v9164 = vlaneseq
      %vm9165 = vcmp.ge.s32.totalorder %v9164, 0
      %vm9166 = vcmp.lt.s32.totalorder %v9164, 512
      %vm9167 = vmand %vm9165, %vm9166
      %9168 = vst.msk [vmem:[%s438] sm:$0xf] %vm9167, %v9162
      %p9169 = scmp.lt.s32.totalorder %s24, 1
      %s9170 = scalar_select %p9169, %s24, 1
      %s9171 = smul.addr %s9170, 4
      %s9172 = scalar_lea.vmem %s13, %s9171
      // Predicated region
      $region73: #{epoch_encoder_forward.1} parent=71 // pred_check
        %p9173 = pneg %p320
      $region74: #{epoch_encoder_forward.1} parent=71 // pred_check_branch
        %9175 = sbr.rel (%p9173) target = $region76
      $region75: #{epoch_encoder_forward.1} parent=71 // pred_region
        _
      $region76: #{epoch_encoder_forward.1} parent=71 // pred_fallthru
        _
    $region72: #{epoch_encoder_forward.1} parent=5 // pred_fallthru
      _
    %p9176 = scmp.le.s32.totalorder 2, %s19
    // Predicated region
    $region77: #{epoch_encoder_forward.1} parent=5 // pred_check
      %p9177 = pneg %p9176
    $region78: #{epoch_encoder_forward.1} parent=5 // pred_check_branch
      %9179 = sbr.rel (%p9177) target = $region80
    $region79: #{epoch_encoder_forward.1} parent=5 // pred_region
      %s9180 = ssub.s32 %s19, 2
      // Predicated region
      $region81: #{epoch_encoder_forward.1} parent=79 // pred_check
        %p9181 = pneg %p326
      $region82: #{epoch_encoder_forward.1} parent=79 // pred_check_branch
        %9183 = sbr.rel (%p9181) target = $region84
      $region83: #{epoch_encoder_forward.1} parent=79 // pred_region
        %p9184 = scmp.lt.s32.totalorder %s25, 1
        %s9185 = scalar_select %p9184, %s25, 1
        %s9186 = smul.addr %s9185, 4
        %s9187 = scalar_lea.vmem %s13, %s9186
      $region84: #{epoch_encoder_forward.1} parent=79 // pred_fallthru
        _
    $region80: #{epoch_encoder_forward.1} parent=5 // pred_fallthru
      _
  $region6: #{epoch_encoder_forward.1} parent=0 // loop_footer
    %s23 = sadd.s32 1, %s19
  $region7: #{epoch_encoder_forward.1} parent=0 // loop_footer_branch
    %18 = sbr.rel target = $region3
  $region8: #{epoch_encoder_forward.1} parent=0 // loop_exit
    _

</llo_original>
